<compile_context>
chip_gen: v7x
topology: tpu7x:2x2x1
jax: 0.10.0
libtpu: 0.0.40
codegen_flags: <defaults>
</compile_context>

<pallas_src>
import jax
import jax.numpy as jnp
from jax.experimental import pallas as pl
from jax.experimental.pallas import tpu as pltpu


BN_EPS = 1e-5
IMG_FEATURES = 28 * 28          # 784
OUT_PAD = 896                   # 7 * 128 -> lane-dense final output
K_PAD = 128                     # latent dim padded to a full lane tile
HIDDEN = (128, 256, 512, 1024)


def _vmem_spec():
    return pl.BlockSpec(memory_space=pltpu.MemorySpace.VMEM)


def _pad_latent(x):
    k = x.shape[1]
    if k == K_PAD:
        return x
    return jnp.pad(x, ((0, 0), (0, K_PAD - k)))


def _bn_relu(y, gamma, beta, inv_b):
    """Training-mode BatchNorm1d (biased variance) + ReLU, lean epilogue.

    Stats via E[y^2] - mean^2 (one traversal for both sums), then a single
    fused y*scale + shift followed by ReLU.
    """
    s1 = jnp.sum(y, axis=0, keepdims=True)
    s2 = jnp.sum(y * y, axis=0, keepdims=True)
    mean = s1 * inv_b
    var = jnp.maximum(s2 * inv_b - mean * mean, 0.0)   # guard f32 round-off
    scale = gamma * jax.lax.rsqrt(var + BN_EPS)        # EUP rsqrt
    shift = beta - mean * scale
    return jnp.maximum(y * scale + shift, 0.0)


def generator_kernel(
    x_ref,
    w1_ref, w2_ref, w3_ref, w4_ref, w5_ref,      # bf16 weights (VMEM)
    b5_ref,                                       # f32 bias of final layer
    g1_ref, be1_ref, g2_ref, be2_ref,             # BN affine params (f32)
    g3_ref, be3_ref, g4_ref, be4_ref,
    o_ref,
):
    inv_b = jnp.float32(1.0 / x_ref.shape[0])     # compile-time constant

    layers = (
        (w1_ref, g1_ref, be1_ref),
        (w2_ref, g2_ref, be2_ref),
        (w3_ref, g3_ref, be3_ref),
        (w4_ref, g4_ref, be4_ref),
    )

    # Activations live in vregs/VMEM; matmul inputs bf16, accumulate f32.
    h = x_ref[...].astype(jnp.bfloat16)
    for w_ref, g_ref, be_ref in layers:
        y = jnp.dot(h, w_ref[...], preferred_element_type=jnp.float32)
        # Pre-BN linear bias omitted: exactly cancelled by the batch-mean
        # subtraction in training-mode BatchNorm.
        h = _bn_relu(y, g_ref[...], be_ref[...], inv_b).astype(jnp.bfloat16)

    y = jnp.dot(h, w5_ref[...], preferred_element_type=jnp.float32) + b5_ref[...]
    o_ref[...] = jax.nn.sigmoid(y).astype(o_ref.dtype)


def _vmem_limit_bytes(batch):
    """Explicit VMEM budget so large batches don't trip the scoped default.

    Weights (bf16, incl. lane-padded w5) ~= 3.1 MiB; per-sample live state:
    x(128 f32) + widest y(1024 f32) + h(1024 bf16) + out(896 f32).
    2x headroom for compiler temporaries; never below the 32 MiB scoped
    default; never above v7x's 64 MiB physical VMEM.
    """
    weight_bytes = 2 * (K_PAD * 128 + 128 * 256 + 256 * 512 + 512 * 1024
                        + 1024 * OUT_PAD)
    per_sample = 4 * (K_PAD + 1024 + OUT_PAD) + 2 * 1024
    est = 2 * (weight_bytes + batch * per_sample) + (4 << 20)
    return int(min(max(32 << 20, est), 64 << 20))


def generator_forward_padded(x, params):
    """x: (B, latent_dim) f32 -> lane-dense (B, OUT_PAD) f32 (cols 784.. are pad)."""
    (w1, g1, be1), (w2, g2, be2), (w3, g3, be3), (w4, g4, be4), (w5, b5) = params
    B = x.shape[0]
    xp = _pad_latent(x.astype(jnp.float32))

    return pl.pallas_call(
        generator_kernel,
        out_shape=jax.ShapeDtypeStruct((B, OUT_PAD), jnp.float32),
        in_specs=[_vmem_spec()] * 15,
        out_specs=_vmem_spec(),
        compiler_params=pltpu.CompilerParams(
            vmem_limit_bytes=_vmem_limit_bytes(B)),
        # NOTE: for compute-bound batches on v7x, a leading batch grid axis
        # with dimension_semantics=("parallel",) could use both TensorCores,
        # but that requires a cross-core (global) BatchNorm reduction; kept
        # gridless here so BN statistics stay exact over the full batch.
    )(xp, w1, w2, w3, w4, w5, b5, g1, be1, g2, be2, g3, be3, g4, be4)


def generator_forward(x, params):
    """x: (B, latent_dim) f32 -> (B, 1, 28, 28) f32 (module semantics)."""
    out_padded = generator_forward_padded(x, params)
    # Crop the lane padding + NCHW reshape (plain JAX glue; negligible here —
    # consumers wanting zero extra HBM traffic can use the padded output).
    return out_padded[:, :IMG_FEATURES].reshape(x.shape[0], 1, 28, 28)


generator_forward_jit = jax.jit(generator_forward)


def init_params(latent_dim, key):
    """Deterministic synthetic parameters (PyTorch-like uniform init).

    Weights are stored pre-transposed as (in, out) in bf16.  w1 rows are
    zero-padded from latent_dim to K_PAD (padded latent lanes contribute
    nothing).  The four pre-BN linear biases are not materialized (they
    cancel under training-mode BatchNorm).  The final layer's weight/bias
    are lane-padded from 784 to 896 columns.
    """
    dims = [latent_dim] + list(HIDDEN) + [IMG_FEATURES]
    params = []
    for i in range(5):
        fan_in, fan_out = dims[i], dims[i + 1]
        key, kw, kb, kg, kbe = jax.random.split(key, 5)
        bound = 1.0 / jnp.sqrt(fan_in)
        w = jax.random.uniform(kw, (fan_in, fan_out), jnp.float32, -bound, bound)
        if i == 0 and fan_in < K_PAD:
            w = jnp.pad(w, ((0, K_PAD - fan_in), (0, 0)))
        if i < 4:
            # BatchNorm affine params (PyTorch default gamma=1, beta=0;
            # perturbed slightly so the affine path is exercised).
            gamma = jnp.ones((1, fan_out), jnp.float32) \
                + 0.01 * jax.random.normal(kg, (1, fan_out), jnp.float32)
            beta = 0.01 * jax.random.normal(kbe, (1, fan_out), jnp.float32)
            params.append((w.astype(jnp.bfloat16), gamma, beta))
        else:
            b = jax.random.uniform(kb, (1, fan_out), jnp.float32, -bound, bound)
            pad = OUT_PAD - fan_out
            w = jnp.pad(w, ((0, 0), (0, pad)))
            b = jnp.pad(b, ((0, 0), (0, pad)))
            params.append((w.astype(jnp.bfloat16), b))
    return params


def generator_reference(x, params):
    """Pure-JAX reference using the same bf16 weights / f32 accumulation."""
    (w1, g1, be1), (w2, g2, be2), (w3, g3, be3), (w4, g4, be4), (w5, b5) = params
    inv_b = jnp.float32(1.0 / x.shape[0])
    h = _pad_latent(x.astype(jnp.float32)).astype(jnp.bfloat16)
    for w, g, be in ((w1, g1, be1), (w2, g2, be2), (w3, g3, be3), (w4, g4, be4)):
        y = jnp.dot(h, w, preferred_element_type=jnp.float32)
        h = _bn_relu(y, g, be, inv_b).astype(jnp.bfloat16)
    y = jnp.dot(h, w5, preferred_element_type=jnp.float32) + b5
    y = jax.nn.sigmoid(y)[:, :IMG_FEATURES]
    return y.reshape(x.shape[0], 1, 28, 28)


if __name__ == "__main__":
    latent_dim = 32
    # Batch raised so the MXU sees a real M and the ~3.1 MB weight fetch is
    # amortized over >=128 samples (per the performance review); the shapes
    # remain tiny in absolute terms.
    batch = 128

    key = jax.random.PRNGKey(0)
    key_x, key_p = jax.random.split(key)

    x = jax.random.normal(key_x, (batch, latent_dim), jnp.float32)
    params = init_params(latent_dim, key_p)

    out = generator_forward_jit(x, params)
    jax.block_until_ready(out)

    assert out.shape == (batch, 1, 28, 28), out.shape
    assert out.dtype == jnp.float32
    # sigmoid output must lie in [0, 1] (f32 sigmoid can round to 0.0 / 1.0)
    assert bool(jnp.all(out >= 0.0)) and bool(jnp.all(out <= 1.0))

    # sanity check against a pure-JAX reference on the same bf16 params
    ref = generator_reference(x, params)
    assert bool(jnp.allclose(out, ref, atol=5e-3)), float(
        jnp.max(jnp.abs(out - ref)))

    print("KERNEL_OK")
</pallas_src>

<mosaic_0001>
module attributes {stable_mosaic.version = 11 : i64} {
  func.func @generator_kernel(%arg0: memref<128x128xf32, #tpu.memory_space<vmem>>, %arg1: memref<128x128xbf16, #tpu.memory_space<vmem>>, %arg2: memref<128x256xbf16, #tpu.memory_space<vmem>>, %arg3: memref<256x512xbf16, #tpu.memory_space<vmem>>, %arg4: memref<512x1024xbf16, #tpu.memory_space<vmem>>, %arg5: memref<1024x896xbf16, #tpu.memory_space<vmem>>, %arg6: memref<1x896xf32, #tpu.memory_space<vmem>>, %arg7: memref<1x128xf32, #tpu.memory_space<vmem>>, %arg8: memref<1x128xf32, #tpu.memory_space<vmem>>, %arg9: memref<1x256xf32, #tpu.memory_space<vmem>>, %arg10: memref<1x256xf32, #tpu.memory_space<vmem>>, %arg11: memref<1x512xf32, #tpu.memory_space<vmem>>, %arg12: memref<1x512xf32, #tpu.memory_space<vmem>>, %arg13: memref<1x1024xf32, #tpu.memory_space<vmem>>, %arg14: memref<1x1024xf32, #tpu.memory_space<vmem>>, %arg15: memref<128x896xf32, #tpu.memory_space<vmem>>) attributes {dimension_semantics = [], scalar_prefetch = 0 : i64, scratch_operands = 0 : i64, tpu.core_type = #tpu.core_type<tc>} {
    %c0 = arith.constant 0 : index
    %c0_0 = arith.constant 0 : index
    %0 = vector.load %arg0[%c0, %c0_0] : memref<128x128xf32, #tpu.memory_space<vmem>>, vector<128x128xf32>
    %1 = arith.truncf %0 : vector<128x128xf32> to vector<128x128xbf16>
    %c0_1 = arith.constant 0 : index
    %c0_2 = arith.constant 0 : index
    %2 = vector.load %arg1[%c0_1, %c0_2] : memref<128x128xbf16, #tpu.memory_space<vmem>>, vector<128x128xbf16>
    %cst = arith.constant dense<0.000000e+00> : vector<128x128xf32>
    %3 = tpu.matmul %1, %2, %cst {dimension_numbers = #tpu.dot_dimension_numbers<[1], [0], [0], [1], [0, 0, 1, 1], [], []>} : vector<128x128xbf16>, vector<128x128xbf16>, vector<128x128xf32> -> vector<128x128xf32>
    %c0_3 = arith.constant 0 : index
    %c0_4 = arith.constant 0 : index
    %4 = vector.load %arg7[%c0_3, %c0_4] : memref<1x128xf32, #tpu.memory_space<vmem>>, vector<1x128xf32>
    %c0_5 = arith.constant 0 : index
    %c0_6 = arith.constant 0 : index
    %5 = vector.load %arg8[%c0_5, %c0_6] : memref<1x128xf32, #tpu.memory_space<vmem>>, vector<1x128xf32>
    %cst_7 = arith.constant dense<0.000000e+00> : vector<128xf32>
    %6 = vector.multi_reduction <add>, %3, %cst_7 [0] : vector<128x128xf32> to vector<128xf32>
    %7 = vector.shape_cast %6 : vector<128xf32> to vector<1x128xf32>
    %8 = arith.mulf %3, %3 : vector<128x128xf32>
    %cst_8 = arith.constant dense<0.000000e+00> : vector<128xf32>
    %9 = vector.multi_reduction <add>, %8, %cst_8 [0] : vector<128x128xf32> to vector<128xf32>
    %10 = vector.shape_cast %9 : vector<128xf32> to vector<1x128xf32>
    %cst_9 = arith.constant 7.812500e-03 : f32
    %11 = vector.broadcast %cst_9 : f32 to vector<1x128xf32>
    %12 = arith.mulf %7, %11 : vector<1x128xf32>
    %cst_10 = arith.constant 7.812500e-03 : f32
    %13 = vector.broadcast %cst_10 : f32 to vector<1x128xf32>
    %14 = arith.mulf %10, %13 : vector<1x128xf32>
    %15 = arith.mulf %12, %12 : vector<1x128xf32>
    %16 = arith.subf %14, %15 : vector<1x128xf32>
    %cst_11 = arith.constant 0.000000e+00 : f32
    %17 = vector.broadcast %cst_11 : f32 to vector<1x128xf32>
    %18 = arith.maximumf %16, %17 : vector<1x128xf32>
    %cst_12 = arith.constant 9.99999974E-6 : f32
    %19 = vector.broadcast %cst_12 : f32 to vector<1x128xf32>
    %20 = arith.addf %18, %19 : vector<1x128xf32>
    %21 = math.rsqrt %20 : vector<1x128xf32>
    %22 = arith.mulf %4, %21 : vector<1x128xf32>
    %23 = arith.mulf %12, %22 : vector<1x128xf32>
    %24 = arith.subf %5, %23 : vector<1x128xf32>
    %25 = vector.broadcast %22 : vector<1x128xf32> to vector<128x128xf32>
    %26 = arith.mulf %3, %25 : vector<128x128xf32>
    %27 = vector.broadcast %24 : vector<1x128xf32> to vector<128x128xf32>
    %28 = arith.addf %26, %27 : vector<128x128xf32>
    %cst_13 = arith.constant 0.000000e+00 : f32
    %29 = vector.broadcast %cst_13 : f32 to vector<128x128xf32>
    %30 = arith.maximumf %28, %29 : vector<128x128xf32>
    %31 = arith.truncf %30 : vector<128x128xf32> to vector<128x128xbf16>
    %c0_14 = arith.constant 0 : index
    %c0_15 = arith.constant 0 : index
    %32 = vector.load %arg2[%c0_14, %c0_15] : memref<128x256xbf16, #tpu.memory_space<vmem>>, vector<128x256xbf16>
    %cst_16 = arith.constant dense<0.000000e+00> : vector<128x256xf32>
    %33 = tpu.matmul %31, %32, %cst_16 {dimension_numbers = #tpu.dot_dimension_numbers<[1], [0], [0], [1], [0, 0, 1, 1], [], []>} : vector<128x128xbf16>, vector<128x256xbf16>, vector<128x256xf32> -> vector<128x256xf32>
    %c0_17 = arith.constant 0 : index
    %c0_18 = arith.constant 0 : index
    %34 = vector.load %arg9[%c0_17, %c0_18] : memref<1x256xf32, #tpu.memory_space<vmem>>, vector<1x256xf32>
    %c0_19 = arith.constant 0 : index
    %c0_20 = arith.constant 0 : index
    %35 = vector.load %arg10[%c0_19, %c0_20] : memref<1x256xf32, #tpu.memory_space<vmem>>, vector<1x256xf32>
    %cst_21 = arith.constant dense<0.000000e+00> : vector<256xf32>
    %36 = vector.multi_reduction <add>, %33, %cst_21 [0] : vector<128x256xf32> to vector<256xf32>
    %37 = vector.shape_cast %36 : vector<256xf32> to vector<1x256xf32>
    %38 = arith.mulf %33, %33 : vector<128x256xf32>
    %cst_22 = arith.constant dense<0.000000e+00> : vector<256xf32>
    %39 = vector.multi_reduction <add>, %38, %cst_22 [0] : vector<128x256xf32> to vector<256xf32>
    %40 = vector.shape_cast %39 : vector<256xf32> to vector<1x256xf32>
    %cst_23 = arith.constant 7.812500e-03 : f32
    %41 = vector.broadcast %cst_23 : f32 to vector<1x256xf32>
    %42 = arith.mulf %37, %41 : vector<1x256xf32>
    %cst_24 = arith.constant 7.812500e-03 : f32
    %43 = vector.broadcast %cst_24 : f32 to vector<1x256xf32>
    %44 = arith.mulf %40, %43 : vector<1x256xf32>
    %45 = arith.mulf %42, %42 : vector<1x256xf32>
    %46 = arith.subf %44, %45 : vector<1x256xf32>
    %cst_25 = arith.constant 0.000000e+00 : f32
    %47 = vector.broadcast %cst_25 : f32 to vector<1x256xf32>
    %48 = arith.maximumf %46, %47 : vector<1x256xf32>
    %cst_26 = arith.constant 9.99999974E-6 : f32
    %49 = vector.broadcast %cst_26 : f32 to vector<1x256xf32>
    %50 = arith.addf %48, %49 : vector<1x256xf32>
    %51 = math.rsqrt %50 : vector<1x256xf32>
    %52 = arith.mulf %34, %51 : vector<1x256xf32>
    %53 = arith.mulf %42, %52 : vector<1x256xf32>
    %54 = arith.subf %35, %53 : vector<1x256xf32>
    %55 = vector.broadcast %52 : vector<1x256xf32> to vector<128x256xf32>
    %56 = arith.mulf %33, %55 : vector<128x256xf32>
    %57 = vector.broadcast %54 : vector<1x256xf32> to vector<128x256xf32>
    %58 = arith.addf %56, %57 : vector<128x256xf32>
    %cst_27 = arith.constant 0.000000e+00 : f32
    %59 = vector.broadcast %cst_27 : f32 to vector<128x256xf32>
    %60 = arith.maximumf %58, %59 : vector<128x256xf32>
    %61 = arith.truncf %60 : vector<128x256xf32> to vector<128x256xbf16>
    %c0_28 = arith.constant 0 : index
    %c0_29 = arith.constant 0 : index
    %62 = vector.load %arg3[%c0_28, %c0_29] : memref<256x512xbf16, #tpu.memory_space<vmem>>, vector<256x512xbf16>
    %cst_30 = arith.constant dense<0.000000e+00> : vector<128x512xf32>
    %63 = tpu.matmul %61, %62, %cst_30 {dimension_numbers = #tpu.dot_dimension_numbers<[1], [0], [0], [1], [0, 0, 1, 1], [], []>} : vector<128x256xbf16>, vector<256x512xbf16>, vector<128x512xf32> -> vector<128x512xf32>
    %c0_31 = arith.constant 0 : index
    %c0_32 = arith.constant 0 : index
    %64 = vector.load %arg11[%c0_31, %c0_32] : memref<1x512xf32, #tpu.memory_space<vmem>>, vector<1x512xf32>
    %c0_33 = arith.constant 0 : index
    %c0_34 = arith.constant 0 : index
    %65 = vector.load %arg12[%c0_33, %c0_34] : memref<1x512xf32, #tpu.memory_space<vmem>>, vector<1x512xf32>
    %cst_35 = arith.constant dense<0.000000e+00> : vector<512xf32>
    %66 = vector.multi_reduction <add>, %63, %cst_35 [0] : vector<128x512xf32> to vector<512xf32>
    %67 = vector.shape_cast %66 : vector<512xf32> to vector<1x512xf32>
    %68 = arith.mulf %63, %63 : vector<128x512xf32>
    %cst_36 = arith.constant dense<0.000000e+00> : vector<512xf32>
    %69 = vector.multi_reduction <add>, %68, %cst_36 [0] : vector<128x512xf32> to vector<512xf32>
    %70 = vector.shape_cast %69 : vector<512xf32> to vector<1x512xf32>
    %cst_37 = arith.constant 7.812500e-03 : f32
    %71 = vector.broadcast %cst_37 : f32 to vector<1x512xf32>
    %72 = arith.mulf %67, %71 : vector<1x512xf32>
    %cst_38 = arith.constant 7.812500e-03 : f32
    %73 = vector.broadcast %cst_38 : f32 to vector<1x512xf32>
    %74 = arith.mulf %70, %73 : vector<1x512xf32>
    %75 = arith.mulf %72, %72 : vector<1x512xf32>
    %76 = arith.subf %74, %75 : vector<1x512xf32>
    %cst_39 = arith.constant 0.000000e+00 : f32
    %77 = vector.broadcast %cst_39 : f32 to vector<1x512xf32>
    %78 = arith.maximumf %76, %77 : vector<1x512xf32>
    %cst_40 = arith.constant 9.99999974E-6 : f32
    %79 = vector.broadcast %cst_40 : f32 to vector<1x512xf32>
    %80 = arith.addf %78, %79 : vector<1x512xf32>
    %81 = math.rsqrt %80 : vector<1x512xf32>
    %82 = arith.mulf %64, %81 : vector<1x512xf32>
    %83 = arith.mulf %72, %82 : vector<1x512xf32>
    %84 = arith.subf %65, %83 : vector<1x512xf32>
    %85 = vector.broadcast %82 : vector<1x512xf32> to vector<128x512xf32>
    %86 = arith.mulf %63, %85 : vector<128x512xf32>
    %87 = vector.broadcast %84 : vector<1x512xf32> to vector<128x512xf32>
    %88 = arith.addf %86, %87 : vector<128x512xf32>
    %cst_41 = arith.constant 0.000000e+00 : f32
    %89 = vector.broadcast %cst_41 : f32 to vector<128x512xf32>
    %90 = arith.maximumf %88, %89 : vector<128x512xf32>
    %91 = arith.truncf %90 : vector<128x512xf32> to vector<128x512xbf16>
    %c0_42 = arith.constant 0 : index
    %c0_43 = arith.constant 0 : index
    %92 = vector.load %arg4[%c0_42, %c0_43] : memref<512x1024xbf16, #tpu.memory_space<vmem>>, vector<512x1024xbf16>
    %cst_44 = arith.constant dense<0.000000e+00> : vector<128x1024xf32>
    %93 = tpu.matmul %91, %92, %cst_44 {dimension_numbers = #tpu.dot_dimension_numbers<[1], [0], [0], [1], [0, 0, 1, 1], [], []>} : vector<128x512xbf16>, vector<512x1024xbf16>, vector<128x1024xf32> -> vector<128x1024xf32>
    %c0_45 = arith.constant 0 : index
    %c0_46 = arith.constant 0 : index
    %94 = vector.load %arg13[%c0_45, %c0_46] : memref<1x1024xf32, #tpu.memory_space<vmem>>, vector<1x1024xf32>
    %c0_47 = arith.constant 0 : index
    %c0_48 = arith.constant 0 : index
    %95 = vector.load %arg14[%c0_47, %c0_48] : memref<1x1024xf32, #tpu.memory_space<vmem>>, vector<1x1024xf32>
    %cst_49 = arith.constant dense<0.000000e+00> : vector<1024xf32>
    %96 = vector.multi_reduction <add>, %93, %cst_49 [0] : vector<128x1024xf32> to vector<1024xf32>
    %97 = vector.shape_cast %96 : vector<1024xf32> to vector<1x1024xf32>
    %98 = arith.mulf %93, %93 : vector<128x1024xf32>
    %cst_50 = arith.constant dense<0.000000e+00> : vector<1024xf32>
    %99 = vector.multi_reduction <add>, %98, %cst_50 [0] : vector<128x1024xf32> to vector<1024xf32>
    %100 = vector.shape_cast %99 : vector<1024xf32> to vector<1x1024xf32>
    %cst_51 = arith.constant 7.812500e-03 : f32
    %101 = vector.broadcast %cst_51 : f32 to vector<1x1024xf32>
    %102 = arith.mulf %97, %101 : vector<1x1024xf32>
    %cst_52 = arith.constant 7.812500e-03 : f32
    %103 = vector.broadcast %cst_52 : f32 to vector<1x1024xf32>
    %104 = arith.mulf %100, %103 : vector<1x1024xf32>
    %105 = arith.mulf %102, %102 : vector<1x1024xf32>
    %106 = arith.subf %104, %105 : vector<1x1024xf32>
    %cst_53 = arith.constant 0.000000e+00 : f32
    %107 = vector.broadcast %cst_53 : f32 to vector<1x1024xf32>
    %108 = arith.maximumf %106, %107 : vector<1x1024xf32>
    %cst_54 = arith.constant 9.99999974E-6 : f32
    %109 = vector.broadcast %cst_54 : f32 to vector<1x1024xf32>
    %110 = arith.addf %108, %109 : vector<1x1024xf32>
    %111 = math.rsqrt %110 : vector<1x1024xf32>
    %112 = arith.mulf %94, %111 : vector<1x1024xf32>
    %113 = arith.mulf %102, %112 : vector<1x1024xf32>
    %114 = arith.subf %95, %113 : vector<1x1024xf32>
    %115 = vector.broadcast %112 : vector<1x1024xf32> to vector<128x1024xf32>
    %116 = arith.mulf %93, %115 : vector<128x1024xf32>
    %117 = vector.broadcast %114 : vector<1x1024xf32> to vector<128x1024xf32>
    %118 = arith.addf %116, %117 : vector<128x1024xf32>
    %cst_55 = arith.constant 0.000000e+00 : f32
    %119 = vector.broadcast %cst_55 : f32 to vector<128x1024xf32>
    %120 = arith.maximumf %118, %119 : vector<128x1024xf32>
    %121 = arith.truncf %120 : vector<128x1024xf32> to vector<128x1024xbf16>
    %c0_56 = arith.constant 0 : index
    %c0_57 = arith.constant 0 : index
    %122 = vector.load %arg5[%c0_56, %c0_57] : memref<1024x896xbf16, #tpu.memory_space<vmem>>, vector<1024x896xbf16>
    %cst_58 = arith.constant dense<0.000000e+00> : vector<128x896xf32>
    %123 = tpu.matmul %121, %122, %cst_58 {dimension_numbers = #tpu.dot_dimension_numbers<[1], [0], [0], [1], [0, 0, 1, 1], [], []>} : vector<128x1024xbf16>, vector<1024x896xbf16>, vector<128x896xf32> -> vector<128x896xf32>
    %c0_59 = arith.constant 0 : index
    %c0_60 = arith.constant 0 : index
    %124 = vector.load %arg6[%c0_59, %c0_60] : memref<1x896xf32, #tpu.memory_space<vmem>>, vector<1x896xf32>
    %125 = vector.broadcast %124 : vector<1x896xf32> to vector<128x896xf32>
    %126 = arith.addf %123, %125 : vector<128x896xf32>
    %127 = arith.negf %126 : vector<128x896xf32>
    %128 = math.exp %127 : vector<128x896xf32>
    %cst_61 = arith.constant 1.000000e+00 : f32
    %129 = vector.broadcast %cst_61 : f32 to vector<128x896xf32>
    %130 = arith.addf %129, %128 : vector<128x896xf32>
    %131 = arith.divf %129, %130 : vector<128x896xf32>
    %c0_62 = arith.constant 0 : index
    %c0_63 = arith.constant 0 : index
    %132 = vector.load %arg15[%c0_62, %c0_63] : memref<128x896xf32, #tpu.memory_space<vmem>>, vector<128x896xf32>
    tpu.vector_store %arg15[%c0_62, %c0_63], %131 {strides = array<i32>} : memref<128x896xf32, #tpu.memory_space<vmem>>, vector<128x896xf32>,
    return
  }
}

</mosaic_0001>

<llo_original>
// kernel: generator_forward.1
$region0: #{generator_forward.1}
  #allocation0 [shape = 'u32[]', space=smem, size = 0x4, offset = 0x4, fixed_abs, tag = 'smem constant byte address 0x4 - core index']
  #allocation1 [shape = 'u32[144,128]{1,0:T(1,128)}', space=vmem, size = 0x12000, scoped, tag = 'internal scratch']
  %s0 = inlined_call_operand.vmem [shape: f32[128,128], index: 0, kind: input, shape index: {}]
  %s1 = inlined_call_operand.hbm [shape: bf16[128,128], index: 1, kind: input, shape index: {}]
  %s2 = inlined_call_operand.hbm [shape: bf16[128,256], index: 2, kind: input, shape index: {}]
  %s3 = inlined_call_operand.hbm [shape: bf16[256,512], index: 3, kind: input, shape index: {}]
  %s4 = inlined_call_operand.hbm [shape: bf16[512,1024], index: 4, kind: input, shape index: {}]
  %s5 = inlined_call_operand.hbm [shape: bf16[1024,896], index: 5, kind: input, shape index: {}]
  %s6 = inlined_call_operand.hbm [shape: f32[1,896], index: 6, kind: input, shape index: {}]
  %s7 = inlined_call_operand.hbm [shape: f32[1,128], index: 7, kind: input, shape index: {}]
  %s8 = inlined_call_operand.hbm [shape: f32[1,128], index: 8, kind: input, shape index: {}]
  %s9 = inlined_call_operand.hbm [shape: f32[1,256], index: 9, kind: input, shape index: {}]
  %s10 = inlined_call_operand.hbm [shape: f32[1,256], index: 10, kind: input, shape index: {}]
  %s11 = inlined_call_operand.hbm [shape: f32[1,512], index: 11, kind: input, shape index: {}]
  %s12 = inlined_call_operand.hbm [shape: f32[1,512], index: 12, kind: input, shape index: {}]
  %s13 = inlined_call_operand.hbm [shape: f32[1,1024], index: 13, kind: input, shape index: {}]
  %s14 = inlined_call_operand.hbm [shape: f32[1,1024], index: 14, kind: input, shape index: {}]
  %s15 = inlined_call_operand.vmem [shape: f32[128,896], index: 15, kind: output, shape index: {}]
  %s16 = sld [smem:[#allocation0]]
  $region126: #{generator_forward.1} parent=0
    _
  %s18 = ssub.s32 1, %s16
  %s19 = scalar_select 0, %s18, %s16
  $region1: #{generator_forward.1} parent=0
    #allocation2 [shape = 'u8[32768]{0}', space=vmem, size = 0x8000, scoped, tag = 'input window, operand 1, single buffered']
    #allocation3 [shape = 's32[1]{0}', space=sflag, size = 0x4, scoped, tag = 'scoped memory for generator_forward.1']
    #allocation4 [shape = 'u8[65536]{0}', space=vmem, size = 0x10000, scoped, tag = 'input window, operand 2, single buffered']
    #allocation5 [shape = 's32[1]{0}', space=sflag, size = 0x4, scoped, tag = 'scoped memory for generator_forward.1']
    #allocation6 [shape = 'u8[262144]{0}', space=vmem, size = 0x40000, scoped, tag = 'input window, operand 3, single buffered']
    #allocation7 [shape = 'u8[1048576]{0}', space=vmem, size = 0x100000, scoped, tag = 'input window, operand 4, single buffered']
    #allocation8 [shape = 's32[1]{0}', space=sflag, size = 0x4, scoped, tag = 'scoped memory for generator_forward.1']
    #allocation9 [shape = 'u8[1835008]{0}', space=vmem, size = 0x1c0000, scoped, tag = 'input window, operand 5, single buffered']
    #allocation10 [shape = 'u8[3584]{0}', space=vmem, size = 0x1000, scoped, tag = 'input window, operand 6, single buffered']
    #allocation11 [shape = 's32[1]{0}', space=sflag, size = 0x4, scoped, tag = 'scoped memory for generator_forward.1']
    #allocation12 [shape = 'u8[512]{0}', space=vmem, size = 0x400, scoped, tag = 'input window, operand 7, single buffered']
    #allocation13 [shape = 'u8[512]{0}', space=vmem, size = 0x400, scoped, tag = 'input window, operand 8, single buffered']
    #allocation14 [shape = 's32[1]{0}', space=sflag, size = 0x4, scoped, tag = 'scoped memory for generator_forward.1']
    #allocation15 [shape = 'u8[1024]{0}', space=vmem, size = 0x400, scoped, tag = 'input window, operand 9, single buffered']
    #allocation16 [shape = 'u8[1024]{0}', space=vmem, size = 0x400, scoped, tag = 'input window, operand 10, single buffered']
    #allocation17 [shape = 's32[1]{0}', space=sflag, size = 0x4, scoped, tag = 'scoped memory for generator_forward.1']
    #allocation18 [shape = 'u8[2048]{0}', space=vmem, size = 0x800, scoped, tag = 'input window, operand 11, single buffered']
    #allocation19 [shape = 'u8[2048]{0}', space=vmem, size = 0x800, scoped, tag = 'input window, operand 12, single buffered']
    #allocation20 [shape = 's32[1]{0}', space=sflag, size = 0x4, scoped, tag = 'scoped memory for generator_forward.1']
    #allocation21 [shape = 'u8[4096]{0}', space=vmem, size = 0x1000, scoped, tag = 'input window, operand 13, single buffered']
    #allocation22 [shape = 'u8[4096]{0}', space=vmem, size = 0x1000, scoped, tag = 'input window, operand 14, single buffered']
    #allocation23 [shape = 's32[1]{0}', space=sflag, size = 0x4, scoped, tag = 'scoped memory for generator_forward.1']
    %20 = vsyncpa [#allocation3], 0
    %21 = vsyncpa [#allocation5], 0
    %22 = vsyncpa [#allocation8], 0
    %23 = vsyncpa [#allocation11], 0
    %24 = vsyncpa [#allocation14], 0
    %25 = vsyncpa [#allocation17], 0
    %26 = vsyncpa [#allocation20], 0
    %27 = vsyncpa [#allocation23], 0
    // Predicated region
    $region2: #{generator_forward.1} parent=1 // pred_check
      _
    $region3: #{generator_forward.1} parent=1 // pred_check_branch
      %29 = sbr.rel (0) target = $region5
    $region4: #{generator_forward.1} parent=1 // pred_region
      _
    $region5: #{generator_forward.1} parent=1 // pred_fallthru
      _
    // Predicated region
    $region6: #{generator_forward.1} parent=1 // pred_check
      _
    $region7: #{generator_forward.1} parent=1 // pred_check_branch
      %31 = sbr.rel (0) target = $region9
    $region8: #{generator_forward.1} parent=1 // pred_region
      %s33 = ssub.s32 1024, 1024
      %34 = vsyncadd [#allocation3], %s33
      %s35 = sshll.u32 [#allocation2], 4
      %s36 = int_to_ptr.vmem [resolvable:$true] %s35
      %41 = dma.hbm_to_vmem [thread:$0]  %s1, 1024, %s36, [#allocation3], 64, 64, 4
    $region9: #{generator_forward.1} parent=1 // pred_fallthru
      _
    // Predicated region
    $region10: #{generator_forward.1} parent=1 // pred_check
      _
    $region11: #{generator_forward.1} parent=1 // pred_check_branch
      %43 = sbr.rel (0) target = $region13
    $region12: #{generator_forward.1} parent=1 // pred_region
      %s45 = ssub.s32 2048, 2048
      %46 = vsyncadd [#allocation5], %s45
      %s47 = sshll.u32 [#allocation4], 4
      %s48 = int_to_ptr.vmem [resolvable:$true] %s47
      %53 = dma.hbm_to_vmem [thread:$0]  %s2, 2048, %s48, [#allocation5], 128, 128, 8
    $region13: #{generator_forward.1} parent=1 // pred_fallthru
      _
    // Predicated region
    $region14: #{generator_forward.1} parent=1 // pred_check
      _
    $region15: #{generator_forward.1} parent=1 // pred_check_branch
      %55 = sbr.rel (0) target = $region17
    $region16: #{generator_forward.1} parent=1 // pred_region
      %s57 = ssub.s32 8192, 8192
      %58 = vsyncadd [#allocation5], %s57
      %s59 = sshll.u32 [#allocation6], 4
      %s60 = int_to_ptr.vmem [resolvable:$true] %s59
      %65 = dma.hbm_to_vmem [thread:$0]  %s3, 8192, %s60, [#allocation5], 256, 256, 16
    $region17: #{generator_forward.1} parent=1 // pred_fallthru
      _
    // Predicated region
    $region18: #{generator_forward.1} parent=1 // pred_check
      _
    $region19: #{generator_forward.1} parent=1 // pred_check_branch
      %67 = sbr.rel (0) target = $region21
    $region20: #{generator_forward.1} parent=1 // pred_region
      %s69 = ssub.s32 32768, 32768
      %70 = vsyncadd [#allocation8], %s69
      %s71 = sshll.u32 [#allocation7], 4
      %s72 = int_to_ptr.vmem [resolvable:$true] %s71
      %77 = dma.hbm_to_vmem [thread:$0]  %s4, 32768, %s72, [#allocation8], 512, 512, 32
    $region21: #{generator_forward.1} parent=1 // pred_fallthru
      _
    // Predicated region
    $region22: #{generator_forward.1} parent=1 // pred_check
      _
    $region23: #{generator_forward.1} parent=1 // pred_check_branch
      %79 = sbr.rel (0) target = $region25
    $region24: #{generator_forward.1} parent=1 // pred_region
      %s81 = ssub.s32 57344, 57344
      %82 = vsyncadd [#allocation8], %s81
      %s83 = sshll.u32 [#allocation9], 4
      %s84 = int_to_ptr.vmem [resolvable:$true] %s83
      %89 = dma.hbm_to_vmem [thread:$0]  %s5, 57344, %s84, [#allocation8], 448, 448, 28
    $region25: #{generator_forward.1} parent=1 // pred_fallthru
      _
    // Predicated region
    $region26: #{generator_forward.1} parent=1 // pred_check
      _
    $region27: #{generator_forward.1} parent=1 // pred_check_branch
      %91 = sbr.rel (0) target = $region29
    $region28: #{generator_forward.1} parent=1 // pred_region
      %s93 = ssub.s32 112, 112
      %94 = vsyncadd [#allocation11], %s93
      %s96 = sshll.u32 [#allocation10], 4
      %s97 = int_to_ptr.vmem [resolvable:$true] %s96
      %99 = dma.hbm_to_vmem [thread:$0]  %s6, 112, %s97, [#allocation11]
    $region29: #{generator_forward.1} parent=1 // pred_fallthru
      _
    // Predicated region
    $region30: #{generator_forward.1} parent=1 // pred_check
      _
    $region31: #{generator_forward.1} parent=1 // pred_check_branch
      %101 = sbr.rel (0) target = $region33
    $region32: #{generator_forward.1} parent=1 // pred_region
      %s103 = ssub.s32 16, 16
      %104 = vsyncadd [#allocation11], %s103
      %s106 = sshll.u32 [#allocation12], 4
      %s107 = int_to_ptr.vmem [resolvable:$true] %s106
      %109 = dma.hbm_to_vmem [thread:$0]  %s7, 16, %s107, [#allocation11]
    $region33: #{generator_forward.1} parent=1 // pred_fallthru
      _
    // Predicated region
    $region34: #{generator_forward.1} parent=1 // pred_check
      _
    $region35: #{generator_forward.1} parent=1 // pred_check_branch
      %111 = sbr.rel (0) target = $region37
    $region36: #{generator_forward.1} parent=1 // pred_region
      %s113 = ssub.s32 16, 16
      %114 = vsyncadd [#allocation14], %s113
      %s116 = sshll.u32 [#allocation13], 4
      %s117 = int_to_ptr.vmem [resolvable:$true] %s116
      %119 = dma.hbm_to_vmem [thread:$0]  %s8, 16, %s117, [#allocation14]
    $region37: #{generator_forward.1} parent=1 // pred_fallthru
      _
    // Predicated region
    $region38: #{generator_forward.1} parent=1 // pred_check
      _
    $region39: #{generator_forward.1} parent=1 // pred_check_branch
      %121 = sbr.rel (0) target = $region41
    $region40: #{generator_forward.1} parent=1 // pred_region
      %s123 = ssub.s32 32, 32
      %124 = vsyncadd [#allocation14], %s123
      %s126 = sshll.u32 [#allocation15], 4
      %s127 = int_to_ptr.vmem [resolvable:$true] %s126
      %129 = dma.hbm_to_vmem [thread:$0]  %s9, 32, %s127, [#allocation14]
    $region41: #{generator_forward.1} parent=1 // pred_fallthru
      _
    // Predicated region
    $region42: #{generator_forward.1} parent=1 // pred_check
      _
    $region43: #{generator_forward.1} parent=1 // pred_check_branch
      %131 = sbr.rel (0) target = $region45
    $region44: #{generator_forward.1} parent=1 // pred_region
      %s133 = ssub.s32 32, 32
      %134 = vsyncadd [#allocation17], %s133
      %s136 = sshll.u32 [#allocation16], 4
      %s137 = int_to_ptr.vmem [resolvable:$true] %s136
      %139 = dma.hbm_to_vmem [thread:$0]  %s10, 32, %s137, [#allocation17]
    $region45: #{generator_forward.1} parent=1 // pred_fallthru
      _
    // Predicated region
    $region46: #{generator_forward.1} parent=1 // pred_check
      _
    $region47: #{generator_forward.1} parent=1 // pred_check_branch
      %141 = sbr.rel (0) target = $region49
    $region48: #{generator_forward.1} parent=1 // pred_region
      %s143 = ssub.s32 64, 64
      %144 = vsyncadd [#allocation17], %s143
      %s146 = sshll.u32 [#allocation18], 4
      %s147 = int_to_ptr.vmem [resolvable:$true] %s146
      %149 = dma.hbm_to_vmem [thread:$0]  %s11, 64, %s147, [#allocation17]
    $region49: #{generator_forward.1} parent=1 // pred_fallthru
      _
    // Predicated region
    $region50: #{generator_forward.1} parent=1 // pred_check
      _
    $region51: #{generator_forward.1} parent=1 // pred_check_branch
      %151 = sbr.rel (0) target = $region53
    $region52: #{generator_forward.1} parent=1 // pred_region
      %s153 = ssub.s32 64, 64
      %154 = vsyncadd [#allocation20], %s153
      %s156 = sshll.u32 [#allocation19], 4
      %s157 = int_to_ptr.vmem [resolvable:$true] %s156
      %159 = dma.hbm_to_vmem [thread:$0]  %s12, 64, %s157, [#allocation20]
    $region53: #{generator_forward.1} parent=1 // pred_fallthru
      _
    // Predicated region
    $region54: #{generator_forward.1} parent=1 // pred_check
      _
    $region55: #{generator_forward.1} parent=1 // pred_check_branch
      %161 = sbr.rel (0) target = $region57
    $region56: #{generator_forward.1} parent=1 // pred_region
      %s163 = ssub.s32 128, 128
      %164 = vsyncadd [#allocation20], %s163
      %s166 = sshll.u32 [#allocation21], 4
      %s167 = int_to_ptr.vmem [resolvable:$true] %s166
      %169 = dma.hbm_to_vmem [thread:$0]  %s13, 128, %s167, [#allocation20]
    $region57: #{generator_forward.1} parent=1 // pred_fallthru
      _
    // Predicated region
    $region58: #{generator_forward.1} parent=1 // pred_check
      _
    $region59: #{generator_forward.1} parent=1 // pred_check_branch
      %171 = sbr.rel (0) target = $region61
    $region60: #{generator_forward.1} parent=1 // pred_region
      %s173 = ssub.s32 128, 128
      %174 = vsyncadd [#allocation23], %s173
      %s176 = sshll.u32 [#allocation22], 4
      %s177 = int_to_ptr.vmem [resolvable:$true] %s176
      %179 = dma.hbm_to_vmem [thread:$0]  %s14, 128, %s177, [#allocation23]
    $region61: #{generator_forward.1} parent=1 // pred_fallthru
      _
    // Predicated region
    $region62: #{generator_forward.1} parent=1 // pred_check
      _
    $region63: #{generator_forward.1} parent=1 // pred_check_branch
      %181 = sbr.rel (0) target = $region65
    $region64: #{generator_forward.1} parent=1 // pred_region
      %182 = dma.done [#allocation3], 1024
    $region65: #{generator_forward.1} parent=1 // pred_fallthru
      _
    // Predicated region
    $region66: #{generator_forward.1} parent=1 // pred_check
      _
    $region67: #{generator_forward.1} parent=1 // pred_check_branch
      %184 = sbr.rel (0) target = $region69
    $region68: #{generator_forward.1} parent=1 // pred_region
      %185 = dma.done [#allocation5], 2048
    $region69: #{generator_forward.1} parent=1 // pred_fallthru
      _
    // Predicated region
    $region70: #{generator_forward.1} parent=1 // pred_check
      _
    $region71: #{generator_forward.1} parent=1 // pred_check_branch
      %187 = sbr.rel (0) target = $region73
    $region72: #{generator_forward.1} parent=1 // pred_region
      %188 = dma.done [#allocation5], 8192
    $region73: #{generator_forward.1} parent=1 // pred_fallthru
      _
    // Predicated region
    $region74: #{generator_forward.1} parent=1 // pred_check
      _
    $region75: #{generator_forward.1} parent=1 // pred_check_branch
      %190 = sbr.rel (0) target = $region77
    $region76: #{generator_forward.1} parent=1 // pred_region
      %191 = dma.done [#allocation8], 32768
    $region77: #{generator_forward.1} parent=1 // pred_fallthru
      _
    // Predicated region
    $region78: #{generator_forward.1} parent=1 // pred_check
      _
    $region79: #{generator_forward.1} parent=1 // pred_check_branch
      %193 = sbr.rel (0) target = $region81
    $region80: #{generator_forward.1} parent=1 // pred_region
      %194 = dma.done [#allocation8], 57344
    $region81: #{generator_forward.1} parent=1 // pred_fallthru
      _
    // Predicated region
    $region82: #{generator_forward.1} parent=1 // pred_check
      _
    $region83: #{generator_forward.1} parent=1 // pred_check_branch
      %196 = sbr.rel (0) target = $region85
    $region84: #{generator_forward.1} parent=1 // pred_region
      %197 = dma.done [#allocation11], 112
    $region85: #{generator_forward.1} parent=1 // pred_fallthru
      _
    // Predicated region
    $region86: #{generator_forward.1} parent=1 // pred_check
      _
    $region87: #{generator_forward.1} parent=1 // pred_check_branch
      %199 = sbr.rel (0) target = $region89
    $region88: #{generator_forward.1} parent=1 // pred_region
      %200 = dma.done [#allocation11], 16
    $region89: #{generator_forward.1} parent=1 // pred_fallthru
      _
    // Predicated region
    $region90: #{generator_forward.1} parent=1 // pred_check
      _
    $region91: #{generator_forward.1} parent=1 // pred_check_branch
      %202 = sbr.rel (0) target = $region93
    $region92: #{generator_forward.1} parent=1 // pred_region
      %203 = dma.done [#allocation14], 16
    $region93: #{generator_forward.1} parent=1 // pred_fallthru
      _
    // Predicated region
    $region94: #{generator_forward.1} parent=1 // pred_check
      _
    $region95: #{generator_forward.1} parent=1 // pred_check_branch
      %205 = sbr.rel (0) target = $region97
    $region96: #{generator_forward.1} parent=1 // pred_region
      %206 = dma.done [#allocation14], 32
    $region97: #{generator_forward.1} parent=1 // pred_fallthru
      _
    // Predicated region
    $region98: #{generator_forward.1} parent=1 // pred_check
      _
    $region99: #{generator_forward.1} parent=1 // pred_check_branch
      %208 = sbr.rel (0) target = $region101
    $region100: #{generator_forward.1} parent=1 // pred_region
      %209 = dma.done [#allocation17], 32
    $region101: #{generator_forward.1} parent=1 // pred_fallthru
      _
    // Predicated region
    $region102: #{generator_forward.1} parent=1 // pred_check
      _
    $region103: #{generator_forward.1} parent=1 // pred_check_branch
      %211 = sbr.rel (0) target = $region105
    $region104: #{generator_forward.1} parent=1 // pred_region
      %212 = dma.done [#allocation17], 64
    $region105: #{generator_forward.1} parent=1 // pred_fallthru
      _
    // Predicated region
    $region106: #{generator_forward.1} parent=1 // pred_check
      _
    $region107: #{generator_forward.1} parent=1 // pred_check_branch
      %214 = sbr.rel (0) target = $region109
    $region108: #{generator_forward.1} parent=1 // pred_region
      %215 = dma.done [#allocation20], 64
    $region109: #{generator_forward.1} parent=1 // pred_fallthru
      _
    // Predicated region
    $region110: #{generator_forward.1} parent=1 // pred_check
      _
    $region111: #{generator_forward.1} parent=1 // pred_check_branch
      %217 = sbr.rel (0) target = $region113
    $region112: #{generator_forward.1} parent=1 // pred_region
      %218 = dma.done [#allocation20], 128
    $region113: #{generator_forward.1} parent=1 // pred_fallthru
      _
    // Predicated region
    $region114: #{generator_forward.1} parent=1 // pred_check
      _
    $region115: #{generator_forward.1} parent=1 // pred_check_branch
      %220 = sbr.rel (0) target = $region117
    $region116: #{generator_forward.1} parent=1 // pred_region
      %221 = dma.done [#allocation23], 128
    $region117: #{generator_forward.1} parent=1 // pred_fallthru
      _
    %v223 = vld [vmem:[%s0] sm:$0xff]
    %v224 = vld [vmem:[%s0 + $0x8] sm:$0xff]
    %v225 = vld [vmem:[%s0 + $0x10] sm:$0xff]
    %v226 = vld [vmem:[%s0 + $0x18] sm:$0xff]
    %v227 = vld [vmem:[%s0 + $0x20] sm:$0xff]
    %v228 = vld [vmem:[%s0 + $0x28] sm:$0xff]
    %v229 = vld [vmem:[%s0 + $0x30] sm:$0xff]
    %v230 = vld [vmem:[%s0 + $0x38] sm:$0xff]
    %v231 = vld [vmem:[%s0 + $0x40] sm:$0xff]
    %v232 = vld [vmem:[%s0 + $0x48] sm:$0xff]
    %v233 = vld [vmem:[%s0 + $0x50] sm:$0xff]
    %v234 = vld [vmem:[%s0 + $0x58] sm:$0xff]
    %v235 = vld [vmem:[%s0 + $0x60] sm:$0xff]
    %v236 = vld [vmem:[%s0 + $0x68] sm:$0xff]
    %v237 = vld [vmem:[%s0 + $0x70] sm:$0xff]
    %v238 = vld [vmem:[%s0 + $0x78] sm:$0xff]
    %v239 = vpack.c.bf16 %v224, %v223
    %v240 = vpack.c.bf16 %v226, %v225
    %v241 = vpack.c.bf16 %v228, %v227
    %v242 = vpack.c.bf16 %v230, %v229
    %v243 = vpack.c.bf16 %v232, %v231
    %v244 = vpack.c.bf16 %v234, %v233
    %v245 = vpack.c.bf16 %v236, %v235
    %v246 = vpack.c.bf16 %v238, %v237
    %v247 = vld [vmem:[#allocation2] sm:$0xf]
    %v248 = vld [vmem:[#allocation2 + $0x4] sm:$0xf]
    %v249 = vld [vmem:[#allocation2 + $0x8] sm:$0xf]
    %v250 = vld [vmem:[#allocation2 + $0xc] sm:$0xf]
    %v251 = vld [vmem:[#allocation2 + $0x10] sm:$0xf]
    %v252 = vld [vmem:[#allocation2 + $0x14] sm:$0xf]
    %v253 = vld [vmem:[#allocation2 + $0x18] sm:$0xf]
    %v254 = vld [vmem:[#allocation2 + $0x1c] sm:$0xf]
    %v255 = vld [vmem:[#allocation2 + $0x20] sm:$0xf]
    %v256 = vld [vmem:[#allocation2 + $0x24] sm:$0xf]
    %v257 = vld [vmem:[#allocation2 + $0x28] sm:$0xf]
    %v258 = vld [vmem:[#allocation2 + $0x2c] sm:$0xf]
    %v259 = vld [vmem:[#allocation2 + $0x30] sm:$0xf]
    %v260 = vld [vmem:[#allocation2 + $0x34] sm:$0xf]
    %v261 = vld [vmem:[#allocation2 + $0x38] sm:$0xf]
    %v262 = vld [vmem:[#allocation2 + $0x3c] sm:$0xf]
    %v279 = vunpack.c.l.b16 %v247
    %v280 = vunpack.c.l.b16 %v248
    %v281 = vunpack.c.l.b16 %v249
    %v282 = vunpack.c.l.b16 %v250
    %v283 = vunpack.c.l.b16 %v251
    %v284 = vunpack.c.l.b16 %v252
    %v285 = vunpack.c.l.b16 %v253
    %v286 = vunpack.c.l.b16 %v254
    %v287 = vunpack.c.l.b16 %v255
    %v288 = vunpack.c.l.b16 %v256
    %v289 = vunpack.c.l.b16 %v257
    %v290 = vunpack.c.l.b16 %v258
    %v291 = vunpack.c.l.b16 %v259
    %v292 = vunpack.c.l.b16 %v260
    %v293 = vunpack.c.l.b16 %v261
    %v294 = vunpack.c.l.b16 %v262
    %v295 = vpack.c.b16 %v280, %v279
    %v296 = vpack.c.b16 %v282, %v281
    %v297 = vpack.c.b16 %v284, %v283
    %v298 = vpack.c.b16 %v286, %v285
    %v299 = vpack.c.b16 %v288, %v287
    %v300 = vpack.c.b16 %v290, %v289
    %v301 = vpack.c.b16 %v292, %v291
    %v302 = vpack.c.b16 %v294, %v293
    %311 = vmatprep.subr.bf16.mxu0 0
    %312 = vmatpush1.bf16.msra.mxu0 %v295
    %313 = vmatprep.subr.bf16.mxu0 0
    %314 = vmatpush1.bf16.msra.mxu0 %v296
    %315 = vmatprep.subr.bf16.mxu0 0
    %316 = vmatpush1.bf16.msra.mxu0 %v297
    %317 = vmatprep.subr.bf16.mxu0 0
    %318 = vmatpush1.bf16.msra.mxu0 %v298
    %319 = vmatprep.subr.bf16.mxu0 0
    %320 = vmatpush1.bf16.msra.mxu0 %v299
    %321 = vmatprep.subr.bf16.mxu0 0
    %322 = vmatpush1.bf16.msra.mxu0 %v300
    %323 = vmatprep.subr.bf16.mxu0 0
    %324 = vmatpush1.bf16.msra.mxu0 %v301
    %325 = vmatprep.subr.bf16.mxu0 0
    %326 = vmatpush1.bf16.msra.mxu0 %v302
    %327 = vmatprep.subr.bf16.mxu0 0
    %328 = vmatpush1.bf16.msra.mxu0 0
    %329 = vmatprep.subr.bf16.mxu0 0
    %330 = vmatpush1.bf16.msra.mxu0 0
    %331 = vmatprep.subr.bf16.mxu0 0
    %332 = vmatpush1.bf16.msra.mxu0 0
    %333 = vmatprep.subr.bf16.mxu0 0
    %334 = vmatpush1.bf16.msra.mxu0 0
    %335 = vmatprep.subr.bf16.mxu0 0
    %336 = vmatpush1.bf16.msra.mxu0 0
    %337 = vmatprep.subr.bf16.mxu0 0
    %338 = vmatpush1.bf16.msra.mxu0 0
    %339 = vmatprep.subr.bf16.mxu0 0
    %340 = vmatpush1.bf16.msra.mxu0 0
    %341 = vmatprep.subr.bf16.mxu0 0
    %342 = vmatpush1.bf16.msra.mxu0 0
    %343 = vmatprep.mubr.bf16.mxu0 0
    %344 = vmatmul.mubr.bf16.gmra.mrb[0].mxu0 %v239
    %v345 = vpop.f32.mrb[0].mxu0
    %v346 = vadd.f32 0.0, %v345
    %v347 = vpop.f32.mrb[0].mxu0
    %v348 = vpop.f32.mrb[0].mxu0
    %v349 = vadd.f32 0.0, %v348
    %v350 = vpop.f32.mrb[0].mxu0
    %351 = vmatprep.mubr.bf16.mxu0 0
    %352 = vmatmul.mubr.bf16.gmra.mrb[0].mxu0 %v240
    %v353 = vpop.f32.mrb[0].mxu0
    %v354 = vadd.f32 0.0, %v353
    %v355 = vpop.f32.mrb[0].mxu0
    %v356 = vpop.f32.mrb[0].mxu0
    %v357 = vadd.f32 0.0, %v356
    %v358 = vpop.f32.mrb[0].mxu0
    %359 = vmatprep.mubr.bf16.mxu0 0
    %360 = vmatmul.mubr.bf16.gmra.mrb[0].mxu0 %v241
    %v361 = vpop.f32.mrb[0].mxu0
    %v362 = vadd.f32 0.0, %v361
    %v363 = vpop.f32.mrb[0].mxu0
    %v364 = vpop.f32.mrb[0].mxu0
    %v365 = vadd.f32 0.0, %v364
    %v366 = vpop.f32.mrb[0].mxu0
    %367 = vmatprep.mubr.bf16.mxu0 0
    %368 = vmatmul.mubr.bf16.gmra.mrb[0].mxu0 %v242
    %v369 = vpop.f32.mrb[0].mxu0
    %v370 = vadd.f32 0.0, %v369
    %v371 = vpop.f32.mrb[0].mxu0
    %v372 = vpop.f32.mrb[0].mxu0
    %v373 = vadd.f32 0.0, %v372
    %v374 = vpop.f32.mrb[0].mxu0
    %375 = vmatprep.mubr.bf16.mxu0 0
    %376 = vmatmul.mubr.bf16.gmra.mrb[0].mxu0 %v243
    %v377 = vpop.f32.mrb[0].mxu0
    %v378 = vadd.f32 0.0, %v377
    %v379 = vpop.f32.mrb[0].mxu0
    %v380 = vpop.f32.mrb[0].mxu0
    %v381 = vadd.f32 0.0, %v380
    %v382 = vpop.f32.mrb[0].mxu0
    %383 = vmatprep.mubr.bf16.mxu0 0
    %384 = vmatmul.mubr.bf16.gmra.mrb[0].mxu0 %v244
    %v385 = vpop.f32.mrb[0].mxu0
    %v386 = vadd.f32 0.0, %v385
    %v387 = vpop.f32.mrb[0].mxu0
    %v388 = vpop.f32.mrb[0].mxu0
    %v389 = vadd.f32 0.0, %v388
    %v390 = vpop.f32.mrb[0].mxu0
    %391 = vmatprep.mubr.bf16.mxu0 0
    %392 = vmatmul.mubr.bf16.gmra.mrb[0].mxu0 %v245
    %v393 = vpop.f32.mrb[0].mxu0
    %v394 = vadd.f32 0.0, %v393
    %v395 = vpop.f32.mrb[0].mxu0
    %v396 = vpop.f32.mrb[0].mxu0
    %v397 = vadd.f32 0.0, %v396
    %v398 = vpop.f32.mrb[0].mxu0
    %399 = vmatprep.mubr.bf16.mxu0 0
    %400 = vmatmul.mubr.bf16.gmra.mrb[0].mxu0 %v246
    %v401 = vpop.f32.mrb[0].mxu0
    %v402 = vadd.f32 0.0, %v401
    %v403 = vpop.f32.mrb[0].mxu0
    %v404 = vpop.f32.mrb[0].mxu0
    %v405 = vadd.f32 0.0, %v404
    %v406 = vpop.f32.mrb[0].mxu0
    %407 = vdwg.mxu0
    %v408 = vld [vmem:[#allocation12] sm:$0x1]
    %v409 = vld [vmem:[#allocation13] sm:$0x1]
    %v410 = vadd.f32 %v346, %v349
    %v411 = vadd.f32 %v410, %v354
    %v412 = vadd.f32 %v411, %v357
    %v413 = vadd.f32 %v412, %v362
    %v414 = vadd.f32 %v413, %v365
    %v415 = vadd.f32 %v414, %v370
    %v416 = vadd.f32 %v415, %v373
    %v417 = vadd.f32 %v416, %v378
    %v418 = vadd.f32 %v417, %v381
    %v419 = vadd.f32 %v418, %v386
    %v420 = vadd.f32 %v419, %v389
    %v421 = vadd.f32 %v420, %v394
    %v422 = vadd.f32 %v421, %v397
    %v423 = vadd.f32 %v422, %v402
    %v424 = vadd.f32 %v423, %v405
    %v425 = vrot.slane %v424, 4
    %v426 = vadd.f32 %v424, %v425
    %v427 = vrot.slane %v426, 2
    %v428 = vadd.f32 %v426, %v427
    %v429 = vrot.slane %v428, 1
    %v430 = vadd.f32 %v428, %v429
    %v431 = vmul.f32 %v346, %v346
    %v432 = vmul.f32 %v349, %v349
    %v433 = vmul.f32 %v354, %v354
    %v434 = vmul.f32 %v357, %v357
    %v435 = vmul.f32 %v362, %v362
    %v436 = vmul.f32 %v365, %v365
    %v437 = vmul.f32 %v370, %v370
    %v438 = vmul.f32 %v373, %v373
    %v439 = vmul.f32 %v378, %v378
    %v440 = vmul.f32 %v381, %v381
    %v441 = vmul.f32 %v386, %v386
    %v442 = vmul.f32 %v389, %v389
    %v443 = vmul.f32 %v394, %v394
    %v444 = vmul.f32 %v397, %v397
    %v445 = vmul.f32 %v402, %v402
    %v446 = vmul.f32 %v405, %v405
    %v447 = vadd.f32 %v431, %v432
    %v448 = vadd.f32 %v447, %v433
    %v449 = vadd.f32 %v448, %v434
    %v450 = vadd.f32 %v449, %v435
    %v451 = vadd.f32 %v450, %v436
    %v452 = vadd.f32 %v451, %v437
    %v453 = vadd.f32 %v452, %v438
    %v454 = vadd.f32 %v453, %v439
    %v455 = vadd.f32 %v454, %v440
    %v456 = vadd.f32 %v455, %v441
    %v457 = vadd.f32 %v456, %v442
    %v458 = vadd.f32 %v457, %v443
    %v459 = vadd.f32 %v458, %v444
    %v460 = vadd.f32 %v459, %v445
    %v461 = vadd.f32 %v460, %v446
    %v462 = vrot.slane %v461, 4
    %v463 = vadd.f32 %v461, %v462
    %v464 = vrot.slane %v463, 2
    %v465 = vadd.f32 %v463, %v464
    %v466 = vrot.slane %v465, 1
    %v467 = vadd.f32 %v465, %v466
    %v468 = vmul.f32 %v430, 0.0078125
    %v469 = vmul.f32 %v467, 0.0078125
    %v470 = vmul.f32 %v468, %v468
    %v471 = vsub.f32 %v469, %v470
    %v472 = vmax.f32 %v471, 0.0
    %v473 = vadd.f32 %v472, 1e-05
    %v474 = vrsqrt.pop %v473
    %v475 = vmul.f32 %v408, %v474
    %v476 = vmul.f32 %v468, %v475
    %v477 = vsub.f32 %v409, %v476
    %v479 = vlaneseq
    %v480 = vshrl.u32 %v479, 7
    %v481 = vsub.s32 0, %v480
    %v482 = vrot.slane %v475, %v481
    %v484 = vmul.f32 %v346, %v482
    %v485 = vmul.f32 %v349, %v482
    %v486 = vmul.f32 %v354, %v482
    %v487 = vmul.f32 %v357, %v482
    %v488 = vmul.f32 %v362, %v482
    %v489 = vmul.f32 %v365, %v482
    %v490 = vmul.f32 %v370, %v482
    %v491 = vmul.f32 %v373, %v482
    %v492 = vmul.f32 %v378, %v482
    %v493 = vmul.f32 %v381, %v482
    %v494 = vmul.f32 %v386, %v482
    %v495 = vmul.f32 %v389, %v482
    %v496 = vmul.f32 %v394, %v482
    %v497 = vmul.f32 %v397, %v482
    %v498 = vmul.f32 %v402, %v482
    %v499 = vmul.f32 %v405, %v482
    %v501 = vlaneseq
    %v502 = vshrl.u32 %v501, 7
    %v503 = vsub.s32 0, %v502
    %v504 = vrot.slane %v477, %v503
    %v506 = vadd.f32 %v484, %v504
    %v507 = vadd.f32 %v485, %v504
    %v508 = vadd.f32 %v486, %v504
    %v509 = vadd.f32 %v487, %v504
    %v510 = vadd.f32 %v488, %v504
    %v511 = vadd.f32 %v489, %v504
    %v512 = vadd.f32 %v490, %v504
    %v513 = vadd.f32 %v491, %v504
    %v514 = vadd.f32 %v492, %v504
    %v515 = vadd.f32 %v493, %v504
    %v516 = vadd.f32 %v494, %v504
    %v517 = vadd.f32 %v495, %v504
    %v518 = vadd.f32 %v496, %v504
    %v519 = vadd.f32 %v497, %v504
    %v520 = vadd.f32 %v498, %v504
    %v521 = vadd.f32 %v499, %v504
    %v522 = vmax.f32 %v506, 0.0
    %v523 = vmax.f32 %v507, 0.0
    %v524 = vmax.f32 %v508, 0.0
    %v525 = vmax.f32 %v509, 0.0
    %v526 = vmax.f32 %v510, 0.0
    %v527 = vmax.f32 %v511, 0.0
    %v528 = vmax.f32 %v512, 0.0
    %v529 = vmax.f32 %v513, 0.0
    %v530 = vmax.f32 %v514, 0.0
    %v531 = vmax.f32 %v515, 0.0
    %v532 = vmax.f32 %v516, 0.0
    %v533 = vmax.f32 %v517, 0.0
    %v534 = vmax.f32 %v518, 0.0
    %v535 = vmax.f32 %v519, 0.0
    %v536 = vmax.f32 %v520, 0.0
    %v537 = vmax.f32 %v521, 0.0
    %v538 = vpack.c.bf16 %v523, %v522
    %v539 = vpack.c.bf16 %v525, %v524
    %v540 = vpack.c.bf16 %v527, %v526
    %v541 = vpack.c.bf16 %v529, %v528
    %v542 = vpack.c.bf16 %v531, %v530
    %v543 = vpack.c.bf16 %v533, %v532
    %v544 = vpack.c.bf16 %v535, %v534
    %v545 = vpack.c.bf16 %v537, %v536
    %v546 = vld [vmem:[#allocation4] sm:$0xff]
    %v547 = vld [vmem:[#allocation4 + $0x8] sm:$0xff]
    %v548 = vld [vmem:[#allocation4 + $0x10] sm:$0xff]
    %v549 = vld [vmem:[#allocation4 + $0x18] sm:$0xff]
    %v550 = vld [vmem:[#allocation4 + $0x20] sm:$0xff]
    %v551 = vld [vmem:[#allocation4 + $0x28] sm:$0xff]
    %v552 = vld [vmem:[#allocation4 + $0x30] sm:$0xff]
    %v553 = vld [vmem:[#allocation4 + $0x38] sm:$0xff]
    %v554 = vld [vmem:[#allocation4 + $0x40] sm:$0xff]
    %v555 = vld [vmem:[#allocation4 + $0x48] sm:$0xff]
    %v556 = vld [vmem:[#allocation4 + $0x50] sm:$0xff]
    %v557 = vld [vmem:[#allocation4 + $0x58] sm:$0xff]
    %v558 = vld [vmem:[#allocation4 + $0x60] sm:$0xff]
    %v559 = vld [vmem:[#allocation4 + $0x68] sm:$0xff]
    %v560 = vld [vmem:[#allocation4 + $0x70] sm:$0xff]
    %v561 = vld [vmem:[#allocation4 + $0x78] sm:$0xff]
    %v578 = vunpack.c.l.b16 %v546
    %v579 = vunpack.c.h.b16 %v546
    %v580 = vunpack.c.l.b16 %v547
    %v581 = vunpack.c.h.b16 %v547
    %v582 = vunpack.c.l.b16 %v548
    %v583 = vunpack.c.h.b16 %v548
    %v584 = vunpack.c.l.b16 %v549
    %v585 = vunpack.c.h.b16 %v549
    %v586 = vunpack.c.l.b16 %v550
    %v587 = vunpack.c.h.b16 %v550
    %v588 = vunpack.c.l.b16 %v551
    %v589 = vunpack.c.h.b16 %v551
    %v590 = vunpack.c.l.b16 %v552
    %v591 = vunpack.c.h.b16 %v552
    %v592 = vunpack.c.l.b16 %v553
    %v593 = vunpack.c.h.b16 %v553
    %v594 = vunpack.c.l.b16 %v554
    %v595 = vunpack.c.h.b16 %v554
    %v596 = vunpack.c.l.b16 %v555
    %v597 = vunpack.c.h.b16 %v555
    %v598 = vunpack.c.l.b16 %v556
    %v599 = vunpack.c.h.b16 %v556
    %v600 = vunpack.c.l.b16 %v557
    %v601 = vunpack.c.h.b16 %v557
    %v602 = vunpack.c.l.b16 %v558
    %v603 = vunpack.c.h.b16 %v558
    %v604 = vunpack.c.l.b16 %v559
    %v605 = vunpack.c.h.b16 %v559
    %v606 = vunpack.c.l.b16 %v560
    %v607 = vunpack.c.h.b16 %v560
    %v608 = vunpack.c.l.b16 %v561
    %v609 = vunpack.c.h.b16 %v561
    %v610 = vpack.c.b16 %v580, %v578
    %v611 = vpack.c.b16 %v581, %v579
    %v612 = vpack.c.b16 %v584, %v582
    %v613 = vpack.c.b16 %v585, %v583
    %v614 = vpack.c.b16 %v588, %v586
    %v615 = vpack.c.b16 %v589, %v587
    %v616 = vpack.c.b16 %v592, %v590
    %v617 = vpack.c.b16 %v593, %v591
    %v618 = vpack.c.b16 %v596, %v594
    %v619 = vpack.c.b16 %v597, %v595
    %v620 = vpack.c.b16 %v600, %v598
    %v621 = vpack.c.b16 %v601, %v599
    %v622 = vpack.c.b16 %v604, %v602
    %v623 = vpack.c.b16 %v605, %v603
    %v624 = vpack.c.b16 %v608, %v606
    %v625 = vpack.c.b16 %v609, %v607
    %642 = vmatprep.subr.bf16.mxu0 %v611
    %643 = vmatpush1.bf16.msra.mxu0 %v610
    %644 = vmatprep.subr.bf16.mxu0 %v613
    %645 = vmatpush1.bf16.msra.mxu0 %v612
    %646 = vmatprep.subr.bf16.mxu0 %v615
    %647 = vmatpush1.bf16.msra.mxu0 %v614
    %648 = vmatprep.subr.bf16.mxu0 %v617
    %649 = vmatpush1.bf16.msra.mxu0 %v616
    %650 = vmatprep.subr.bf16.mxu0 %v619
    %651 = vmatpush1.bf16.msra.mxu0 %v618
    %652 = vmatprep.subr.bf16.mxu0 %v621
    %653 = vmatpush1.bf16.msra.mxu0 %v620
    %654 = vmatprep.subr.bf16.mxu0 %v623
    %655 = vmatpush1.bf16.msra.mxu0 %v622
    %656 = vmatprep.subr.bf16.mxu0 %v625
    %657 = vmatpush1.bf16.msra.mxu0 %v624
    %658 = vmatprep.subr.bf16.mxu0 0
    %659 = vmatpush1.bf16.msra.mxu0 0
    %660 = vmatprep.subr.bf16.mxu0 0
    %661 = vmatpush1.bf16.msra.mxu0 0
    %662 = vmatprep.subr.bf16.mxu0 0
    %663 = vmatpush1.bf16.msra.mxu0 0
    %664 = vmatprep.subr.bf16.mxu0 0
    %665 = vmatpush1.bf16.msra.mxu0 0
    %666 = vmatprep.subr.bf16.mxu0 0
    %667 = vmatpush1.bf16.msra.mxu0 0
    %668 = vmatprep.subr.bf16.mxu0 0
    %669 = vmatpush1.bf16.msra.mxu0 0
    %670 = vmatprep.subr.bf16.mxu0 0
    %671 = vmatpush1.bf16.msra.mxu0 0
    %672 = vmatprep.subr.bf16.mxu0 0
    %673 = vmatpush1.bf16.msra.mxu0 0
    %674 = vmatprep.mubr.bf16.mxu0 0
    %675 = vmatmul.mubr.bf16.gmra.mrb[0].mxu0 %v538
    %v676 = vpop.f32.mrb[0].mxu0
    %v677 = vadd.f32 0.0, %v676
    %v678 = vpop.f32.mrb[0].mxu0
    %v679 = vadd.f32 0.0, %v678
    %v680 = vpop.f32.mrb[0].mxu0
    %v681 = vadd.f32 0.0, %v680
    %v682 = vpop.f32.mrb[0].mxu0
    %v683 = vadd.f32 0.0, %v682
    %684 = vmatprep.mubr.bf16.mxu0 0
    %685 = vmatmul.mubr.bf16.gmra.mrb[0].mxu0 %v539
    %v686 = vpop.f32.mrb[0].mxu0
    %v687 = vadd.f32 0.0, %v686
    %v688 = vpop.f32.mrb[0].mxu0
    %v689 = vadd.f32 0.0, %v688
    %v690 = vpop.f32.mrb[0].mxu0
    %v691 = vadd.f32 0.0, %v690
    %v692 = vpop.f32.mrb[0].mxu0
    %v693 = vadd.f32 0.0, %v692
    %694 = vmatprep.mubr.bf16.mxu0 0
    %695 = vmatmul.mubr.bf16.gmra.mrb[0].mxu0 %v540
    %v696 = vpop.f32.mrb[0].mxu0
    %v697 = vadd.f32 0.0, %v696
    %v698 = vpop.f32.mrb[0].mxu0
    %v699 = vadd.f32 0.0, %v698
    %v700 = vpop.f32.mrb[0].mxu0
    %v701 = vadd.f32 0.0, %v700
    %v702 = vpop.f32.mrb[0].mxu0
    %v703 = vadd.f32 0.0, %v702
    %704 = vmatprep.mubr.bf16.mxu0 0
    %705 = vmatmul.mubr.bf16.gmra.mrb[0].mxu0 %v541
    %v706 = vpop.f32.mrb[0].mxu0
    %v707 = vadd.f32 0.0, %v706
    %v708 = vpop.f32.mrb[0].mxu0
    %v709 = vadd.f32 0.0, %v708
    %v710 = vpop.f32.mrb[0].mxu0
    %v711 = vadd.f32 0.0, %v710
    %v712 = vpop.f32.mrb[0].mxu0
    %v713 = vadd.f32 0.0, %v712
    %714 = vmatprep.mubr.bf16.mxu0 0
    %715 = vmatmul.mubr.bf16.gmra.mrb[0].mxu0 %v542
    %v716 = vpop.f32.mrb[0].mxu0
    %v717 = vadd.f32 0.0, %v716
    %v718 = vpop.f32.mrb[0].mxu0
    %v719 = vadd.f32 0.0, %v718
    %v720 = vpop.f32.mrb[0].mxu0
    %v721 = vadd.f32 0.0, %v720
    %v722 = vpop.f32.mrb[0].mxu0
    %v723 = vadd.f32 0.0, %v722
    %724 = vmatprep.mubr.bf16.mxu0 0
    %725 = vmatmul.mubr.bf16.gmra.mrb[0].mxu0 %v543
    %v726 = vpop.f32.mrb[0].mxu0
    %v727 = vadd.f32 0.0, %v726
    %v728 = vpop.f32.mrb[0].mxu0
    %v729 = vadd.f32 0.0, %v728
    %v730 = vpop.f32.mrb[0].mxu0
    %v731 = vadd.f32 0.0, %v730
    %v732 = vpop.f32.mrb[0].mxu0
    %v733 = vadd.f32 0.0, %v732
    %734 = vmatprep.mubr.bf16.mxu0 0
    %735 = vmatmul.mubr.bf16.gmra.mrb[0].mxu0 %v544
    %v736 = vpop.f32.mrb[0].mxu0
    %v737 = vadd.f32 0.0, %v736
    %v738 = vpop.f32.mrb[0].mxu0
    %v739 = vadd.f32 0.0, %v738
    %v740 = vpop.f32.mrb[0].mxu0
    %v741 = vadd.f32 0.0, %v740
    %v742 = vpop.f32.mrb[0].mxu0
    %v743 = vadd.f32 0.0, %v742
    %744 = vmatprep.mubr.bf16.mxu0 0
    %745 = vmatmul.mubr.bf16.gmra.mrb[0].mxu0 %v545
    %v746 = vpop.f32.mrb[0].mxu0
    %v747 = vadd.f32 0.0, %v746
    %v748 = vpop.f32.mrb[0].mxu0
    %v749 = vadd.f32 0.0, %v748
    %v750 = vpop.f32.mrb[0].mxu0
    %v751 = vadd.f32 0.0, %v750
    %v752 = vpop.f32.mrb[0].mxu0
    %v753 = vadd.f32 0.0, %v752
    %754 = vdwg.mxu0
    %v755 = vld [vmem:[#allocation15] sm:$0x3]
    %v756 = vld [vmem:[#allocation16] sm:$0x3]
    %v757 = vadd.f32 %v677, %v681
    %v758 = vadd.f32 %v757, %v687
    %v759 = vadd.f32 %v758, %v691
    %v760 = vadd.f32 %v759, %v697
    %v761 = vadd.f32 %v760, %v701
    %v762 = vadd.f32 %v761, %v707
    %v763 = vadd.f32 %v762, %v711
    %v764 = vadd.f32 %v763, %v717
    %v765 = vadd.f32 %v764, %v721
    %v766 = vadd.f32 %v765, %v727
    %v767 = vadd.f32 %v766, %v731
    %v768 = vadd.f32 %v767, %v737
    %v769 = vadd.f32 %v768, %v741
    %v770 = vadd.f32 %v769, %v747
    %v771 = vadd.f32 %v770, %v751
    %v772 = vrot.slane %v771, 4
    %v773 = vadd.f32 %v771, %v772
    %v774 = vrot.slane %v773, 2
    %v775 = vadd.f32 %v773, %v774
    %v776 = vrot.slane %v775, 1
    %v777 = vadd.f32 %v775, %v776
    %v778 = vadd.f32 %v679, %v683
    %v779 = vadd.f32 %v778, %v689
    %v780 = vadd.f32 %v779, %v693
    %v781 = vadd.f32 %v780, %v699
    %v782 = vadd.f32 %v781, %v703
    %v783 = vadd.f32 %v782, %v709
    %v784 = vadd.f32 %v783, %v713
    %v785 = vadd.f32 %v784, %v719
    %v786 = vadd.f32 %v785, %v723
    %v787 = vadd.f32 %v786, %v729
    %v788 = vadd.f32 %v787, %v733
    %v789 = vadd.f32 %v788, %v739
    %v790 = vadd.f32 %v789, %v743
    %v791 = vadd.f32 %v790, %v749
    %v792 = vadd.f32 %v791, %v753
    %v793 = vrot.slane %v792, 4
    %v794 = vadd.f32 %v792, %v793
    %v795 = vrot.slane %v794, 2
    %v796 = vadd.f32 %v794, %v795
    %v797 = vrot.slane %v796, 1
    %v798 = vadd.f32 %v796, %v797
    %v799 = vmul.f32 %v677, %v677
    %v800 = vmul.f32 %v679, %v679
    %v801 = vmul.f32 %v681, %v681
    %v802 = vmul.f32 %v683, %v683
    %v803 = vmul.f32 %v687, %v687
    %v804 = vmul.f32 %v689, %v689
    %v805 = vmul.f32 %v691, %v691
    %v806 = vmul.f32 %v693, %v693
    %v807 = vmul.f32 %v697, %v697
    %v808 = vmul.f32 %v699, %v699
    %v809 = vmul.f32 %v701, %v701
    %v810 = vmul.f32 %v703, %v703
    %v811 = vmul.f32 %v707, %v707
    %v812 = vmul.f32 %v709, %v709
    %v813 = vmul.f32 %v711, %v711
    %v814 = vmul.f32 %v713, %v713
    %v815 = vmul.f32 %v717, %v717
    %v816 = vmul.f32 %v719, %v719
    %v817 = vmul.f32 %v721, %v721
    %v818 = vmul.f32 %v723, %v723
    %v819 = vmul.f32 %v727, %v727
    %v820 = vmul.f32 %v729, %v729
    %v821 = vmul.f32 %v731, %v731
    %v822 = vmul.f32 %v733, %v733
    %v823 = vmul.f32 %v737, %v737
    %v824 = vmul.f32 %v739, %v739
    %v825 = vmul.f32 %v741, %v741
    %v826 = vmul.f32 %v743, %v743
    %v827 = vmul.f32 %v747, %v747
    %v828 = vmul.f32 %v749, %v749
    %v829 = vmul.f32 %v751, %v751
    %v830 = vmul.f32 %v753, %v753
    %v831 = vadd.f32 %v799, %v801
    %v832 = vadd.f32 %v831, %v803
    %v833 = vadd.f32 %v832, %v805
    %v834 = vadd.f32 %v833, %v807
    %v835 = vadd.f32 %v834, %v809
    %v836 = vadd.f32 %v835, %v811
    %v837 = vadd.f32 %v836, %v813
    %v838 = vadd.f32 %v837, %v815
    %v839 = vadd.f32 %v838, %v817
    %v840 = vadd.f32 %v839, %v819
    %v841 = vadd.f32 %v840, %v821
    %v842 = vadd.f32 %v841, %v823
    %v843 = vadd.f32 %v842, %v825
    %v844 = vadd.f32 %v843, %v827
    %v845 = vadd.f32 %v844, %v829
    %v846 = vrot.slane %v845, 4
    %v847 = vadd.f32 %v845, %v846
    %v848 = vrot.slane %v847, 2
    %v849 = vadd.f32 %v847, %v848
    %v850 = vrot.slane %v849, 1
    %v851 = vadd.f32 %v849, %v850
    %v852 = vadd.f32 %v800, %v802
    %v853 = vadd.f32 %v852, %v804
    %v854 = vadd.f32 %v853, %v806
    %v855 = vadd.f32 %v854, %v808
    %v856 = vadd.f32 %v855, %v810
    %v857 = vadd.f32 %v856, %v812
    %v858 = vadd.f32 %v857, %v814
    %v859 = vadd.f32 %v858, %v816
    %v860 = vadd.f32 %v859, %v818
    %v861 = vadd.f32 %v860, %v820
    %v862 = vadd.f32 %v861, %v822
    %v863 = vadd.f32 %v862, %v824
    %v864 = vadd.f32 %v863, %v826
    %v865 = vadd.f32 %v864, %v828
    %v866 = vadd.f32 %v865, %v830
    %v867 = vrot.slane %v866, 4
    %v868 = vadd.f32 %v866, %v867
    %v869 = vrot.slane %v868, 2
    %v870 = vadd.f32 %v868, %v869
    %v871 = vrot.slane %v870, 1
    %v872 = vadd.f32 %v870, %v871
    %v873 = vmul.f32 %v777, 0.0078125
    %v874 = vmul.f32 %v798, 0.0078125
    %v875 = vmul.f32 %v851, 0.0078125
    %v876 = vmul.f32 %v872, 0.0078125
    %v877 = vmul.f32 %v873, %v873
    %v878 = vmul.f32 %v874, %v874
    %v879 = vsub.f32 %v875, %v877
    %v880 = vsub.f32 %v876, %v878
    %v881 = vmax.f32 %v879, 0.0
    %v882 = vmax.f32 %v880, 0.0
    %v883 = vadd.f32 %v881, 1e-05
    %v884 = vadd.f32 %v882, 1e-05
    %v885 = vrsqrt.pop %v883
    %v886 = vrsqrt.pop %v884
    %v889 = vcombine.low %v885, %v886
    %v891 = vunpack.c.l.s4 1966171168
    %v892 = vunpack.c.0.s8 %v891
    %v893 = vlaneseq
    %v894 = vshrl.u32 %v893, 7
    %v895 = vsub.s32 %v892, %v894
    %v896 = vrot.slane %v889, %v895
    %v898 = vunpack.c.l.s4 1966171168
    %v899 = vunpack.c.0.s8 %v898
    %v900 = vlaneseq
    %v901 = vshrl.u32 %v900, 7
    %v902 = vsub.s32 %v899, %v901
    %v903 = vrot.slane %v896, %v902
    %v905 = vmul.f32 %v755, %v903
    %v907 = vlaneseq
    %v908 = vshrl.u32 %v907, 7
    %v909 = vsub.s32 0, %v908
    %v910 = vrot.slane %v905, %v909
    %v911 = vlaneseq
    %v912 = vshrl.u32 %v911, 7
    %v913 = vsub.s32 1, %v912
    %v914 = vrot.slane %v905, %v913
    %v917 = vmul.f32 %v873, %v910
    %v918 = vmul.f32 %v874, %v914
    %v921 = vcombine.low %v917, %v918
    %v923 = vunpack.c.l.s4 1966171168
    %v924 = vunpack.c.0.s8 %v923
    %v925 = vlaneseq
    %v926 = vshrl.u32 %v925, 7
    %v927 = vsub.s32 %v924, %v926
    %v928 = vrot.slane %v921, %v927
    %v930 = vunpack.c.l.s4 1966171168
    %v931 = vunpack.c.0.s8 %v930
    %v932 = vlaneseq
    %v933 = vshrl.u32 %v932, 7
    %v934 = vsub.s32 %v931, %v933
    %v935 = vrot.slane %v928, %v934
    %v937 = vsub.f32 %v756, %v935
    %v938 = vmul.f32 %v677, %v910
    %v939 = vmul.f32 %v679, %v914
    %v940 = vmul.f32 %v681, %v910
    %v941 = vmul.f32 %v683, %v914
    %v942 = vmul.f32 %v687, %v910
    %v943 = vmul.f32 %v689, %v914
    %v944 = vmul.f32 %v691, %v910
    %v945 = vmul.f32 %v693, %v914
    %v946 = vmul.f32 %v697, %v910
    %v947 = vmul.f32 %v699, %v914
    %v948 = vmul.f32 %v701, %v910
    %v949 = vmul.f32 %v703, %v914
    %v950 = vmul.f32 %v707, %v910
    %v951 = vmul.f32 %v709, %v914
    %v952 = vmul.f32 %v711, %v910
    %v953 = vmul.f32 %v713, %v914
    %v954 = vmul.f32 %v717, %v910
    %v955 = vmul.f32 %v719, %v914
    %v956 = vmul.f32 %v721, %v910
    %v957 = vmul.f32 %v723, %v914
    %v958 = vmul.f32 %v727, %v910
    %v959 = vmul.f32 %v729, %v914
    %v960 = vmul.f32 %v731, %v910
    %v961 = vmul.f32 %v733, %v914
    %v962 = vmul.f32 %v737, %v910
    %v963 = vmul.f32 %v739, %v914
    %v964 = vmul.f32 %v741, %v910
    %v965 = vmul.f32 %v743, %v914
    %v966 = vmul.f32 %v747, %v910
    %v967 = vmul.f32 %v749, %v914
    %v968 = vmul.f32 %v751, %v910
    %v969 = vmul.f32 %v753, %v914
    %v971 = vlaneseq
    %v972 = vshrl.u32 %v971, 7
    %v973 = vsub.s32 0, %v972
    %v974 = vrot.slane %v937, %v973
    %v975 = vlaneseq
    %v976 = vshrl.u32 %v975, 7
    %v977 = vsub.s32 1, %v976
    %v978 = vrot.slane %v937, %v977
    %v981 = vadd.f32 %v938, %v974
    %v982 = vadd.f32 %v939, %v978
    %v983 = vadd.f32 %v940, %v974
    %v984 = vadd.f32 %v941, %v978
    %v985 = vadd.f32 %v942, %v974
    %v986 = vadd.f32 %v943, %v978
    %v987 = vadd.f32 %v944, %v974
    %v988 = vadd.f32 %v945, %v978
    %v989 = vadd.f32 %v946, %v974
    %v990 = vadd.f32 %v947, %v978
    %v991 = vadd.f32 %v948, %v974
    %v992 = vadd.f32 %v949, %v978
    %v993 = vadd.f32 %v950, %v974
    %v994 = vadd.f32 %v951, %v978
    %v995 = vadd.f32 %v952, %v974
    %v996 = vadd.f32 %v953, %v978
    %v997 = vadd.f32 %v954, %v974
    %v998 = vadd.f32 %v955, %v978
    %v999 = vadd.f32 %v956, %v974
    %v1000 = vadd.f32 %v957, %v978
    %v1001 = vadd.f32 %v958, %v974
    %v1002 = vadd.f32 %v959, %v978
    %v1003 = vadd.f32 %v960, %v974
    %v1004 = vadd.f32 %v961, %v978
    %v1005 = vadd.f32 %v962, %v974
    %v1006 = vadd.f32 %v963, %v978
    %v1007 = vadd.f32 %v964, %v974
    %v1008 = vadd.f32 %v965, %v978
    %v1009 = vadd.f32 %v966, %v974
    %v1010 = vadd.f32 %v967, %v978
    %v1011 = vadd.f32 %v968, %v974
    %v1012 = vadd.f32 %v969, %v978
    %v1013 = vmax.f32 %v981, 0.0
    %v1014 = vmax.f32 %v982, 0.0
    %v1015 = vmax.f32 %v983, 0.0
    %v1016 = vmax.f32 %v984, 0.0
    %v1017 = vmax.f32 %v985, 0.0
    %v1018 = vmax.f32 %v986, 0.0
    %v1019 = vmax.f32 %v987, 0.0
    %v1020 = vmax.f32 %v988, 0.0
    %v1021 = vmax.f32 %v989, 0.0
    %v1022 = vmax.f32 %v990, 0.0
    %v1023 = vmax.f32 %v991, 0.0
    %v1024 = vmax.f32 %v992, 0.0
    %v1025 = vmax.f32 %v993, 0.0
    %v1026 = vmax.f32 %v994, 0.0
    %v1027 = vmax.f32 %v995, 0.0
    %v1028 = vmax.f32 %v996, 0.0
    %v1029 = vmax.f32 %v997, 0.0
    %v1030 = vmax.f32 %v998, 0.0
    %v1031 = vmax.f32 %v999, 0.0
    %v1032 = vmax.f32 %v1000, 0.0
    %v1033 = vmax.f32 %v1001, 0.0
    %v1034 = vmax.f32 %v1002, 0.0
    %v1035 = vmax.f32 %v1003, 0.0
    %v1036 = vmax.f32 %v1004, 0.0
    %v1037 = vmax.f32 %v1005, 0.0
    %v1038 = vmax.f32 %v1006, 0.0
    %v1039 = vmax.f32 %v1007, 0.0
    %v1040 = vmax.f32 %v1008, 0.0
    %v1041 = vmax.f32 %v1009, 0.0
    %v1042 = vmax.f32 %v1010, 0.0
    %v1043 = vmax.f32 %v1011, 0.0
    %v1044 = vmax.f32 %v1012, 0.0
    %v1045 = vpack.c.bf16 %v1015, %v1013
    %v1046 = vpack.c.bf16 %v1016, %v1014
    %v1047 = vpack.c.bf16 %v1019, %v1017
    %v1048 = vpack.c.bf16 %v1020, %v1018
    %v1049 = vpack.c.bf16 %v1023, %v1021
    %v1050 = vpack.c.bf16 %v1024, %v1022
    %v1051 = vpack.c.bf16 %v1027, %v1025
    %v1052 = vpack.c.bf16 %v1028, %v1026
    %v1053 = vpack.c.bf16 %v1031, %v1029
    %v1054 = vpack.c.bf16 %v1032, %v1030
    %v1055 = vpack.c.bf16 %v1035, %v1033
    %v1056 = vpack.c.bf16 %v1036, %v1034
    %v1057 = vpack.c.bf16 %v1039, %v1037
    %v1058 = vpack.c.bf16 %v1040, %v1038
    %v1059 = vpack.c.bf16 %v1043, %v1041
    %v1060 = vpack.c.bf16 %v1044, %v1042
    %v1061 = vld [vmem:[#allocation6] sm:$0xff]
    %v1062 = vld [vmem:[#allocation6 + $0x8] sm:$0xff]
    %v1063 = vld [vmem:[#allocation6 + $0x10] sm:$0xff]
    %v1064 = vld [vmem:[#allocation6 + $0x18] sm:$0xff]
    %v1065 = vld [vmem:[#allocation6 + $0x20] sm:$0xff]
    %v1066 = vld [vmem:[#allocation6 + $0x28] sm:$0xff]
    %v1067 = vld [vmem:[#allocation6 + $0x30] sm:$0xff]
    %v1068 = vld [vmem:[#allocation6 + $0x38] sm:$0xff]
    %v1069 = vld [vmem:[#allocation6 + $0x40] sm:$0xff]
    %v1070 = vld [vmem:[#allocation6 + $0x48] sm:$0xff]
    %v1071 = vld [vmem:[#allocation6 + $0x50] sm:$0xff]
    %v1072 = vld [vmem:[#allocation6 + $0x58] sm:$0xff]
    %v1073 = vld [vmem:[#allocation6 + $0x60] sm:$0xff]
    %v1074 = vld [vmem:[#allocation6 + $0x68] sm:$0xff]
    %v1075 = vld [vmem:[#allocation6 + $0x70] sm:$0xff]
    %v1076 = vld [vmem:[#allocation6 + $0x78] sm:$0xff]
    %v1077 = vld [vmem:[#allocation6 + $0x80] sm:$0xff]
    %v1078 = vld [vmem:[#allocation6 + $0x88] sm:$0xff]
    %v1079 = vld [vmem:[#allocation6 + $0x90] sm:$0xff]
    %v1080 = vld [vmem:[#allocation6 + $0x98] sm:$0xff]
    %v1081 = vld [vmem:[#allocation6 + $0xa0] sm:$0xff]
    %v1082 = vld [vmem:[#allocation6 + $0xa8] sm:$0xff]
    %v1083 = vld [vmem:[#allocation6 + $0xb0] sm:$0xff]
    %v1084 = vld [vmem:[#allocation6 + $0xb8] sm:$0xff]
    %v1085 = vld [vmem:[#allocation6 + $0xc0] sm:$0xff]
    %v1086 = vld [vmem:[#allocation6 + $0xc8] sm:$0xff]
    %v1087 = vld [vmem:[#allocation6 + $0xd0] sm:$0xff]
    %v1088 = vld [vmem:[#allocation6 + $0xd8] sm:$0xff]
    %v1089 = vld [vmem:[#allocation6 + $0xe0] sm:$0xff]
    %v1090 = vld [vmem:[#allocation6 + $0xe8] sm:$0xff]
    %v1091 = vld [vmem:[#allocation6 + $0xf0] sm:$0xff]
    %v1092 = vld [vmem:[#allocation6 + $0xf8] sm:$0xff]
    %v1093 = vld [vmem:[#allocation6 + $0x100] sm:$0xff]
    %v1094 = vld [vmem:[#allocation6 + $0x108] sm:$0xff]
    %v1095 = vld [vmem:[#allocation6 + $0x110] sm:$0xff]
    %v1096 = vld [vmem:[#allocation6 + $0x118] sm:$0xff]
    %v1097 = vld [vmem:[#allocation6 + $0x120] sm:$0xff]
    %v1098 = vld [vmem:[#allocation6 + $0x128] sm:$0xff]
    %v1099 = vld [vmem:[#allocation6 + $0x130] sm:$0xff]
    %v1100 = vld [vmem:[#allocation6 + $0x138] sm:$0xff]
    %v1101 = vld [vmem:[#allocation6 + $0x140] sm:$0xff]
    %v1102 = vld [vmem:[#allocation6 + $0x148] sm:$0xff]
    %v1103 = vld [vmem:[#allocation6 + $0x150] sm:$0xff]
    %v1104 = vld [vmem:[#allocation6 + $0x158] sm:$0xff]
    %v1105 = vld [vmem:[#allocation6 + $0x160] sm:$0xff]
    %v1106 = vld [vmem:[#allocation6 + $0x168] sm:$0xff]
    %v1107 = vld [vmem:[#allocation6 + $0x170] sm:$0xff]
    %v1108 = vld [vmem:[#allocation6 + $0x178] sm:$0xff]
    %v1109 = vld [vmem:[#allocation6 + $0x180] sm:$0xff]
    %v1110 = vld [vmem:[#allocation6 + $0x188] sm:$0xff]
    %v1111 = vld [vmem:[#allocation6 + $0x190] sm:$0xff]
    %v1112 = vld [vmem:[#allocation6 + $0x198] sm:$0xff]
    %v1113 = vld [vmem:[#allocation6 + $0x1a0] sm:$0xff]
    %v1114 = vld [vmem:[#allocation6 + $0x1a8] sm:$0xff]
    %v1115 = vld [vmem:[#allocation6 + $0x1b0] sm:$0xff]
    %v1116 = vld [vmem:[#allocation6 + $0x1b8] sm:$0xff]
    %v1117 = vld [vmem:[#allocation6 + $0x1c0] sm:$0xff]
    %v1118 = vld [vmem:[#allocation6 + $0x1c8] sm:$0xff]
    %v1119 = vld [vmem:[#allocation6 + $0x1d0] sm:$0xff]
    %v1120 = vld [vmem:[#allocation6 + $0x1d8] sm:$0xff]
    %v1121 = vld [vmem:[#allocation6 + $0x1e0] sm:$0xff]
    %v1122 = vld [vmem:[#allocation6 + $0x1e8] sm:$0xff]
    %v1123 = vld [vmem:[#allocation6 + $0x1f0] sm:$0xff]
    %v1124 = vld [vmem:[#allocation6 + $0x1f8] sm:$0xff]
    %v1189 = vunpack.c.l.b16 %v1061
    %v1190 = vunpack.c.h.b16 %v1061
    %v1191 = vunpack.c.l.b16 %v1062
    %v1192 = vunpack.c.h.b16 %v1062
    %v1193 = vunpack.c.l.b16 %v1063
    %v1194 = vunpack.c.h.b16 %v1063
    %v1195 = vunpack.c.l.b16 %v1064
    %v1196 = vunpack.c.h.b16 %v1064
    %v1197 = vunpack.c.l.b16 %v1065
    %v1198 = vunpack.c.h.b16 %v1065
    %v1199 = vunpack.c.l.b16 %v1066
    %v1200 = vunpack.c.h.b16 %v1066
    %v1201 = vunpack.c.l.b16 %v1067
    %v1202 = vunpack.c.h.b16 %v1067
    %v1203 = vunpack.c.l.b16 %v1068
    %v1204 = vunpack.c.h.b16 %v1068
    %v1205 = vunpack.c.l.b16 %v1069
    %v1206 = vunpack.c.h.b16 %v1069
    %v1207 = vunpack.c.l.b16 %v1070
    %v1208 = vunpack.c.h.b16 %v1070
    %v1209 = vunpack.c.l.b16 %v1071
    %v1210 = vunpack.c.h.b16 %v1071
    %v1211 = vunpack.c.l.b16 %v1072
    %v1212 = vunpack.c.h.b16 %v1072
    %v1213 = vunpack.c.l.b16 %v1073
    %v1214 = vunpack.c.h.b16 %v1073
    %v1215 = vunpack.c.l.b16 %v1074
    %v1216 = vunpack.c.h.b16 %v1074
    %v1217 = vunpack.c.l.b16 %v1075
    %v1218 = vunpack.c.h.b16 %v1075
    %v1219 = vunpack.c.l.b16 %v1076
    %v1220 = vunpack.c.h.b16 %v1076
    %v1221 = vunpack.c.l.b16 %v1077
    %v1222 = vunpack.c.h.b16 %v1077
    %v1223 = vunpack.c.l.b16 %v1078
    %v1224 = vunpack.c.h.b16 %v1078
    %v1225 = vunpack.c.l.b16 %v1079
    %v1226 = vunpack.c.h.b16 %v1079
    %v1227 = vunpack.c.l.b16 %v1080
    %v1228 = vunpack.c.h.b16 %v1080
    %v1229 = vunpack.c.l.b16 %v1081
    %v1230 = vunpack.c.h.b16 %v1081
    %v1231 = vunpack.c.l.b16 %v1082
    %v1232 = vunpack.c.h.b16 %v1082
    %v1233 = vunpack.c.l.b16 %v1083
    %v1234 = vunpack.c.h.b16 %v1083
    %v1235 = vunpack.c.l.b16 %v1084
    %v1236 = vunpack.c.h.b16 %v1084
    %v1237 = vunpack.c.l.b16 %v1085
    %v1238 = vunpack.c.h.b16 %v1085
    %v1239 = vunpack.c.l.b16 %v1086
    %v1240 = vunpack.c.h.b16 %v1086
    %v1241 = vunpack.c.l.b16 %v1087
    %v1242 = vunpack.c.h.b16 %v1087
    %v1243 = vunpack.c.l.b16 %v1088
    %v1244 = vunpack.c.h.b16 %v1088
    %v1245 = vunpack.c.l.b16 %v1089
    %v1246 = vunpack.c.h.b16 %v1089
    %v1247 = vunpack.c.l.b16 %v1090
    %v1248 = vunpack.c.h.b16 %v1090
    %v1249 = vunpack.c.l.b16 %v1091
    %v1250 = vunpack.c.h.b16 %v1091
    %v1251 = vunpack.c.l.b16 %v1092
    %v1252 = vunpack.c.h.b16 %v1092
    %v1253 = vunpack.c.l.b16 %v1093
    %v1254 = vunpack.c.h.b16 %v1093
    %v1255 = vunpack.c.l.b16 %v1094
    %v1256 = vunpack.c.h.b16 %v1094
    %v1257 = vunpack.c.l.b16 %v1095
    %v1258 = vunpack.c.h.b16 %v1095
    %v1259 = vunpack.c.l.b16 %v1096
    %v1260 = vunpack.c.h.b16 %v1096
    %v1261 = vunpack.c.l.b16 %v1097
    %v1262 = vunpack.c.h.b16 %v1097
    %v1263 = vunpack.c.l.b16 %v1098
    %v1264 = vunpack.c.h.b16 %v1098
    %v1265 = vunpack.c.l.b16 %v1099
    %v1266 = vunpack.c.h.b16 %v1099
    %v1267 = vunpack.c.l.b16 %v1100
    %v1268 = vunpack.c.h.b16 %v1100
    %v1269 = vunpack.c.l.b16 %v1101
    %v1270 = vunpack.c.h.b16 %v1101
    %v1271 = vunpack.c.l.b16 %v1102
    %v1272 = vunpack.c.h.b16 %v1102
    %v1273 = vunpack.c.l.b16 %v1103
    %v1274 = vunpack.c.h.b16 %v1103
    %v1275 = vunpack.c.l.b16 %v1104
    %v1276 = vunpack.c.h.b16 %v1104
    %v1277 = vunpack.c.l.b16 %v1105
    %v1278 = vunpack.c.h.b16 %v1105
    %v1279 = vunpack.c.l.b16 %v1106
    %v1280 = vunpack.c.h.b16 %v1106
    %v1281 = vunpack.c.l.b16 %v1107
    %v1282 = vunpack.c.h.b16 %v1107
    %v1283 = vunpack.c.l.b16 %v1108
    %v1284 = vunpack.c.h.b16 %v1108
    %v1285 = vunpack.c.l.b16 %v1109
    %v1286 = vunpack.c.h.b16 %v1109
    %v1287 = vunpack.c.l.b16 %v1110
    %v1288 = vunpack.c.h.b16 %v1110
    %v1289 = vunpack.c.l.b16 %v1111
    %v1290 = vunpack.c.h.b16 %v1111
    %v1291 = vunpack.c.l.b16 %v1112
    %v1292 = vunpack.c.h.b16 %v1112
    %v1293 = vunpack.c.l.b16 %v1113
    %v1294 = vunpack.c.h.b16 %v1113
    %v1295 = vunpack.c.l.b16 %v1114
    %v1296 = vunpack.c.h.b16 %v1114
    %v1297 = vunpack.c.l.b16 %v1115
    %v1298 = vunpack.c.h.b16 %v1115
    %v1299 = vunpack.c.l.b16 %v1116
    %v1300 = vunpack.c.h.b16 %v1116
    %v1301 = vunpack.c.l.b16 %v1117
    %v1302 = vunpack.c.h.b16 %v1117
    %v1303 = vunpack.c.l.b16 %v1118
    %v1304 = vunpack.c.h.b16 %v1118
    %v1305 = vunpack.c.l.b16 %v1119
    %v1306 = vunpack.c.h.b16 %v1119
    %v1307 = vunpack.c.l.b16 %v1120
    %v1308 = vunpack.c.h.b16 %v1120
    %v1309 = vunpack.c.l.b16 %v1121
    %v1310 = vunpack.c.h.b16 %v1121
    %v1311 = vunpack.c.l.b16 %v1122
    %v1312 = vunpack.c.h.b16 %v1122
    %v1313 = vunpack.c.l.b16 %v1123
    %v1314 = vunpack.c.h.b16 %v1123
    %v1315 = vunpack.c.l.b16 %v1124
    %v1316 = vunpack.c.h.b16 %v1124
    %v1317 = vpack.c.b16 %v1193, %v1189
    %v1318 = vpack.c.b16 %v1194, %v1190
    %v1319 = vpack.c.b16 %v1195, %v1191
    %v1320 = vpack.c.b16 %v1196, %v1192
    %v1321 = vpack.c.b16 %v1201, %v1197
    %v1322 = vpack.c.b16 %v1202, %v1198
    %v1323 = vpack.c.b16 %v1203, %v1199
    %v1324 = vpack.c.b16 %v1204, %v1200
    %v1325 = vpack.c.b16 %v1209, %v1205
    %v1326 = vpack.c.b16 %v1210, %v1206
    %v1327 = vpack.c.b16 %v1211, %v1207
    %v1328 = vpack.c.b16 %v1212, %v1208
    %v1329 = vpack.c.b16 %v1217, %v1213
    %v1330 = vpack.c.b16 %v1218, %v1214
    %v1331 = vpack.c.b16 %v1219, %v1215
    %v1332 = vpack.c.b16 %v1220, %v1216
    %v1333 = vpack.c.b16 %v1225, %v1221
    %v1334 = vpack.c.b16 %v1226, %v1222
    %v1335 = vpack.c.b16 %v1227, %v1223
    %v1336 = vpack.c.b16 %v1228, %v1224
    %v1337 = vpack.c.b16 %v1233, %v1229
    %v1338 = vpack.c.b16 %v1234, %v1230
    %v1339 = vpack.c.b16 %v1235, %v1231
    %v1340 = vpack.c.b16 %v1236, %v1232
    %v1341 = vpack.c.b16 %v1241, %v1237
    %v1342 = vpack.c.b16 %v1242, %v1238
    %v1343 = vpack.c.b16 %v1243, %v1239
    %v1344 = vpack.c.b16 %v1244, %v1240
    %v1345 = vpack.c.b16 %v1249, %v1245
    %v1346 = vpack.c.b16 %v1250, %v1246
    %v1347 = vpack.c.b16 %v1251, %v1247
    %v1348 = vpack.c.b16 %v1252, %v1248
    %v1349 = vpack.c.b16 %v1257, %v1253
    %v1350 = vpack.c.b16 %v1258, %v1254
    %v1351 = vpack.c.b16 %v1259, %v1255
    %v1352 = vpack.c.b16 %v1260, %v1256
    %v1353 = vpack.c.b16 %v1265, %v1261
    %v1354 = vpack.c.b16 %v1266, %v1262
    %v1355 = vpack.c.b16 %v1267, %v1263
    %v1356 = vpack.c.b16 %v1268, %v1264
    %v1357 = vpack.c.b16 %v1273, %v1269
    %v1358 = vpack.c.b16 %v1274, %v1270
    %v1359 = vpack.c.b16 %v1275, %v1271
    %v1360 = vpack.c.b16 %v1276, %v1272
    %v1361 = vpack.c.b16 %v1281, %v1277
    %v1362 = vpack.c.b16 %v1282, %v1278
    %v1363 = vpack.c.b16 %v1283, %v1279
    %v1364 = vpack.c.b16 %v1284, %v1280
    %v1365 = vpack.c.b16 %v1289, %v1285
    %v1366 = vpack.c.b16 %v1290, %v1286
    %v1367 = vpack.c.b16 %v1291, %v1287
    %v1368 = vpack.c.b16 %v1292, %v1288
    %v1369 = vpack.c.b16 %v1297, %v1293
    %v1370 = vpack.c.b16 %v1298, %v1294
    %v1371 = vpack.c.b16 %v1299, %v1295
    %v1372 = vpack.c.b16 %v1300, %v1296
    %v1373 = vpack.c.b16 %v1305, %v1301
    %v1374 = vpack.c.b16 %v1306, %v1302
    %v1375 = vpack.c.b16 %v1307, %v1303
    %v1376 = vpack.c.b16 %v1308, %v1304
    %v1377 = vpack.c.b16 %v1313, %v1309
    %v1378 = vpack.c.b16 %v1314, %v1310
    %v1379 = vpack.c.b16 %v1315, %v1311
    %v1380 = vpack.c.b16 %v1316, %v1312
    %1445 = vmatprep.subr.bf16.mxu0 %v1318
    %1446 = vmatpush1.bf16.msra.mxu0 %v1317
    %1447 = vmatprep.subr.bf16.mxu0 %v1322
    %1448 = vmatpush1.bf16.msra.mxu0 %v1321
    %1449 = vmatprep.subr.bf16.mxu0 %v1326
    %1450 = vmatpush1.bf16.msra.mxu0 %v1325
    %1451 = vmatprep.subr.bf16.mxu0 %v1330
    %1452 = vmatpush1.bf16.msra.mxu0 %v1329
    %1453 = vmatprep.subr.bf16.mxu0 %v1334
    %1454 = vmatpush1.bf16.msra.mxu0 %v1333
    %1455 = vmatprep.subr.bf16.mxu0 %v1338
    %1456 = vmatpush1.bf16.msra.mxu0 %v1337
    %1457 = vmatprep.subr.bf16.mxu0 %v1342
    %1458 = vmatpush1.bf16.msra.mxu0 %v1341
    %1459 = vmatprep.subr.bf16.mxu0 %v1346
    %1460 = vmatpush1.bf16.msra.mxu0 %v1345
    %1461 = vmatprep.subr.bf16.mxu0 %v1350
    %1462 = vmatpush1.bf16.msra.mxu0 %v1349
    %1463 = vmatprep.subr.bf16.mxu0 %v1354
    %1464 = vmatpush1.bf16.msra.mxu0 %v1353
    %1465 = vmatprep.subr.bf16.mxu0 %v1358
    %1466 = vmatpush1.bf16.msra.mxu0 %v1357
    %1467 = vmatprep.subr.bf16.mxu0 %v1362
    %1468 = vmatpush1.bf16.msra.mxu0 %v1361
    %1469 = vmatprep.subr.bf16.mxu0 %v1366
    %1470 = vmatpush1.bf16.msra.mxu0 %v1365
    %1471 = vmatprep.subr.bf16.mxu0 %v1370
    %1472 = vmatpush1.bf16.msra.mxu0 %v1369
    %1473 = vmatprep.subr.bf16.mxu0 %v1374
    %1474 = vmatpush1.bf16.msra.mxu0 %v1373
    %1475 = vmatprep.subr.bf16.mxu0 %v1378
    %1476 = vmatpush1.bf16.msra.mxu0 %v1377
    %1477 = vmatprep.mubr.bf16.mxu0 %v1046
    %1478 = vmatmul.mubr.bf16.gmra.mrb[0].mxu0 %v1045
    %v1479 = vpop.f32.mrb[0].mxu0
    %v1480 = vadd.f32 0.0, %v1479
    %v1481 = vpop.f32.mrb[0].mxu0
    %v1482 = vadd.f32 0.0, %v1481
    %v1483 = vpop.f32.mrb[0].mxu0
    %v1484 = vadd.f32 0.0, %v1483
    %v1485 = vpop.f32.mrb[0].mxu0
    %v1486 = vadd.f32 0.0, %v1485
    %1487 = vmatprep.mubr.bf16.mxu0 %v1048
    %1488 = vmatmul.mubr.bf16.gmra.mrb[0].mxu0 %v1047
    %v1489 = vpop.f32.mrb[0].mxu0
    %v1490 = vadd.f32 0.0, %v1489
    %v1491 = vpop.f32.mrb[0].mxu0
    %v1492 = vadd.f32 0.0, %v1491
    %v1493 = vpop.f32.mrb[0].mxu0
    %v1494 = vadd.f32 0.0, %v1493
    %v1495 = vpop.f32.mrb[0].mxu0
    %v1496 = vadd.f32 0.0, %v1495
    %1497 = vmatprep.mubr.bf16.mxu0 %v1050
    %1498 = vmatmul.mubr.bf16.gmra.mrb[0].mxu0 %v1049
    %v1499 = vpop.f32.mrb[0].mxu0
    %v1500 = vadd.f32 0.0, %v1499
    %v1501 = vpop.f32.mrb[0].mxu0
    %v1502 = vadd.f32 0.0, %v1501
    %v1503 = vpop.f32.mrb[0].mxu0
    %v1504 = vadd.f32 0.0, %v1503
    %v1505 = vpop.f32.mrb[0].mxu0
    %v1506 = vadd.f32 0.0, %v1505
    %1507 = vmatprep.mubr.bf16.mxu0 %v1052
    %1508 = vmatmul.mubr.bf16.gmra.mrb[0].mxu0 %v1051
    %v1509 = vpop.f32.mrb[0].mxu0
    %v1510 = vadd.f32 0.0, %v1509
    %v1511 = vpop.f32.mrb[0].mxu0
    %v1512 = vadd.f32 0.0, %v1511
    %v1513 = vpop.f32.mrb[0].mxu0
    %v1514 = vadd.f32 0.0, %v1513
    %v1515 = vpop.f32.mrb[0].mxu0
    %v1516 = vadd.f32 0.0, %v1515
    %1517 = vmatprep.mubr.bf16.mxu0 %v1054
    %1518 = vmatmul.mubr.bf16.gmra.mrb[0].mxu0 %v1053
    %v1519 = vpop.f32.mrb[0].mxu0
    %v1520 = vadd.f32 0.0, %v1519
    %v1521 = vpop.f32.mrb[0].mxu0
    %v1522 = vadd.f32 0.0, %v1521
    %v1523 = vpop.f32.mrb[0].mxu0
    %v1524 = vadd.f32 0.0, %v1523
    %v1525 = vpop.f32.mrb[0].mxu0
    %v1526 = vadd.f32 0.0, %v1525
    %1527 = vmatprep.mubr.bf16.mxu0 %v1056
    %1528 = vmatmul.mubr.bf16.gmra.mrb[0].mxu0 %v1055
    %v1529 = vpop.f32.mrb[0].mxu0
    %v1530 = vadd.f32 0.0, %v1529
    %v1531 = vpop.f32.mrb[0].mxu0
    %v1532 = vadd.f32 0.0, %v1531
    %v1533 = vpop.f32.mrb[0].mxu0
    %v1534 = vadd.f32 0.0, %v1533
    %v1535 = vpop.f32.mrb[0].mxu0
    %v1536 = vadd.f32 0.0, %v1535
    %1537 = vmatprep.mubr.bf16.mxu0 %v1058
    %1538 = vmatmul.mubr.bf16.gmra.mrb[0].mxu0 %v1057
    %v1539 = vpop.f32.mrb[0].mxu0
    %v1540 = vadd.f32 0.0, %v1539
    %v1541 = vpop.f32.mrb[0].mxu0
    %v1542 = vadd.f32 0.0, %v1541
    %v1543 = vpop.f32.mrb[0].mxu0
    %v1544 = vadd.f32 0.0, %v1543
    %v1545 = vpop.f32.mrb[0].mxu0
    %v1546 = vadd.f32 0.0, %v1545
    %1547 = vmatprep.mubr.bf16.mxu0 %v1060
    %1548 = vmatmul.mubr.bf16.gmra.mrb[0].mxu0 %v1059
    %v1549 = vpop.f32.mrb[0].mxu0
    %v1550 = vadd.f32 0.0, %v1549
    %v1551 = vpop.f32.mrb[0].mxu0
    %v1552 = vadd.f32 0.0, %v1551
    %v1553 = vpop.f32.mrb[0].mxu0
    %v1554 = vadd.f32 0.0, %v1553
    %v1555 = vpop.f32.mrb[0].mxu0
    %v1556 = vadd.f32 0.0, %v1555
    %1557 = vdwg.mxu0
    %1558 = vmatprep.subr.bf16.mxu0 %v1320
    %1559 = vmatpush1.bf16.msra.mxu0 %v1319
    %1560 = vmatprep.subr.bf16.mxu0 %v1324
    %1561 = vmatpush1.bf16.msra.mxu0 %v1323
    %1562 = vmatprep.subr.bf16.mxu0 %v1328
    %1563 = vmatpush1.bf16.msra.mxu0 %v1327
    %1564 = vmatprep.subr.bf16.mxu0 %v1332
    %1565 = vmatpush1.bf16.msra.mxu0 %v1331
    %1566 = vmatprep.subr.bf16.mxu0 %v1336
    %1567 = vmatpush1.bf16.msra.mxu0 %v1335
    %1568 = vmatprep.subr.bf16.mxu0 %v1340
    %1569 = vmatpush1.bf16.msra.mxu0 %v1339
    %1570 = vmatprep.subr.bf16.mxu0 %v1344
    %1571 = vmatpush1.bf16.msra.mxu0 %v1343
    %1572 = vmatprep.subr.bf16.mxu0 %v1348
    %1573 = vmatpush1.bf16.msra.mxu0 %v1347
    %1574 = vmatprep.subr.bf16.mxu0 %v1352
    %1575 = vmatpush1.bf16.msra.mxu0 %v1351
    %1576 = vmatprep.subr.bf16.mxu0 %v1356
    %1577 = vmatpush1.bf16.msra.mxu0 %v1355
    %1578 = vmatprep.subr.bf16.mxu0 %v1360
    %1579 = vmatpush1.bf16.msra.mxu0 %v1359
    %1580 = vmatprep.subr.bf16.mxu0 %v1364
    %1581 = vmatpush1.bf16.msra.mxu0 %v1363
    %1582 = vmatprep.subr.bf16.mxu0 %v1368
    %1583 = vmatpush1.bf16.msra.mxu0 %v1367
    %1584 = vmatprep.subr.bf16.mxu0 %v1372
    %1585 = vmatpush1.bf16.msra.mxu0 %v1371
    %1586 = vmatprep.subr.bf16.mxu0 %v1376
    %1587 = vmatpush1.bf16.msra.mxu0 %v1375
    %1588 = vmatprep.subr.bf16.mxu0 %v1380
    %1589 = vmatpush1.bf16.msra.mxu0 %v1379
    %1590 = vmatprep.mubr.bf16.mxu0 %v1046
    %1591 = vmatmul.mubr.bf16.gmra.mrb[0].mxu0 %v1045
    %v1592 = vpop.f32.mrb[0].mxu0
    %v1593 = vadd.f32 0.0, %v1592
    %v1594 = vpop.f32.mrb[0].mxu0
    %v1595 = vadd.f32 0.0, %v1594
    %v1596 = vpop.f32.mrb[0].mxu0
    %v1597 = vadd.f32 0.0, %v1596
    %v1598 = vpop.f32.mrb[0].mxu0
    %v1599 = vadd.f32 0.0, %v1598
    %1600 = vmatprep.mubr.bf16.mxu0 %v1048
    %1601 = vmatmul.mubr.bf16.gmra.mrb[0].mxu0 %v1047
    %v1602 = vpop.f32.mrb[0].mxu0
    %v1603 = vadd.f32 0.0, %v1602
    %v1604 = vpop.f32.mrb[0].mxu0
    %v1605 = vadd.f32 0.0, %v1604
    %v1606 = vpop.f32.mrb[0].mxu0
    %v1607 = vadd.f32 0.0, %v1606
    %v1608 = vpop.f32.mrb[0].mxu0
    %v1609 = vadd.f32 0.0, %v1608
    %1610 = vmatprep.mubr.bf16.mxu0 %v1050
    %1611 = vmatmul.mubr.bf16.gmra.mrb[0].mxu0 %v1049
    %v1612 = vpop.f32.mrb[0].mxu0
    %v1613 = vadd.f32 0.0, %v1612
    %v1614 = vpop.f32.mrb[0].mxu0
    %v1615 = vadd.f32 0.0, %v1614
    %v1616 = vpop.f32.mrb[0].mxu0
    %v1617 = vadd.f32 0.0, %v1616
    %v1618 = vpop.f32.mrb[0].mxu0
    %v1619 = vadd.f32 0.0, %v1618
    %1620 = vmatprep.mubr.bf16.mxu0 %v1052
    %1621 = vmatmul.mubr.bf16.gmra.mrb[0].mxu0 %v1051
    %v1622 = vpop.f32.mrb[0].mxu0
    %v1623 = vadd.f32 0.0, %v1622
    %v1624 = vpop.f32.mrb[0].mxu0
    %v1625 = vadd.f32 0.0, %v1624
    %v1626 = vpop.f32.mrb[0].mxu0
    %v1627 = vadd.f32 0.0, %v1626
    %v1628 = vpop.f32.mrb[0].mxu0
    %v1629 = vadd.f32 0.0, %v1628
    %1630 = vmatprep.mubr.bf16.mxu0 %v1054
    %1631 = vmatmul.mubr.bf16.gmra.mrb[0].mxu0 %v1053
    %v1632 = vpop.f32.mrb[0].mxu0
    %v1633 = vadd.f32 0.0, %v1632
    %v1634 = vpop.f32.mrb[0].mxu0
    %v1635 = vadd.f32 0.0, %v1634
    %v1636 = vpop.f32.mrb[0].mxu0
    %v1637 = vadd.f32 0.0, %v1636
    %v1638 = vpop.f32.mrb[0].mxu0
    %v1639 = vadd.f32 0.0, %v1638
    %1640 = vmatprep.mubr.bf16.mxu0 %v1056
    %1641 = vmatmul.mubr.bf16.gmra.mrb[0].mxu0 %v1055
    %v1642 = vpop.f32.mrb[0].mxu0
    %v1643 = vadd.f32 0.0, %v1642
    %v1644 = vpop.f32.mrb[0].mxu0
    %v1645 = vadd.f32 0.0, %v1644
    %v1646 = vpop.f32.mrb[0].mxu0
    %v1647 = vadd.f32 0.0, %v1646
    %v1648 = vpop.f32.mrb[0].mxu0
    %v1649 = vadd.f32 0.0, %v1648
    %1650 = vmatprep.mubr.bf16.mxu0 %v1058
    %1651 = vmatmul.mubr.bf16.gmra.mrb[0].mxu0 %v1057
    %v1652 = vpop.f32.mrb[0].mxu0
    %v1653 = vadd.f32 0.0, %v1652
    %v1654 = vpop.f32.mrb[0].mxu0
    %v1655 = vadd.f32 0.0, %v1654
    %v1656 = vpop.f32.mrb[0].mxu0
    %v1657 = vadd.f32 0.0, %v1656
    %v1658 = vpop.f32.mrb[0].mxu0
    %v1659 = vadd.f32 0.0, %v1658
    %1660 = vmatprep.mubr.bf16.mxu0 %v1060
    %1661 = vmatmul.mubr.bf16.gmra.mrb[0].mxu0 %v1059
    %v1662 = vpop.f32.mrb[0].mxu0
    %v1663 = vadd.f32 0.0, %v1662
    %v1664 = vpop.f32.mrb[0].mxu0
    %v1665 = vadd.f32 0.0, %v1664
    %v1666 = vpop.f32.mrb[0].mxu0
    %v1667 = vadd.f32 0.0, %v1666
    %v1668 = vpop.f32.mrb[0].mxu0
    %v1669 = vadd.f32 0.0, %v1668
    %1670 = vdwg.mxu0
    %v1671 = vld [vmem:[#allocation18] sm:$0xf]
    %v1672 = vld [vmem:[#allocation19] sm:$0xf]
    %v1673 = vadd.f32 %v1480, %v1484
    %v1674 = vadd.f32 %v1673, %v1490
    %v1675 = vadd.f32 %v1674, %v1494
    %v1676 = vadd.f32 %v1675, %v1500
    %v1677 = vadd.f32 %v1676, %v1504
    %v1678 = vadd.f32 %v1677, %v1510
    %v1679 = vadd.f32 %v1678, %v1514
    %v1680 = vadd.f32 %v1679, %v1520
    %v1681 = vadd.f32 %v1680, %v1524
    %v1682 = vadd.f32 %v1681, %v1530
    %v1683 = vadd.f32 %v1682, %v1534
    %v1684 = vadd.f32 %v1683, %v1540
    %v1685 = vadd.f32 %v1684, %v1544
    %v1686 = vadd.f32 %v1685, %v1550
    %v1687 = vadd.f32 %v1686, %v1554
    %v1688 = vrot.slane %v1687, 4
    %v1689 = vadd.f32 %v1687, %v1688
    %v1690 = vrot.slane %v1689, 2
    %v1691 = vadd.f32 %v1689, %v1690
    %v1692 = vrot.slane %v1691, 1
    %v1693 = vadd.f32 %v1691, %v1692
    %v1694 = vadd.f32 %v1482, %v1486
    %v1695 = vadd.f32 %v1694, %v1492
    %v1696 = vadd.f32 %v1695, %v1496
    %v1697 = vadd.f32 %v1696, %v1502
    %v1698 = vadd.f32 %v1697, %v1506
    %v1699 = vadd.f32 %v1698, %v1512
    %v1700 = vadd.f32 %v1699, %v1516
    %v1701 = vadd.f32 %v1700, %v1522
    %v1702 = vadd.f32 %v1701, %v1526
    %v1703 = vadd.f32 %v1702, %v1532
    %v1704 = vadd.f32 %v1703, %v1536
    %v1705 = vadd.f32 %v1704, %v1542
    %v1706 = vadd.f32 %v1705, %v1546
    %v1707 = vadd.f32 %v1706, %v1552
    %v1708 = vadd.f32 %v1707, %v1556
    %v1709 = vrot.slane %v1708, 4
    %v1710 = vadd.f32 %v1708, %v1709
    %v1711 = vrot.slane %v1710, 2
    %v1712 = vadd.f32 %v1710, %v1711
    %v1713 = vrot.slane %v1712, 1
    %v1714 = vadd.f32 %v1712, %v1713
    %v1715 = vadd.f32 %v1593, %v1597
    %v1716 = vadd.f32 %v1715, %v1603
    %v1717 = vadd.f32 %v1716, %v1607
    %v1718 = vadd.f32 %v1717, %v1613
    %v1719 = vadd.f32 %v1718, %v1617
    %v1720 = vadd.f32 %v1719, %v1623
    %v1721 = vadd.f32 %v1720, %v1627
    %v1722 = vadd.f32 %v1721, %v1633
    %v1723 = vadd.f32 %v1722, %v1637
    %v1724 = vadd.f32 %v1723, %v1643
    %v1725 = vadd.f32 %v1724, %v1647
    %v1726 = vadd.f32 %v1725, %v1653
    %v1727 = vadd.f32 %v1726, %v1657
    %v1728 = vadd.f32 %v1727, %v1663
    %v1729 = vadd.f32 %v1728, %v1667
    %v1730 = vrot.slane %v1729, 4
    %v1731 = vadd.f32 %v1729, %v1730
    %v1732 = vrot.slane %v1731, 2
    %v1733 = vadd.f32 %v1731, %v1732
    %v1734 = vrot.slane %v1733, 1
    %v1735 = vadd.f32 %v1733, %v1734
    %v1736 = vadd.f32 %v1595, %v1599
    %v1737 = vadd.f32 %v1736, %v1605
    %v1738 = vadd.f32 %v1737, %v1609
    %v1739 = vadd.f32 %v1738, %v1615
    %v1740 = vadd.f32 %v1739, %v1619
    %v1741 = vadd.f32 %v1740, %v1625
    %v1742 = vadd.f32 %v1741, %v1629
    %v1743 = vadd.f32 %v1742, %v1635
    %v1744 = vadd.f32 %v1743, %v1639
    %v1745 = vadd.f32 %v1744, %v1645
    %v1746 = vadd.f32 %v1745, %v1649
    %v1747 = vadd.f32 %v1746, %v1655
    %v1748 = vadd.f32 %v1747, %v1659
    %v1749 = vadd.f32 %v1748, %v1665
    %v1750 = vadd.f32 %v1749, %v1669
    %v1751 = vrot.slane %v1750, 4
    %v1752 = vadd.f32 %v1750, %v1751
    %v1753 = vrot.slane %v1752, 2
    %v1754 = vadd.f32 %v1752, %v1753
    %v1755 = vrot.slane %v1754, 1
    %v1756 = vadd.f32 %v1754, %v1755
    %v1757 = vmul.f32 %v1480, %v1480
    %v1758 = vmul.f32 %v1482, %v1482
    %v1759 = vmul.f32 %v1593, %v1593
    %v1760 = vmul.f32 %v1595, %v1595
    %v1761 = vmul.f32 %v1484, %v1484
    %v1762 = vmul.f32 %v1486, %v1486
    %v1763 = vmul.f32 %v1597, %v1597
    %v1764 = vmul.f32 %v1599, %v1599
    %v1765 = vmul.f32 %v1490, %v1490
    %v1766 = vmul.f32 %v1492, %v1492
    %v1767 = vmul.f32 %v1603, %v1603
    %v1768 = vmul.f32 %v1605, %v1605
    %v1769 = vmul.f32 %v1494, %v1494
    %v1770 = vmul.f32 %v1496, %v1496
    %v1771 = vmul.f32 %v1607, %v1607
    %v1772 = vmul.f32 %v1609, %v1609
    %v1773 = vmul.f32 %v1500, %v1500
    %v1774 = vmul.f32 %v1502, %v1502
    %v1775 = vmul.f32 %v1613, %v1613
    %v1776 = vmul.f32 %v1615, %v1615
    %v1777 = vmul.f32 %v1504, %v1504
    %v1778 = vmul.f32 %v1506, %v1506
    %v1779 = vmul.f32 %v1617, %v1617
    %v1780 = vmul.f32 %v1619, %v1619
    %v1781 = vmul.f32 %v1510, %v1510
    %v1782 = vmul.f32 %v1512, %v1512
    %v1783 = vmul.f32 %v1623, %v1623
    %v1784 = vmul.f32 %v1625, %v1625
    %v1785 = vmul.f32 %v1514, %v1514
    %v1786 = vmul.f32 %v1516, %v1516
    %v1787 = vmul.f32 %v1627, %v1627
    %v1788 = vmul.f32 %v1629, %v1629
    %v1789 = vmul.f32 %v1520, %v1520
    %v1790 = vmul.f32 %v1522, %v1522
    %v1791 = vmul.f32 %v1633, %v1633
    %v1792 = vmul.f32 %v1635, %v1635
    %v1793 = vmul.f32 %v1524, %v1524
    %v1794 = vmul.f32 %v1526, %v1526
    %v1795 = vmul.f32 %v1637, %v1637
    %v1796 = vmul.f32 %v1639, %v1639
    %v1797 = vmul.f32 %v1530, %v1530
    %v1798 = vmul.f32 %v1532, %v1532
    %v1799 = vmul.f32 %v1643, %v1643
    %v1800 = vmul.f32 %v1645, %v1645
    %v1801 = vmul.f32 %v1534, %v1534
    %v1802 = vmul.f32 %v1536, %v1536
    %v1803 = vmul.f32 %v1647, %v1647
    %v1804 = vmul.f32 %v1649, %v1649
    %v1805 = vmul.f32 %v1540, %v1540
    %v1806 = vmul.f32 %v1542, %v1542
    %v1807 = vmul.f32 %v1653, %v1653
    %v1808 = vmul.f32 %v1655, %v1655
    %v1809 = vmul.f32 %v1544, %v1544
    %v1810 = vmul.f32 %v1546, %v1546
    %v1811 = vmul.f32 %v1657, %v1657
    %v1812 = vmul.f32 %v1659, %v1659
    %v1813 = vmul.f32 %v1550, %v1550
    %v1814 = vmul.f32 %v1552, %v1552
    %v1815 = vmul.f32 %v1663, %v1663
    %v1816 = vmul.f32 %v1665, %v1665
    %v1817 = vmul.f32 %v1554, %v1554
    %v1818 = vmul.f32 %v1556, %v1556
    %v1819 = vmul.f32 %v1667, %v1667
    %v1820 = vmul.f32 %v1669, %v1669
    %v1821 = vadd.f32 %v1757, %v1761
    %v1822 = vadd.f32 %v1821, %v1765
    %v1823 = vadd.f32 %v1822, %v1769
    %v1824 = vadd.f32 %v1823, %v1773
    %v1825 = vadd.f32 %v1824, %v1777
    %v1826 = vadd.f32 %v1825, %v1781
    %v1827 = vadd.f32 %v1826, %v1785
    %v1828 = vadd.f32 %v1827, %v1789
    %v1829 = vadd.f32 %v1828, %v1793
    %v1830 = vadd.f32 %v1829, %v1797
    %v1831 = vadd.f32 %v1830, %v1801
    %v1832 = vadd.f32 %v1831, %v1805
    %v1833 = vadd.f32 %v1832, %v1809
    %v1834 = vadd.f32 %v1833, %v1813
    %v1835 = vadd.f32 %v1834, %v1817
    %v1836 = vrot.slane %v1835, 4
    %v1837 = vadd.f32 %v1835, %v1836
    %v1838 = vrot.slane %v1837, 2
    %v1839 = vadd.f32 %v1837, %v1838
    %v1840 = vrot.slane %v1839, 1
    %v1841 = vadd.f32 %v1839, %v1840
    %v1842 = vadd.f32 %v1758, %v1762
    %v1843 = vadd.f32 %v1842, %v1766
    %v1844 = vadd.f32 %v1843, %v1770
    %v1845 = vadd.f32 %v1844, %v1774
    %v1846 = vadd.f32 %v1845, %v1778
    %v1847 = vadd.f32 %v1846, %v1782
    %v1848 = vadd.f32 %v1847, %v1786
    %v1849 = vadd.f32 %v1848, %v1790
    %v1850 = vadd.f32 %v1849, %v1794
    %v1851 = vadd.f32 %v1850, %v1798
    %v1852 = vadd.f32 %v1851, %v1802
    %v1853 = vadd.f32 %v1852, %v1806
    %v1854 = vadd.f32 %v1853, %v1810
    %v1855 = vadd.f32 %v1854, %v1814
    %v1856 = vadd.f32 %v1855, %v1818
    %v1857 = vrot.slane %v1856, 4
    %v1858 = vadd.f32 %v1856, %v1857
    %v1859 = vrot.slane %v1858, 2
    %v1860 = vadd.f32 %v1858, %v1859
    %v1861 = vrot.slane %v1860, 1
    %v1862 = vadd.f32 %v1860, %v1861
    %v1863 = vadd.f32 %v1759, %v1763
    %v1864 = vadd.f32 %v1863, %v1767
    %v1865 = vadd.f32 %v1864, %v1771
    %v1866 = vadd.f32 %v1865, %v1775
    %v1867 = vadd.f32 %v1866, %v1779
    %v1868 = vadd.f32 %v1867, %v1783
    %v1869 = vadd.f32 %v1868, %v1787
    %v1870 = vadd.f32 %v1869, %v1791
    %v1871 = vadd.f32 %v1870, %v1795
    %v1872 = vadd.f32 %v1871, %v1799
    %v1873 = vadd.f32 %v1872, %v1803
    %v1874 = vadd.f32 %v1873, %v1807
    %v1875 = vadd.f32 %v1874, %v1811
    %v1876 = vadd.f32 %v1875, %v1815
    %v1877 = vadd.f32 %v1876, %v1819
    %v1878 = vrot.slane %v1877, 4
    %v1879 = vadd.f32 %v1877, %v1878
    %v1880 = vrot.slane %v1879, 2
    %v1881 = vadd.f32 %v1879, %v1880
    %v1882 = vrot.slane %v1881, 1
    %v1883 = vadd.f32 %v1881, %v1882
    %v1884 = vadd.f32 %v1760, %v1764
    %v1885 = vadd.f32 %v1884, %v1768
    %v1886 = vadd.f32 %v1885, %v1772
    %v1887 = vadd.f32 %v1886, %v1776
    %v1888 = vadd.f32 %v1887, %v1780
    %v1889 = vadd.f32 %v1888, %v1784
    %v1890 = vadd.f32 %v1889, %v1788
    %v1891 = vadd.f32 %v1890, %v1792
    %v1892 = vadd.f32 %v1891, %v1796
    %v1893 = vadd.f32 %v1892, %v1800
    %v1894 = vadd.f32 %v1893, %v1804
    %v1895 = vadd.f32 %v1894, %v1808
    %v1896 = vadd.f32 %v1895, %v1812
    %v1897 = vadd.f32 %v1896, %v1816
    %v1898 = vadd.f32 %v1897, %v1820
    %v1899 = vrot.slane %v1898, 4
    %v1900 = vadd.f32 %v1898, %v1899
    %v1901 = vrot.slane %v1900, 2
    %v1902 = vadd.f32 %v1900, %v1901
    %v1903 = vrot.slane %v1902, 1
    %v1904 = vadd.f32 %v1902, %v1903
    %v1905 = vmul.f32 %v1693, 0.0078125
    %v1906 = vmul.f32 %v1714, 0.0078125
    %v1907 = vmul.f32 %v1735, 0.0078125
    %v1908 = vmul.f32 %v1756, 0.0078125
    %v1909 = vmul.f32 %v1841, 0.0078125
    %v1910 = vmul.f32 %v1862, 0.0078125
    %v1911 = vmul.f32 %v1883, 0.0078125
    %v1912 = vmul.f32 %v1904, 0.0078125
    %v1913 = vmul.f32 %v1905, %v1905
    %v1914 = vmul.f32 %v1906, %v1906
    %v1915 = vmul.f32 %v1907, %v1907
    %v1916 = vmul.f32 %v1908, %v1908
    %v1917 = vsub.f32 %v1909, %v1913
    %v1918 = vsub.f32 %v1910, %v1914
    %v1919 = vsub.f32 %v1911, %v1915
    %v1920 = vsub.f32 %v1912, %v1916
    %v1921 = vmax.f32 %v1917, 0.0
    %v1922 = vmax.f32 %v1918, 0.0
    %v1923 = vmax.f32 %v1919, 0.0
    %v1924 = vmax.f32 %v1920, 0.0
    %v1925 = vadd.f32 %v1921, 1e-05
    %v1926 = vadd.f32 %v1922, 1e-05
    %v1927 = vadd.f32 %v1923, 1e-05
    %v1928 = vadd.f32 %v1924, 1e-05
    %v1929 = vrsqrt.pop %v1925
    %v1930 = vrsqrt.pop %v1926
    %v1931 = vrsqrt.pop %v1927
    %v1932 = vrsqrt.pop %v1928
    %v1937 = vcombine.low %v1929, %v1930
    %v1938 = vcombine.low %v1931, %v1932
    %v1940 = vunpack.c.l.s4 1966171168
    %v1941 = vunpack.c.0.s8 %v1940
    %v1942 = vlaneseq
    %v1943 = vshrl.u32 %v1942, 7
    %v1944 = vsub.s32 %v1941, %v1943
    %v1945 = vrot.slane %v1937, %v1944
    %v1947 = vunpack.c.l.s4 1966171168
    %v1948 = vunpack.c.0.s8 %v1947
    %v1949 = vlaneseq
    %v1950 = vshrl.u32 %v1949, 7
    %v1951 = vsub.s32 %v1948, %v1950
    %v1952 = vrot.slane %v1938, %v1951
    %v1953 = vcombine.low %v1945, %v1952
    %v1955 = vunpack.c.l.s4 1966171168
    %v1956 = vunpack.c.0.s8 %v1955
    %v1957 = vlaneseq
    %v1958 = vshrl.u32 %v1957, 7
    %v1959 = vsub.s32 %v1956, %v1958
    %v1960 = vrot.slane %v1953, %v1959
    %v1962 = vmul.f32 %v1671, %v1960
    %v1964 = vlaneseq
    %v1965 = vshrl.u32 %v1964, 7
    %v1966 = vsub.s32 0, %v1965
    %v1967 = vrot.slane %v1962, %v1966
    %v1968 = vlaneseq
    %v1969 = vshrl.u32 %v1968, 7
    %v1970 = vsub.s32 1, %v1969
    %v1971 = vrot.slane %v1962, %v1970
    %v1972 = vlaneseq
    %v1973 = vshrl.u32 %v1972, 7
    %v1974 = vsub.s32 2, %v1973
    %v1975 = vrot.slane %v1962, %v1974
    %v1976 = vlaneseq
    %v1977 = vshrl.u32 %v1976, 7
    %v1978 = vsub.s32 3, %v1977
    %v1979 = vrot.slane %v1962, %v1978
    %v1984 = vmul.f32 %v1905, %v1967
    %v1985 = vmul.f32 %v1906, %v1971
    %v1986 = vmul.f32 %v1907, %v1975
    %v1987 = vmul.f32 %v1908, %v1979
    %v1992 = vcombine.low %v1984, %v1985
    %v1993 = vcombine.low %v1986, %v1987
    %v1995 = vunpack.c.l.s4 1966171168
    %v1996 = vunpack.c.0.s8 %v1995
    %v1997 = vlaneseq
    %v1998 = vshrl.u32 %v1997, 7
    %v1999 = vsub.s32 %v1996, %v1998
    %v2000 = vrot.slane %v1992, %v1999
    %v2002 = vunpack.c.l.s4 1966171168
    %v2003 = vunpack.c.0.s8 %v2002
    %v2004 = vlaneseq
    %v2005 = vshrl.u32 %v2004, 7
    %v2006 = vsub.s32 %v2003, %v2005
    %v2007 = vrot.slane %v1993, %v2006
    %v2008 = vcombine.low %v2000, %v2007
    %v2010 = vunpack.c.l.s4 1966171168
    %v2011 = vunpack.c.0.s8 %v2010
    %v2012 = vlaneseq
    %v2013 = vshrl.u32 %v2012, 7
    %v2014 = vsub.s32 %v2011, %v2013
    %v2015 = vrot.slane %v2008, %v2014
    %v2017 = vsub.f32 %v1672, %v2015
    %v2018 = vmul.f32 %v1480, %v1967
    %v2019 = vmul.f32 %v1482, %v1971
    %v2020 = vmul.f32 %v1593, %v1975
    %v2021 = vmul.f32 %v1595, %v1979
    %v2022 = vmul.f32 %v1484, %v1967
    %v2023 = vmul.f32 %v1486, %v1971
    %v2024 = vmul.f32 %v1597, %v1975
    %v2025 = vmul.f32 %v1599, %v1979
    %v2026 = vmul.f32 %v1490, %v1967
    %v2027 = vmul.f32 %v1492, %v1971
    %v2028 = vmul.f32 %v1603, %v1975
    %v2029 = vmul.f32 %v1605, %v1979
    %v2030 = vmul.f32 %v1494, %v1967
    %v2031 = vmul.f32 %v1496, %v1971
    %v2032 = vmul.f32 %v1607, %v1975
    %v2033 = vmul.f32 %v1609, %v1979
    %v2034 = vmul.f32 %v1500, %v1967
    %v2035 = vmul.f32 %v1502, %v1971
    %v2036 = vmul.f32 %v1613, %v1975
    %v2037 = vmul.f32 %v1615, %v1979
    %v2038 = vmul.f32 %v1504, %v1967
    %v2039 = vmul.f32 %v1506, %v1971
    %v2040 = vmul.f32 %v1617, %v1975
    %v2041 = vmul.f32 %v1619, %v1979
    %v2042 = vmul.f32 %v1510, %v1967
    %v2043 = vmul.f32 %v1512, %v1971
    %v2044 = vmul.f32 %v1623, %v1975
    %v2045 = vmul.f32 %v1625, %v1979
    %v2046 = vmul.f32 %v1514, %v1967
    %v2047 = vmul.f32 %v1516, %v1971
    %v2048 = vmul.f32 %v1627, %v1975
    %v2049 = vmul.f32 %v1629, %v1979
    %v2050 = vmul.f32 %v1520, %v1967
    %v2051 = vmul.f32 %v1522, %v1971
    %v2052 = vmul.f32 %v1633, %v1975
    %v2053 = vmul.f32 %v1635, %v1979
    %v2054 = vmul.f32 %v1524, %v1967
    %v2055 = vmul.f32 %v1526, %v1971
    %v2056 = vmul.f32 %v1637, %v1975
    %v2057 = vmul.f32 %v1639, %v1979
    %v2058 = vmul.f32 %v1530, %v1967
    %v2059 = vmul.f32 %v1532, %v1971
    %v2060 = vmul.f32 %v1643, %v1975
    %v2061 = vmul.f32 %v1645, %v1979
    %v2062 = vmul.f32 %v1534, %v1967
    %v2063 = vmul.f32 %v1536, %v1971
    %v2064 = vmul.f32 %v1647, %v1975
    %v2065 = vmul.f32 %v1649, %v1979
    %v2066 = vmul.f32 %v1540, %v1967
    %v2067 = vmul.f32 %v1542, %v1971
    %v2068 = vmul.f32 %v1653, %v1975
    %v2069 = vmul.f32 %v1655, %v1979
    %v2070 = vmul.f32 %v1544, %v1967
    %v2071 = vmul.f32 %v1546, %v1971
    %v2072 = vmul.f32 %v1657, %v1975
    %v2073 = vmul.f32 %v1659, %v1979
    %v2074 = vmul.f32 %v1550, %v1967
    %v2075 = vmul.f32 %v1552, %v1971
    %v2076 = vmul.f32 %v1663, %v1975
    %v2077 = vmul.f32 %v1665, %v1979
    %v2078 = vmul.f32 %v1554, %v1967
    %v2079 = vmul.f32 %v1556, %v1971
    %v2080 = vmul.f32 %v1667, %v1975
    %v2081 = vmul.f32 %v1669, %v1979
    %v2083 = vlaneseq
    %v2084 = vshrl.u32 %v2083, 7
    %v2085 = vsub.s32 0, %v2084
    %v2086 = vrot.slane %v2017, %v2085
    %v2087 = vlaneseq
    %v2088 = vshrl.u32 %v2087, 7
    %v2089 = vsub.s32 1, %v2088
    %v2090 = vrot.slane %v2017, %v2089
    %v2091 = vlaneseq
    %v2092 = vshrl.u32 %v2091, 7
    %v2093 = vsub.s32 2, %v2092
    %v2094 = vrot.slane %v2017, %v2093
    %v2095 = vlaneseq
    %v2096 = vshrl.u32 %v2095, 7
    %v2097 = vsub.s32 3, %v2096
    %v2098 = vrot.slane %v2017, %v2097
    %v2103 = vadd.f32 %v2018, %v2086
    %v2104 = vadd.f32 %v2019, %v2090
    %v2105 = vadd.f32 %v2020, %v2094
    %v2106 = vadd.f32 %v2021, %v2098
    %v2107 = vadd.f32 %v2022, %v2086
    %v2108 = vadd.f32 %v2023, %v2090
    %v2109 = vadd.f32 %v2024, %v2094
    %v2110 = vadd.f32 %v2025, %v2098
    %v2111 = vadd.f32 %v2026, %v2086
    %v2112 = vadd.f32 %v2027, %v2090
    %v2113 = vadd.f32 %v2028, %v2094
    %v2114 = vadd.f32 %v2029, %v2098
    %v2115 = vadd.f32 %v2030, %v2086
    %v2116 = vadd.f32 %v2031, %v2090
    %v2117 = vadd.f32 %v2032, %v2094
    %v2118 = vadd.f32 %v2033, %v2098
    %v2119 = vadd.f32 %v2034, %v2086
    %v2120 = vadd.f32 %v2035, %v2090
    %v2121 = vadd.f32 %v2036, %v2094
    %v2122 = vadd.f32 %v2037, %v2098
    %v2123 = vadd.f32 %v2038, %v2086
    %v2124 = vadd.f32 %v2039, %v2090
    %v2125 = vadd.f32 %v2040, %v2094
    %v2126 = vadd.f32 %v2041, %v2098
    %v2127 = vadd.f32 %v2042, %v2086
    %v2128 = vadd.f32 %v2043, %v2090
    %v2129 = vadd.f32 %v2044, %v2094
    %v2130 = vadd.f32 %v2045, %v2098
    %v2131 = vadd.f32 %v2046, %v2086
    %v2132 = vadd.f32 %v2047, %v2090
    %v2133 = vadd.f32 %v2048, %v2094
    %v2134 = vadd.f32 %v2049, %v2098
    %v2135 = vadd.f32 %v2050, %v2086
    %v2136 = vadd.f32 %v2051, %v2090
    %v2137 = vadd.f32 %v2052, %v2094
    %v2138 = vadd.f32 %v2053, %v2098
    %v2139 = vadd.f32 %v2054, %v2086
    %v2140 = vadd.f32 %v2055, %v2090
    %v2141 = vadd.f32 %v2056, %v2094
    %v2142 = vadd.f32 %v2057, %v2098
    %v2143 = vadd.f32 %v2058, %v2086
    %v2144 = vadd.f32 %v2059, %v2090
    %v2145 = vadd.f32 %v2060, %v2094
    %v2146 = vadd.f32 %v2061, %v2098
    %v2147 = vadd.f32 %v2062, %v2086
    %v2148 = vadd.f32 %v2063, %v2090
    %v2149 = vadd.f32 %v2064, %v2094
    %v2150 = vadd.f32 %v2065, %v2098
    %v2151 = vadd.f32 %v2066, %v2086
    %v2152 = vadd.f32 %v2067, %v2090
    %v2153 = vadd.f32 %v2068, %v2094
    %v2154 = vadd.f32 %v2069, %v2098
    %v2155 = vadd.f32 %v2070, %v2086
    %v2156 = vadd.f32 %v2071, %v2090
    %v2157 = vadd.f32 %v2072, %v2094
    %v2158 = vadd.f32 %v2073, %v2098
    %v2159 = vadd.f32 %v2074, %v2086
    %v2160 = vadd.f32 %v2075, %v2090
    %v2161 = vadd.f32 %v2076, %v2094
    %v2162 = vadd.f32 %v2077, %v2098
    %v2163 = vadd.f32 %v2078, %v2086
    %v2164 = vadd.f32 %v2079, %v2090
    %v2165 = vadd.f32 %v2080, %v2094
    %v2166 = vadd.f32 %v2081, %v2098
    %v2167 = vmax.f32 %v2103, 0.0
    %v2168 = vmax.f32 %v2104, 0.0
    %v2169 = vmax.f32 %v2105, 0.0
    %v2170 = vmax.f32 %v2106, 0.0
    %v2171 = vmax.f32 %v2107, 0.0
    %v2172 = vmax.f32 %v2108, 0.0
    %v2173 = vmax.f32 %v2109, 0.0
    %v2174 = vmax.f32 %v2110, 0.0
    %v2175 = vmax.f32 %v2111, 0.0
    %v2176 = vmax.f32 %v2112, 0.0
    %v2177 = vmax.f32 %v2113, 0.0
    %v2178 = vmax.f32 %v2114, 0.0
    %v2179 = vmax.f32 %v2115, 0.0
    %v2180 = vmax.f32 %v2116, 0.0
    %v2181 = vmax.f32 %v2117, 0.0
    %v2182 = vmax.f32 %v2118, 0.0
    %v2183 = vmax.f32 %v2119, 0.0
    %v2184 = vmax.f32 %v2120, 0.0
    %v2185 = vmax.f32 %v2121, 0.0
    %v2186 = vmax.f32 %v2122, 0.0
    %v2187 = vmax.f32 %v2123, 0.0
    %v2188 = vmax.f32 %v2124, 0.0
    %v2189 = vmax.f32 %v2125, 0.0
    %v2190 = vmax.f32 %v2126, 0.0
    %v2191 = vmax.f32 %v2127, 0.0
    %v2192 = vmax.f32 %v2128, 0.0
    %v2193 = vmax.f32 %v2129, 0.0
    %v2194 = vmax.f32 %v2130, 0.0
    %v2195 = vmax.f32 %v2131, 0.0
    %v2196 = vmax.f32 %v2132, 0.0
    %v2197 = vmax.f32 %v2133, 0.0
    %v2198 = vmax.f32 %v2134, 0.0
    %v2199 = vmax.f32 %v2135, 0.0
    %v2200 = vmax.f32 %v2136, 0.0
    %v2201 = vmax.f32 %v2137, 0.0
    %v2202 = vmax.f32 %v2138, 0.0
    %v2203 = vmax.f32 %v2139, 0.0
    %v2204 = vmax.f32 %v2140, 0.0
    %v2205 = vmax.f32 %v2141, 0.0
    %v2206 = vmax.f32 %v2142, 0.0
    %v2207 = vmax.f32 %v2143, 0.0
    %v2208 = vmax.f32 %v2144, 0.0
    %v2209 = vmax.f32 %v2145, 0.0
    %v2210 = vmax.f32 %v2146, 0.0
    %v2211 = vmax.f32 %v2147, 0.0
    %v2212 = vmax.f32 %v2148, 0.0
    %v2213 = vmax.f32 %v2149, 0.0
    %v2214 = vmax.f32 %v2150, 0.0
    %v2215 = vmax.f32 %v2151, 0.0
    %v2216 = vmax.f32 %v2152, 0.0
    %v2217 = vmax.f32 %v2153, 0.0
    %v2218 = vmax.f32 %v2154, 0.0
    %v2219 = vmax.f32 %v2155, 0.0
    %v2220 = vmax.f32 %v2156, 0.0
    %v2221 = vmax.f32 %v2157, 0.0
    %v2222 = vmax.f32 %v2158, 0.0
    %v2223 = vmax.f32 %v2159, 0.0
    %v2224 = vmax.f32 %v2160, 0.0
    %v2225 = vmax.f32 %v2161, 0.0
    %v2226 = vmax.f32 %v2162, 0.0
    %v2227 = vmax.f32 %v2163, 0.0
    %v2228 = vmax.f32 %v2164, 0.0
    %v2229 = vmax.f32 %v2165, 0.0
    %v2230 = vmax.f32 %v2166, 0.0
    %v2231 = vpack.c.bf16 %v2171, %v2167
    %v2232 = vpack.c.bf16 %v2172, %v2168
    %v2233 = vpack.c.bf16 %v2173, %v2169
    %v2234 = vpack.c.bf16 %v2174, %v2170
    %v2235 = vpack.c.bf16 %v2179, %v2175
    %v2236 = vpack.c.bf16 %v2180, %v2176
    %v2237 = vpack.c.bf16 %v2181, %v2177
    %v2238 = vpack.c.bf16 %v2182, %v2178
    %v2239 = vpack.c.bf16 %v2187, %v2183
    %v2240 = vpack.c.bf16 %v2188, %v2184
    %v2241 = vpack.c.bf16 %v2189, %v2185
    %v2242 = vpack.c.bf16 %v2190, %v2186
    %v2243 = vpack.c.bf16 %v2195, %v2191
    %v2244 = vpack.c.bf16 %v2196, %v2192
    %v2245 = vpack.c.bf16 %v2197, %v2193
    %v2246 = vpack.c.bf16 %v2198, %v2194
    %v2247 = vpack.c.bf16 %v2203, %v2199
    %v2248 = vpack.c.bf16 %v2204, %v2200
    %v2249 = vpack.c.bf16 %v2205, %v2201
    %v2250 = vpack.c.bf16 %v2206, %v2202
    %v2251 = vpack.c.bf16 %v2211, %v2207
    %v2252 = vpack.c.bf16 %v2212, %v2208
    %v2253 = vpack.c.bf16 %v2213, %v2209
    %v2254 = vpack.c.bf16 %v2214, %v2210
    %v2255 = vpack.c.bf16 %v2219, %v2215
    %v2256 = vpack.c.bf16 %v2220, %v2216
    %v2257 = vpack.c.bf16 %v2221, %v2217
    %v2258 = vpack.c.bf16 %v2222, %v2218
    %v2259 = vpack.c.bf16 %v2227, %v2223
    %v2260 = vpack.c.bf16 %v2228, %v2224
    %v2261 = vpack.c.bf16 %v2229, %v2225
    %v2262 = vpack.c.bf16 %v2230, %v2226
    %v2263 = vld [vmem:[#allocation7] sm:$0xff]
    %v2264 = vld [vmem:[#allocation7 + $0x8] sm:$0xff]
    %v2265 = vld [vmem:[#allocation7 + $0x10] sm:$0xff]
    %v2266 = vld [vmem:[#allocation7 + $0x18] sm:$0xff]
    %v2267 = vld [vmem:[#allocation7 + $0x20] sm:$0xff]
    %v2268 = vld [vmem:[#allocation7 + $0x28] sm:$0xff]
    %v2269 = vld [vmem:[#allocation7 + $0x30] sm:$0xff]
    %v2270 = vld [vmem:[#allocation7 + $0x38] sm:$0xff]
    %v2271 = vld [vmem:[#allocation7 + $0x40] sm:$0xff]
    %v2272 = vld [vmem:[#allocation7 + $0x48] sm:$0xff]
    %v2273 = vld [vmem:[#allocation7 + $0x50] sm:$0xff]
    %v2274 = vld [vmem:[#allocation7 + $0x58] sm:$0xff]
    %v2275 = vld [vmem:[#allocation7 + $0x60] sm:$0xff]
    %v2276 = vld [vmem:[#allocation7 + $0x68] sm:$0xff]
    %v2277 = vld [vmem:[#allocation7 + $0x70] sm:$0xff]
    %v2278 = vld [vmem:[#allocation7 + $0x78] sm:$0xff]
    %v2279 = vld [vmem:[#allocation7 + $0x80] sm:$0xff]
    %v2280 = vld [vmem:[#allocation7 + $0x88] sm:$0xff]
    %v2281 = vld [vmem:[#allocation7 + $0x90] sm:$0xff]
    %v2282 = vld [vmem:[#allocation7 + $0x98] sm:$0xff]
    %v2283 = vld [vmem:[#allocation7 + $0xa0] sm:$0xff]
    %v2284 = vld [vmem:[#allocation7 + $0xa8] sm:$0xff]
    %v2285 = vld [vmem:[#allocation7 + $0xb0] sm:$0xff]
    %v2286 = vld [vmem:[#allocation7 + $0xb8] sm:$0xff]
    %v2287 = vld [vmem:[#allocation7 + $0xc0] sm:$0xff]
    %v2288 = vld [vmem:[#allocation7 + $0xc8] sm:$0xff]
    %v2289 = vld [vmem:[#allocation7 + $0xd0] sm:$0xff]
    %v2290 = vld [vmem:[#allocation7 + $0xd8] sm:$0xff]
    %v2291 = vld [vmem:[#allocation7 + $0xe0] sm:$0xff]
    %v2292 = vld [vmem:[#allocation7 + $0xe8] sm:$0xff]
    %v2293 = vld [vmem:[#allocation7 + $0xf0] sm:$0xff]
    %v2294 = vld [vmem:[#allocation7 + $0xf8] sm:$0xff]
    %v2295 = vld [vmem:[#allocation7 + $0x100] sm:$0xff]
    %v2296 = vld [vmem:[#allocation7 + $0x108] sm:$0xff]
    %v2297 = vld [vmem:[#allocation7 + $0x110] sm:$0xff]
    %v2298 = vld [vmem:[#allocation7 + $0x118] sm:$0xff]
    %v2299 = vld [vmem:[#allocation7 + $0x120] sm:$0xff]
    %v2300 = vld [vmem:[#allocation7 + $0x128] sm:$0xff]
    %v2301 = vld [vmem:[#allocation7 + $0x130] sm:$0xff]
    %v2302 = vld [vmem:[#allocation7 + $0x138] sm:$0xff]
    %v2303 = vld [vmem:[#allocation7 + $0x140] sm:$0xff]
    %v2304 = vld [vmem:[#allocation7 + $0x148] sm:$0xff]
    %v2305 = vld [vmem:[#allocation7 + $0x150] sm:$0xff]
    %v2306 = vld [vmem:[#allocation7 + $0x158] sm:$0xff]
    %v2307 = vld [vmem:[#allocation7 + $0x160] sm:$0xff]
    %v2308 = vld [vmem:[#allocation7 + $0x168] sm:$0xff]
    %v2309 = vld [vmem:[#allocation7 + $0x170] sm:$0xff]
    %v2310 = vld [vmem:[#allocation7 + $0x178] sm:$0xff]
    %v2311 = vld [vmem:[#allocation7 + $0x180] sm:$0xff]
    %v2312 = vld [vmem:[#allocation7 + $0x188] sm:$0xff]
    %v2313 = vld [vmem:[#allocation7 + $0x190] sm:$0xff]
    %v2314 = vld [vmem:[#allocation7 + $0x198] sm:$0xff]
    %v2315 = vld [vmem:[#allocation7 + $0x1a0] sm:$0xff]
    %v2316 = vld [vmem:[#allocation7 + $0x1a8] sm:$0xff]
    %v2317 = vld [vmem:[#allocation7 + $0x1b0] sm:$0xff]
    %v2318 = vld [vmem:[#allocation7 + $0x1b8] sm:$0xff]
    %v2319 = vld [vmem:[#allocation7 + $0x1c0] sm:$0xff]
    %v2320 = vld [vmem:[#allocation7 + $0x1c8] sm:$0xff]
    %v2321 = vld [vmem:[#allocation7 + $0x1d0] sm:$0xff]
    %v2322 = vld [vmem:[#allocation7 + $0x1d8] sm:$0xff]
    %v2323 = vld [vmem:[#allocation7 + $0x1e0] sm:$0xff]
    %v2324 = vld [vmem:[#allocation7 + $0x1e8] sm:$0xff]
    %v2325 = vld [vmem:[#allocation7 + $0x1f0] sm:$0xff]
    %v2326 = vld [vmem:[#allocation7 + $0x1f8] sm:$0xff]
    %v2327 = vld [vmem:[#allocation7 + $0x200] sm:$0xff]
    %v2328 = vld [vmem:[#allocation7 + $0x208] sm:$0xff]
    %v2329 = vld [vmem:[#allocation7 + $0x210] sm:$0xff]
    %v2330 = vld [vmem:[#allocation7 + $0x218] sm:$0xff]
    %v2331 = vld [vmem:[#allocation7 + $0x220] sm:$0xff]
    %v2332 = vld [vmem:[#allocation7 + $0x228] sm:$0xff]
    %v2333 = vld [vmem:[#allocation7 + $0x230] sm:$0xff]
    %v2334 = vld [vmem:[#allocation7 + $0x238] sm:$0xff]
    %v2335 = vld [vmem:[#allocation7 + $0x240] sm:$0xff]
    %v2336 = vld [vmem:[#allocation7 + $0x248] sm:$0xff]
    %v2337 = vld [vmem:[#allocation7 + $0x250] sm:$0xff]
    %v2338 = vld [vmem:[#allocation7 + $0x258] sm:$0xff]
    %v2339 = vld [vmem:[#allocation7 + $0x260] sm:$0xff]
    %v2340 = vld [vmem:[#allocation7 + $0x268] sm:$0xff]
    %v2341 = vld [vmem:[#allocation7 + $0x270] sm:$0xff]
    %v2342 = vld [vmem:[#allocation7 + $0x278] sm:$0xff]
    %v2343 = vld [vmem:[#allocation7 + $0x280] sm:$0xff]
    %v2344 = vld [vmem:[#allocation7 + $0x288] sm:$0xff]
    %v2345 = vld [vmem:[#allocation7 + $0x290] sm:$0xff]
    %v2346 = vld [vmem:[#allocation7 + $0x298] sm:$0xff]
    %v2347 = vld [vmem:[#allocation7 + $0x2a0] sm:$0xff]
    %v2348 = vld [vmem:[#allocation7 + $0x2a8] sm:$0xff]
    %v2349 = vld [vmem:[#allocation7 + $0x2b0] sm:$0xff]
    %v2350 = vld [vmem:[#allocation7 + $0x2b8] sm:$0xff]
    %v2351 = vld [vmem:[#allocation7 + $0x2c0] sm:$0xff]
    %v2352 = vld [vmem:[#allocation7 + $0x2c8] sm:$0xff]
    %v2353 = vld [vmem:[#allocation7 + $0x2d0] sm:$0xff]
    %v2354 = vld [vmem:[#allocation7 + $0x2d8] sm:$0xff]
    %v2355 = vld [vmem:[#allocation7 + $0x2e0] sm:$0xff]
    %v2356 = vld [vmem:[#allocation7 + $0x2e8] sm:$0xff]
    %v2357 = vld [vmem:[#allocation7 + $0x2f0] sm:$0xff]
    %v2358 = vld [vmem:[#allocation7 + $0x2f8] sm:$0xff]
    %v2359 = vld [vmem:[#allocation7 + $0x300] sm:$0xff]
    %v2360 = vld [vmem:[#allocation7 + $0x308] sm:$0xff]
    %v2361 = vld [vmem:[#allocation7 + $0x310] sm:$0xff]
    %v2362 = vld [vmem:[#allocation7 + $0x318] sm:$0xff]
    %v2363 = vld [vmem:[#allocation7 + $0x320] sm:$0xff]
    %v2364 = vld [vmem:[#allocation7 + $0x328] sm:$0xff]
    %v2365 = vld [vmem:[#allocation7 + $0x330] sm:$0xff]
    %v2366 = vld [vmem:[#allocation7 + $0x338] sm:$0xff]
    %v2367 = vld [vmem:[#allocation7 + $0x340] sm:$0xff]
    %v2368 = vld [vmem:[#allocation7 + $0x348] sm:$0xff]
    %v2369 = vld [vmem:[#allocation7 + $0x350] sm:$0xff]
    %v2370 = vld [vmem:[#allocation7 + $0x358] sm:$0xff]
    %v2371 = vld [vmem:[#allocation7 + $0x360] sm:$0xff]
    %v2372 = vld [vmem:[#allocation7 + $0x368] sm:$0xff]
    %v2373 = vld [vmem:[#allocation7 + $0x370] sm:$0xff]
    %v2374 = vld [vmem:[#allocation7 + $0x378] sm:$0xff]
    %v2375 = vld [vmem:[#allocation7 + $0x380] sm:$0xff]
    %v2376 = vld [vmem:[#allocation7 + $0x388] sm:$0xff]
    %v2377 = vld [vmem:[#allocation7 + $0x390] sm:$0xff]
    %v2378 = vld [vmem:[#allocation7 + $0x398] sm:$0xff]
    %v2379 = vld [vmem:[#allocation7 + $0x3a0] sm:$0xff]
    %v2380 = vld [vmem:[#allocation7 + $0x3a8] sm:$0xff]
    %v2381 = vld [vmem:[#allocation7 + $0x3b0] sm:$0xff]
    %v2382 = vld [vmem:[#allocation7 + $0x3b8] sm:$0xff]
    %v2383 = vld [vmem:[#allocation7 + $0x3c0] sm:$0xff]
    %v2384 = vld [vmem:[#allocation7 + $0x3c8] sm:$0xff]
    %v2385 = vld [vmem:[#allocation7 + $0x3d0] sm:$0xff]
    %v2386 = vld [vmem:[#allocation7 + $0x3d8] sm:$0xff]
    %v2387 = vld [vmem:[#allocation7 + $0x3e0] sm:$0xff]
    %v2388 = vld [vmem:[#allocation7 + $0x3e8] sm:$0xff]
    %v2389 = vld [vmem:[#allocation7 + $0x3f0] sm:$0xff]
    %v2390 = vld [vmem:[#allocation7 + $0x3f8] sm:$0xff]
    %v2391 = vld [vmem:[#allocation7 + $0x400] sm:$0xff]
    %v2392 = vld [vmem:[#allocation7 + $0x408] sm:$0xff]
    %v2393 = vld [vmem:[#allocation7 + $0x410] sm:$0xff]
    %v2394 = vld [vmem:[#allocation7 + $0x418] sm:$0xff]
    %v2395 = vld [vmem:[#allocation7 + $0x420] sm:$0xff]
    %v2396 = vld [vmem:[#allocation7 + $0x428] sm:$0xff]
    %v2397 = vld [vmem:[#allocation7 + $0x430] sm:$0xff]
    %v2398 = vld [vmem:[#allocation7 + $0x438] sm:$0xff]
    %v2399 = vld [vmem:[#allocation7 + $0x440] sm:$0xff]
    %v2400 = vld [vmem:[#allocation7 + $0x448] sm:$0xff]
    %v2401 = vld [vmem:[#allocation7 + $0x450] sm:$0xff]
    %v2402 = vld [vmem:[#allocation7 + $0x458] sm:$0xff]
    %v2403 = vld [vmem:[#allocation7 + $0x460] sm:$0xff]
    %v2404 = vld [vmem:[#allocation7 + $0x468] sm:$0xff]
    %v2405 = vld [vmem:[#allocation7 + $0x470] sm:$0xff]
    %v2406 = vld [vmem:[#allocation7 + $0x478] sm:$0xff]
    %v2407 = vld [vmem:[#allocation7 + $0x480] sm:$0xff]
    %v2408 = vld [vmem:[#allocation7 + $0x488] sm:$0xff]
    %v2409 = vld [vmem:[#allocation7 + $0x490] sm:$0xff]
    %v2410 = vld [vmem:[#allocation7 + $0x498] sm:$0xff]
    %v2411 = vld [vmem:[#allocation7 + $0x4a0] sm:$0xff]
    %v2412 = vld [vmem:[#allocation7 + $0x4a8] sm:$0xff]
    %v2413 = vld [vmem:[#allocation7 + $0x4b0] sm:$0xff]
    %v2414 = vld [vmem:[#allocation7 + $0x4b8] sm:$0xff]
    %v2415 = vld [vmem:[#allocation7 + $0x4c0] sm:$0xff]
    %v2416 = vld [vmem:[#allocation7 + $0x4c8] sm:$0xff]
    %v2417 = vld [vmem:[#allocation7 + $0x4d0] sm:$0xff]
    %v2418 = vld [vmem:[#allocation7 + $0x4d8] sm:$0xff]
    %v2419 = vld [vmem:[#allocation7 + $0x4e0] sm:$0xff]
    %v2420 = vld [vmem:[#allocation7 + $0x4e8] sm:$0xff]
    %v2421 = vld [vmem:[#allocation7 + $0x4f0] sm:$0xff]
    %v2422 = vld [vmem:[#allocation7 + $0x4f8] sm:$0xff]
    %v2423 = vld [vmem:[#allocation7 + $0x500] sm:$0xff]
    %v2424 = vld [vmem:[#allocation7 + $0x508] sm:$0xff]
    %v2425 = vld [vmem:[#allocation7 + $0x510] sm:$0xff]
    %v2426 = vld [vmem:[#allocation7 + $0x518] sm:$0xff]
    %v2427 = vld [vmem:[#allocation7 + $0x520] sm:$0xff]
    %v2428 = vld [vmem:[#allocation7 + $0x528] sm:$0xff]
    %v2429 = vld [vmem:[#allocation7 + $0x530] sm:$0xff]
    %v2430 = vld [vmem:[#allocation7 + $0x538] sm:$0xff]
    %v2431 = vld [vmem:[#allocation7 + $0x540] sm:$0xff]
    %v2432 = vld [vmem:[#allocation7 + $0x548] sm:$0xff]
    %v2433 = vld [vmem:[#allocation7 + $0x550] sm:$0xff]
    %v2434 = vld [vmem:[#allocation7 + $0x558] sm:$0xff]
    %v2435 = vld [vmem:[#allocation7 + $0x560] sm:$0xff]
    %v2436 = vld [vmem:[#allocation7 + $0x568] sm:$0xff]
    %v2437 = vld [vmem:[#allocation7 + $0x570] sm:$0xff]
    %v2438 = vld [vmem:[#allocation7 + $0x578] sm:$0xff]
    %v2439 = vld [vmem:[#allocation7 + $0x580] sm:$0xff]
    %v2440 = vld [vmem:[#allocation7 + $0x588] sm:$0xff]
    %v2441 = vld [vmem:[#allocation7 + $0x590] sm:$0xff]
    %v2442 = vld [vmem:[#allocation7 + $0x598] sm:$0xff]
    %v2443 = vld [vmem:[#allocation7 + $0x5a0] sm:$0xff]
    %v2444 = vld [vmem:[#allocation7 + $0x5a8] sm:$0xff]
    %v2445 = vld [vmem:[#allocation7 + $0x5b0] sm:$0xff]
    %v2446 = vld [vmem:[#allocation7 + $0x5b8] sm:$0xff]
    %v2447 = vld [vmem:[#allocation7 + $0x5c0] sm:$0xff]
    %v2448 = vld [vmem:[#allocation7 + $0x5c8] sm:$0xff]
    %v2449 = vld [vmem:[#allocation7 + $0x5d0] sm:$0xff]
    %v2450 = vld [vmem:[#allocation7 + $0x5d8] sm:$0xff]
    %v2451 = vld [vmem:[#allocation7 + $0x5e0] sm:$0xff]
    %v2452 = vld [vmem:[#allocation7 + $0x5e8] sm:$0xff]
    %v2453 = vld [vmem:[#allocation7 + $0x5f0] sm:$0xff]
    %v2454 = vld [vmem:[#allocation7 + $0x5f8] sm:$0xff]
    %v2455 = vld [vmem:[#allocation7 + $0x600] sm:$0xff]
    %v2456 = vld [vmem:[#allocation7 + $0x608] sm:$0xff]
    %v2457 = vld [vmem:[#allocation7 + $0x610] sm:$0xff]
    %v2458 = vld [vmem:[#allocation7 + $0x618] sm:$0xff]
    %v2459 = vld [vmem:[#allocation7 + $0x620] sm:$0xff]
    %v2460 = vld [vmem:[#allocation7 + $0x628] sm:$0xff]
    %v2461 = vld [vmem:[#allocation7 + $0x630] sm:$0xff]
    %v2462 = vld [vmem:[#allocation7 + $0x638] sm:$0xff]
    %v2463 = vld [vmem:[#allocation7 + $0x640] sm:$0xff]
    %v2464 = vld [vmem:[#allocation7 + $0x648] sm:$0xff]
    %v2465 = vld [vmem:[#allocation7 + $0x650] sm:$0xff]
    %v2466 = vld [vmem:[#allocation7 + $0x658] sm:$0xff]
    %v2467 = vld [vmem:[#allocation7 + $0x660] sm:$0xff]
    %v2468 = vld [vmem:[#allocation7 + $0x668] sm:$0xff]
    %v2469 = vld [vmem:[#allocation7 + $0x670] sm:$0xff]
    %v2470 = vld [vmem:[#allocation7 + $0x678] sm:$0xff]
    %v2471 = vld [vmem:[#allocation7 + $0x680] sm:$0xff]
    %v2472 = vld [vmem:[#allocation7 + $0x688] sm:$0xff]
    %v2473 = vld [vmem:[#allocation7 + $0x690] sm:$0xff]
    %v2474 = vld [vmem:[#allocation7 + $0x698] sm:$0xff]
    %v2475 = vld [vmem:[#allocation7 + $0x6a0] sm:$0xff]
    %v2476 = vld [vmem:[#allocation7 + $0x6a8] sm:$0xff]
    %v2477 = vld [vmem:[#allocation7 + $0x6b0] sm:$0xff]
    %v2478 = vld [vmem:[#allocation7 + $0x6b8] sm:$0xff]
    %v2479 = vld [vmem:[#allocation7 + $0x6c0] sm:$0xff]
    %v2480 = vld [vmem:[#allocation7 + $0x6c8] sm:$0xff]
    %v2481 = vld [vmem:[#allocation7 + $0x6d0] sm:$0xff]
    %v2482 = vld [vmem:[#allocation7 + $0x6d8] sm:$0xff]
    %v2483 = vld [vmem:[#allocation7 + $0x6e0] sm:$0xff]
    %v2484 = vld [vmem:[#allocation7 + $0x6e8] sm:$0xff]
    %v2485 = vld [vmem:[#allocation7 + $0x6f0] sm:$0xff]
    %v2486 = vld [vmem:[#allocation7 + $0x6f8] sm:$0xff]
    %v2487 = vld [vmem:[#allocation7 + $0x700] sm:$0xff]
    %v2488 = vld [vmem:[#allocation7 + $0x708] sm:$0xff]
    %v2489 = vld [vmem:[#allocation7 + $0x710] sm:$0xff]
    %v2490 = vld [vmem:[#allocation7 + $0x718] sm:$0xff]
    %v2491 = vld [vmem:[#allocation7 + $0x720] sm:$0xff]
    %v2492 = vld [vmem:[#allocation7 + $0x728] sm:$0xff]
    %v2493 = vld [vmem:[#allocation7 + $0x730] sm:$0xff]
    %v2494 = vld [vmem:[#allocation7 + $0x738] sm:$0xff]
    %v2495 = vld [vmem:[#allocation7 + $0x740] sm:$0xff]
    %v2496 = vld [vmem:[#allocation7 + $0x748] sm:$0xff]
    %v2497 = vld [vmem:[#allocation7 + $0x750] sm:$0xff]
    %v2498 = vld [vmem:[#allocation7 + $0x758] sm:$0xff]
    %v2499 = vld [vmem:[#allocation7 + $0x760] sm:$0xff]
    %v2500 = vld [vmem:[#allocation7 + $0x768] sm:$0xff]
    %v2501 = vld [vmem:[#allocation7 + $0x770] sm:$0xff]
    %v2502 = vld [vmem:[#allocation7 + $0x778] sm:$0xff]
    %v2503 = vld [vmem:[#allocation7 + $0x780] sm:$0xff]
    %v2504 = vld [vmem:[#allocation7 + $0x788] sm:$0xff]
    %v2505 = vld [vmem:[#allocation7 + $0x790] sm:$0xff]
    %v2506 = vld [vmem:[#allocation7 + $0x798] sm:$0xff]
    %v2507 = vld [vmem:[#allocation7 + $0x7a0] sm:$0xff]
    %v2508 = vld [vmem:[#allocation7 + $0x7a8] sm:$0xff]
    %v2509 = vld [vmem:[#allocation7 + $0x7b0] sm:$0xff]
    %v2510 = vld [vmem:[#allocation7 + $0x7b8] sm:$0xff]
    %v2511 = vld [vmem:[#allocation7 + $0x7c0] sm:$0xff]
    %v2512 = vld [vmem:[#allocation7 + $0x7c8] sm:$0xff]
    %v2513 = vld [vmem:[#allocation7 + $0x7d0] sm:$0xff]
    %v2514 = vld [vmem:[#allocation7 + $0x7d8] sm:$0xff]
    %v2515 = vld [vmem:[#allocation7 + $0x7e0] sm:$0xff]
    %v2516 = vld [vmem:[#allocation7 + $0x7e8] sm:$0xff]
    %v2517 = vld [vmem:[#allocation7 + $0x7f0] sm:$0xff]
    %v2518 = vld [vmem:[#allocation7 + $0x7f8] sm:$0xff]
    %v2775 = vunpack.c.l.b16 %v2263
    %v2776 = vunpack.c.h.b16 %v2263
    %v2777 = vunpack.c.l.b16 %v2264
    %v2778 = vunpack.c.h.b16 %v2264
    %v2779 = vunpack.c.l.b16 %v2265
    %v2780 = vunpack.c.h.b16 %v2265
    %v2781 = vunpack.c.l.b16 %v2266
    %v2782 = vunpack.c.h.b16 %v2266
    %v2783 = vunpack.c.l.b16 %v2267
    %v2784 = vunpack.c.h.b16 %v2267
    %v2785 = vunpack.c.l.b16 %v2268
    %v2786 = vunpack.c.h.b16 %v2268
    %v2787 = vunpack.c.l.b16 %v2269
    %v2788 = vunpack.c.h.b16 %v2269
    %v2789 = vunpack.c.l.b16 %v2270
    %v2790 = vunpack.c.h.b16 %v2270
    %v2791 = vunpack.c.l.b16 %v2271
    %v2792 = vunpack.c.h.b16 %v2271
    %v2793 = vunpack.c.l.b16 %v2272
    %v2794 = vunpack.c.h.b16 %v2272
    %v2795 = vunpack.c.l.b16 %v2273
    %v2796 = vunpack.c.h.b16 %v2273
    %v2797 = vunpack.c.l.b16 %v2274
    %v2798 = vunpack.c.h.b16 %v2274
    %v2799 = vunpack.c.l.b16 %v2275
    %v2800 = vunpack.c.h.b16 %v2275
    %v2801 = vunpack.c.l.b16 %v2276
    %v2802 = vunpack.c.h.b16 %v2276
    %v2803 = vunpack.c.l.b16 %v2277
    %v2804 = vunpack.c.h.b16 %v2277
    %v2805 = vunpack.c.l.b16 %v2278
    %v2806 = vunpack.c.h.b16 %v2278
    %v2807 = vunpack.c.l.b16 %v2279
    %v2808 = vunpack.c.h.b16 %v2279
    %v2809 = vunpack.c.l.b16 %v2280
    %v2810 = vunpack.c.h.b16 %v2280
    %v2811 = vunpack.c.l.b16 %v2281
    %v2812 = vunpack.c.h.b16 %v2281
    %v2813 = vunpack.c.l.b16 %v2282
    %v2814 = vunpack.c.h.b16 %v2282
    %v2815 = vunpack.c.l.b16 %v2283
    %v2816 = vunpack.c.h.b16 %v2283
    %v2817 = vunpack.c.l.b16 %v2284
    %v2818 = vunpack.c.h.b16 %v2284
    %v2819 = vunpack.c.l.b16 %v2285
    %v2820 = vunpack.c.h.b16 %v2285
    %v2821 = vunpack.c.l.b16 %v2286
    %v2822 = vunpack.c.h.b16 %v2286
    %v2823 = vunpack.c.l.b16 %v2287
    %v2824 = vunpack.c.h.b16 %v2287
    %v2825 = vunpack.c.l.b16 %v2288
    %v2826 = vunpack.c.h.b16 %v2288
    %v2827 = vunpack.c.l.b16 %v2289
    %v2828 = vunpack.c.h.b16 %v2289
    %v2829 = vunpack.c.l.b16 %v2290
    %v2830 = vunpack.c.h.b16 %v2290
    %v2831 = vunpack.c.l.b16 %v2291
    %v2832 = vunpack.c.h.b16 %v2291
    %v2833 = vunpack.c.l.b16 %v2292
    %v2834 = vunpack.c.h.b16 %v2292
    %v2835 = vunpack.c.l.b16 %v2293
    %v2836 = vunpack.c.h.b16 %v2293
    %v2837 = vunpack.c.l.b16 %v2294
    %v2838 = vunpack.c.h.b16 %v2294
    %v2839 = vunpack.c.l.b16 %v2295
    %v2840 = vunpack.c.h.b16 %v2295
    %v2841 = vunpack.c.l.b16 %v2296
    %v2842 = vunpack.c.h.b16 %v2296
    %v2843 = vunpack.c.l.b16 %v2297
    %v2844 = vunpack.c.h.b16 %v2297
    %v2845 = vunpack.c.l.b16 %v2298
    %v2846 = vunpack.c.h.b16 %v2298
    %v2847 = vunpack.c.l.b16 %v2299
    %v2848 = vunpack.c.h.b16 %v2299
    %v2849 = vunpack.c.l.b16 %v2300
    %v2850 = vunpack.c.h.b16 %v2300
    %v2851 = vunpack.c.l.b16 %v2301
    %v2852 = vunpack.c.h.b16 %v2301
    %v2853 = vunpack.c.l.b16 %v2302
    %v2854 = vunpack.c.h.b16 %v2302
    %v2855 = vunpack.c.l.b16 %v2303
    %v2856 = vunpack.c.h.b16 %v2303
    %v2857 = vunpack.c.l.b16 %v2304
    %v2858 = vunpack.c.h.b16 %v2304
    %v2859 = vunpack.c.l.b16 %v2305
    %v2860 = vunpack.c.h.b16 %v2305
    %v2861 = vunpack.c.l.b16 %v2306
    %v2862 = vunpack.c.h.b16 %v2306
    %v2863 = vunpack.c.l.b16 %v2307
    %v2864 = vunpack.c.h.b16 %v2307
    %v2865 = vunpack.c.l.b16 %v2308
    %v2866 = vunpack.c.h.b16 %v2308
    %v2867 = vunpack.c.l.b16 %v2309
    %v2868 = vunpack.c.h.b16 %v2309
    %v2869 = vunpack.c.l.b16 %v2310
    %v2870 = vunpack.c.h.b16 %v2310
    %v2871 = vunpack.c.l.b16 %v2311
    %v2872 = vunpack.c.h.b16 %v2311
    %v2873 = vunpack.c.l.b16 %v2312
    %v2874 = vunpack.c.h.b16 %v2312
    %v2875 = vunpack.c.l.b16 %v2313
    %v2876 = vunpack.c.h.b16 %v2313
    %v2877 = vunpack.c.l.b16 %v2314
    %v2878 = vunpack.c.h.b16 %v2314
    %v2879 = vunpack.c.l.b16 %v2315
    %v2880 = vunpack.c.h.b16 %v2315
    %v2881 = vunpack.c.l.b16 %v2316
    %v2882 = vunpack.c.h.b16 %v2316
    %v2883 = vunpack.c.l.b16 %v2317
    %v2884 = vunpack.c.h.b16 %v2317
    %v2885 = vunpack.c.l.b16 %v2318
    %v2886 = vunpack.c.h.b16 %v2318
    %v2887 = vunpack.c.l.b16 %v2319
    %v2888 = vunpack.c.h.b16 %v2319
    %v2889 = vunpack.c.l.b16 %v2320
    %v2890 = vunpack.c.h.b16 %v2320
    %v2891 = vunpack.c.l.b16 %v2321
    %v2892 = vunpack.c.h.b16 %v2321
    %v2893 = vunpack.c.l.b16 %v2322
    %v2894 = vunpack.c.h.b16 %v2322
    %v2895 = vunpack.c.l.b16 %v2323
    %v2896 = vunpack.c.h.b16 %v2323
    %v2897 = vunpack.c.l.b16 %v2324
    %v2898 = vunpack.c.h.b16 %v2324
    %v2899 = vunpack.c.l.b16 %v2325
    %v2900 = vunpack.c.h.b16 %v2325
    %v2901 = vunpack.c.l.b16 %v2326
    %v2902 = vunpack.c.h.b16 %v2326
    %v2903 = vunpack.c.l.b16 %v2327
    %v2904 = vunpack.c.h.b16 %v2327
    %v2905 = vunpack.c.l.b16 %v2328
    %v2906 = vunpack.c.h.b16 %v2328
    %v2907 = vunpack.c.l.b16 %v2329
    %v2908 = vunpack.c.h.b16 %v2329
    %v2909 = vunpack.c.l.b16 %v2330
    %v2910 = vunpack.c.h.b16 %v2330
    %v2911 = vunpack.c.l.b16 %v2331
    %v2912 = vunpack.c.h.b16 %v2331
    %v2913 = vunpack.c.l.b16 %v2332
    %v2914 = vunpack.c.h.b16 %v2332
    %v2915 = vunpack.c.l.b16 %v2333
    %v2916 = vunpack.c.h.b16 %v2333
    %v2917 = vunpack.c.l.b16 %v2334
    %v2918 = vunpack.c.h.b16 %v2334
    %v2919 = vunpack.c.l.b16 %v2335
    %v2920 = vunpack.c.h.b16 %v2335
    %v2921 = vunpack.c.l.b16 %v2336
    %v2922 = vunpack.c.h.b16 %v2336
    %v2923 = vunpack.c.l.b16 %v2337
    %v2924 = vunpack.c.h.b16 %v2337
    %v2925 = vunpack.c.l.b16 %v2338
    %v2926 = vunpack.c.h.b16 %v2338
    %v2927 = vunpack.c.l.b16 %v2339
    %v2928 = vunpack.c.h.b16 %v2339
    %v2929 = vunpack.c.l.b16 %v2340
    %v2930 = vunpack.c.h.b16 %v2340
    %v2931 = vunpack.c.l.b16 %v2341
    %v2932 = vunpack.c.h.b16 %v2341
    %v2933 = vunpack.c.l.b16 %v2342
    %v2934 = vunpack.c.h.b16 %v2342
    %v2935 = vunpack.c.l.b16 %v2343
    %v2936 = vunpack.c.h.b16 %v2343
    %v2937 = vunpack.c.l.b16 %v2344
    %v2938 = vunpack.c.h.b16 %v2344
    %v2939 = vunpack.c.l.b16 %v2345
    %v2940 = vunpack.c.h.b16 %v2345
    %v2941 = vunpack.c.l.b16 %v2346
    %v2942 = vunpack.c.h.b16 %v2346
    %v2943 = vunpack.c.l.b16 %v2347
    %v2944 = vunpack.c.h.b16 %v2347
    %v2945 = vunpack.c.l.b16 %v2348
    %v2946 = vunpack.c.h.b16 %v2348
    %v2947 = vunpack.c.l.b16 %v2349
    %v2948 = vunpack.c.h.b16 %v2349
    %v2949 = vunpack.c.l.b16 %v2350
    %v2950 = vunpack.c.h.b16 %v2350
    %v2951 = vunpack.c.l.b16 %v2351
    %v2952 = vunpack.c.h.b16 %v2351
    %v2953 = vunpack.c.l.b16 %v2352
    %v2954 = vunpack.c.h.b16 %v2352
    %v2955 = vunpack.c.l.b16 %v2353
    %v2956 = vunpack.c.h.b16 %v2353
    %v2957 = vunpack.c.l.b16 %v2354
    %v2958 = vunpack.c.h.b16 %v2354
    %v2959 = vunpack.c.l.b16 %v2355
    %v2960 = vunpack.c.h.b16 %v2355
    %v2961 = vunpack.c.l.b16 %v2356
    %v2962 = vunpack.c.h.b16 %v2356
    %v2963 = vunpack.c.l.b16 %v2357
    %v2964 = vunpack.c.h.b16 %v2357
    %v2965 = vunpack.c.l.b16 %v2358
    %v2966 = vunpack.c.h.b16 %v2358
    %v2967 = vunpack.c.l.b16 %v2359
    %v2968 = vunpack.c.h.b16 %v2359
    %v2969 = vunpack.c.l.b16 %v2360
    %v2970 = vunpack.c.h.b16 %v2360
    %v2971 = vunpack.c.l.b16 %v2361
    %v2972 = vunpack.c.h.b16 %v2361
    %v2973 = vunpack.c.l.b16 %v2362
    %v2974 = vunpack.c.h.b16 %v2362
    %v2975 = vunpack.c.l.b16 %v2363
    %v2976 = vunpack.c.h.b16 %v2363
    %v2977 = vunpack.c.l.b16 %v2364
    %v2978 = vunpack.c.h.b16 %v2364
    %v2979 = vunpack.c.l.b16 %v2365
    %v2980 = vunpack.c.h.b16 %v2365
    %v2981 = vunpack.c.l.b16 %v2366
    %v2982 = vunpack.c.h.b16 %v2366
    %v2983 = vunpack.c.l.b16 %v2367
    %v2984 = vunpack.c.h.b16 %v2367
    %v2985 = vunpack.c.l.b16 %v2368
    %v2986 = vunpack.c.h.b16 %v2368
    %v2987 = vunpack.c.l.b16 %v2369
    %v2988 = vunpack.c.h.b16 %v2369
    %v2989 = vunpack.c.l.b16 %v2370
    %v2990 = vunpack.c.h.b16 %v2370
    %v2991 = vunpack.c.l.b16 %v2371
    %v2992 = vunpack.c.h.b16 %v2371
    %v2993 = vunpack.c.l.b16 %v2372
    %v2994 = vunpack.c.h.b16 %v2372
    %v2995 = vunpack.c.l.b16 %v2373
    %v2996 = vunpack.c.h.b16 %v2373
    %v2997 = vunpack.c.l.b16 %v2374
    %v2998 = vunpack.c.h.b16 %v2374
    %v2999 = vunpack.c.l.b16 %v2375
    %v3000 = vunpack.c.h.b16 %v2375
    %v3001 = vunpack.c.l.b16 %v2376
    %v3002 = vunpack.c.h.b16 %v2376
    %v3003 = vunpack.c.l.b16 %v2377
    %v3004 = vunpack.c.h.b16 %v2377
    %v3005 = vunpack.c.l.b16 %v2378
    %v3006 = vunpack.c.h.b16 %v2378
    %v3007 = vunpack.c.l.b16 %v2379
    %v3008 = vunpack.c.h.b16 %v2379
    %v3009 = vunpack.c.l.b16 %v2380
    %v3010 = vunpack.c.h.b16 %v2380
    %v3011 = vunpack.c.l.b16 %v2381
    %v3012 = vunpack.c.h.b16 %v2381
    %v3013 = vunpack.c.l.b16 %v2382
    %v3014 = vunpack.c.h.b16 %v2382
    %v3015 = vunpack.c.l.b16 %v2383
    %v3016 = vunpack.c.h.b16 %v2383
    %v3017 = vunpack.c.l.b16 %v2384
    %v3018 = vunpack.c.h.b16 %v2384
    %v3019 = vunpack.c.l.b16 %v2385
    %v3020 = vunpack.c.h.b16 %v2385
    %v3021 = vunpack.c.l.b16 %v2386
    %v3022 = vunpack.c.h.b16 %v2386
    %v3023 = vunpack.c.l.b16 %v2387
    %v3024 = vunpack.c.h.b16 %v2387
    %v3025 = vunpack.c.l.b16 %v2388
    %v3026 = vunpack.c.h.b16 %v2388
    %v3027 = vunpack.c.l.b16 %v2389
    %v3028 = vunpack.c.h.b16 %v2389
    %v3029 = vunpack.c.l.b16 %v2390
    %v3030 = vunpack.c.h.b16 %v2390
    %v3031 = vunpack.c.l.b16 %v2391
    %v3032 = vunpack.c.h.b16 %v2391
    %v3033 = vunpack.c.l.b16 %v2392
    %v3034 = vunpack.c.h.b16 %v2392
    %v3035 = vunpack.c.l.b16 %v2393
    %v3036 = vunpack.c.h.b16 %v2393
    %v3037 = vunpack.c.l.b16 %v2394
    %v3038 = vunpack.c.h.b16 %v2394
    %v3039 = vunpack.c.l.b16 %v2395
    %v3040 = vunpack.c.h.b16 %v2395
    %v3041 = vunpack.c.l.b16 %v2396
    %v3042 = vunpack.c.h.b16 %v2396
    %v3043 = vunpack.c.l.b16 %v2397
    %v3044 = vunpack.c.h.b16 %v2397
    %v3045 = vunpack.c.l.b16 %v2398
    %v3046 = vunpack.c.h.b16 %v2398
    %v3047 = vunpack.c.l.b16 %v2399
    %v3048 = vunpack.c.h.b16 %v2399
    %v3049 = vunpack.c.l.b16 %v2400
    %v3050 = vunpack.c.h.b16 %v2400
    %v3051 = vunpack.c.l.b16 %v2401
    %v3052 = vunpack.c.h.b16 %v2401
    %v3053 = vunpack.c.l.b16 %v2402
    %v3054 = vunpack.c.h.b16 %v2402
    %v3055 = vunpack.c.l.b16 %v2403
    %v3056 = vunpack.c.h.b16 %v2403
    %v3057 = vunpack.c.l.b16 %v2404
    %v3058 = vunpack.c.h.b16 %v2404
    %v3059 = vunpack.c.l.b16 %v2405
    %v3060 = vunpack.c.h.b16 %v2405
    %v3061 = vunpack.c.l.b16 %v2406
    %v3062 = vunpack.c.h.b16 %v2406
    %v3063 = vunpack.c.l.b16 %v2407
    %v3064 = vunpack.c.h.b16 %v2407
    %v3065 = vunpack.c.l.b16 %v2408
    %v3066 = vunpack.c.h.b16 %v2408
    %v3067 = vunpack.c.l.b16 %v2409
    %v3068 = vunpack.c.h.b16 %v2409
    %v3069 = vunpack.c.l.b16 %v2410
    %v3070 = vunpack.c.h.b16 %v2410
    %v3071 = vunpack.c.l.b16 %v2411
    %v3072 = vunpack.c.h.b16 %v2411
    %v3073 = vunpack.c.l.b16 %v2412
    %v3074 = vunpack.c.h.b16 %v2412
    %v3075 = vunpack.c.l.b16 %v2413
    %v3076 = vunpack.c.h.b16 %v2413
    %v3077 = vunpack.c.l.b16 %v2414
    %v3078 = vunpack.c.h.b16 %v2414
    %v3079 = vunpack.c.l.b16 %v2415
    %v3080 = vunpack.c.h.b16 %v2415
    %v3081 = vunpack.c.l.b16 %v2416
    %v3082 = vunpack.c.h.b16 %v2416
    %v3083 = vunpack.c.l.b16 %v2417
    %v3084 = vunpack.c.h.b16 %v2417
    %v3085 = vunpack.c.l.b16 %v2418
    %v3086 = vunpack.c.h.b16 %v2418
    %v3087 = vunpack.c.l.b16 %v2419
    %v3088 = vunpack.c.h.b16 %v2419
    %v3089 = vunpack.c.l.b16 %v2420
    %v3090 = vunpack.c.h.b16 %v2420
    %v3091 = vunpack.c.l.b16 %v2421
    %v3092 = vunpack.c.h.b16 %v2421
    %v3093 = vunpack.c.l.b16 %v2422
    %v3094 = vunpack.c.h.b16 %v2422
    %v3095 = vunpack.c.l.b16 %v2423
    %v3096 = vunpack.c.h.b16 %v2423
    %v3097 = vunpack.c.l.b16 %v2424
    %v3098 = vunpack.c.h.b16 %v2424
    %v3099 = vunpack.c.l.b16 %v2425
    %v3100 = vunpack.c.h.b16 %v2425
    %v3101 = vunpack.c.l.b16 %v2426
    %v3102 = vunpack.c.h.b16 %v2426
    %v3103 = vunpack.c.l.b16 %v2427
    %v3104 = vunpack.c.h.b16 %v2427
    %v3105 = vunpack.c.l.b16 %v2428
    %v3106 = vunpack.c.h.b16 %v2428
    %v3107 = vunpack.c.l.b16 %v2429
    %v3108 = vunpack.c.h.b16 %v2429
    %v3109 = vunpack.c.l.b16 %v2430
    %v3110 = vunpack.c.h.b16 %v2430
    %v3111 = vunpack.c.l.b16 %v2431
    %v3112 = vunpack.c.h.b16 %v2431
    %v3113 = vunpack.c.l.b16 %v2432
    %v3114 = vunpack.c.h.b16 %v2432
    %v3115 = vunpack.c.l.b16 %v2433
    %v3116 = vunpack.c.h.b16 %v2433
    %v3117 = vunpack.c.l.b16 %v2434
    %v3118 = vunpack.c.h.b16 %v2434
    %v3119 = vunpack.c.l.b16 %v2435
    %v3120 = vunpack.c.h.b16 %v2435
    %v3121 = vunpack.c.l.b16 %v2436
    %v3122 = vunpack.c.h.b16 %v2436
    %v3123 = vunpack.c.l.b16 %v2437
    %v3124 = vunpack.c.h.b16 %v2437
    %v3125 = vunpack.c.l.b16 %v2438
    %v3126 = vunpack.c.h.b16 %v2438
    %v3127 = vunpack.c.l.b16 %v2439
    %v3128 = vunpack.c.h.b16 %v2439
    %v3129 = vunpack.c.l.b16 %v2440
    %v3130 = vunpack.c.h.b16 %v2440
    %v3131 = vunpack.c.l.b16 %v2441
    %v3132 = vunpack.c.h.b16 %v2441
    %v3133 = vunpack.c.l.b16 %v2442
    %v3134 = vunpack.c.h.b16 %v2442
    %v3135 = vunpack.c.l.b16 %v2443
    %v3136 = vunpack.c.h.b16 %v2443
    %v3137 = vunpack.c.l.b16 %v2444
    %v3138 = vunpack.c.h.b16 %v2444
    %v3139 = vunpack.c.l.b16 %v2445
    %v3140 = vunpack.c.h.b16 %v2445
    %v3141 = vunpack.c.l.b16 %v2446
    %v3142 = vunpack.c.h.b16 %v2446
    %v3143 = vunpack.c.l.b16 %v2447
    %v3144 = vunpack.c.h.b16 %v2447
    %v3145 = vunpack.c.l.b16 %v2448
    %v3146 = vunpack.c.h.b16 %v2448
    %v3147 = vunpack.c.l.b16 %v2449
    %v3148 = vunpack.c.h.b16 %v2449
    %v3149 = vunpack.c.l.b16 %v2450
    %v3150 = vunpack.c.h.b16 %v2450
    %v3151 = vunpack.c.l.b16 %v2451
    %v3152 = vunpack.c.h.b16 %v2451
    %v3153 = vunpack.c.l.b16 %v2452
    %v3154 = vunpack.c.h.b16 %v2452
    %v3155 = vunpack.c.l.b16 %v2453
    %v3156 = vunpack.c.h.b16 %v2453
    %v3157 = vunpack.c.l.b16 %v2454
    %v3158 = vunpack.c.h.b16 %v2454
    %v3159 = vunpack.c.l.b16 %v2455
    %v3160 = vunpack.c.h.b16 %v2455
    %v3161 = vunpack.c.l.b16 %v2456
    %v3162 = vunpack.c.h.b16 %v2456
    %v3163 = vunpack.c.l.b16 %v2457
    %v3164 = vunpack.c.h.b16 %v2457
    %v3165 = vunpack.c.l.b16 %v2458
    %v3166 = vunpack.c.h.b16 %v2458
    %v3167 = vunpack.c.l.b16 %v2459
    %v3168 = vunpack.c.h.b16 %v2459
    %v3169 = vunpack.c.l.b16 %v2460
    %v3170 = vunpack.c.h.b16 %v2460
    %v3171 = vunpack.c.l.b16 %v2461
    %v3172 = vunpack.c.h.b16 %v2461
    %v3173 = vunpack.c.l.b16 %v2462
    %v3174 = vunpack.c.h.b16 %v2462
    %v3175 = vunpack.c.l.b16 %v2463
    %v3176 = vunpack.c.h.b16 %v2463
    %v3177 = vunpack.c.l.b16 %v2464
    %v3178 = vunpack.c.h.b16 %v2464
    %v3179 = vunpack.c.l.b16 %v2465
    %v3180 = vunpack.c.h.b16 %v2465
    %v3181 = vunpack.c.l.b16 %v2466
    %v3182 = vunpack.c.h.b16 %v2466
    %v3183 = vunpack.c.l.b16 %v2467
    %v3184 = vunpack.c.h.b16 %v2467
    %v3185 = vunpack.c.l.b16 %v2468
    %v3186 = vunpack.c.h.b16 %v2468
    %v3187 = vunpack.c.l.b16 %v2469
    %v3188 = vunpack.c.h.b16 %v2469
    %v3189 = vunpack.c.l.b16 %v2470
    %v3190 = vunpack.c.h.b16 %v2470
    %v3191 = vunpack.c.l.b16 %v2471
    %v3192 = vunpack.c.h.b16 %v2471
    %v3193 = vunpack.c.l.b16 %v2472
    %v3194 = vunpack.c.h.b16 %v2472
    %v3195 = vunpack.c.l.b16 %v2473
    %v3196 = vunpack.c.h.b16 %v2473
    %v3197 = vunpack.c.l.b16 %v2474
    %v3198 = vunpack.c.h.b16 %v2474
    %v3199 = vunpack.c.l.b16 %v2475
    %v3200 = vunpack.c.h.b16 %v2475
    %v3201 = vunpack.c.l.b16 %v2476
    %v3202 = vunpack.c.h.b16 %v2476
    %v3203 = vunpack.c.l.b16 %v2477
    %v3204 = vunpack.c.h.b16 %v2477
    %v3205 = vunpack.c.l.b16 %v2478
    %v3206 = vunpack.c.h.b16 %v2478
    %v3207 = vunpack.c.l.b16 %v2479
    %v3208 = vunpack.c.h.b16 %v2479
    %v3209 = vunpack.c.l.b16 %v2480
    %v3210 = vunpack.c.h.b16 %v2480
    %v3211 = vunpack.c.l.b16 %v2481
    %v3212 = vunpack.c.h.b16 %v2481
    %v3213 = vunpack.c.l.b16 %v2482
    %v3214 = vunpack.c.h.b16 %v2482
    %v3215 = vunpack.c.l.b16 %v2483
    %v3216 = vunpack.c.h.b16 %v2483
    %v3217 = vunpack.c.l.b16 %v2484
    %v3218 = vunpack.c.h.b16 %v2484
    %v3219 = vunpack.c.l.b16 %v2485
    %v3220 = vunpack.c.h.b16 %v2485
    %v3221 = vunpack.c.l.b16 %v2486
    %v3222 = vunpack.c.h.b16 %v2486
    %v3223 = vunpack.c.l.b16 %v2487
    %v3224 = vunpack.c.h.b16 %v2487
    %v3225 = vunpack.c.l.b16 %v2488
    %v3226 = vunpack.c.h.b16 %v2488
    %v3227 = vunpack.c.l.b16 %v2489
    %v3228 = vunpack.c.h.b16 %v2489
    %v3229 = vunpack.c.l.b16 %v2490
    %v3230 = vunpack.c.h.b16 %v2490
    %v3231 = vunpack.c.l.b16 %v2491
    %v3232 = vunpack.c.h.b16 %v2491
    %v3233 = vunpack.c.l.b16 %v2492
    %v3234 = vunpack.c.h.b16 %v2492
    %v3235 = vunpack.c.l.b16 %v2493
    %v3236 = vunpack.c.h.b16 %v2493
    %v3237 = vunpack.c.l.b16 %v2494
    %v3238 = vunpack.c.h.b16 %v2494
    %v3239 = vunpack.c.l.b16 %v2495
    %v3240 = vunpack.c.h.b16 %v2495
    %v3241 = vunpack.c.l.b16 %v2496
    %v3242 = vunpack.c.h.b16 %v2496
    %v3243 = vunpack.c.l.b16 %v2497
    %v3244 = vunpack.c.h.b16 %v2497
    %v3245 = vunpack.c.l.b16 %v2498
    %v3246 = vunpack.c.h.b16 %v2498
    %v3247 = vunpack.c.l.b16 %v2499
    %v3248 = vunpack.c.h.b16 %v2499
    %v3249 = vunpack.c.l.b16 %v2500
    %v3250 = vunpack.c.h.b16 %v2500
    %v3251 = vunpack.c.l.b16 %v2501
    %v3252 = vunpack.c.h.b16 %v2501
    %v3253 = vunpack.c.l.b16 %v2502
    %v3254 = vunpack.c.h.b16 %v2502
    %v3255 = vunpack.c.l.b16 %v2503
    %v3256 = vunpack.c.h.b16 %v2503
    %v3257 = vunpack.c.l.b16 %v2504
    %v3258 = vunpack.c.h.b16 %v2504
    %v3259 = vunpack.c.l.b16 %v2505
    %v3260 = vunpack.c.h.b16 %v2505
    %v3261 = vunpack.c.l.b16 %v2506
    %v3262 = vunpack.c.h.b16 %v2506
    %v3263 = vunpack.c.l.b16 %v2507
    %v3264 = vunpack.c.h.b16 %v2507
    %v3265 = vunpack.c.l.b16 %v2508
    %v3266 = vunpack.c.h.b16 %v2508
    %v3267 = vunpack.c.l.b16 %v2509
    %v3268 = vunpack.c.h.b16 %v2509
    %v3269 = vunpack.c.l.b16 %v2510
    %v3270 = vunpack.c.h.b16 %v2510
    %v3271 = vunpack.c.l.b16 %v2511
    %v3272 = vunpack.c.h.b16 %v2511
    %v3273 = vunpack.c.l.b16 %v2512
    %v3274 = vunpack.c.h.b16 %v2512
    %v3275 = vunpack.c.l.b16 %v2513
    %v3276 = vunpack.c.h.b16 %v2513
    %v3277 = vunpack.c.l.b16 %v2514
    %v3278 = vunpack.c.h.b16 %v2514
    %v3279 = vunpack.c.l.b16 %v2515
    %v3280 = vunpack.c.h.b16 %v2515
    %v3281 = vunpack.c.l.b16 %v2516
    %v3282 = vunpack.c.h.b16 %v2516
    %v3283 = vunpack.c.l.b16 %v2517
    %v3284 = vunpack.c.h.b16 %v2517
    %v3285 = vunpack.c.l.b16 %v2518
    %v3286 = vunpack.c.h.b16 %v2518
    %v3287 = vpack.c.b16 %v2783, %v2775
    %v3288 = vpack.c.b16 %v2784, %v2776
    %v3289 = vpack.c.b16 %v2785, %v2777
    %v3290 = vpack.c.b16 %v2786, %v2778
    %v3291 = vpack.c.b16 %v2787, %v2779
    %v3292 = vpack.c.b16 %v2788, %v2780
    %v3293 = vpack.c.b16 %v2789, %v2781
    %v3294 = vpack.c.b16 %v2790, %v2782
    %v3295 = vpack.c.b16 %v2799, %v2791
    %v3296 = vpack.c.b16 %v2800, %v2792
    %v3297 = vpack.c.b16 %v2801, %v2793
    %v3298 = vpack.c.b16 %v2802, %v2794
    %v3299 = vpack.c.b16 %v2803, %v2795
    %v3300 = vpack.c.b16 %v2804, %v2796
    %v3301 = vpack.c.b16 %v2805, %v2797
    %v3302 = vpack.c.b16 %v2806, %v2798
    %v3303 = vpack.c.b16 %v2815, %v2807
    %v3304 = vpack.c.b16 %v2816, %v2808
    %v3305 = vpack.c.b16 %v2817, %v2809
    %v3306 = vpack.c.b16 %v2818, %v2810
    %v3307 = vpack.c.b16 %v2819, %v2811
    %v3308 = vpack.c.b16 %v2820, %v2812
    %v3309 = vpack.c.b16 %v2821, %v2813
    %v3310 = vpack.c.b16 %v2822, %v2814
    %v3311 = vpack.c.b16 %v2831, %v2823
    %v3312 = vpack.c.b16 %v2832, %v2824
    %v3313 = vpack.c.b16 %v2833, %v2825
    %v3314 = vpack.c.b16 %v2834, %v2826
    %v3315 = vpack.c.b16 %v2835, %v2827
    %v3316 = vpack.c.b16 %v2836, %v2828
    %v3317 = vpack.c.b16 %v2837, %v2829
    %v3318 = vpack.c.b16 %v2838, %v2830
    %v3319 = vpack.c.b16 %v2847, %v2839
    %v3320 = vpack.c.b16 %v2848, %v2840
    %v3321 = vpack.c.b16 %v2849, %v2841
    %v3322 = vpack.c.b16 %v2850, %v2842
    %v3323 = vpack.c.b16 %v2851, %v2843
    %v3324 = vpack.c.b16 %v2852, %v2844
    %v3325 = vpack.c.b16 %v2853, %v2845
    %v3326 = vpack.c.b16 %v2854, %v2846
    %v3327 = vpack.c.b16 %v2863, %v2855
    %v3328 = vpack.c.b16 %v2864, %v2856
    %v3329 = vpack.c.b16 %v2865, %v2857
    %v3330 = vpack.c.b16 %v2866, %v2858
    %v3331 = vpack.c.b16 %v2867, %v2859
    %v3332 = vpack.c.b16 %v2868, %v2860
    %v3333 = vpack.c.b16 %v2869, %v2861
    %v3334 = vpack.c.b16 %v2870, %v2862
    %v3335 = vpack.c.b16 %v2879, %v2871
    %v3336 = vpack.c.b16 %v2880, %v2872
    %v3337 = vpack.c.b16 %v2881, %v2873
    %v3338 = vpack.c.b16 %v2882, %v2874
    %v3339 = vpack.c.b16 %v2883, %v2875
    %v3340 = vpack.c.b16 %v2884, %v2876
    %v3341 = vpack.c.b16 %v2885, %v2877
    %v3342 = vpack.c.b16 %v2886, %v2878
    %v3343 = vpack.c.b16 %v2895, %v2887
    %v3344 = vpack.c.b16 %v2896, %v2888
    %v3345 = vpack.c.b16 %v2897, %v2889
    %v3346 = vpack.c.b16 %v2898, %v2890
    %v3347 = vpack.c.b16 %v2899, %v2891
    %v3348 = vpack.c.b16 %v2900, %v2892
    %v3349 = vpack.c.b16 %v2901, %v2893
    %v3350 = vpack.c.b16 %v2902, %v2894
    %v3351 = vpack.c.b16 %v2911, %v2903
    %v3352 = vpack.c.b16 %v2912, %v2904
    %v3353 = vpack.c.b16 %v2913, %v2905
    %v3354 = vpack.c.b16 %v2914, %v2906
    %v3355 = vpack.c.b16 %v2915, %v2907
    %v3356 = vpack.c.b16 %v2916, %v2908
    %v3357 = vpack.c.b16 %v2917, %v2909
    %v3358 = vpack.c.b16 %v2918, %v2910
    %v3359 = vpack.c.b16 %v2927, %v2919
    %v3360 = vpack.c.b16 %v2928, %v2920
    %v3361 = vpack.c.b16 %v2929, %v2921
    %v3362 = vpack.c.b16 %v2930, %v2922
    %v3363 = vpack.c.b16 %v2931, %v2923
    %v3364 = vpack.c.b16 %v2932, %v2924
    %v3365 = vpack.c.b16 %v2933, %v2925
    %v3366 = vpack.c.b16 %v2934, %v2926
    %v3367 = vpack.c.b16 %v2943, %v2935
    %v3368 = vpack.c.b16 %v2944, %v2936
    %v3369 = vpack.c.b16 %v2945, %v2937
    %v3370 = vpack.c.b16 %v2946, %v2938
    %v3371 = vpack.c.b16 %v2947, %v2939
    %v3372 = vpack.c.b16 %v2948, %v2940
    %v3373 = vpack.c.b16 %v2949, %v2941
    %v3374 = vpack.c.b16 %v2950, %v2942
    %v3375 = vpack.c.b16 %v2959, %v2951
    %v3376 = vpack.c.b16 %v2960, %v2952
    %v3377 = vpack.c.b16 %v2961, %v2953
    %v3378 = vpack.c.b16 %v2962, %v2954
    %v3379 = vpack.c.b16 %v2963, %v2955
    %v3380 = vpack.c.b16 %v2964, %v2956
    %v3381 = vpack.c.b16 %v2965, %v2957
    %v3382 = vpack.c.b16 %v2966, %v2958
    %v3383 = vpack.c.b16 %v2975, %v2967
    %v3384 = vpack.c.b16 %v2976, %v2968
    %v3385 = vpack.c.b16 %v2977, %v2969
    %v3386 = vpack.c.b16 %v2978, %v2970
    %v3387 = vpack.c.b16 %v2979, %v2971
    %v3388 = vpack.c.b16 %v2980, %v2972
    %v3389 = vpack.c.b16 %v2981, %v2973
    %v3390 = vpack.c.b16 %v2982, %v2974
    %v3391 = vpack.c.b16 %v2991, %v2983
    %v3392 = vpack.c.b16 %v2992, %v2984
    %v3393 = vpack.c.b16 %v2993, %v2985
    %v3394 = vpack.c.b16 %v2994, %v2986
    %v3395 = vpack.c.b16 %v2995, %v2987
    %v3396 = vpack.c.b16 %v2996, %v2988
    %v3397 = vpack.c.b16 %v2997, %v2989
    %v3398 = vpack.c.b16 %v2998, %v2990
    %v3399 = vpack.c.b16 %v3007, %v2999
    %v3400 = vpack.c.b16 %v3008, %v3000
    %v3401 = vpack.c.b16 %v3009, %v3001
    %v3402 = vpack.c.b16 %v3010, %v3002
    %v3403 = vpack.c.b16 %v3011, %v3003
    %v3404 = vpack.c.b16 %v3012, %v3004
    %v3405 = vpack.c.b16 %v3013, %v3005
    %v3406 = vpack.c.b16 %v3014, %v3006
    %v3407 = vpack.c.b16 %v3023, %v3015
    %v3408 = vpack.c.b16 %v3024, %v3016
    %v3409 = vpack.c.b16 %v3025, %v3017
    %v3410 = vpack.c.b16 %v3026, %v3018
    %v3411 = vpack.c.b16 %v3027, %v3019
    %v3412 = vpack.c.b16 %v3028, %v3020
    %v3413 = vpack.c.b16 %v3029, %v3021
    %v3414 = vpack.c.b16 %v3030, %v3022
    %v3415 = vpack.c.b16 %v3039, %v3031
    %v3416 = vpack.c.b16 %v3040, %v3032
    %v3417 = vpack.c.b16 %v3041, %v3033
    %v3418 = vpack.c.b16 %v3042, %v3034
    %v3419 = vpack.c.b16 %v3043, %v3035
    %v3420 = vpack.c.b16 %v3044, %v3036
    %v3421 = vpack.c.b16 %v3045, %v3037
    %v3422 = vpack.c.b16 %v3046, %v3038
    %v3423 = vpack.c.b16 %v3055, %v3047
    %v3424 = vpack.c.b16 %v3056, %v3048
    %v3425 = vpack.c.b16 %v3057, %v3049
    %v3426 = vpack.c.b16 %v3058, %v3050
    %v3427 = vpack.c.b16 %v3059, %v3051
    %v3428 = vpack.c.b16 %v3060, %v3052
    %v3429 = vpack.c.b16 %v3061, %v3053
    %v3430 = vpack.c.b16 %v3062, %v3054
    %v3431 = vpack.c.b16 %v3071, %v3063
    %v3432 = vpack.c.b16 %v3072, %v3064
    %v3433 = vpack.c.b16 %v3073, %v3065
    %v3434 = vpack.c.b16 %v3074, %v3066
    %v3435 = vpack.c.b16 %v3075, %v3067
    %v3436 = vpack.c.b16 %v3076, %v3068
    %v3437 = vpack.c.b16 %v3077, %v3069
    %v3438 = vpack.c.b16 %v3078, %v3070
    %v3439 = vpack.c.b16 %v3087, %v3079
    %v3440 = vpack.c.b16 %v3088, %v3080
    %v3441 = vpack.c.b16 %v3089, %v3081
    %v3442 = vpack.c.b16 %v3090, %v3082
    %v3443 = vpack.c.b16 %v3091, %v3083
    %v3444 = vpack.c.b16 %v3092, %v3084
    %v3445 = vpack.c.b16 %v3093, %v3085
    %v3446 = vpack.c.b16 %v3094, %v3086
    %v3447 = vpack.c.b16 %v3103, %v3095
    %v3448 = vpack.c.b16 %v3104, %v3096
    %v3449 = vpack.c.b16 %v3105, %v3097
    %v3450 = vpack.c.b16 %v3106, %v3098
    %v3451 = vpack.c.b16 %v3107, %v3099
    %v3452 = vpack.c.b16 %v3108, %v3100
    %v3453 = vpack.c.b16 %v3109, %v3101
    %v3454 = vpack.c.b16 %v3110, %v3102
    %v3455 = vpack.c.b16 %v3119, %v3111
    %v3456 = vpack.c.b16 %v3120, %v3112
    %v3457 = vpack.c.b16 %v3121, %v3113
    %v3458 = vpack.c.b16 %v3122, %v3114
    %v3459 = vpack.c.b16 %v3123, %v3115
    %v3460 = vpack.c.b16 %v3124, %v3116
    %v3461 = vpack.c.b16 %v3125, %v3117
    %v3462 = vpack.c.b16 %v3126, %v3118
    %v3463 = vpack.c.b16 %v3135, %v3127
    %v3464 = vpack.c.b16 %v3136, %v3128
    %v3465 = vpack.c.b16 %v3137, %v3129
    %v3466 = vpack.c.b16 %v3138, %v3130
    %v3467 = vpack.c.b16 %v3139, %v3131
    %v3468 = vpack.c.b16 %v3140, %v3132
    %v3469 = vpack.c.b16 %v3141, %v3133
    %v3470 = vpack.c.b16 %v3142, %v3134
    %v3471 = vpack.c.b16 %v3151, %v3143
    %v3472 = vpack.c.b16 %v3152, %v3144
    %v3473 = vpack.c.b16 %v3153, %v3145
    %v3474 = vpack.c.b16 %v3154, %v3146
    %v3475 = vpack.c.b16 %v3155, %v3147
    %v3476 = vpack.c.b16 %v3156, %v3148
    %v3477 = vpack.c.b16 %v3157, %v3149
    %v3478 = vpack.c.b16 %v3158, %v3150
    %v3479 = vpack.c.b16 %v3167, %v3159
    %v3480 = vpack.c.b16 %v3168, %v3160
    %v3481 = vpack.c.b16 %v3169, %v3161
    %v3482 = vpack.c.b16 %v3170, %v3162
    %v3483 = vpack.c.b16 %v3171, %v3163
    %v3484 = vpack.c.b16 %v3172, %v3164
    %v3485 = vpack.c.b16 %v3173, %v3165
    %v3486 = vpack.c.b16 %v3174, %v3166
    %v3487 = vpack.c.b16 %v3183, %v3175
    %v3488 = vpack.c.b16 %v3184, %v3176
    %v3489 = vpack.c.b16 %v3185, %v3177
    %v3490 = vpack.c.b16 %v3186, %v3178
    %v3491 = vpack.c.b16 %v3187, %v3179
    %v3492 = vpack.c.b16 %v3188, %v3180
    %v3493 = vpack.c.b16 %v3189, %v3181
    %v3494 = vpack.c.b16 %v3190, %v3182
    %v3495 = vpack.c.b16 %v3199, %v3191
    %v3496 = vpack.c.b16 %v3200, %v3192
    %v3497 = vpack.c.b16 %v3201, %v3193
    %v3498 = vpack.c.b16 %v3202, %v3194
    %v3499 = vpack.c.b16 %v3203, %v3195
    %v3500 = vpack.c.b16 %v3204, %v3196
    %v3501 = vpack.c.b16 %v3205, %v3197
    %v3502 = vpack.c.b16 %v3206, %v3198
    %v3503 = vpack.c.b16 %v3215, %v3207
    %v3504 = vpack.c.b16 %v3216, %v3208
    %v3505 = vpack.c.b16 %v3217, %v3209
    %v3506 = vpack.c.b16 %v3218, %v3210
    %v3507 = vpack.c.b16 %v3219, %v3211
    %v3508 = vpack.c.b16 %v3220, %v3212
    %v3509 = vpack.c.b16 %v3221, %v3213
    %v3510 = vpack.c.b16 %v3222, %v3214
    %v3511 = vpack.c.b16 %v3231, %v3223
    %v3512 = vpack.c.b16 %v3232, %v3224
    %v3513 = vpack.c.b16 %v3233, %v3225
    %v3514 = vpack.c.b16 %v3234, %v3226
    %v3515 = vpack.c.b16 %v3235, %v3227
    %v3516 = vpack.c.b16 %v3236, %v3228
    %v3517 = vpack.c.b16 %v3237, %v3229
    %v3518 = vpack.c.b16 %v3238, %v3230
    %v3519 = vpack.c.b16 %v3247, %v3239
    %v3520 = vpack.c.b16 %v3248, %v3240
    %v3521 = vpack.c.b16 %v3249, %v3241
    %v3522 = vpack.c.b16 %v3250, %v3242
    %v3523 = vpack.c.b16 %v3251, %v3243
    %v3524 = vpack.c.b16 %v3252, %v3244
    %v3525 = vpack.c.b16 %v3253, %v3245
    %v3526 = vpack.c.b16 %v3254, %v3246
    %v3527 = vpack.c.b16 %v3263, %v3255
    %v3528 = vpack.c.b16 %v3264, %v3256
    %v3529 = vpack.c.b16 %v3265, %v3257
    %v3530 = vpack.c.b16 %v3266, %v3258
    %v3531 = vpack.c.b16 %v3267, %v3259
    %v3532 = vpack.c.b16 %v3268, %v3260
    %v3533 = vpack.c.b16 %v3269, %v3261
    %v3534 = vpack.c.b16 %v3270, %v3262
    %v3535 = vpack.c.b16 %v3279, %v3271
    %v3536 = vpack.c.b16 %v3280, %v3272
    %v3537 = vpack.c.b16 %v3281, %v3273
    %v3538 = vpack.c.b16 %v3282, %v3274
    %v3539 = vpack.c.b16 %v3283, %v3275
    %v3540 = vpack.c.b16 %v3284, %v3276
    %v3541 = vpack.c.b16 %v3285, %v3277
    %v3542 = vpack.c.b16 %v3286, %v3278
    %3799 = vmatprep.subr.bf16.mxu0 %v3288
    %3800 = vmatpush1.bf16.msra.mxu0 %v3287
    %3801 = vmatprep.subr.bf16.mxu0 %v3296
    %3802 = vmatpush1.bf16.msra.mxu0 %v3295
    %3803 = vmatprep.subr.bf16.mxu0 %v3304
    %3804 = vmatpush1.bf16.msra.mxu0 %v3303
    %3805 = vmatprep.subr.bf16.mxu0 %v3312
    %3806 = vmatpush1.bf16.msra.mxu0 %v3311
    %3807 = vmatprep.subr.bf16.mxu0 %v3320
    %3808 = vmatpush1.bf16.msra.mxu0 %v3319
    %3809 = vmatprep.subr.bf16.mxu0 %v3328
    %3810 = vmatpush1.bf16.msra.mxu0 %v3327
    %3811 = vmatprep.subr.bf16.mxu0 %v3336
    %3812 = vmatpush1.bf16.msra.mxu0 %v3335
    %3813 = vmatprep.subr.bf16.mxu0 %v3344
    %3814 = vmatpush1.bf16.msra.mxu0 %v3343
    %3815 = vmatprep.subr.bf16.mxu0 %v3352
    %3816 = vmatpush1.bf16.msra.mxu0 %v3351
    %3817 = vmatprep.subr.bf16.mxu0 %v3360
    %3818 = vmatpush1.bf16.msra.mxu0 %v3359
    %3819 = vmatprep.subr.bf16.mxu0 %v3368
    %3820 = vmatpush1.bf16.msra.mxu0 %v3367
    %3821 = vmatprep.subr.bf16.mxu0 %v3376
    %3822 = vmatpush1.bf16.msra.mxu0 %v3375
    %3823 = vmatprep.subr.bf16.mxu0 %v3384
    %3824 = vmatpush1.bf16.msra.mxu0 %v3383
    %3825 = vmatprep.subr.bf16.mxu0 %v3392
    %3826 = vmatpush1.bf16.msra.mxu0 %v3391
    %3827 = vmatprep.subr.bf16.mxu0 %v3400
    %3828 = vmatpush1.bf16.msra.mxu0 %v3399
    %3829 = vmatprep.subr.bf16.mxu0 %v3408
    %3830 = vmatpush1.bf16.msra.mxu0 %v3407
    %3831 = vmatprep.mubr.bf16.mxu0 %v2232
    %3832 = vmatmul.mubr.bf16.gmra.mrb[0].mxu0 %v2231
    %v3833 = vpop.f32.mrb[0].mxu0
    %v3834 = vadd.f32 0.0, %v3833
    %v3835 = vpop.f32.mrb[0].mxu0
    %v3836 = vadd.f32 0.0, %v3835
    %v3837 = vpop.f32.mrb[0].mxu0
    %v3838 = vadd.f32 0.0, %v3837
    %v3839 = vpop.f32.mrb[0].mxu0
    %v3840 = vadd.f32 0.0, %v3839
    %3841 = vmatprep.mubr.bf16.mxu0 %v2236
    %3842 = vmatmul.mubr.bf16.gmra.mrb[0].mxu0 %v2235
    %v3843 = vpop.f32.mrb[0].mxu0
    %v3844 = vadd.f32 0.0, %v3843
    %v3845 = vpop.f32.mrb[0].mxu0
    %v3846 = vadd.f32 0.0, %v3845
    %v3847 = vpop.f32.mrb[0].mxu0
    %v3848 = vadd.f32 0.0, %v3847
    %v3849 = vpop.f32.mrb[0].mxu0
    %v3850 = vadd.f32 0.0, %v3849
    %3851 = vmatprep.mubr.bf16.mxu0 %v2240
    %3852 = vmatmul.mubr.bf16.gmra.mrb[0].mxu0 %v2239
    %v3853 = vpop.f32.mrb[0].mxu0
    %v3854 = vadd.f32 0.0, %v3853
    %v3855 = vpop.f32.mrb[0].mxu0
    %v3856 = vadd.f32 0.0, %v3855
    %v3857 = vpop.f32.mrb[0].mxu0
    %v3858 = vadd.f32 0.0, %v3857
    %v3859 = vpop.f32.mrb[0].mxu0
    %v3860 = vadd.f32 0.0, %v3859
    %3861 = vmatprep.mubr.bf16.mxu0 %v2244
    %3862 = vmatmul.mubr.bf16.gmra.mrb[0].mxu0 %v2243
    %v3863 = vpop.f32.mrb[0].mxu0
    %v3864 = vadd.f32 0.0, %v3863
    %v3865 = vpop.f32.mrb[0].mxu0
    %v3866 = vadd.f32 0.0, %v3865
    %v3867 = vpop.f32.mrb[0].mxu0
    %v3868 = vadd.f32 0.0, %v3867
    %v3869 = vpop.f32.mrb[0].mxu0
    %v3870 = vadd.f32 0.0, %v3869
    %3871 = vmatprep.mubr.bf16.mxu0 %v2248
    %3872 = vmatmul.mubr.bf16.gmra.mrb[0].mxu0 %v2247
    %v3873 = vpop.f32.mrb[0].mxu0
    %v3874 = vadd.f32 0.0, %v3873
    %v3875 = vpop.f32.mrb[0].mxu0
    %v3876 = vadd.f32 0.0, %v3875
    %v3877 = vpop.f32.mrb[0].mxu0
    %v3878 = vadd.f32 0.0, %v3877
    %v3879 = vpop.f32.mrb[0].mxu0
    %v3880 = vadd.f32 0.0, %v3879
    %3881 = vmatprep.mubr.bf16.mxu0 %v2252
    %3882 = vmatmul.mubr.bf16.gmra.mrb[0].mxu0 %v2251
    %v3883 = vpop.f32.mrb[0].mxu0
    %v3884 = vadd.f32 0.0, %v3883
    %v3885 = vpop.f32.mrb[0].mxu0
    %v3886 = vadd.f32 0.0, %v3885
    %v3887 = vpop.f32.mrb[0].mxu0
    %v3888 = vadd.f32 0.0, %v3887
    %v3889 = vpop.f32.mrb[0].mxu0
    %v3890 = vadd.f32 0.0, %v3889
    %3891 = vmatprep.mubr.bf16.mxu0 %v2256
    %3892 = vmatmul.mubr.bf16.gmra.mrb[0].mxu0 %v2255
    %v3893 = vpop.f32.mrb[0].mxu0
    %v3894 = vadd.f32 0.0, %v3893
    %v3895 = vpop.f32.mrb[0].mxu0
    %v3896 = vadd.f32 0.0, %v3895
    %v3897 = vpop.f32.mrb[0].mxu0
    %v3898 = vadd.f32 0.0, %v3897
    %v3899 = vpop.f32.mrb[0].mxu0
    %v3900 = vadd.f32 0.0, %v3899
    %3901 = vmatprep.mubr.bf16.mxu0 %v2260
    %3902 = vmatmul.mubr.bf16.gmra.mrb[0].mxu0 %v2259
    %v3903 = vpop.f32.mrb[0].mxu0
    %v3904 = vadd.f32 0.0, %v3903
    %v3905 = vpop.f32.mrb[0].mxu0
    %v3906 = vadd.f32 0.0, %v3905
    %v3907 = vpop.f32.mrb[0].mxu0
    %v3908 = vadd.f32 0.0, %v3907
    %v3909 = vpop.f32.mrb[0].mxu0
    %v3910 = vadd.f32 0.0, %v3909
    %3911 = vdwg.mxu0
    %3912 = vmatprep.subr.bf16.mxu0 %v3416
    %3913 = vmatpush1.bf16.msra.mxu0 %v3415
    %3914 = vmatprep.subr.bf16.mxu0 %v3424
    %3915 = vmatpush1.bf16.msra.mxu0 %v3423
    %3916 = vmatprep.subr.bf16.mxu0 %v3432
    %3917 = vmatpush1.bf16.msra.mxu0 %v3431
    %3918 = vmatprep.subr.bf16.mxu0 %v3440
    %3919 = vmatpush1.bf16.msra.mxu0 %v3439
    %3920 = vmatprep.subr.bf16.mxu0 %v3448
    %3921 = vmatpush1.bf16.msra.mxu0 %v3447
    %3922 = vmatprep.subr.bf16.mxu0 %v3456
    %3923 = vmatpush1.bf16.msra.mxu0 %v3455
    %3924 = vmatprep.subr.bf16.mxu0 %v3464
    %3925 = vmatpush1.bf16.msra.mxu0 %v3463
    %3926 = vmatprep.subr.bf16.mxu0 %v3472
    %3927 = vmatpush1.bf16.msra.mxu0 %v3471
    %3928 = vmatprep.subr.bf16.mxu0 %v3480
    %3929 = vmatpush1.bf16.msra.mxu0 %v3479
    %3930 = vmatprep.subr.bf16.mxu0 %v3488
    %3931 = vmatpush1.bf16.msra.mxu0 %v3487
    %3932 = vmatprep.subr.bf16.mxu0 %v3496
    %3933 = vmatpush1.bf16.msra.mxu0 %v3495
    %3934 = vmatprep.subr.bf16.mxu0 %v3504
    %3935 = vmatpush1.bf16.msra.mxu0 %v3503
    %3936 = vmatprep.subr.bf16.mxu0 %v3512
    %3937 = vmatpush1.bf16.msra.mxu0 %v3511
    %3938 = vmatprep.subr.bf16.mxu0 %v3520
    %3939 = vmatpush1.bf16.msra.mxu0 %v3519
    %3940 = vmatprep.subr.bf16.mxu0 %v3528
    %3941 = vmatpush1.bf16.msra.mxu0 %v3527
    %3942 = vmatprep.subr.bf16.mxu0 %v3536
    %3943 = vmatpush1.bf16.msra.mxu0 %v3535
    %3944 = vmatprep.mubr.bf16.mxu0 %v2234
    %3945 = vmatmul.mubr.bf16.gmra.mrb[0].mxu0 %v2233
    %v3946 = vpop.f32.mrb[0].mxu0
    %v3947 = vadd.f32 %v3834, %v3946
    %v3948 = vpop.f32.mrb[0].mxu0
    %v3949 = vadd.f32 %v3836, %v3948
    %v3950 = vpop.f32.mrb[0].mxu0
    %v3951 = vadd.f32 %v3838, %v3950
    %v3952 = vpop.f32.mrb[0].mxu0
    %v3953 = vadd.f32 %v3840, %v3952
    %3954 = vmatprep.mubr.bf16.mxu0 %v2238
    %3955 = vmatmul.mubr.bf16.gmra.mrb[0].mxu0 %v2237
    %v3956 = vpop.f32.mrb[0].mxu0
    %v3957 = vadd.f32 %v3844, %v3956
    %v3958 = vpop.f32.mrb[0].mxu0
    %v3959 = vadd.f32 %v3846, %v3958
    %v3960 = vpop.f32.mrb[0].mxu0
    %v3961 = vadd.f32 %v3848, %v3960
    %v3962 = vpop.f32.mrb[0].mxu0
    %v3963 = vadd.f32 %v3850, %v3962
    %3964 = vmatprep.mubr.bf16.mxu0 %v2242
    %3965 = vmatmul.mubr.bf16.gmra.mrb[0].mxu0 %v2241
    %v3966 = vpop.f32.mrb[0].mxu0
    %v3967 = vadd.f32 %v3854, %v3966
    %v3968 = vpop.f32.mrb[0].mxu0
    %v3969 = vadd.f32 %v3856, %v3968
    %v3970 = vpop.f32.mrb[0].mxu0
    %v3971 = vadd.f32 %v3858, %v3970
    %v3972 = vpop.f32.mrb[0].mxu0
    %v3973 = vadd.f32 %v3860, %v3972
    %3974 = vmatprep.mubr.bf16.mxu0 %v2246
    %3975 = vmatmul.mubr.bf16.gmra.mrb[0].mxu0 %v2245
    %v3976 = vpop.f32.mrb[0].mxu0
    %v3977 = vadd.f32 %v3864, %v3976
    %v3978 = vpop.f32.mrb[0].mxu0
    %v3979 = vadd.f32 %v3866, %v3978
    %v3980 = vpop.f32.mrb[0].mxu0
    %v3981 = vadd.f32 %v3868, %v3980
    %v3982 = vpop.f32.mrb[0].mxu0
    %v3983 = vadd.f32 %v3870, %v3982
    %3984 = vmatprep.mubr.bf16.mxu0 %v2250
    %3985 = vmatmul.mubr.bf16.gmra.mrb[0].mxu0 %v2249
    %v3986 = vpop.f32.mrb[0].mxu0
    %v3987 = vadd.f32 %v3874, %v3986
    %v3988 = vpop.f32.mrb[0].mxu0
    %v3989 = vadd.f32 %v3876, %v3988
    %v3990 = vpop.f32.mrb[0].mxu0
    %v3991 = vadd.f32 %v3878, %v3990
    %v3992 = vpop.f32.mrb[0].mxu0
    %v3993 = vadd.f32 %v3880, %v3992
    %3994 = vmatprep.mubr.bf16.mxu0 %v2254
    %3995 = vmatmul.mubr.bf16.gmra.mrb[0].mxu0 %v2253
    %v3996 = vpop.f32.mrb[0].mxu0
    %v3997 = vadd.f32 %v3884, %v3996
    %v3998 = vpop.f32.mrb[0].mxu0
    %v3999 = vadd.f32 %v3886, %v3998
    %v4000 = vpop.f32.mrb[0].mxu0
    %v4001 = vadd.f32 %v3888, %v4000
    %v4002 = vpop.f32.mrb[0].mxu0
    %v4003 = vadd.f32 %v3890, %v4002
    %4004 = vmatprep.mubr.bf16.mxu0 %v2258
    %4005 = vmatmul.mubr.bf16.gmra.mrb[0].mxu0 %v2257
    %v4006 = vpop.f32.mrb[0].mxu0
    %v4007 = vadd.f32 %v3894, %v4006
    %v4008 = vpop.f32.mrb[0].mxu0
    %v4009 = vadd.f32 %v3896, %v4008
    %v4010 = vpop.f32.mrb[0].mxu0
    %v4011 = vadd.f32 %v3898, %v4010
    %v4012 = vpop.f32.mrb[0].mxu0
    %v4013 = vadd.f32 %v3900, %v4012
    %4014 = vmatprep.mubr.bf16.mxu0 %v2262
    %4015 = vmatmul.mubr.bf16.gmra.mrb[0].mxu0 %v2261
    %v4016 = vpop.f32.mrb[0].mxu0
    %v4017 = vadd.f32 %v3904, %v4016
    %v4018 = vpop.f32.mrb[0].mxu0
    %v4019 = vadd.f32 %v3906, %v4018
    %v4020 = vpop.f32.mrb[0].mxu0
    %v4021 = vadd.f32 %v3908, %v4020
    %v4022 = vpop.f32.mrb[0].mxu0
    %v4023 = vadd.f32 %v3910, %v4022
    %4024 = vdwg.mxu0
    %4025 = vmatprep.subr.bf16.mxu0 %v3290
    %4026 = vmatpush1.bf16.msra.mxu0 %v3289
    %4027 = vmatprep.subr.bf16.mxu0 %v3298
    %4028 = vmatpush1.bf16.msra.mxu0 %v3297
    %4029 = vmatprep.subr.bf16.mxu0 %v3306
    %4030 = vmatpush1.bf16.msra.mxu0 %v3305
    %4031 = vmatprep.subr.bf16.mxu0 %v3314
    %4032 = vmatpush1.bf16.msra.mxu0 %v3313
    %4033 = vmatprep.subr.bf16.mxu0 %v3322
    %4034 = vmatpush1.bf16.msra.mxu0 %v3321
    %4035 = vmatprep.subr.bf16.mxu0 %v3330
    %4036 = vmatpush1.bf16.msra.mxu0 %v3329
    %4037 = vmatprep.subr.bf16.mxu0 %v3338
    %4038 = vmatpush1.bf16.msra.mxu0 %v3337
    %4039 = vmatprep.subr.bf16.mxu0 %v3346
    %4040 = vmatpush1.bf16.msra.mxu0 %v3345
    %4041 = vmatprep.subr.bf16.mxu0 %v3354
    %4042 = vmatpush1.bf16.msra.mxu0 %v3353
    %4043 = vmatprep.subr.bf16.mxu0 %v3362
    %4044 = vmatpush1.bf16.msra.mxu0 %v3361
    %4045 = vmatprep.subr.bf16.mxu0 %v3370
    %4046 = vmatpush1.bf16.msra.mxu0 %v3369
    %4047 = vmatprep.subr.bf16.mxu0 %v3378
    %4048 = vmatpush1.bf16.msra.mxu0 %v3377
    %4049 = vmatprep.subr.bf16.mxu0 %v3386
    %4050 = vmatpush1.bf16.msra.mxu0 %v3385
    %4051 = vmatprep.subr.bf16.mxu0 %v3394
    %4052 = vmatpush1.bf16.msra.mxu0 %v3393
    %4053 = vmatprep.subr.bf16.mxu0 %v3402
    %4054 = vmatpush1.bf16.msra.mxu0 %v3401
    %4055 = vmatprep.subr.bf16.mxu0 %v3410
    %4056 = vmatpush1.bf16.msra.mxu0 %v3409
    %4057 = vmatprep.mubr.bf16.mxu0 %v2232
    %4058 = vmatmul.mubr.bf16.gmra.mrb[0].mxu0 %v2231
    %v4059 = vpop.f32.mrb[0].mxu0
    %v4060 = vadd.f32 0.0, %v4059
    %v4061 = vpop.f32.mrb[0].mxu0
    %v4062 = vadd.f32 0.0, %v4061
    %v4063 = vpop.f32.mrb[0].mxu0
    %v4064 = vadd.f32 0.0, %v4063
    %v4065 = vpop.f32.mrb[0].mxu0
    %v4066 = vadd.f32 0.0, %v4065
    %4067 = vmatprep.mubr.bf16.mxu0 %v2236
    %4068 = vmatmul.mubr.bf16.gmra.mrb[0].mxu0 %v2235
    %v4069 = vpop.f32.mrb[0].mxu0
    %v4070 = vadd.f32 0.0, %v4069
    %v4071 = vpop.f32.mrb[0].mxu0
    %v4072 = vadd.f32 0.0, %v4071
    %v4073 = vpop.f32.mrb[0].mxu0
    %v4074 = vadd.f32 0.0, %v4073
    %v4075 = vpop.f32.mrb[0].mxu0
    %v4076 = vadd.f32 0.0, %v4075
    %4077 = vmatprep.mubr.bf16.mxu0 %v2240
    %4078 = vmatmul.mubr.bf16.gmra.mrb[0].mxu0 %v2239
    %v4079 = vpop.f32.mrb[0].mxu0
    %v4080 = vadd.f32 0.0, %v4079
    %v4081 = vpop.f32.mrb[0].mxu0
    %v4082 = vadd.f32 0.0, %v4081
    %v4083 = vpop.f32.mrb[0].mxu0
    %v4084 = vadd.f32 0.0, %v4083
    %v4085 = vpop.f32.mrb[0].mxu0
    %v4086 = vadd.f32 0.0, %v4085
    %4087 = vmatprep.mubr.bf16.mxu0 %v2244
    %4088 = vmatmul.mubr.bf16.gmra.mrb[0].mxu0 %v2243
    %v4089 = vpop.f32.mrb[0].mxu0
    %v4090 = vadd.f32 0.0, %v4089
    %v4091 = vpop.f32.mrb[0].mxu0
    %v4092 = vadd.f32 0.0, %v4091
    %v4093 = vpop.f32.mrb[0].mxu0
    %v4094 = vadd.f32 0.0, %v4093
    %v4095 = vpop.f32.mrb[0].mxu0
    %v4096 = vadd.f32 0.0, %v4095
    %4097 = vmatprep.mubr.bf16.mxu0 %v2248
    %4098 = vmatmul.mubr.bf16.gmra.mrb[0].mxu0 %v2247
    %v4099 = vpop.f32.mrb[0].mxu0
    %v4100 = vadd.f32 0.0, %v4099
    %v4101 = vpop.f32.mrb[0].mxu0
    %v4102 = vadd.f32 0.0, %v4101
    %v4103 = vpop.f32.mrb[0].mxu0
    %v4104 = vadd.f32 0.0, %v4103
    %v4105 = vpop.f32.mrb[0].mxu0
    %v4106 = vadd.f32 0.0, %v4105
    %4107 = vmatprep.mubr.bf16.mxu0 %v2252
    %4108 = vmatmul.mubr.bf16.gmra.mrb[0].mxu0 %v2251
    %v4109 = vpop.f32.mrb[0].mxu0
    %v4110 = vadd.f32 0.0, %v4109
    %v4111 = vpop.f32.mrb[0].mxu0
    %v4112 = vadd.f32 0.0, %v4111
    %v4113 = vpop.f32.mrb[0].mxu0
    %v4114 = vadd.f32 0.0, %v4113
    %v4115 = vpop.f32.mrb[0].mxu0
    %v4116 = vadd.f32 0.0, %v4115
    %4117 = vmatprep.mubr.bf16.mxu0 %v2256
    %4118 = vmatmul.mubr.bf16.gmra.mrb[0].mxu0 %v2255
    %v4119 = vpop.f32.mrb[0].mxu0
    %v4120 = vadd.f32 0.0, %v4119
    %v4121 = vpop.f32.mrb[0].mxu0
    %v4122 = vadd.f32 0.0, %v4121
    %v4123 = vpop.f32.mrb[0].mxu0
    %v4124 = vadd.f32 0.0, %v4123
    %v4125 = vpop.f32.mrb[0].mxu0
    %v4126 = vadd.f32 0.0, %v4125
    %4127 = vmatprep.mubr.bf16.mxu0 %v2260
    %4128 = vmatmul.mubr.bf16.gmra.mrb[0].mxu0 %v2259
    %v4129 = vpop.f32.mrb[0].mxu0
    %v4130 = vadd.f32 0.0, %v4129
    %v4131 = vpop.f32.mrb[0].mxu0
    %v4132 = vadd.f32 0.0, %v4131
    %v4133 = vpop.f32.mrb[0].mxu0
    %v4134 = vadd.f32 0.0, %v4133
    %v4135 = vpop.f32.mrb[0].mxu0
    %v4136 = vadd.f32 0.0, %v4135
    %4137 = vdwg.mxu0
    %4138 = vmatprep.subr.bf16.mxu0 %v3418
    %4139 = vmatpush1.bf16.msra.mxu0 %v3417
    %4140 = vmatprep.subr.bf16.mxu0 %v3426
    %4141 = vmatpush1.bf16.msra.mxu0 %v3425
    %4142 = vmatprep.subr.bf16.mxu0 %v3434
    %4143 = vmatpush1.bf16.msra.mxu0 %v3433
    %4144 = vmatprep.subr.bf16.mxu0 %v3442
    %4145 = vmatpush1.bf16.msra.mxu0 %v3441
    %4146 = vmatprep.subr.bf16.mxu0 %v3450
    %4147 = vmatpush1.bf16.msra.mxu0 %v3449
    %4148 = vmatprep.subr.bf16.mxu0 %v3458
    %4149 = vmatpush1.bf16.msra.mxu0 %v3457
    %4150 = vmatprep.subr.bf16.mxu0 %v3466
    %4151 = vmatpush1.bf16.msra.mxu0 %v3465
    %4152 = vmatprep.subr.bf16.mxu0 %v3474
    %4153 = vmatpush1.bf16.msra.mxu0 %v3473
    %4154 = vmatprep.subr.bf16.mxu0 %v3482
    %4155 = vmatpush1.bf16.msra.mxu0 %v3481
    %4156 = vmatprep.subr.bf16.mxu0 %v3490
    %4157 = vmatpush1.bf16.msra.mxu0 %v3489
    %4158 = vmatprep.subr.bf16.mxu0 %v3498
    %4159 = vmatpush1.bf16.msra.mxu0 %v3497
    %4160 = vmatprep.subr.bf16.mxu0 %v3506
    %4161 = vmatpush1.bf16.msra.mxu0 %v3505
    %4162 = vmatprep.subr.bf16.mxu0 %v3514
    %4163 = vmatpush1.bf16.msra.mxu0 %v3513
    %4164 = vmatprep.subr.bf16.mxu0 %v3522
    %4165 = vmatpush1.bf16.msra.mxu0 %v3521
    %4166 = vmatprep.subr.bf16.mxu0 %v3530
    %4167 = vmatpush1.bf16.msra.mxu0 %v3529
    %4168 = vmatprep.subr.bf16.mxu0 %v3538
    %4169 = vmatpush1.bf16.msra.mxu0 %v3537
    %4170 = vmatprep.mubr.bf16.mxu0 %v2234
    %4171 = vmatmul.mubr.bf16.gmra.mrb[0].mxu0 %v2233
    %v4172 = vpop.f32.mrb[0].mxu0
    %v4173 = vadd.f32 %v4060, %v4172
    %v4174 = vpop.f32.mrb[0].mxu0
    %v4175 = vadd.f32 %v4062, %v4174
    %v4176 = vpop.f32.mrb[0].mxu0
    %v4177 = vadd.f32 %v4064, %v4176
    %v4178 = vpop.f32.mrb[0].mxu0
    %v4179 = vadd.f32 %v4066, %v4178
    %4180 = vmatprep.mubr.bf16.mxu0 %v2238
    %4181 = vmatmul.mubr.bf16.gmra.mrb[0].mxu0 %v2237
    %v4182 = vpop.f32.mrb[0].mxu0
    %v4183 = vadd.f32 %v4070, %v4182
    %v4184 = vpop.f32.mrb[0].mxu0
    %v4185 = vadd.f32 %v4072, %v4184
    %v4186 = vpop.f32.mrb[0].mxu0
    %v4187 = vadd.f32 %v4074, %v4186
    %v4188 = vpop.f32.mrb[0].mxu0
    %v4189 = vadd.f32 %v4076, %v4188
    %4190 = vmatprep.mubr.bf16.mxu0 %v2242
    %4191 = vmatmul.mubr.bf16.gmra.mrb[0].mxu0 %v2241
    %v4192 = vpop.f32.mrb[0].mxu0
    %v4193 = vadd.f32 %v4080, %v4192
    %v4194 = vpop.f32.mrb[0].mxu0
    %v4195 = vadd.f32 %v4082, %v4194
    %v4196 = vpop.f32.mrb[0].mxu0
    %v4197 = vadd.f32 %v4084, %v4196
    %v4198 = vpop.f32.mrb[0].mxu0
    %v4199 = vadd.f32 %v4086, %v4198
    %4200 = vmatprep.mubr.bf16.mxu0 %v2246
    %4201 = vmatmul.mubr.bf16.gmra.mrb[0].mxu0 %v2245
    %v4202 = vpop.f32.mrb[0].mxu0
    %v4203 = vadd.f32 %v4090, %v4202
    %v4204 = vpop.f32.mrb[0].mxu0
    %v4205 = vadd.f32 %v4092, %v4204
    %v4206 = vpop.f32.mrb[0].mxu0
    %v4207 = vadd.f32 %v4094, %v4206
    %v4208 = vpop.f32.mrb[0].mxu0
    %v4209 = vadd.f32 %v4096, %v4208
    %4210 = vmatprep.mubr.bf16.mxu0 %v2250
    %4211 = vmatmul.mubr.bf16.gmra.mrb[0].mxu0 %v2249
    %v4212 = vpop.f32.mrb[0].mxu0
    %v4213 = vadd.f32 %v4100, %v4212
    %v4214 = vpop.f32.mrb[0].mxu0
    %v4215 = vadd.f32 %v4102, %v4214
    %v4216 = vpop.f32.mrb[0].mxu0
    %v4217 = vadd.f32 %v4104, %v4216
    %v4218 = vpop.f32.mrb[0].mxu0
    %v4219 = vadd.f32 %v4106, %v4218
    %4220 = vmatprep.mubr.bf16.mxu0 %v2254
    %4221 = vmatmul.mubr.bf16.gmra.mrb[0].mxu0 %v2253
    %v4222 = vpop.f32.mrb[0].mxu0
    %v4223 = vadd.f32 %v4110, %v4222
    %v4224 = vpop.f32.mrb[0].mxu0
    %v4225 = vadd.f32 %v4112, %v4224
    %v4226 = vpop.f32.mrb[0].mxu0
    %v4227 = vadd.f32 %v4114, %v4226
    %v4228 = vpop.f32.mrb[0].mxu0
    %v4229 = vadd.f32 %v4116, %v4228
    %4230 = vmatprep.mubr.bf16.mxu0 %v2258
    %4231 = vmatmul.mubr.bf16.gmra.mrb[0].mxu0 %v2257
    %v4232 = vpop.f32.mrb[0].mxu0
    %v4233 = vadd.f32 %v4120, %v4232
    %v4234 = vpop.f32.mrb[0].mxu0
    %v4235 = vadd.f32 %v4122, %v4234
    %v4236 = vpop.f32.mrb[0].mxu0
    %v4237 = vadd.f32 %v4124, %v4236
    %v4238 = vpop.f32.mrb[0].mxu0
    %v4239 = vadd.f32 %v4126, %v4238
    %4240 = vmatprep.mubr.bf16.mxu0 %v2262
    %4241 = vmatmul.mubr.bf16.gmra.mrb[0].mxu0 %v2261
    %v4242 = vpop.f32.mrb[0].mxu0
    %v4243 = vadd.f32 %v4130, %v4242
    %v4244 = vpop.f32.mrb[0].mxu0
    %v4245 = vadd.f32 %v4132, %v4244
    %v4246 = vpop.f32.mrb[0].mxu0
    %v4247 = vadd.f32 %v4134, %v4246
    %v4248 = vpop.f32.mrb[0].mxu0
    %v4249 = vadd.f32 %v4136, %v4248
    %4250 = vdwg.mxu0
    %4251 = vmatprep.subr.bf16.mxu0 %v3292
    %4252 = vmatpush1.bf16.msra.mxu0 %v3291
    %4253 = vmatprep.subr.bf16.mxu0 %v3300
    %4254 = vmatpush1.bf16.msra.mxu0 %v3299
    %4255 = vmatprep.subr.bf16.mxu0 %v3308
    %4256 = vmatpush1.bf16.msra.mxu0 %v3307
    %4257 = vmatprep.subr.bf16.mxu0 %v3316
    %4258 = vmatpush1.bf16.msra.mxu0 %v3315
    %4259 = vmatprep.subr.bf16.mxu0 %v3324
    %4260 = vmatpush1.bf16.msra.mxu0 %v3323
    %4261 = vmatprep.subr.bf16.mxu0 %v3332
    %4262 = vmatpush1.bf16.msra.mxu0 %v3331
    %4263 = vmatprep.subr.bf16.mxu0 %v3340
    %4264 = vmatpush1.bf16.msra.mxu0 %v3339
    %4265 = vmatprep.subr.bf16.mxu0 %v3348
    %4266 = vmatpush1.bf16.msra.mxu0 %v3347
    %4267 = vmatprep.subr.bf16.mxu0 %v3356
    %4268 = vmatpush1.bf16.msra.mxu0 %v3355
    %4269 = vmatprep.subr.bf16.mxu0 %v3364
    %4270 = vmatpush1.bf16.msra.mxu0 %v3363
    %4271 = vmatprep.subr.bf16.mxu0 %v3372
    %4272 = vmatpush1.bf16.msra.mxu0 %v3371
    %4273 = vmatprep.subr.bf16.mxu0 %v3380
    %4274 = vmatpush1.bf16.msra.mxu0 %v3379
    %4275 = vmatprep.subr.bf16.mxu0 %v3388
    %4276 = vmatpush1.bf16.msra.mxu0 %v3387
    %4277 = vmatprep.subr.bf16.mxu0 %v3396
    %4278 = vmatpush1.bf16.msra.mxu0 %v3395
    %4279 = vmatprep.subr.bf16.mxu0 %v3404
    %4280 = vmatpush1.bf16.msra.mxu0 %v3403
    %4281 = vmatprep.subr.bf16.mxu0 %v3412
    %4282 = vmatpush1.bf16.msra.mxu0 %v3411
    %4283 = vmatprep.mubr.bf16.mxu0 %v2232
    %4284 = vmatmul.mubr.bf16.gmra.mrb[0].mxu0 %v2231
    %v4285 = vpop.f32.mrb[0].mxu0
    %v4286 = vadd.f32 0.0, %v4285
    %v4287 = vpop.f32.mrb[0].mxu0
    %v4288 = vadd.f32 0.0, %v4287
    %v4289 = vpop.f32.mrb[0].mxu0
    %v4290 = vadd.f32 0.0, %v4289
    %v4291 = vpop.f32.mrb[0].mxu0
    %v4292 = vadd.f32 0.0, %v4291
    %4293 = vmatprep.mubr.bf16.mxu0 %v2236
    %4294 = vmatmul.mubr.bf16.gmra.mrb[0].mxu0 %v2235
    %v4295 = vpop.f32.mrb[0].mxu0
    %v4296 = vadd.f32 0.0, %v4295
    %v4297 = vpop.f32.mrb[0].mxu0
    %v4298 = vadd.f32 0.0, %v4297
    %v4299 = vpop.f32.mrb[0].mxu0
    %v4300 = vadd.f32 0.0, %v4299
    %v4301 = vpop.f32.mrb[0].mxu0
    %v4302 = vadd.f32 0.0, %v4301
    %4303 = vmatprep.mubr.bf16.mxu0 %v2240
    %4304 = vmatmul.mubr.bf16.gmra.mrb[0].mxu0 %v2239
    %v4305 = vpop.f32.mrb[0].mxu0
    %v4306 = vadd.f32 0.0, %v4305
    %v4307 = vpop.f32.mrb[0].mxu0
    %v4308 = vadd.f32 0.0, %v4307
    %v4309 = vpop.f32.mrb[0].mxu0
    %v4310 = vadd.f32 0.0, %v4309
    %v4311 = vpop.f32.mrb[0].mxu0
    %v4312 = vadd.f32 0.0, %v4311
    %4313 = vmatprep.mubr.bf16.mxu0 %v2244
    %4314 = vmatmul.mubr.bf16.gmra.mrb[0].mxu0 %v2243
    %v4315 = vpop.f32.mrb[0].mxu0
    %v4316 = vadd.f32 0.0, %v4315
    %v4317 = vpop.f32.mrb[0].mxu0
    %v4318 = vadd.f32 0.0, %v4317
    %v4319 = vpop.f32.mrb[0].mxu0
    %v4320 = vadd.f32 0.0, %v4319
    %v4321 = vpop.f32.mrb[0].mxu0
    %v4322 = vadd.f32 0.0, %v4321
    %4323 = vmatprep.mubr.bf16.mxu0 %v2248
    %4324 = vmatmul.mubr.bf16.gmra.mrb[0].mxu0 %v2247
    %v4325 = vpop.f32.mrb[0].mxu0
    %v4326 = vadd.f32 0.0, %v4325
    %v4327 = vpop.f32.mrb[0].mxu0
    %v4328 = vadd.f32 0.0, %v4327
    %v4329 = vpop.f32.mrb[0].mxu0
    %v4330 = vadd.f32 0.0, %v4329
    %v4331 = vpop.f32.mrb[0].mxu0
    %v4332 = vadd.f32 0.0, %v4331
    %4333 = vmatprep.mubr.bf16.mxu0 %v2252
    %4334 = vmatmul.mubr.bf16.gmra.mrb[0].mxu0 %v2251
    %v4335 = vpop.f32.mrb[0].mxu0
    %v4336 = vadd.f32 0.0, %v4335
    %v4337 = vpop.f32.mrb[0].mxu0
    %v4338 = vadd.f32 0.0, %v4337
    %v4339 = vpop.f32.mrb[0].mxu0
    %v4340 = vadd.f32 0.0, %v4339
    %v4341 = vpop.f32.mrb[0].mxu0
    %v4342 = vadd.f32 0.0, %v4341
    %4343 = vmatprep.mubr.bf16.mxu0 %v2256
    %4344 = vmatmul.mubr.bf16.gmra.mrb[0].mxu0 %v2255
    %v4345 = vpop.f32.mrb[0].mxu0
    %v4346 = vadd.f32 0.0, %v4345
    %v4347 = vpop.f32.mrb[0].mxu0
    %v4348 = vadd.f32 0.0, %v4347
    %v4349 = vpop.f32.mrb[0].mxu0
    %v4350 = vadd.f32 0.0, %v4349
    %v4351 = vpop.f32.mrb[0].mxu0
    %v4352 = vadd.f32 0.0, %v4351
    %4353 = vmatprep.mubr.bf16.mxu0 %v2260
    %4354 = vmatmul.mubr.bf16.gmra.mrb[0].mxu0 %v2259
    %v4355 = vpop.f32.mrb[0].mxu0
    %v4356 = vadd.f32 0.0, %v4355
    %v4357 = vpop.f32.mrb[0].mxu0
    %v4358 = vadd.f32 0.0, %v4357
    %v4359 = vpop.f32.mrb[0].mxu0
    %v4360 = vadd.f32 0.0, %v4359
    %v4361 = vpop.f32.mrb[0].mxu0
    %v4362 = vadd.f32 0.0, %v4361
    %4363 = vdwg.mxu0
    %4364 = vmatprep.subr.bf16.mxu0 %v3420
    %4365 = vmatpush1.bf16.msra.mxu0 %v3419
    %4366 = vmatprep.subr.bf16.mxu0 %v3428
    %4367 = vmatpush1.bf16.msra.mxu0 %v3427
    %4368 = vmatprep.subr.bf16.mxu0 %v3436
    %4369 = vmatpush1.bf16.msra.mxu0 %v3435
    %4370 = vmatprep.subr.bf16.mxu0 %v3444
    %4371 = vmatpush1.bf16.msra.mxu0 %v3443
    %4372 = vmatprep.subr.bf16.mxu0 %v3452
    %4373 = vmatpush1.bf16.msra.mxu0 %v3451
    %4374 = vmatprep.subr.bf16.mxu0 %v3460
    %4375 = vmatpush1.bf16.msra.mxu0 %v3459
    %4376 = vmatprep.subr.bf16.mxu0 %v3468
    %4377 = vmatpush1.bf16.msra.mxu0 %v3467
    %4378 = vmatprep.subr.bf16.mxu0 %v3476
    %4379 = vmatpush1.bf16.msra.mxu0 %v3475
    %4380 = vmatprep.subr.bf16.mxu0 %v3484
    %4381 = vmatpush1.bf16.msra.mxu0 %v3483
    %4382 = vmatprep.subr.bf16.mxu0 %v3492
    %4383 = vmatpush1.bf16.msra.mxu0 %v3491
    %4384 = vmatprep.subr.bf16.mxu0 %v3500
    %4385 = vmatpush1.bf16.msra.mxu0 %v3499
    %4386 = vmatprep.subr.bf16.mxu0 %v3508
    %4387 = vmatpush1.bf16.msra.mxu0 %v3507
    %4388 = vmatprep.subr.bf16.mxu0 %v3516
    %4389 = vmatpush1.bf16.msra.mxu0 %v3515
    %4390 = vmatprep.subr.bf16.mxu0 %v3524
    %4391 = vmatpush1.bf16.msra.mxu0 %v3523
    %4392 = vmatprep.subr.bf16.mxu0 %v3532
    %4393 = vmatpush1.bf16.msra.mxu0 %v3531
    %4394 = vmatprep.subr.bf16.mxu0 %v3540
    %4395 = vmatpush1.bf16.msra.mxu0 %v3539
    %4396 = vmatprep.mubr.bf16.mxu0 %v2234
    %4397 = vmatmul.mubr.bf16.gmra.mrb[0].mxu0 %v2233
    %v4398 = vpop.f32.mrb[0].mxu0
    %v4399 = vadd.f32 %v4286, %v4398
    %v4400 = vpop.f32.mrb[0].mxu0
    %v4401 = vadd.f32 %v4288, %v4400
    %v4402 = vpop.f32.mrb[0].mxu0
    %v4403 = vadd.f32 %v4290, %v4402
    %v4404 = vpop.f32.mrb[0].mxu0
    %v4405 = vadd.f32 %v4292, %v4404
    %4406 = vmatprep.mubr.bf16.mxu0 %v2238
    %4407 = vmatmul.mubr.bf16.gmra.mrb[0].mxu0 %v2237
    %v4408 = vpop.f32.mrb[0].mxu0
    %v4409 = vadd.f32 %v4296, %v4408
    %v4410 = vpop.f32.mrb[0].mxu0
    %v4411 = vadd.f32 %v4298, %v4410
    %v4412 = vpop.f32.mrb[0].mxu0
    %v4413 = vadd.f32 %v4300, %v4412
    %v4414 = vpop.f32.mrb[0].mxu0
    %v4415 = vadd.f32 %v4302, %v4414
    %4416 = vmatprep.mubr.bf16.mxu0 %v2242
    %4417 = vmatmul.mubr.bf16.gmra.mrb[0].mxu0 %v2241
    %v4418 = vpop.f32.mrb[0].mxu0
    %v4419 = vadd.f32 %v4306, %v4418
    %v4420 = vpop.f32.mrb[0].mxu0
    %v4421 = vadd.f32 %v4308, %v4420
    %v4422 = vpop.f32.mrb[0].mxu0
    %v4423 = vadd.f32 %v4310, %v4422
    %v4424 = vpop.f32.mrb[0].mxu0
    %v4425 = vadd.f32 %v4312, %v4424
    %4426 = vmatprep.mubr.bf16.mxu0 %v2246
    %4427 = vmatmul.mubr.bf16.gmra.mrb[0].mxu0 %v2245
    %v4428 = vpop.f32.mrb[0].mxu0
    %v4429 = vadd.f32 %v4316, %v4428
    %v4430 = vpop.f32.mrb[0].mxu0
    %v4431 = vadd.f32 %v4318, %v4430
    %v4432 = vpop.f32.mrb[0].mxu0
    %v4433 = vadd.f32 %v4320, %v4432
    %v4434 = vpop.f32.mrb[0].mxu0
    %v4435 = vadd.f32 %v4322, %v4434
    %4436 = vmatprep.mubr.bf16.mxu0 %v2250
    %4437 = vmatmul.mubr.bf16.gmra.mrb[0].mxu0 %v2249
    %v4438 = vpop.f32.mrb[0].mxu0
    %v4439 = vadd.f32 %v4326, %v4438
    %v4440 = vpop.f32.mrb[0].mxu0
    %v4441 = vadd.f32 %v4328, %v4440
    %v4442 = vpop.f32.mrb[0].mxu0
    %v4443 = vadd.f32 %v4330, %v4442
    %v4444 = vpop.f32.mrb[0].mxu0
    %v4445 = vadd.f32 %v4332, %v4444
    %4446 = vmatprep.mubr.bf16.mxu0 %v2254
    %4447 = vmatmul.mubr.bf16.gmra.mrb[0].mxu0 %v2253
    %v4448 = vpop.f32.mrb[0].mxu0
    %v4449 = vadd.f32 %v4336, %v4448
    %v4450 = vpop.f32.mrb[0].mxu0
    %v4451 = vadd.f32 %v4338, %v4450
    %v4452 = vpop.f32.mrb[0].mxu0
    %v4453 = vadd.f32 %v4340, %v4452
    %v4454 = vpop.f32.mrb[0].mxu0
    %v4455 = vadd.f32 %v4342, %v4454
    %4456 = vmatprep.mubr.bf16.mxu0 %v2258
    %4457 = vmatmul.mubr.bf16.gmra.mrb[0].mxu0 %v2257
    %v4458 = vpop.f32.mrb[0].mxu0
    %v4459 = vadd.f32 %v4346, %v4458
    %v4460 = vpop.f32.mrb[0].mxu0
    %v4461 = vadd.f32 %v4348, %v4460
    %v4462 = vpop.f32.mrb[0].mxu0
    %v4463 = vadd.f32 %v4350, %v4462
    %v4464 = vpop.f32.mrb[0].mxu0
    %v4465 = vadd.f32 %v4352, %v4464
    %4466 = vmatprep.mubr.bf16.mxu0 %v2262
    %4467 = vmatmul.mubr.bf16.gmra.mrb[0].mxu0 %v2261
    %v4468 = vpop.f32.mrb[0].mxu0
    %v4469 = vadd.f32 %v4356, %v4468
    %v4470 = vpop.f32.mrb[0].mxu0
    %v4471 = vadd.f32 %v4358, %v4470
    %v4472 = vpop.f32.mrb[0].mxu0
    %v4473 = vadd.f32 %v4360, %v4472
    %v4474 = vpop.f32.mrb[0].mxu0
    %v4475 = vadd.f32 %v4362, %v4474
    %4476 = vdwg.mxu0
    %4477 = vmatprep.subr.bf16.mxu0 %v3294
    %4478 = vmatpush1.bf16.msra.mxu0 %v3293
    %4479 = vmatprep.subr.bf16.mxu0 %v3302
    %4480 = vmatpush1.bf16.msra.mxu0 %v3301
    %4481 = vmatprep.subr.bf16.mxu0 %v3310
    %4482 = vmatpush1.bf16.msra.mxu0 %v3309
    %4483 = vmatprep.subr.bf16.mxu0 %v3318
    %4484 = vmatpush1.bf16.msra.mxu0 %v3317
    %4485 = vmatprep.subr.bf16.mxu0 %v3326
    %4486 = vmatpush1.bf16.msra.mxu0 %v3325
    %4487 = vmatprep.subr.bf16.mxu0 %v3334
    %4488 = vmatpush1.bf16.msra.mxu0 %v3333
    %4489 = vmatprep.subr.bf16.mxu0 %v3342
    %4490 = vmatpush1.bf16.msra.mxu0 %v3341
    %4491 = vmatprep.subr.bf16.mxu0 %v3350
    %4492 = vmatpush1.bf16.msra.mxu0 %v3349
    %4493 = vmatprep.subr.bf16.mxu0 %v3358
    %4494 = vmatpush1.bf16.msra.mxu0 %v3357
    %4495 = vmatprep.subr.bf16.mxu0 %v3366
    %4496 = vmatpush1.bf16.msra.mxu0 %v3365
    %4497 = vmatprep.subr.bf16.mxu0 %v3374
    %4498 = vmatpush1.bf16.msra.mxu0 %v3373
    %4499 = vmatprep.subr.bf16.mxu0 %v3382
    %4500 = vmatpush1.bf16.msra.mxu0 %v3381
    %4501 = vmatprep.subr.bf16.mxu0 %v3390
    %4502 = vmatpush1.bf16.msra.mxu0 %v3389
    %4503 = vmatprep.subr.bf16.mxu0 %v3398
    %4504 = vmatpush1.bf16.msra.mxu0 %v3397
    %4505 = vmatprep.subr.bf16.mxu0 %v3406
    %4506 = vmatpush1.bf16.msra.mxu0 %v3405
    %4507 = vmatprep.subr.bf16.mxu0 %v3414
    %4508 = vmatpush1.bf16.msra.mxu0 %v3413
    %4509 = vmatprep.mubr.bf16.mxu0 %v2232
    %4510 = vmatmul.mubr.bf16.gmra.mrb[0].mxu0 %v2231
    %v4511 = vpop.f32.mrb[0].mxu0
    %v4512 = vadd.f32 0.0, %v4511
    %v4513 = vpop.f32.mrb[0].mxu0
    %v4514 = vadd.f32 0.0, %v4513
    %v4515 = vpop.f32.mrb[0].mxu0
    %v4516 = vadd.f32 0.0, %v4515
    %v4517 = vpop.f32.mrb[0].mxu0
    %v4518 = vadd.f32 0.0, %v4517
    %4519 = vmatprep.mubr.bf16.mxu0 %v2236
    %4520 = vmatmul.mubr.bf16.gmra.mrb[0].mxu0 %v2235
    %v4521 = vpop.f32.mrb[0].mxu0
    %v4522 = vadd.f32 0.0, %v4521
    %v4523 = vpop.f32.mrb[0].mxu0
    %v4524 = vadd.f32 0.0, %v4523
    %v4525 = vpop.f32.mrb[0].mxu0
    %v4526 = vadd.f32 0.0, %v4525
    %v4527 = vpop.f32.mrb[0].mxu0
    %v4528 = vadd.f32 0.0, %v4527
    %4529 = vmatprep.mubr.bf16.mxu0 %v2240
    %4530 = vmatmul.mubr.bf16.gmra.mrb[0].mxu0 %v2239
    %v4531 = vpop.f32.mrb[0].mxu0
    %v4532 = vadd.f32 0.0, %v4531
    %v4533 = vpop.f32.mrb[0].mxu0
    %v4534 = vadd.f32 0.0, %v4533
    %v4535 = vpop.f32.mrb[0].mxu0
    %v4536 = vadd.f32 0.0, %v4535
    %v4537 = vpop.f32.mrb[0].mxu0
    %v4538 = vadd.f32 0.0, %v4537
    %4539 = vmatprep.mubr.bf16.mxu0 %v2244
    %4540 = vmatmul.mubr.bf16.gmra.mrb[0].mxu0 %v2243
    %v4541 = vpop.f32.mrb[0].mxu0
    %v4542 = vadd.f32 0.0, %v4541
    %v4543 = vpop.f32.mrb[0].mxu0
    %v4544 = vadd.f32 0.0, %v4543
    %v4545 = vpop.f32.mrb[0].mxu0
    %v4546 = vadd.f32 0.0, %v4545
    %v4547 = vpop.f32.mrb[0].mxu0
    %v4548 = vadd.f32 0.0, %v4547
    %4549 = vmatprep.mubr.bf16.mxu0 %v2248
    %4550 = vmatmul.mubr.bf16.gmra.mrb[0].mxu0 %v2247
    %v4551 = vpop.f32.mrb[0].mxu0
    %v4552 = vadd.f32 0.0, %v4551
    %v4553 = vpop.f32.mrb[0].mxu0
    %v4554 = vadd.f32 0.0, %v4553
    %v4555 = vpop.f32.mrb[0].mxu0
    %v4556 = vadd.f32 0.0, %v4555
    %v4557 = vpop.f32.mrb[0].mxu0
    %v4558 = vadd.f32 0.0, %v4557
    %4559 = vmatprep.mubr.bf16.mxu0 %v2252
    %4560 = vmatmul.mubr.bf16.gmra.mrb[0].mxu0 %v2251
    %v4561 = vpop.f32.mrb[0].mxu0
    %v4562 = vadd.f32 0.0, %v4561
    %v4563 = vpop.f32.mrb[0].mxu0
    %v4564 = vadd.f32 0.0, %v4563
    %v4565 = vpop.f32.mrb[0].mxu0
    %v4566 = vadd.f32 0.0, %v4565
    %v4567 = vpop.f32.mrb[0].mxu0
    %v4568 = vadd.f32 0.0, %v4567
    %4569 = vmatprep.mubr.bf16.mxu0 %v2256
    %4570 = vmatmul.mubr.bf16.gmra.mrb[0].mxu0 %v2255
    %v4571 = vpop.f32.mrb[0].mxu0
    %v4572 = vadd.f32 0.0, %v4571
    %v4573 = vpop.f32.mrb[0].mxu0
    %v4574 = vadd.f32 0.0, %v4573
    %v4575 = vpop.f32.mrb[0].mxu0
    %v4576 = vadd.f32 0.0, %v4575
    %v4577 = vpop.f32.mrb[0].mxu0
    %v4578 = vadd.f32 0.0, %v4577
    %4579 = vmatprep.mubr.bf16.mxu0 %v2260
    %4580 = vmatmul.mubr.bf16.gmra.mrb[0].mxu0 %v2259
    %v4581 = vpop.f32.mrb[0].mxu0
    %v4582 = vadd.f32 0.0, %v4581
    %v4583 = vpop.f32.mrb[0].mxu0
    %v4584 = vadd.f32 0.0, %v4583
    %v4585 = vpop.f32.mrb[0].mxu0
    %v4586 = vadd.f32 0.0, %v4585
    %v4587 = vpop.f32.mrb[0].mxu0
    %v4588 = vadd.f32 0.0, %v4587
    %4589 = vdwg.mxu0
    %4590 = vmatprep.subr.bf16.mxu0 %v3422
    %4591 = vmatpush1.bf16.msra.mxu0 %v3421
    %4592 = vmatprep.subr.bf16.mxu0 %v3430
    %4593 = vmatpush1.bf16.msra.mxu0 %v3429
    %4594 = vmatprep.subr.bf16.mxu0 %v3438
    %4595 = vmatpush1.bf16.msra.mxu0 %v3437
    %4596 = vmatprep.subr.bf16.mxu0 %v3446
    %4597 = vmatpush1.bf16.msra.mxu0 %v3445
    %4598 = vmatprep.subr.bf16.mxu0 %v3454
    %4599 = vmatpush1.bf16.msra.mxu0 %v3453
    %4600 = vmatprep.subr.bf16.mxu0 %v3462
    %4601 = vmatpush1.bf16.msra.mxu0 %v3461
    %4602 = vmatprep.subr.bf16.mxu0 %v3470
    %4603 = vmatpush1.bf16.msra.mxu0 %v3469
    %4604 = vmatprep.subr.bf16.mxu0 %v3478
    %4605 = vmatpush1.bf16.msra.mxu0 %v3477
    %4606 = vmatprep.subr.bf16.mxu0 %v3486
    %4607 = vmatpush1.bf16.msra.mxu0 %v3485
    %4608 = vmatprep.subr.bf16.mxu0 %v3494
    %4609 = vmatpush1.bf16.msra.mxu0 %v3493
    %4610 = vmatprep.subr.bf16.mxu0 %v3502
    %4611 = vmatpush1.bf16.msra.mxu0 %v3501
    %4612 = vmatprep.subr.bf16.mxu0 %v3510
    %4613 = vmatpush1.bf16.msra.mxu0 %v3509
    %4614 = vmatprep.subr.bf16.mxu0 %v3518
    %4615 = vmatpush1.bf16.msra.mxu0 %v3517
    %4616 = vmatprep.subr.bf16.mxu0 %v3526
    %4617 = vmatpush1.bf16.msra.mxu0 %v3525
    %4618 = vmatprep.subr.bf16.mxu0 %v3534
    %4619 = vmatpush1.bf16.msra.mxu0 %v3533
    %4620 = vmatprep.subr.bf16.mxu0 %v3542
    %4621 = vmatpush1.bf16.msra.mxu0 %v3541
    %4622 = vmatprep.mubr.bf16.mxu0 %v2234
    %4623 = vmatmul.mubr.bf16.gmra.mrb[0].mxu0 %v2233
    %v4624 = vpop.f32.mrb[0].mxu0
    %v4625 = vadd.f32 %v4512, %v4624
    %v4626 = vpop.f32.mrb[0].mxu0
    %v4627 = vadd.f32 %v4514, %v4626
    %v4628 = vpop.f32.mrb[0].mxu0
    %v4629 = vadd.f32 %v4516, %v4628
    %v4630 = vpop.f32.mrb[0].mxu0
    %v4631 = vadd.f32 %v4518, %v4630
    %4632 = vmatprep.mubr.bf16.mxu0 %v2238
    %4633 = vmatmul.mubr.bf16.gmra.mrb[0].mxu0 %v2237
    %v4634 = vpop.f32.mrb[0].mxu0
    %v4635 = vadd.f32 %v4522, %v4634
    %v4636 = vpop.f32.mrb[0].mxu0
    %v4637 = vadd.f32 %v4524, %v4636
    %v4638 = vpop.f32.mrb[0].mxu0
    %v4639 = vadd.f32 %v4526, %v4638
    %v4640 = vpop.f32.mrb[0].mxu0
    %v4641 = vadd.f32 %v4528, %v4640
    %4642 = vmatprep.mubr.bf16.mxu0 %v2242
    %4643 = vmatmul.mubr.bf16.gmra.mrb[0].mxu0 %v2241
    %v4644 = vpop.f32.mrb[0].mxu0
    %v4645 = vadd.f32 %v4532, %v4644
    %v4646 = vpop.f32.mrb[0].mxu0
    %v4647 = vadd.f32 %v4534, %v4646
    %v4648 = vpop.f32.mrb[0].mxu0
    %v4649 = vadd.f32 %v4536, %v4648
    %v4650 = vpop.f32.mrb[0].mxu0
    %v4651 = vadd.f32 %v4538, %v4650
    %4652 = vmatprep.mubr.bf16.mxu0 %v2246
    %4653 = vmatmul.mubr.bf16.gmra.mrb[0].mxu0 %v2245
    %v4654 = vpop.f32.mrb[0].mxu0
    %v4655 = vadd.f32 %v4542, %v4654
    %v4656 = vpop.f32.mrb[0].mxu0
    %v4657 = vadd.f32 %v4544, %v4656
    %v4658 = vpop.f32.mrb[0].mxu0
    %v4659 = vadd.f32 %v4546, %v4658
    %v4660 = vpop.f32.mrb[0].mxu0
    %v4661 = vadd.f32 %v4548, %v4660
    %4662 = vmatprep.mubr.bf16.mxu0 %v2250
    %4663 = vmatmul.mubr.bf16.gmra.mrb[0].mxu0 %v2249
    %v4664 = vpop.f32.mrb[0].mxu0
    %v4665 = vadd.f32 %v4552, %v4664
    %v4666 = vpop.f32.mrb[0].mxu0
    %v4667 = vadd.f32 %v4554, %v4666
    %v4668 = vpop.f32.mrb[0].mxu0
    %v4669 = vadd.f32 %v4556, %v4668
    %v4670 = vpop.f32.mrb[0].mxu0
    %v4671 = vadd.f32 %v4558, %v4670
    %4672 = vmatprep.mubr.bf16.mxu0 %v2254
    %4673 = vmatmul.mubr.bf16.gmra.mrb[0].mxu0 %v2253
    %v4674 = vpop.f32.mrb[0].mxu0
    %v4675 = vadd.f32 %v4562, %v4674
    %v4676 = vpop.f32.mrb[0].mxu0
    %v4677 = vadd.f32 %v4564, %v4676
    %v4678 = vpop.f32.mrb[0].mxu0
    %v4679 = vadd.f32 %v4566, %v4678
    %v4680 = vpop.f32.mrb[0].mxu0
    %v4681 = vadd.f32 %v4568, %v4680
    %4682 = vmatprep.mubr.bf16.mxu0 %v2258
    %4683 = vmatmul.mubr.bf16.gmra.mrb[0].mxu0 %v2257
    %v4684 = vpop.f32.mrb[0].mxu0
    %v4685 = vadd.f32 %v4572, %v4684
    %v4686 = vpop.f32.mrb[0].mxu0
    %v4687 = vadd.f32 %v4574, %v4686
    %v4688 = vpop.f32.mrb[0].mxu0
    %v4689 = vadd.f32 %v4576, %v4688
    %v4690 = vpop.f32.mrb[0].mxu0
    %v4691 = vadd.f32 %v4578, %v4690
    %4692 = vmatprep.mubr.bf16.mxu0 %v2262
    %4693 = vmatmul.mubr.bf16.gmra.mrb[0].mxu0 %v2261
    %v4694 = vpop.f32.mrb[0].mxu0
    %v4695 = vadd.f32 %v4582, %v4694
    %v4696 = vpop.f32.mrb[0].mxu0
    %v4697 = vadd.f32 %v4584, %v4696
    %v4698 = vpop.f32.mrb[0].mxu0
    %v4699 = vadd.f32 %v4586, %v4698
    %v4700 = vpop.f32.mrb[0].mxu0
    %v4701 = vadd.f32 %v4588, %v4700
    %4702 = vdwg.mxu0
    %v4703 = vld [vmem:[#allocation21] sm:$0xff]
    %v4704 = vld [vmem:[#allocation22] sm:$0xff]
    %v4705 = vadd.f32 %v3947, %v3951
    %v4706 = vadd.f32 %v4705, %v3957
    %v4707 = vadd.f32 %v4706, %v3961
    %v4708 = vadd.f32 %v4707, %v3967
    %v4709 = vadd.f32 %v4708, %v3971
    %v4710 = vadd.f32 %v4709, %v3977
    %v4711 = vadd.f32 %v4710, %v3981
    %v4712 = vadd.f32 %v4711, %v3987
    %v4713 = vadd.f32 %v4712, %v3991
    %v4714 = vadd.f32 %v4713, %v3997
    %v4715 = vadd.f32 %v4714, %v4001
    %v4716 = vadd.f32 %v4715, %v4007
    %v4717 = vadd.f32 %v4716, %v4011
    %v4718 = vadd.f32 %v4717, %v4017
    %v4719 = vadd.f32 %v4718, %v4021
    %v4720 = vrot.slane %v4719, 4
    %v4721 = vadd.f32 %v4719, %v4720
    %v4722 = vrot.slane %v4721, 2
    %v4723 = vadd.f32 %v4721, %v4722
    %v4724 = vrot.slane %v4723, 1
    %v4725 = vadd.f32 %v4723, %v4724
    %v4726 = vadd.f32 %v3949, %v3953
    %v4727 = vadd.f32 %v4726, %v3959
    %v4728 = vadd.f32 %v4727, %v3963
    %v4729 = vadd.f32 %v4728, %v3969
    %v4730 = vadd.f32 %v4729, %v3973
    %v4731 = vadd.f32 %v4730, %v3979
    %v4732 = vadd.f32 %v4731, %v3983
    %v4733 = vadd.f32 %v4732, %v3989
    %v4734 = vadd.f32 %v4733, %v3993
    %v4735 = vadd.f32 %v4734, %v3999
    %v4736 = vadd.f32 %v4735, %v4003
    %v4737 = vadd.f32 %v4736, %v4009
    %v4738 = vadd.f32 %v4737, %v4013
    %v4739 = vadd.f32 %v4738, %v4019
    %v4740 = vadd.f32 %v4739, %v4023
    %v4741 = vrot.slane %v4740, 4
    %v4742 = vadd.f32 %v4740, %v4741
    %v4743 = vrot.slane %v4742, 2
    %v4744 = vadd.f32 %v4742, %v4743
    %v4745 = vrot.slane %v4744, 1
    %v4746 = vadd.f32 %v4744, %v4745
    %v4747 = vadd.f32 %v4173, %v4177
    %v4748 = vadd.f32 %v4747, %v4183
    %v4749 = vadd.f32 %v4748, %v4187
    %v4750 = vadd.f32 %v4749, %v4193
    %v4751 = vadd.f32 %v4750, %v4197
    %v4752 = vadd.f32 %v4751, %v4203
    %v4753 = vadd.f32 %v4752, %v4207
    %v4754 = vadd.f32 %v4753, %v4213
    %v4755 = vadd.f32 %v4754, %v4217
    %v4756 = vadd.f32 %v4755, %v4223
    %v4757 = vadd.f32 %v4756, %v4227
    %v4758 = vadd.f32 %v4757, %v4233
    %v4759 = vadd.f32 %v4758, %v4237
    %v4760 = vadd.f32 %v4759, %v4243
    %v4761 = vadd.f32 %v4760, %v4247
    %v4762 = vrot.slane %v4761, 4
    %v4763 = vadd.f32 %v4761, %v4762
    %v4764 = vrot.slane %v4763, 2
    %v4765 = vadd.f32 %v4763, %v4764
    %v4766 = vrot.slane %v4765, 1
    %v4767 = vadd.f32 %v4765, %v4766
    %v4768 = vadd.f32 %v4175, %v4179
    %v4769 = vadd.f32 %v4768, %v4185
    %v4770 = vadd.f32 %v4769, %v4189
    %v4771 = vadd.f32 %v4770, %v4195
    %v4772 = vadd.f32 %v4771, %v4199
    %v4773 = vadd.f32 %v4772, %v4205
    %v4774 = vadd.f32 %v4773, %v4209
    %v4775 = vadd.f32 %v4774, %v4215
    %v4776 = vadd.f32 %v4775, %v4219
    %v4777 = vadd.f32 %v4776, %v4225
    %v4778 = vadd.f32 %v4777, %v4229
    %v4779 = vadd.f32 %v4778, %v4235
    %v4780 = vadd.f32 %v4779, %v4239
    %v4781 = vadd.f32 %v4780, %v4245
    %v4782 = vadd.f32 %v4781, %v4249
    %v4783 = vrot.slane %v4782, 4
    %v4784 = vadd.f32 %v4782, %v4783
    %v4785 = vrot.slane %v4784, 2
    %v4786 = vadd.f32 %v4784, %v4785
    %v4787 = vrot.slane %v4786, 1
    %v4788 = vadd.f32 %v4786, %v4787
    %v4789 = vadd.f32 %v4399, %v4403
    %v4790 = vadd.f32 %v4789, %v4409
    %v4791 = vadd.f32 %v4790, %v4413
    %v4792 = vadd.f32 %v4791, %v4419
    %v4793 = vadd.f32 %v4792, %v4423
    %v4794 = vadd.f32 %v4793, %v4429
    %v4795 = vadd.f32 %v4794, %v4433
    %v4796 = vadd.f32 %v4795, %v4439
    %v4797 = vadd.f32 %v4796, %v4443
    %v4798 = vadd.f32 %v4797, %v4449
    %v4799 = vadd.f32 %v4798, %v4453
    %v4800 = vadd.f32 %v4799, %v4459
    %v4801 = vadd.f32 %v4800, %v4463
    %v4802 = vadd.f32 %v4801, %v4469
    %v4803 = vadd.f32 %v4802, %v4473
    %v4804 = vrot.slane %v4803, 4
    %v4805 = vadd.f32 %v4803, %v4804
    %v4806 = vrot.slane %v4805, 2
    %v4807 = vadd.f32 %v4805, %v4806
    %v4808 = vrot.slane %v4807, 1
    %v4809 = vadd.f32 %v4807, %v4808
    %v4810 = vadd.f32 %v4401, %v4405
    %v4811 = vadd.f32 %v4810, %v4411
    %v4812 = vadd.f32 %v4811, %v4415
    %v4813 = vadd.f32 %v4812, %v4421
    %v4814 = vadd.f32 %v4813, %v4425
    %v4815 = vadd.f32 %v4814, %v4431
    %v4816 = vadd.f32 %v4815, %v4435
    %v4817 = vadd.f32 %v4816, %v4441
    %v4818 = vadd.f32 %v4817, %v4445
    %v4819 = vadd.f32 %v4818, %v4451
    %v4820 = vadd.f32 %v4819, %v4455
    %v4821 = vadd.f32 %v4820, %v4461
    %v4822 = vadd.f32 %v4821, %v4465
    %v4823 = vadd.f32 %v4822, %v4471
    %v4824 = vadd.f32 %v4823, %v4475
    %v4825 = vrot.slane %v4824, 4
    %v4826 = vadd.f32 %v4824, %v4825
    %v4827 = vrot.slane %v4826, 2
    %v4828 = vadd.f32 %v4826, %v4827
    %v4829 = vrot.slane %v4828, 1
    %v4830 = vadd.f32 %v4828, %v4829
    %v4831 = vadd.f32 %v4625, %v4629
    %v4832 = vadd.f32 %v4831, %v4635
    %v4833 = vadd.f32 %v4832, %v4639
    %v4834 = vadd.f32 %v4833, %v4645
    %v4835 = vadd.f32 %v4834, %v4649
    %v4836 = vadd.f32 %v4835, %v4655
    %v4837 = vadd.f32 %v4836, %v4659
    %v4838 = vadd.f32 %v4837, %v4665
    %v4839 = vadd.f32 %v4838, %v4669
    %v4840 = vadd.f32 %v4839, %v4675
    %v4841 = vadd.f32 %v4840, %v4679
    %v4842 = vadd.f32 %v4841, %v4685
    %v4843 = vadd.f32 %v4842, %v4689
    %v4844 = vadd.f32 %v4843, %v4695
    %v4845 = vadd.f32 %v4844, %v4699
    %v4846 = vrot.slane %v4845, 4
    %v4847 = vadd.f32 %v4845, %v4846
    %v4848 = vrot.slane %v4847, 2
    %v4849 = vadd.f32 %v4847, %v4848
    %v4850 = vrot.slane %v4849, 1
    %v4851 = vadd.f32 %v4849, %v4850
    %v4852 = vadd.f32 %v4627, %v4631
    %v4853 = vadd.f32 %v4852, %v4637
    %v4854 = vadd.f32 %v4853, %v4641
    %v4855 = vadd.f32 %v4854, %v4647
    %v4856 = vadd.f32 %v4855, %v4651
    %v4857 = vadd.f32 %v4856, %v4657
    %v4858 = vadd.f32 %v4857, %v4661
    %v4859 = vadd.f32 %v4858, %v4667
    %v4860 = vadd.f32 %v4859, %v4671
    %v4861 = vadd.f32 %v4860, %v4677
    %v4862 = vadd.f32 %v4861, %v4681
    %v4863 = vadd.f32 %v4862, %v4687
    %v4864 = vadd.f32 %v4863, %v4691
    %v4865 = vadd.f32 %v4864, %v4697
    %v4866 = vadd.f32 %v4865, %v4701
    %v4867 = vrot.slane %v4866, 4
    %v4868 = vadd.f32 %v4866, %v4867
    %v4869 = vrot.slane %v4868, 2
    %v4870 = vadd.f32 %v4868, %v4869
    %v4871 = vrot.slane %v4870, 1
    %v4872 = vadd.f32 %v4870, %v4871
    %v4873 = vmul.f32 %v3947, %v3947
    %v4874 = vmul.f32 %v3949, %v3949
    %v4875 = vmul.f32 %v4173, %v4173
    %v4876 = vmul.f32 %v4175, %v4175
    %v4877 = vmul.f32 %v4399, %v4399
    %v4878 = vmul.f32 %v4401, %v4401
    %v4879 = vmul.f32 %v4625, %v4625
    %v4880 = vmul.f32 %v4627, %v4627
    %v4881 = vmul.f32 %v3951, %v3951
    %v4882 = vmul.f32 %v3953, %v3953
    %v4883 = vmul.f32 %v4177, %v4177
    %v4884 = vmul.f32 %v4179, %v4179
    %v4885 = vmul.f32 %v4403, %v4403
    %v4886 = vmul.f32 %v4405, %v4405
    %v4887 = vmul.f32 %v4629, %v4629
    %v4888 = vmul.f32 %v4631, %v4631
    %v4889 = vmul.f32 %v3957, %v3957
    %v4890 = vmul.f32 %v3959, %v3959
    %v4891 = vmul.f32 %v4183, %v4183
    %v4892 = vmul.f32 %v4185, %v4185
    %v4893 = vmul.f32 %v4409, %v4409
    %v4894 = vmul.f32 %v4411, %v4411
    %v4895 = vmul.f32 %v4635, %v4635
    %v4896 = vmul.f32 %v4637, %v4637
    %v4897 = vmul.f32 %v3961, %v3961
    %v4898 = vmul.f32 %v3963, %v3963
    %v4899 = vmul.f32 %v4187, %v4187
    %v4900 = vmul.f32 %v4189, %v4189
    %v4901 = vmul.f32 %v4413, %v4413
    %v4902 = vmul.f32 %v4415, %v4415
    %v4903 = vmul.f32 %v4639, %v4639
    %v4904 = vmul.f32 %v4641, %v4641
    %v4905 = vmul.f32 %v3967, %v3967
    %v4906 = vmul.f32 %v3969, %v3969
    %v4907 = vmul.f32 %v4193, %v4193
    %v4908 = vmul.f32 %v4195, %v4195
    %v4909 = vmul.f32 %v4419, %v4419
    %v4910 = vmul.f32 %v4421, %v4421
    %v4911 = vmul.f32 %v4645, %v4645
    %v4912 = vmul.f32 %v4647, %v4647
    %v4913 = vmul.f32 %v3971, %v3971
    %v4914 = vmul.f32 %v3973, %v3973
    %v4915 = vmul.f32 %v4197, %v4197
    %v4916 = vmul.f32 %v4199, %v4199
    %v4917 = vmul.f32 %v4423, %v4423
    %v4918 = vmul.f32 %v4425, %v4425
    %v4919 = vmul.f32 %v4649, %v4649
    %v4920 = vmul.f32 %v4651, %v4651
    %v4921 = vmul.f32 %v3977, %v3977
    %v4922 = vmul.f32 %v3979, %v3979
    %v4923 = vmul.f32 %v4203, %v4203
    %v4924 = vmul.f32 %v4205, %v4205
    %v4925 = vmul.f32 %v4429, %v4429
    %v4926 = vmul.f32 %v4431, %v4431
    %v4927 = vmul.f32 %v4655, %v4655
    %v4928 = vmul.f32 %v4657, %v4657
    %v4929 = vmul.f32 %v3981, %v3981
    %v4930 = vmul.f32 %v3983, %v3983
    %v4931 = vmul.f32 %v4207, %v4207
    %v4932 = vmul.f32 %v4209, %v4209
    %v4933 = vmul.f32 %v4433, %v4433
    %v4934 = vmul.f32 %v4435, %v4435
    %v4935 = vmul.f32 %v4659, %v4659
    %v4936 = vmul.f32 %v4661, %v4661
    %v4937 = vmul.f32 %v3987, %v3987
    %v4938 = vmul.f32 %v3989, %v3989
    %v4939 = vmul.f32 %v4213, %v4213
    %v4940 = vmul.f32 %v4215, %v4215
    %v4941 = vmul.f32 %v4439, %v4439
    %v4942 = vmul.f32 %v4441, %v4441
    %v4943 = vmul.f32 %v4665, %v4665
    %v4944 = vmul.f32 %v4667, %v4667
    %v4945 = vmul.f32 %v3991, %v3991
    %v4946 = vmul.f32 %v3993, %v3993
    %v4947 = vmul.f32 %v4217, %v4217
    %v4948 = vmul.f32 %v4219, %v4219
    %v4949 = vmul.f32 %v4443, %v4443
    %v4950 = vmul.f32 %v4445, %v4445
    %v4951 = vmul.f32 %v4669, %v4669
    %v4952 = vmul.f32 %v4671, %v4671
    %v4953 = vmul.f32 %v3997, %v3997
    %v4954 = vmul.f32 %v3999, %v3999
    %v4955 = vmul.f32 %v4223, %v4223
    %v4956 = vmul.f32 %v4225, %v4225
    %v4957 = vmul.f32 %v4449, %v4449
    %v4958 = vmul.f32 %v4451, %v4451
    %v4959 = vmul.f32 %v4675, %v4675
    %v4960 = vmul.f32 %v4677, %v4677
    %v4961 = vmul.f32 %v4001, %v4001
    %v4962 = vmul.f32 %v4003, %v4003
    %v4963 = vmul.f32 %v4227, %v4227
    %v4964 = vmul.f32 %v4229, %v4229
    %v4965 = vmul.f32 %v4453, %v4453
    %v4966 = vmul.f32 %v4455, %v4455
    %v4967 = vmul.f32 %v4679, %v4679
    %v4968 = vmul.f32 %v4681, %v4681
    %v4969 = vmul.f32 %v4007, %v4007
    %v4970 = vmul.f32 %v4009, %v4009
    %v4971 = vmul.f32 %v4233, %v4233
    %v4972 = vmul.f32 %v4235, %v4235
    %v4973 = vmul.f32 %v4459, %v4459
    %v4974 = vmul.f32 %v4461, %v4461
    %v4975 = vmul.f32 %v4685, %v4685
    %v4976 = vmul.f32 %v4687, %v4687
    %v4977 = vmul.f32 %v4011, %v4011
    %v4978 = vmul.f32 %v4013, %v4013
    %v4979 = vmul.f32 %v4237, %v4237
    %v4980 = vmul.f32 %v4239, %v4239
    %v4981 = vmul.f32 %v4463, %v4463
    %v4982 = vmul.f32 %v4465, %v4465
    %v4983 = vmul.f32 %v4689, %v4689
    %v4984 = vmul.f32 %v4691, %v4691
    %v4985 = vmul.f32 %v4017, %v4017
    %v4986 = vmul.f32 %v4019, %v4019
    %v4987 = vmul.f32 %v4243, %v4243
    %v4988 = vmul.f32 %v4245, %v4245
    %v4989 = vmul.f32 %v4469, %v4469
    %v4990 = vmul.f32 %v4471, %v4471
    %v4991 = vmul.f32 %v4695, %v4695
    %v4992 = vmul.f32 %v4697, %v4697
    %v4993 = vmul.f32 %v4021, %v4021
    %v4994 = vmul.f32 %v4023, %v4023
    %v4995 = vmul.f32 %v4247, %v4247
    %v4996 = vmul.f32 %v4249, %v4249
    %v4997 = vmul.f32 %v4473, %v4473
    %v4998 = vmul.f32 %v4475, %v4475
    %v4999 = vmul.f32 %v4699, %v4699
    %v5000 = vmul.f32 %v4701, %v4701
    %v5001 = vadd.f32 %v4873, %v4881
    %v5002 = vadd.f32 %v5001, %v4889
    %v5003 = vadd.f32 %v5002, %v4897
    %v5004 = vadd.f32 %v5003, %v4905
    %v5005 = vadd.f32 %v5004, %v4913
    %v5006 = vadd.f32 %v5005, %v4921
    %v5007 = vadd.f32 %v5006, %v4929
    %v5008 = vadd.f32 %v5007, %v4937
    %v5009 = vadd.f32 %v5008, %v4945
    %v5010 = vadd.f32 %v5009, %v4953
    %v5011 = vadd.f32 %v5010, %v4961
    %v5012 = vadd.f32 %v5011, %v4969
    %v5013 = vadd.f32 %v5012, %v4977
    %v5014 = vadd.f32 %v5013, %v4985
    %v5015 = vadd.f32 %v5014, %v4993
    %v5016 = vrot.slane %v5015, 4
    %v5017 = vadd.f32 %v5015, %v5016
    %v5018 = vrot.slane %v5017, 2
    %v5019 = vadd.f32 %v5017, %v5018
    %v5020 = vrot.slane %v5019, 1
    %v5021 = vadd.f32 %v5019, %v5020
    %v5022 = vadd.f32 %v4874, %v4882
    %v5023 = vadd.f32 %v5022, %v4890
    %v5024 = vadd.f32 %v5023, %v4898
    %v5025 = vadd.f32 %v5024, %v4906
    %v5026 = vadd.f32 %v5025, %v4914
    %v5027 = vadd.f32 %v5026, %v4922
    %v5028 = vadd.f32 %v5027, %v4930
    %v5029 = vadd.f32 %v5028, %v4938
    %v5030 = vadd.f32 %v5029, %v4946
    %v5031 = vadd.f32 %v5030, %v4954
    %v5032 = vadd.f32 %v5031, %v4962
    %v5033 = vadd.f32 %v5032, %v4970
    %v5034 = vadd.f32 %v5033, %v4978
    %v5035 = vadd.f32 %v5034, %v4986
    %v5036 = vadd.f32 %v5035, %v4994
    %v5037 = vrot.slane %v5036, 4
    %v5038 = vadd.f32 %v5036, %v5037
    %v5039 = vrot.slane %v5038, 2
    %v5040 = vadd.f32 %v5038, %v5039
    %v5041 = vrot.slane %v5040, 1
    %v5042 = vadd.f32 %v5040, %v5041
    %v5043 = vadd.f32 %v4875, %v4883
    %v5044 = vadd.f32 %v5043, %v4891
    %v5045 = vadd.f32 %v5044, %v4899
    %v5046 = vadd.f32 %v5045, %v4907
    %v5047 = vadd.f32 %v5046, %v4915
    %v5048 = vadd.f32 %v5047, %v4923
    %v5049 = vadd.f32 %v5048, %v4931
    %v5050 = vadd.f32 %v5049, %v4939
    %v5051 = vadd.f32 %v5050, %v4947
    %v5052 = vadd.f32 %v5051, %v4955
    %v5053 = vadd.f32 %v5052, %v4963
    %v5054 = vadd.f32 %v5053, %v4971
    %v5055 = vadd.f32 %v5054, %v4979
    %v5056 = vadd.f32 %v5055, %v4987
    %v5057 = vadd.f32 %v5056, %v4995
    %v5058 = vrot.slane %v5057, 4
    %v5059 = vadd.f32 %v5057, %v5058
    %v5060 = vrot.slane %v5059, 2
    %v5061 = vadd.f32 %v5059, %v5060
    %v5062 = vrot.slane %v5061, 1
    %v5063 = vadd.f32 %v5061, %v5062
    %v5064 = vadd.f32 %v4876, %v4884
    %v5065 = vadd.f32 %v5064, %v4892
    %v5066 = vadd.f32 %v5065, %v4900
    %v5067 = vadd.f32 %v5066, %v4908
    %v5068 = vadd.f32 %v5067, %v4916
    %v5069 = vadd.f32 %v5068, %v4924
    %v5070 = vadd.f32 %v5069, %v4932
    %v5071 = vadd.f32 %v5070, %v4940
    %v5072 = vadd.f32 %v5071, %v4948
    %v5073 = vadd.f32 %v5072, %v4956
    %v5074 = vadd.f32 %v5073, %v4964
    %v5075 = vadd.f32 %v5074, %v4972
    %v5076 = vadd.f32 %v5075, %v4980
    %v5077 = vadd.f32 %v5076, %v4988
    %v5078 = vadd.f32 %v5077, %v4996
    %v5079 = vrot.slane %v5078, 4
    %v5080 = vadd.f32 %v5078, %v5079
    %v5081 = vrot.slane %v5080, 2
    %v5082 = vadd.f32 %v5080, %v5081
    %v5083 = vrot.slane %v5082, 1
    %v5084 = vadd.f32 %v5082, %v5083
    %v5085 = vadd.f32 %v4877, %v4885
    %v5086 = vadd.f32 %v5085, %v4893
    %v5087 = vadd.f32 %v5086, %v4901
    %v5088 = vadd.f32 %v5087, %v4909
    %v5089 = vadd.f32 %v5088, %v4917
    %v5090 = vadd.f32 %v5089, %v4925
    %v5091 = vadd.f32 %v5090, %v4933
    %v5092 = vadd.f32 %v5091, %v4941
    %v5093 = vadd.f32 %v5092, %v4949
    %v5094 = vadd.f32 %v5093, %v4957
    %v5095 = vadd.f32 %v5094, %v4965
    %v5096 = vadd.f32 %v5095, %v4973
    %v5097 = vadd.f32 %v5096, %v4981
    %v5098 = vadd.f32 %v5097, %v4989
    %v5099 = vadd.f32 %v5098, %v4997
    %v5100 = vrot.slane %v5099, 4
    %v5101 = vadd.f32 %v5099, %v5100
    %v5102 = vrot.slane %v5101, 2
    %v5103 = vadd.f32 %v5101, %v5102
    %v5104 = vrot.slane %v5103, 1
    %v5105 = vadd.f32 %v5103, %v5104
    %v5106 = vadd.f32 %v4878, %v4886
    %v5107 = vadd.f32 %v5106, %v4894
    %v5108 = vadd.f32 %v5107, %v4902
    %v5109 = vadd.f32 %v5108, %v4910
    %v5110 = vadd.f32 %v5109, %v4918
    %v5111 = vadd.f32 %v5110, %v4926
    %v5112 = vadd.f32 %v5111, %v4934
    %v5113 = vadd.f32 %v5112, %v4942
    %v5114 = vadd.f32 %v5113, %v4950
    %v5115 = vadd.f32 %v5114, %v4958
    %v5116 = vadd.f32 %v5115, %v4966
    %v5117 = vadd.f32 %v5116, %v4974
    %v5118 = vadd.f32 %v5117, %v4982
    %v5119 = vadd.f32 %v5118, %v4990
    %v5120 = vadd.f32 %v5119, %v4998
    %v5121 = vrot.slane %v5120, 4
    %v5122 = vadd.f32 %v5120, %v5121
    %v5123 = vrot.slane %v5122, 2
    %v5124 = vadd.f32 %v5122, %v5123
    %v5125 = vrot.slane %v5124, 1
    %v5126 = vadd.f32 %v5124, %v5125
    %v5127 = vadd.f32 %v4879, %v4887
    %v5128 = vadd.f32 %v5127, %v4895
    %v5129 = vadd.f32 %v5128, %v4903
    %v5130 = vadd.f32 %v5129, %v4911
    %v5131 = vadd.f32 %v5130, %v4919
    %v5132 = vadd.f32 %v5131, %v4927
    %v5133 = vadd.f32 %v5132, %v4935
    %v5134 = vadd.f32 %v5133, %v4943
    %v5135 = vadd.f32 %v5134, %v4951
    %v5136 = vadd.f32 %v5135, %v4959
    %v5137 = vadd.f32 %v5136, %v4967
    %v5138 = vadd.f32 %v5137, %v4975
    %v5139 = vadd.f32 %v5138, %v4983
    %v5140 = vadd.f32 %v5139, %v4991
    %v5141 = vadd.f32 %v5140, %v4999
    %v5142 = vrot.slane %v5141, 4
    %v5143 = vadd.f32 %v5141, %v5142
    %v5144 = vrot.slane %v5143, 2
    %v5145 = vadd.f32 %v5143, %v5144
    %v5146 = vrot.slane %v5145, 1
    %v5147 = vadd.f32 %v5145, %v5146
    %v5148 = vadd.f32 %v4880, %v4888
    %v5149 = vadd.f32 %v5148, %v4896
    %v5150 = vadd.f32 %v5149, %v4904
    %v5151 = vadd.f32 %v5150, %v4912
    %v5152 = vadd.f32 %v5151, %v4920
    %v5153 = vadd.f32 %v5152, %v4928
    %v5154 = vadd.f32 %v5153, %v4936
    %v5155 = vadd.f32 %v5154, %v4944
    %v5156 = vadd.f32 %v5155, %v4952
    %v5157 = vadd.f32 %v5156, %v4960
    %v5158 = vadd.f32 %v5157, %v4968
    %v5159 = vadd.f32 %v5158, %v4976
    %v5160 = vadd.f32 %v5159, %v4984
    %v5161 = vadd.f32 %v5160, %v4992
    %v5162 = vadd.f32 %v5161, %v5000
    %v5163 = vrot.slane %v5162, 4
    %v5164 = vadd.f32 %v5162, %v5163
    %v5165 = vrot.slane %v5164, 2
    %v5166 = vadd.f32 %v5164, %v5165
    %v5167 = vrot.slane %v5166, 1
    %v5168 = vadd.f32 %v5166, %v5167
    %v5169 = vmul.f32 %v4725, 0.0078125
    %v5170 = vmul.f32 %v4746, 0.0078125
    %v5171 = vmul.f32 %v4767, 0.0078125
    %v5172 = vmul.f32 %v4788, 0.0078125
    %v5173 = vmul.f32 %v4809, 0.0078125
    %v5174 = vmul.f32 %v4830, 0.0078125
    %v5175 = vmul.f32 %v4851, 0.0078125
    %v5176 = vmul.f32 %v4872, 0.0078125
    %v5177 = vmul.f32 %v5021, 0.0078125
    %v5178 = vmul.f32 %v5042, 0.0078125
    %v5179 = vmul.f32 %v5063, 0.0078125
    %v5180 = vmul.f32 %v5084, 0.0078125
    %v5181 = vmul.f32 %v5105, 0.0078125
    %v5182 = vmul.f32 %v5126, 0.0078125
    %v5183 = vmul.f32 %v5147, 0.0078125
    %v5184 = vmul.f32 %v5168, 0.0078125
    %v5185 = vmul.f32 %v5169, %v5169
    %v5186 = vmul.f32 %v5170, %v5170
    %v5187 = vmul.f32 %v5171, %v5171
    %v5188 = vmul.f32 %v5172, %v5172
    %v5189 = vmul.f32 %v5173, %v5173
    %v5190 = vmul.f32 %v5174, %v5174
    %v5191 = vmul.f32 %v5175, %v5175
    %v5192 = vmul.f32 %v5176, %v5176
    %v5193 = vsub.f32 %v5177, %v5185
    %v5194 = vsub.f32 %v5178, %v5186
    %v5195 = vsub.f32 %v5179, %v5187
    %v5196 = vsub.f32 %v5180, %v5188
    %v5197 = vsub.f32 %v5181, %v5189
    %v5198 = vsub.f32 %v5182, %v5190
    %v5199 = vsub.f32 %v5183, %v5191
    %v5200 = vsub.f32 %v5184, %v5192
    %v5201 = vmax.f32 %v5193, 0.0
    %v5202 = vmax.f32 %v5194, 0.0
    %v5203 = vmax.f32 %v5195, 0.0
    %v5204 = vmax.f32 %v5196, 0.0
    %v5205 = vmax.f32 %v5197, 0.0
    %v5206 = vmax.f32 %v5198, 0.0
    %v5207 = vmax.f32 %v5199, 0.0
    %v5208 = vmax.f32 %v5200, 0.0
    %v5209 = vadd.f32 %v5201, 1e-05
    %v5210 = vadd.f32 %v5202, 1e-05
    %v5211 = vadd.f32 %v5203, 1e-05
    %v5212 = vadd.f32 %v5204, 1e-05
    %v5213 = vadd.f32 %v5205, 1e-05
    %v5214 = vadd.f32 %v5206, 1e-05
    %v5215 = vadd.f32 %v5207, 1e-05
    %v5216 = vadd.f32 %v5208, 1e-05
    %v5217 = vrsqrt.pop %v5209
    %v5218 = vrsqrt.pop %v5210
    %v5219 = vrsqrt.pop %v5211
    %v5220 = vrsqrt.pop %v5212
    %v5221 = vrsqrt.pop %v5213
    %v5222 = vrsqrt.pop %v5214
    %v5223 = vrsqrt.pop %v5215
    %v5224 = vrsqrt.pop %v5216
    %v5233 = vcombine.low %v5217, %v5218
    %v5234 = vcombine.low %v5219, %v5220
    %v5235 = vcombine.low %v5221, %v5222
    %v5236 = vcombine.low %v5223, %v5224
    %v5238 = vunpack.c.l.s4 1966171168
    %v5239 = vunpack.c.0.s8 %v5238
    %v5240 = vlaneseq
    %v5241 = vshrl.u32 %v5240, 7
    %v5242 = vsub.s32 %v5239, %v5241
    %v5243 = vrot.slane %v5233, %v5242
    %v5245 = vunpack.c.l.s4 1966171168
    %v5246 = vunpack.c.0.s8 %v5245
    %v5247 = vlaneseq
    %v5248 = vshrl.u32 %v5247, 7
    %v5249 = vsub.s32 %v5246, %v5248
    %v5250 = vrot.slane %v5234, %v5249
    %v5252 = vunpack.c.l.s4 1966171168
    %v5253 = vunpack.c.0.s8 %v5252
    %v5254 = vlaneseq
    %v5255 = vshrl.u32 %v5254, 7
    %v5256 = vsub.s32 %v5253, %v5255
    %v5257 = vrot.slane %v5235, %v5256
    %v5259 = vunpack.c.l.s4 1966171168
    %v5260 = vunpack.c.0.s8 %v5259
    %v5261 = vlaneseq
    %v5262 = vshrl.u32 %v5261, 7
    %v5263 = vsub.s32 %v5260, %v5262
    %v5264 = vrot.slane %v5236, %v5263
    %v5265 = vcombine.low %v5243, %v5250
    %v5266 = vcombine.low %v5257, %v5264
    %v5268 = vunpack.c.l.s4 1966171168
    %v5269 = vunpack.c.0.s8 %v5268
    %v5270 = vlaneseq
    %v5271 = vshrl.u32 %v5270, 7
    %v5272 = vsub.s32 %v5269, %v5271
    %v5273 = vrot.slane %v5265, %v5272
    %v5275 = vunpack.c.l.s4 1966171168
    %v5276 = vunpack.c.0.s8 %v5275
    %v5277 = vlaneseq
    %v5278 = vshrl.u32 %v5277, 7
    %v5279 = vsub.s32 %v5276, %v5278
    %v5280 = vrot.slane %v5266, %v5279
    %v5281 = vcombine.low %v5273, %v5280
    %v5283 = vmul.f32 %v4703, %v5281
    %v5285 = vlaneseq
    %v5286 = vshrl.u32 %v5285, 7
    %v5287 = vsub.s32 0, %v5286
    %v5288 = vrot.slane %v5283, %v5287
    %v5289 = vlaneseq
    %v5290 = vshrl.u32 %v5289, 7
    %v5291 = vsub.s32 1, %v5290
    %v5292 = vrot.slane %v5283, %v5291
    %v5293 = vlaneseq
    %v5294 = vshrl.u32 %v5293, 7
    %v5295 = vsub.s32 2, %v5294
    %v5296 = vrot.slane %v5283, %v5295
    %v5297 = vlaneseq
    %v5298 = vshrl.u32 %v5297, 7
    %v5299 = vsub.s32 3, %v5298
    %v5300 = vrot.slane %v5283, %v5299
    %v5301 = vlaneseq
    %v5302 = vshrl.u32 %v5301, 7
    %v5303 = vsub.s32 4, %v5302
    %v5304 = vrot.slane %v5283, %v5303
    %v5305 = vlaneseq
    %v5306 = vshrl.u32 %v5305, 7
    %v5307 = vsub.s32 5, %v5306
    %v5308 = vrot.slane %v5283, %v5307
    %v5309 = vlaneseq
    %v5310 = vshrl.u32 %v5309, 7
    %v5311 = vsub.s32 6, %v5310
    %v5312 = vrot.slane %v5283, %v5311
    %v5313 = vlaneseq
    %v5314 = vshrl.u32 %v5313, 7
    %v5315 = vsub.s32 7, %v5314
    %v5316 = vrot.slane %v5283, %v5315
    %v5325 = vmul.f32 %v5169, %v5288
    %v5326 = vmul.f32 %v5170, %v5292
    %v5327 = vmul.f32 %v5171, %v5296
    %v5328 = vmul.f32 %v5172, %v5300
    %v5329 = vmul.f32 %v5173, %v5304
    %v5330 = vmul.f32 %v5174, %v5308
    %v5331 = vmul.f32 %v5175, %v5312
    %v5332 = vmul.f32 %v5176, %v5316
    %v5341 = vcombine.low %v5325, %v5326
    %v5342 = vcombine.low %v5327, %v5328
    %v5343 = vcombine.low %v5329, %v5330
    %v5344 = vcombine.low %v5331, %v5332
    %v5346 = vunpack.c.l.s4 1966171168
    %v5347 = vunpack.c.0.s8 %v5346
    %v5348 = vlaneseq
    %v5349 = vshrl.u32 %v5348, 7
    %v5350 = vsub.s32 %v5347, %v5349
    %v5351 = vrot.slane %v5341, %v5350
    %v5353 = vunpack.c.l.s4 1966171168
    %v5354 = vunpack.c.0.s8 %v5353
    %v5355 = vlaneseq
    %v5356 = vshrl.u32 %v5355, 7
    %v5357 = vsub.s32 %v5354, %v5356
    %v5358 = vrot.slane %v5342, %v5357
    %v5360 = vunpack.c.l.s4 1966171168
    %v5361 = vunpack.c.0.s8 %v5360
    %v5362 = vlaneseq
    %v5363 = vshrl.u32 %v5362, 7
    %v5364 = vsub.s32 %v5361, %v5363
    %v5365 = vrot.slane %v5343, %v5364
    %v5367 = vunpack.c.l.s4 1966171168
    %v5368 = vunpack.c.0.s8 %v5367
    %v5369 = vlaneseq
    %v5370 = vshrl.u32 %v5369, 7
    %v5371 = vsub.s32 %v5368, %v5370
    %v5372 = vrot.slane %v5344, %v5371
    %v5373 = vcombine.low %v5351, %v5358
    %v5374 = vcombine.low %v5365, %v5372
    %v5376 = vunpack.c.l.s4 1966171168
    %v5377 = vunpack.c.0.s8 %v5376
    %v5378 = vlaneseq
    %v5379 = vshrl.u32 %v5378, 7
    %v5380 = vsub.s32 %v5377, %v5379
    %v5381 = vrot.slane %v5373, %v5380
    %v5383 = vunpack.c.l.s4 1966171168
    %v5384 = vunpack.c.0.s8 %v5383
    %v5385 = vlaneseq
    %v5386 = vshrl.u32 %v5385, 7
    %v5387 = vsub.s32 %v5384, %v5386
    %v5388 = vrot.slane %v5374, %v5387
    %v5389 = vcombine.low %v5381, %v5388
    %v5391 = vsub.f32 %v4704, %v5389
    %v5392 = vmul.f32 %v3947, %v5288
    %v5393 = vmul.f32 %v3949, %v5292
    %v5394 = vmul.f32 %v4173, %v5296
    %v5395 = vmul.f32 %v4175, %v5300
    %v5396 = vmul.f32 %v4399, %v5304
    %v5397 = vmul.f32 %v4401, %v5308
    %v5398 = vmul.f32 %v4625, %v5312
    %v5399 = vmul.f32 %v4627, %v5316
    %v5400 = vmul.f32 %v3951, %v5288
    %v5401 = vmul.f32 %v3953, %v5292
    %v5402 = vmul.f32 %v4177, %v5296
    %v5403 = vmul.f32 %v4179, %v5300
    %v5404 = vmul.f32 %v4403, %v5304
    %v5405 = vmul.f32 %v4405, %v5308
    %v5406 = vmul.f32 %v4629, %v5312
    %v5407 = vmul.f32 %v4631, %v5316
    %v5408 = vmul.f32 %v3957, %v5288
    %v5409 = vmul.f32 %v3959, %v5292
    %v5410 = vmul.f32 %v4183, %v5296
    %v5411 = vmul.f32 %v4185, %v5300
    %v5412 = vmul.f32 %v4409, %v5304
    %v5413 = vmul.f32 %v4411, %v5308
    %v5414 = vmul.f32 %v4635, %v5312
    %v5415 = vmul.f32 %v4637, %v5316
    %v5416 = vmul.f32 %v3961, %v5288
    %v5417 = vmul.f32 %v3963, %v5292
    %v5418 = vmul.f32 %v4187, %v5296
    %v5419 = vmul.f32 %v4189, %v5300
    %v5420 = vmul.f32 %v4413, %v5304
    %v5421 = vmul.f32 %v4415, %v5308
    %v5422 = vmul.f32 %v4639, %v5312
    %v5423 = vmul.f32 %v4641, %v5316
    %v5424 = vmul.f32 %v3967, %v5288
    %v5425 = vmul.f32 %v3969, %v5292
    %v5426 = vmul.f32 %v4193, %v5296
    %v5427 = vmul.f32 %v4195, %v5300
    %v5428 = vmul.f32 %v4419, %v5304
    %v5429 = vmul.f32 %v4421, %v5308
    %v5430 = vmul.f32 %v4645, %v5312
    %v5431 = vmul.f32 %v4647, %v5316
    %v5432 = vmul.f32 %v3971, %v5288
    %v5433 = vmul.f32 %v3973, %v5292
    %v5434 = vmul.f32 %v4197, %v5296
    %v5435 = vmul.f32 %v4199, %v5300
    %v5436 = vmul.f32 %v4423, %v5304
    %v5437 = vmul.f32 %v4425, %v5308
    %v5438 = vmul.f32 %v4649, %v5312
    %v5439 = vmul.f32 %v4651, %v5316
    %v5440 = vmul.f32 %v3977, %v5288
    %v5441 = vmul.f32 %v3979, %v5292
    %v5442 = vmul.f32 %v4203, %v5296
    %v5443 = vmul.f32 %v4205, %v5300
    %v5444 = vmul.f32 %v4429, %v5304
    %v5445 = vmul.f32 %v4431, %v5308
    %v5446 = vmul.f32 %v4655, %v5312
    %v5447 = vmul.f32 %v4657, %v5316
    %v5448 = vmul.f32 %v3981, %v5288
    %v5449 = vmul.f32 %v3983, %v5292
    %v5450 = vmul.f32 %v4207, %v5296
    %v5451 = vmul.f32 %v4209, %v5300
    %v5452 = vmul.f32 %v4433, %v5304
    %v5453 = vmul.f32 %v4435, %v5308
    %v5454 = vmul.f32 %v4659, %v5312
    %v5455 = vmul.f32 %v4661, %v5316
    %v5456 = vmul.f32 %v3987, %v5288
    %v5457 = vmul.f32 %v3989, %v5292
    %v5458 = vmul.f32 %v4213, %v5296
    %v5459 = vmul.f32 %v4215, %v5300
    %v5460 = vmul.f32 %v4439, %v5304
    %v5461 = vmul.f32 %v4441, %v5308
    %v5462 = vmul.f32 %v4665, %v5312
    %v5463 = vmul.f32 %v4667, %v5316
    %v5464 = vmul.f32 %v3991, %v5288
    %v5465 = vmul.f32 %v3993, %v5292
    %v5466 = vmul.f32 %v4217, %v5296
    %v5467 = vmul.f32 %v4219, %v5300
    %v5468 = vmul.f32 %v4443, %v5304
    %v5469 = vmul.f32 %v4445, %v5308
    %v5470 = vmul.f32 %v4669, %v5312
    %v5471 = vmul.f32 %v4671, %v5316
    %v5472 = vmul.f32 %v3997, %v5288
    %v5473 = vmul.f32 %v3999, %v5292
    %v5474 = vmul.f32 %v4223, %v5296
    %v5475 = vmul.f32 %v4225, %v5300
    %v5476 = vmul.f32 %v4449, %v5304
    %v5477 = vmul.f32 %v4451, %v5308
    %v5478 = vmul.f32 %v4675, %v5312
    %v5479 = vmul.f32 %v4677, %v5316
    %v5480 = vmul.f32 %v4001, %v5288
    %v5481 = vmul.f32 %v4003, %v5292
    %v5482 = vmul.f32 %v4227, %v5296
    %v5483 = vmul.f32 %v4229, %v5300
    %v5484 = vmul.f32 %v4453, %v5304
    %v5485 = vmul.f32 %v4455, %v5308
    %v5486 = vmul.f32 %v4679, %v5312
    %v5487 = vmul.f32 %v4681, %v5316
    %v5488 = vmul.f32 %v4007, %v5288
    %v5489 = vmul.f32 %v4009, %v5292
    %v5490 = vmul.f32 %v4233, %v5296
    %v5491 = vmul.f32 %v4235, %v5300
    %v5492 = vmul.f32 %v4459, %v5304
    %v5493 = vmul.f32 %v4461, %v5308
    %v5494 = vmul.f32 %v4685, %v5312
    %v5495 = vmul.f32 %v4687, %v5316
    %v5496 = vmul.f32 %v4011, %v5288
    %v5497 = vmul.f32 %v4013, %v5292
    %v5498 = vmul.f32 %v4237, %v5296
    %v5499 = vmul.f32 %v4239, %v5300
    %v5500 = vmul.f32 %v4463, %v5304
    %v5501 = vmul.f32 %v4465, %v5308
    %v5502 = vmul.f32 %v4689, %v5312
    %v5503 = vmul.f32 %v4691, %v5316
    %v5504 = vmul.f32 %v4017, %v5288
    %v5505 = vmul.f32 %v4019, %v5292
    %v5506 = vmul.f32 %v4243, %v5296
    %v5507 = vmul.f32 %v4245, %v5300
    %v5508 = vmul.f32 %v4469, %v5304
    %v5509 = vmul.f32 %v4471, %v5308
    %v5510 = vmul.f32 %v4695, %v5312
    %v5511 = vmul.f32 %v4697, %v5316
    %v5512 = vmul.f32 %v4021, %v5288
    %v5513 = vmul.f32 %v4023, %v5292
    %v5514 = vmul.f32 %v4247, %v5296
    %v5515 = vmul.f32 %v4249, %v5300
    %v5516 = vmul.f32 %v4473, %v5304
    %v5517 = vmul.f32 %v4475, %v5308
    %v5518 = vmul.f32 %v4699, %v5312
    %v5519 = vmul.f32 %v4701, %v5316
    %v5521 = vlaneseq
    %v5522 = vshrl.u32 %v5521, 7
    %v5523 = vsub.s32 0, %v5522
    %v5524 = vrot.slane %v5391, %v5523
    %v5525 = vlaneseq
    %v5526 = vshrl.u32 %v5525, 7
    %v5527 = vsub.s32 1, %v5526
    %v5528 = vrot.slane %v5391, %v5527
    %v5529 = vlaneseq
    %v5530 = vshrl.u32 %v5529, 7
    %v5531 = vsub.s32 2, %v5530
    %v5532 = vrot.slane %v5391, %v5531
    %v5533 = vlaneseq
    %v5534 = vshrl.u32 %v5533, 7
    %v5535 = vsub.s32 3, %v5534
    %v5536 = vrot.slane %v5391, %v5535
    %v5537 = vlaneseq
    %v5538 = vshrl.u32 %v5537, 7
    %v5539 = vsub.s32 4, %v5538
    %v5540 = vrot.slane %v5391, %v5539
    %v5541 = vlaneseq
    %v5542 = vshrl.u32 %v5541, 7
    %v5543 = vsub.s32 5, %v5542
    %v5544 = vrot.slane %v5391, %v5543
    %v5545 = vlaneseq
    %v5546 = vshrl.u32 %v5545, 7
    %v5547 = vsub.s32 6, %v5546
    %v5548 = vrot.slane %v5391, %v5547
    %v5549 = vlaneseq
    %v5550 = vshrl.u32 %v5549, 7
    %v5551 = vsub.s32 7, %v5550
    %v5552 = vrot.slane %v5391, %v5551
    %v5561 = vadd.f32 %v5392, %v5524
    %v5562 = vadd.f32 %v5393, %v5528
    %v5563 = vadd.f32 %v5394, %v5532
    %v5564 = vadd.f32 %v5395, %v5536
    %v5565 = vadd.f32 %v5396, %v5540
    %v5566 = vadd.f32 %v5397, %v5544
    %v5567 = vadd.f32 %v5398, %v5548
    %v5568 = vadd.f32 %v5399, %v5552
    %v5569 = vadd.f32 %v5400, %v5524
    %v5570 = vadd.f32 %v5401, %v5528
    %v5571 = vadd.f32 %v5402, %v5532
    %v5572 = vadd.f32 %v5403, %v5536
    %v5573 = vadd.f32 %v5404, %v5540
    %v5574 = vadd.f32 %v5405, %v5544
    %v5575 = vadd.f32 %v5406, %v5548
    %v5576 = vadd.f32 %v5407, %v5552
    %v5577 = vadd.f32 %v5408, %v5524
    %v5578 = vadd.f32 %v5409, %v5528
    %v5579 = vadd.f32 %v5410, %v5532
    %v5580 = vadd.f32 %v5411, %v5536
    %v5581 = vadd.f32 %v5412, %v5540
    %v5582 = vadd.f32 %v5413, %v5544
    %v5583 = vadd.f32 %v5414, %v5548
    %v5584 = vadd.f32 %v5415, %v5552
    %v5585 = vadd.f32 %v5416, %v5524
    %v5586 = vadd.f32 %v5417, %v5528
    %v5587 = vadd.f32 %v5418, %v5532
    %v5588 = vadd.f32 %v5419, %v5536
    %v5589 = vadd.f32 %v5420, %v5540
    %v5590 = vadd.f32 %v5421, %v5544
    %v5591 = vadd.f32 %v5422, %v5548
    %v5592 = vadd.f32 %v5423, %v5552
    %v5593 = vadd.f32 %v5424, %v5524
    %v5594 = vadd.f32 %v5425, %v5528
    %v5595 = vadd.f32 %v5426, %v5532
    %v5596 = vadd.f32 %v5427, %v5536
    %v5597 = vadd.f32 %v5428, %v5540
    %v5598 = vadd.f32 %v5429, %v5544
    %v5599 = vadd.f32 %v5430, %v5548
    %v5600 = vadd.f32 %v5431, %v5552
    %v5601 = vadd.f32 %v5432, %v5524
    %v5602 = vadd.f32 %v5433, %v5528
    %v5603 = vadd.f32 %v5434, %v5532
    %v5604 = vadd.f32 %v5435, %v5536
    %v5605 = vadd.f32 %v5436, %v5540
    %v5606 = vadd.f32 %v5437, %v5544
    %v5607 = vadd.f32 %v5438, %v5548
    %v5608 = vadd.f32 %v5439, %v5552
    %v5609 = vadd.f32 %v5440, %v5524
    %v5610 = vadd.f32 %v5441, %v5528
    %v5611 = vadd.f32 %v5442, %v5532
    %v5612 = vadd.f32 %v5443, %v5536
    %v5613 = vadd.f32 %v5444, %v5540
    %v5614 = vadd.f32 %v5445, %v5544
    %v5615 = vadd.f32 %v5446, %v5548
    %v5616 = vadd.f32 %v5447, %v5552
    %v5617 = vadd.f32 %v5448, %v5524
    %v5618 = vadd.f32 %v5449, %v5528
    %v5619 = vadd.f32 %v5450, %v5532
    %v5620 = vadd.f32 %v5451, %v5536
    %v5621 = vadd.f32 %v5452, %v5540
    %v5622 = vadd.f32 %v5453, %v5544
    %v5623 = vadd.f32 %v5454, %v5548
    %v5624 = vadd.f32 %v5455, %v5552
    %v5625 = vadd.f32 %v5456, %v5524
    %v5626 = vadd.f32 %v5457, %v5528
    %v5627 = vadd.f32 %v5458, %v5532
    %v5628 = vadd.f32 %v5459, %v5536
    %v5629 = vadd.f32 %v5460, %v5540
    %v5630 = vadd.f32 %v5461, %v5544
    %v5631 = vadd.f32 %v5462, %v5548
    %v5632 = vadd.f32 %v5463, %v5552
    %v5633 = vadd.f32 %v5464, %v5524
    %v5634 = vadd.f32 %v5465, %v5528
    %v5635 = vadd.f32 %v5466, %v5532
    %v5636 = vadd.f32 %v5467, %v5536
    %v5637 = vadd.f32 %v5468, %v5540
    %v5638 = vadd.f32 %v5469, %v5544
    %v5639 = vadd.f32 %v5470, %v5548
    %v5640 = vadd.f32 %v5471, %v5552
    %v5641 = vadd.f32 %v5472, %v5524
    %v5642 = vadd.f32 %v5473, %v5528
    %v5643 = vadd.f32 %v5474, %v5532
    %v5644 = vadd.f32 %v5475, %v5536
    %v5645 = vadd.f32 %v5476, %v5540
    %v5646 = vadd.f32 %v5477, %v5544
    %v5647 = vadd.f32 %v5478, %v5548
    %v5648 = vadd.f32 %v5479, %v5552
    %v5649 = vadd.f32 %v5480, %v5524
    %v5650 = vadd.f32 %v5481, %v5528
    %v5651 = vadd.f32 %v5482, %v5532
    %v5652 = vadd.f32 %v5483, %v5536
    %v5653 = vadd.f32 %v5484, %v5540
    %v5654 = vadd.f32 %v5485, %v5544
    %v5655 = vadd.f32 %v5486, %v5548
    %v5656 = vadd.f32 %v5487, %v5552
    %v5657 = vadd.f32 %v5488, %v5524
    %v5658 = vadd.f32 %v5489, %v5528
    %v5659 = vadd.f32 %v5490, %v5532
    %v5660 = vadd.f32 %v5491, %v5536
    %v5661 = vadd.f32 %v5492, %v5540
    %v5662 = vadd.f32 %v5493, %v5544
    %v5663 = vadd.f32 %v5494, %v5548
    %v5664 = vadd.f32 %v5495, %v5552
    %v5665 = vadd.f32 %v5496, %v5524
    %v5666 = vadd.f32 %v5497, %v5528
    %v5667 = vadd.f32 %v5498, %v5532
    %v5668 = vadd.f32 %v5499, %v5536
    %v5669 = vadd.f32 %v5500, %v5540
    %v5670 = vadd.f32 %v5501, %v5544
    %v5671 = vadd.f32 %v5502, %v5548
    %v5672 = vadd.f32 %v5503, %v5552
    %v5673 = vadd.f32 %v5504, %v5524
    %v5674 = vadd.f32 %v5505, %v5528
    %v5675 = vadd.f32 %v5506, %v5532
    %v5676 = vadd.f32 %v5507, %v5536
    %v5677 = vadd.f32 %v5508, %v5540
    %v5678 = vadd.f32 %v5509, %v5544
    %v5679 = vadd.f32 %v5510, %v5548
    %v5680 = vadd.f32 %v5511, %v5552
    %v5681 = vadd.f32 %v5512, %v5524
    %v5682 = vadd.f32 %v5513, %v5528
    %v5683 = vadd.f32 %v5514, %v5532
    %v5684 = vadd.f32 %v5515, %v5536
    %v5685 = vadd.f32 %v5516, %v5540
    %v5686 = vadd.f32 %v5517, %v5544
    %v5687 = vadd.f32 %v5518, %v5548
    %v5688 = vadd.f32 %v5519, %v5552
    %v5689 = vmax.f32 %v5561, 0.0
    %v5690 = vmax.f32 %v5562, 0.0
    %v5691 = vmax.f32 %v5563, 0.0
    %v5692 = vmax.f32 %v5564, 0.0
    %v5693 = vmax.f32 %v5565, 0.0
    %v5694 = vmax.f32 %v5566, 0.0
    %v5695 = vmax.f32 %v5567, 0.0
    %v5696 = vmax.f32 %v5568, 0.0
    %v5697 = vmax.f32 %v5569, 0.0
    %v5698 = vmax.f32 %v5570, 0.0
    %v5699 = vmax.f32 %v5571, 0.0
    %v5700 = vmax.f32 %v5572, 0.0
    %v5701 = vmax.f32 %v5573, 0.0
    %v5702 = vmax.f32 %v5574, 0.0
    %v5703 = vmax.f32 %v5575, 0.0
    %v5704 = vmax.f32 %v5576, 0.0
    %v5705 = vmax.f32 %v5577, 0.0
    %v5706 = vmax.f32 %v5578, 0.0
    %v5707 = vmax.f32 %v5579, 0.0
    %v5708 = vmax.f32 %v5580, 0.0
    %v5709 = vmax.f32 %v5581, 0.0
    %v5710 = vmax.f32 %v5582, 0.0
    %v5711 = vmax.f32 %v5583, 0.0
    %v5712 = vmax.f32 %v5584, 0.0
    %v5713 = vmax.f32 %v5585, 0.0
    %v5714 = vmax.f32 %v5586, 0.0
    %v5715 = vmax.f32 %v5587, 0.0
    %v5716 = vmax.f32 %v5588, 0.0
    %v5717 = vmax.f32 %v5589, 0.0
    %v5718 = vmax.f32 %v5590, 0.0
    %v5719 = vmax.f32 %v5591, 0.0
    %v5720 = vmax.f32 %v5592, 0.0
    %v5721 = vmax.f32 %v5593, 0.0
    %v5722 = vmax.f32 %v5594, 0.0
    %v5723 = vmax.f32 %v5595, 0.0
    %v5724 = vmax.f32 %v5596, 0.0
    %v5725 = vmax.f32 %v5597, 0.0
    %v5726 = vmax.f32 %v5598, 0.0
    %v5727 = vmax.f32 %v5599, 0.0
    %v5728 = vmax.f32 %v5600, 0.0
    %v5729 = vmax.f32 %v5601, 0.0
    %v5730 = vmax.f32 %v5602, 0.0
    %v5731 = vmax.f32 %v5603, 0.0
    %v5732 = vmax.f32 %v5604, 0.0
    %v5733 = vmax.f32 %v5605, 0.0
    %v5734 = vmax.f32 %v5606, 0.0
    %v5735 = vmax.f32 %v5607, 0.0
    %v5736 = vmax.f32 %v5608, 0.0
    %v5737 = vmax.f32 %v5609, 0.0
    %v5738 = vmax.f32 %v5610, 0.0
    %v5739 = vmax.f32 %v5611, 0.0
    %v5740 = vmax.f32 %v5612, 0.0
    %v5741 = vmax.f32 %v5613, 0.0
    %v5742 = vmax.f32 %v5614, 0.0
    %v5743 = vmax.f32 %v5615, 0.0
    %v5744 = vmax.f32 %v5616, 0.0
    %v5745 = vmax.f32 %v5617, 0.0
    %v5746 = vmax.f32 %v5618, 0.0
    %v5747 = vmax.f32 %v5619, 0.0
    %v5748 = vmax.f32 %v5620, 0.0
    %v5749 = vmax.f32 %v5621, 0.0
    %v5750 = vmax.f32 %v5622, 0.0
    %v5751 = vmax.f32 %v5623, 0.0
    %v5752 = vmax.f32 %v5624, 0.0
    %v5753 = vmax.f32 %v5625, 0.0
    %v5754 = vmax.f32 %v5626, 0.0
    %v5755 = vmax.f32 %v5627, 0.0
    %v5756 = vmax.f32 %v5628, 0.0
    %v5757 = vmax.f32 %v5629, 0.0
    %v5758 = vmax.f32 %v5630, 0.0
    %v5759 = vmax.f32 %v5631, 0.0
    %v5760 = vmax.f32 %v5632, 0.0
    %v5761 = vmax.f32 %v5633, 0.0
    %v5762 = vmax.f32 %v5634, 0.0
    %v5763 = vmax.f32 %v5635, 0.0
    %v5764 = vmax.f32 %v5636, 0.0
    %v5765 = vmax.f32 %v5637, 0.0
    %v5766 = vmax.f32 %v5638, 0.0
    %v5767 = vmax.f32 %v5639, 0.0
    %v5768 = vmax.f32 %v5640, 0.0
    %v5769 = vmax.f32 %v5641, 0.0
    %v5770 = vmax.f32 %v5642, 0.0
    %v5771 = vmax.f32 %v5643, 0.0
    %v5772 = vmax.f32 %v5644, 0.0
    %v5773 = vmax.f32 %v5645, 0.0
    %v5774 = vmax.f32 %v5646, 0.0
    %v5775 = vmax.f32 %v5647, 0.0
    %v5776 = vmax.f32 %v5648, 0.0
    %v5777 = vmax.f32 %v5649, 0.0
    %v5778 = vmax.f32 %v5650, 0.0
    %v5779 = vmax.f32 %v5651, 0.0
    %v5780 = vmax.f32 %v5652, 0.0
    %v5781 = vmax.f32 %v5653, 0.0
    %v5782 = vmax.f32 %v5654, 0.0
    %v5783 = vmax.f32 %v5655, 0.0
    %v5784 = vmax.f32 %v5656, 0.0
    %v5785 = vmax.f32 %v5657, 0.0
    %v5786 = vmax.f32 %v5658, 0.0
    %v5787 = vmax.f32 %v5659, 0.0
    %v5788 = vmax.f32 %v5660, 0.0
    %v5789 = vmax.f32 %v5661, 0.0
    %v5790 = vmax.f32 %v5662, 0.0
    %v5791 = vmax.f32 %v5663, 0.0
    %v5792 = vmax.f32 %v5664, 0.0
    %v5793 = vmax.f32 %v5665, 0.0
    %v5794 = vmax.f32 %v5666, 0.0
    %v5795 = vmax.f32 %v5667, 0.0
    %v5796 = vmax.f32 %v5668, 0.0
    %v5797 = vmax.f32 %v5669, 0.0
    %v5798 = vmax.f32 %v5670, 0.0
    %v5799 = vmax.f32 %v5671, 0.0
    %v5800 = vmax.f32 %v5672, 0.0
    %v5801 = vmax.f32 %v5673, 0.0
    %v5802 = vmax.f32 %v5674, 0.0
    %v5803 = vmax.f32 %v5675, 0.0
    %v5804 = vmax.f32 %v5676, 0.0
    %v5805 = vmax.f32 %v5677, 0.0
    %v5806 = vmax.f32 %v5678, 0.0
    %v5807 = vmax.f32 %v5679, 0.0
    %v5808 = vmax.f32 %v5680, 0.0
    %v5809 = vmax.f32 %v5681, 0.0
    %v5810 = vmax.f32 %v5682, 0.0
    %v5811 = vmax.f32 %v5683, 0.0
    %v5812 = vmax.f32 %v5684, 0.0
    %v5813 = vmax.f32 %v5685, 0.0
    %v5814 = vmax.f32 %v5686, 0.0
    %v5815 = vmax.f32 %v5687, 0.0
    %v5816 = vmax.f32 %v5688, 0.0
    %v5817 = vpack.c.bf16 %v5697, %v5689
    %v5818 = vpack.c.bf16 %v5698, %v5690
    %v5819 = vpack.c.bf16 %v5699, %v5691
    %v5820 = vpack.c.bf16 %v5700, %v5692
    %v5821 = vpack.c.bf16 %v5701, %v5693
    %v5822 = vpack.c.bf16 %v5702, %v5694
    %v5823 = vpack.c.bf16 %v5703, %v5695
    %v5824 = vpack.c.bf16 %v5704, %v5696
    %v5825 = vpack.c.bf16 %v5713, %v5705
    %v5826 = vpack.c.bf16 %v5714, %v5706
    %v5827 = vpack.c.bf16 %v5715, %v5707
    %v5828 = vpack.c.bf16 %v5716, %v5708
    %v5829 = vpack.c.bf16 %v5717, %v5709
    %v5830 = vpack.c.bf16 %v5718, %v5710
    %v5831 = vpack.c.bf16 %v5719, %v5711
    %v5832 = vpack.c.bf16 %v5720, %v5712
    %v5833 = vpack.c.bf16 %v5729, %v5721
    %v5834 = vpack.c.bf16 %v5730, %v5722
    %v5835 = vpack.c.bf16 %v5731, %v5723
    %v5836 = vpack.c.bf16 %v5732, %v5724
    %v5837 = vpack.c.bf16 %v5733, %v5725
    %v5838 = vpack.c.bf16 %v5734, %v5726
    %v5839 = vpack.c.bf16 %v5735, %v5727
    %v5840 = vpack.c.bf16 %v5736, %v5728
    %v5841 = vpack.c.bf16 %v5745, %v5737
    %v5842 = vpack.c.bf16 %v5746, %v5738
    %v5843 = vpack.c.bf16 %v5747, %v5739
    %v5844 = vpack.c.bf16 %v5748, %v5740
    %v5845 = vpack.c.bf16 %v5749, %v5741
    %v5846 = vpack.c.bf16 %v5750, %v5742
    %v5847 = vpack.c.bf16 %v5751, %v5743
    %v5848 = vpack.c.bf16 %v5752, %v5744
    %v5849 = vpack.c.bf16 %v5761, %v5753
    %v5850 = vpack.c.bf16 %v5762, %v5754
    %v5851 = vpack.c.bf16 %v5763, %v5755
    %v5852 = vpack.c.bf16 %v5764, %v5756
    %v5853 = vpack.c.bf16 %v5765, %v5757
    %v5854 = vpack.c.bf16 %v5766, %v5758
    %v5855 = vpack.c.bf16 %v5767, %v5759
    %v5856 = vpack.c.bf16 %v5768, %v5760
    %v5857 = vpack.c.bf16 %v5777, %v5769
    %v5858 = vpack.c.bf16 %v5778, %v5770
    %v5859 = vpack.c.bf16 %v5779, %v5771
    %v5860 = vpack.c.bf16 %v5780, %v5772
    %v5861 = vpack.c.bf16 %v5781, %v5773
    %v5862 = vpack.c.bf16 %v5782, %v5774
    %v5863 = vpack.c.bf16 %v5783, %v5775
    %v5864 = vpack.c.bf16 %v5784, %v5776
    %v5865 = vpack.c.bf16 %v5793, %v5785
    %v5866 = vpack.c.bf16 %v5794, %v5786
    %v5867 = vpack.c.bf16 %v5795, %v5787
    %v5868 = vpack.c.bf16 %v5796, %v5788
    %v5869 = vpack.c.bf16 %v5797, %v5789
    %v5870 = vpack.c.bf16 %v5798, %v5790
    %v5871 = vpack.c.bf16 %v5799, %v5791
    %v5872 = vpack.c.bf16 %v5800, %v5792
    %v5873 = vpack.c.bf16 %v5809, %v5801
    %v5874 = vpack.c.bf16 %v5810, %v5802
    %v5875 = vpack.c.bf16 %v5811, %v5803
    %v5876 = vpack.c.bf16 %v5812, %v5804
    %v5877 = vpack.c.bf16 %v5813, %v5805
    %v5878 = vpack.c.bf16 %v5814, %v5806
    %v5879 = vpack.c.bf16 %v5815, %v5807
    %v5880 = vpack.c.bf16 %v5816, %v5808
    %v5881 = vld [vmem:[#allocation9] sm:$0xff]
    %v5882 = vld [vmem:[#allocation9 + $0x8] sm:$0xff]
    %v5883 = vld [vmem:[#allocation9 + $0x10] sm:$0xff]
    %v5884 = vld [vmem:[#allocation9 + $0x18] sm:$0xf]
    %v5885 = vld [vmem:[#allocation9 + $0x1c] sm:$0xff]
    %v5886 = vld [vmem:[#allocation9 + $0x24] sm:$0xff]
    %v5887 = vld [vmem:[#allocation9 + $0x2c] sm:$0xff]
    %v5888 = vld [vmem:[#allocation9 + $0x34] sm:$0xf]
    %v5889 = vld [vmem:[#allocation9 + $0x38] sm:$0xff]
    %v5890 = vld [vmem:[#allocation9 + $0x40] sm:$0xff]
    %v5891 = vld [vmem:[#allocation9 + $0x48] sm:$0xff]
    %v5892 = vld [vmem:[#allocation9 + $0x50] sm:$0xf]
    %v5893 = vld [vmem:[#allocation9 + $0x54] sm:$0xff]
    %v5894 = vld [vmem:[#allocation9 + $0x5c] sm:$0xff]
    %v5895 = vld [vmem:[#allocation9 + $0x64] sm:$0xff]
    %v5896 = vld [vmem:[#allocation9 + $0x6c] sm:$0xf]
    %v5897 = vld [vmem:[#allocation9 + $0x70] sm:$0xff]
    %v5898 = vld [vmem:[#allocation9 + $0x78] sm:$0xff]
    %v5899 = vld [vmem:[#allocation9 + $0x80] sm:$0xff]
    %v5900 = vld [vmem:[#allocation9 + $0x88] sm:$0xf]
    %v5901 = vld [vmem:[#allocation9 + $0x8c] sm:$0xff]
    %v5902 = vld [vmem:[#allocation9 + $0x94] sm:$0xff]
    %v5903 = vld [vmem:[#allocation9 + $0x9c] sm:$0xff]
    %v5904 = vld [vmem:[#allocation9 + $0xa4] sm:$0xf]
    %v5905 = vld [vmem:[#allocation9 + $0xa8] sm:$0xff]
    %v5906 = vld [vmem:[#allocation9 + $0xb0] sm:$0xff]
    %v5907 = vld [vmem:[#allocation9 + $0xb8] sm:$0xff]
    %v5908 = vld [vmem:[#allocation9 + $0xc0] sm:$0xf]
    %v5909 = vld [vmem:[#allocation9 + $0xc4] sm:$0xff]
    %v5910 = vld [vmem:[#allocation9 + $0xcc] sm:$0xff]
    %v5911 = vld [vmem:[#allocation9 + $0xd4] sm:$0xff]
    %v5912 = vld [vmem:[#allocation9 + $0xdc] sm:$0xf]
    %v5913 = vld [vmem:[#allocation9 + $0xe0] sm:$0xff]
    %v5914 = vld [vmem:[#allocation9 + $0xe8] sm:$0xff]
    %v5915 = vld [vmem:[#allocation9 + $0xf0] sm:$0xff]
    %v5916 = vld [vmem:[#allocation9 + $0xf8] sm:$0xf]
    %v5917 = vld [vmem:[#allocation9 + $0xfc] sm:$0xff]
    %v5918 = vld [vmem:[#allocation9 + $0x104] sm:$0xff]
    %v5919 = vld [vmem:[#allocation9 + $0x10c] sm:$0xff]
    %v5920 = vld [vmem:[#allocation9 + $0x114] sm:$0xf]
    %v5921 = vld [vmem:[#allocation9 + $0x118] sm:$0xff]
    %v5922 = vld [vmem:[#allocation9 + $0x120] sm:$0xff]
    %v5923 = vld [vmem:[#allocation9 + $0x128] sm:$0xff]
    %v5924 = vld [vmem:[#allocation9 + $0x130] sm:$0xf]
    %v5925 = vld [vmem:[#allocation9 + $0x134] sm:$0xff]
    %v5926 = vld [vmem:[#allocation9 + $0x13c] sm:$0xff]
    %v5927 = vld [vmem:[#allocation9 + $0x144] sm:$0xff]
    %v5928 = vld [vmem:[#allocation9 + $0x14c] sm:$0xf]
    %v5929 = vld [vmem:[#allocation9 + $0x150] sm:$0xff]
    %v5930 = vld [vmem:[#allocation9 + $0x158] sm:$0xff]
    %v5931 = vld [vmem:[#allocation9 + $0x160] sm:$0xff]
    %v5932 = vld [vmem:[#allocation9 + $0x168] sm:$0xf]
    %v5933 = vld [vmem:[#allocation9 + $0x16c] sm:$0xff]
    %v5934 = vld [vmem:[#allocation9 + $0x174] sm:$0xff]
    %v5935 = vld [vmem:[#allocation9 + $0x17c] sm:$0xff]
    %v5936 = vld [vmem:[#allocation9 + $0x184] sm:$0xf]
    %v5937 = vld [vmem:[#allocation9 + $0x188] sm:$0xff]
    %v5938 = vld [vmem:[#allocation9 + $0x190] sm:$0xff]
    %v5939 = vld [vmem:[#allocation9 + $0x198] sm:$0xff]
    %v5940 = vld [vmem:[#allocation9 + $0x1a0] sm:$0xf]
    %v5941 = vld [vmem:[#allocation9 + $0x1a4] sm:$0xff]
    %v5942 = vld [vmem:[#allocation9 + $0x1ac] sm:$0xff]
    %v5943 = vld [vmem:[#allocation9 + $0x1b4] sm:$0xff]
    %v5944 = vld [vmem:[#allocation9 + $0x1bc] sm:$0xf]
    %v5945 = vld [vmem:[#allocation9 + $0x1c0] sm:$0xff]
    %v5946 = vld [vmem:[#allocation9 + $0x1c8] sm:$0xff]
    %v5947 = vld [vmem:[#allocation9 + $0x1d0] sm:$0xff]
    %v5948 = vld [vmem:[#allocation9 + $0x1d8] sm:$0xf]
    %v5949 = vld [vmem:[#allocation9 + $0x1dc] sm:$0xff]
    %v5950 = vld [vmem:[#allocation9 + $0x1e4] sm:$0xff]
    %v5951 = vld [vmem:[#allocation9 + $0x1ec] sm:$0xff]
    %v5952 = vld [vmem:[#allocation9 + $0x1f4] sm:$0xf]
    %v5953 = vld [vmem:[#allocation9 + $0x1f8] sm:$0xff]
    %v5954 = vld [vmem:[#allocation9 + $0x200] sm:$0xff]
    %v5955 = vld [vmem:[#allocation9 + $0x208] sm:$0xff]
    %v5956 = vld [vmem:[#allocation9 + $0x210] sm:$0xf]
    %v5957 = vld [vmem:[#allocation9 + $0x214] sm:$0xff]
    %v5958 = vld [vmem:[#allocation9 + $0x21c] sm:$0xff]
    %v5959 = vld [vmem:[#allocation9 + $0x224] sm:$0xff]
    %v5960 = vld [vmem:[#allocation9 + $0x22c] sm:$0xf]
    %v5961 = vld [vmem:[#allocation9 + $0x230] sm:$0xff]
    %v5962 = vld [vmem:[#allocation9 + $0x238] sm:$0xff]
    %v5963 = vld [vmem:[#allocation9 + $0x240] sm:$0xff]
    %v5964 = vld [vmem:[#allocation9 + $0x248] sm:$0xf]
    %v5965 = vld [vmem:[#allocation9 + $0x24c] sm:$0xff]
    %v5966 = vld [vmem:[#allocation9 + $0x254] sm:$0xff]
    %v5967 = vld [vmem:[#allocation9 + $0x25c] sm:$0xff]
    %v5968 = vld [vmem:[#allocation9 + $0x264] sm:$0xf]
    %v5969 = vld [vmem:[#allocation9 + $0x268] sm:$0xff]
    %v5970 = vld [vmem:[#allocation9 + $0x270] sm:$0xff]
    %v5971 = vld [vmem:[#allocation9 + $0x278] sm:$0xff]
    %v5972 = vld [vmem:[#allocation9 + $0x280] sm:$0xf]
    %v5973 = vld [vmem:[#allocation9 + $0x284] sm:$0xff]
    %v5974 = vld [vmem:[#allocation9 + $0x28c] sm:$0xff]
    %v5975 = vld [vmem:[#allocation9 + $0x294] sm:$0xff]
    %v5976 = vld [vmem:[#allocation9 + $0x29c] sm:$0xf]
    %v5977 = vld [vmem:[#allocation9 + $0x2a0] sm:$0xff]
    %v5978 = vld [vmem:[#allocation9 + $0x2a8] sm:$0xff]
    %v5979 = vld [vmem:[#allocation9 + $0x2b0] sm:$0xff]
    %v5980 = vld [vmem:[#allocation9 + $0x2b8] sm:$0xf]
    %v5981 = vld [vmem:[#allocation9 + $0x2bc] sm:$0xff]
    %v5982 = vld [vmem:[#allocation9 + $0x2c4] sm:$0xff]
    %v5983 = vld [vmem:[#allocation9 + $0x2cc] sm:$0xff]
    %v5984 = vld [vmem:[#allocation9 + $0x2d4] sm:$0xf]
    %v5985 = vld [vmem:[#allocation9 + $0x2d8] sm:$0xff]
    %v5986 = vld [vmem:[#allocation9 + $0x2e0] sm:$0xff]
    %v5987 = vld [vmem:[#allocation9 + $0x2e8] sm:$0xff]
    %v5988 = vld [vmem:[#allocation9 + $0x2f0] sm:$0xf]
    %v5989 = vld [vmem:[#allocation9 + $0x2f4] sm:$0xff]
    %v5990 = vld [vmem:[#allocation9 + $0x2fc] sm:$0xff]
    %v5991 = vld [vmem:[#allocation9 + $0x304] sm:$0xff]
    %v5992 = vld [vmem:[#allocation9 + $0x30c] sm:$0xf]
    %v5993 = vld [vmem:[#allocation9 + $0x310] sm:$0xff]
    %v5994 = vld [vmem:[#allocation9 + $0x318] sm:$0xff]
    %v5995 = vld [vmem:[#allocation9 + $0x320] sm:$0xff]
    %v5996 = vld [vmem:[#allocation9 + $0x328] sm:$0xf]
    %v5997 = vld [vmem:[#allocation9 + $0x32c] sm:$0xff]
    %v5998 = vld [vmem:[#allocation9 + $0x334] sm:$0xff]
    %v5999 = vld [vmem:[#allocation9 + $0x33c] sm:$0xff]
    %v6000 = vld [vmem:[#allocation9 + $0x344] sm:$0xf]
    %v6001 = vld [vmem:[#allocation9 + $0x348] sm:$0xff]
    %v6002 = vld [vmem:[#allocation9 + $0x350] sm:$0xff]
    %v6003 = vld [vmem:[#allocation9 + $0x358] sm:$0xff]
    %v6004 = vld [vmem:[#allocation9 + $0x360] sm:$0xf]
    %v6005 = vld [vmem:[#allocation9 + $0x364] sm:$0xff]
    %v6006 = vld [vmem:[#allocation9 + $0x36c] sm:$0xff]
    %v6007 = vld [vmem:[#allocation9 + $0x374] sm:$0xff]
    %v6008 = vld [vmem:[#allocation9 + $0x37c] sm:$0xf]
    %v6009 = vld [vmem:[#allocation9 + $0x380] sm:$0xff]
    %v6010 = vld [vmem:[#allocation9 + $0x388] sm:$0xff]
    %v6011 = vld [vmem:[#allocation9 + $0x390] sm:$0xff]
    %v6012 = vld [vmem:[#allocation9 + $0x398] sm:$0xf]
    %v6013 = vld [vmem:[#allocation9 + $0x39c] sm:$0xff]
    %v6014 = vld [vmem:[#allocation9 + $0x3a4] sm:$0xff]
    %v6015 = vld [vmem:[#allocation9 + $0x3ac] sm:$0xff]
    %v6016 = vld [vmem:[#allocation9 + $0x3b4] sm:$0xf]
    %v6017 = vld [vmem:[#allocation9 + $0x3b8] sm:$0xff]
    %v6018 = vld [vmem:[#allocation9 + $0x3c0] sm:$0xff]
    %v6019 = vld [vmem:[#allocation9 + $0x3c8] sm:$0xff]
    %v6020 = vld [vmem:[#allocation9 + $0x3d0] sm:$0xf]
    %v6021 = vld [vmem:[#allocation9 + $0x3d4] sm:$0xff]
    %v6022 = vld [vmem:[#allocation9 + $0x3dc] sm:$0xff]
    %v6023 = vld [vmem:[#allocation9 + $0x3e4] sm:$0xff]
    %v6024 = vld [vmem:[#allocation9 + $0x3ec] sm:$0xf]
    %v6025 = vld [vmem:[#allocation9 + $0x3f0] sm:$0xff]
    %v6026 = vld [vmem:[#allocation9 + $0x3f8] sm:$0xff]
    %v6027 = vld [vmem:[#allocation9 + $0x400] sm:$0xff]
    %v6028 = vld [vmem:[#allocation9 + $0x408] sm:$0xf]
    %v6029 = vld [vmem:[#allocation9 + $0x40c] sm:$0xff]
    %v6030 = vld [vmem:[#allocation9 + $0x414] sm:$0xff]
    %v6031 = vld [vmem:[#allocation9 + $0x41c] sm:$0xff]
    %v6032 = vld [vmem:[#allocation9 + $0x424] sm:$0xf]
    %v6033 = vld [vmem:[#allocation9 + $0x428] sm:$0xff]
    %v6034 = vld [vmem:[#allocation9 + $0x430] sm:$0xff]
    %v6035 = vld [vmem:[#allocation9 + $0x438] sm:$0xff]
    %v6036 = vld [vmem:[#allocation9 + $0x440] sm:$0xf]
    %v6037 = vld [vmem:[#allocation9 + $0x444] sm:$0xff]
    %v6038 = vld [vmem:[#allocation9 + $0x44c] sm:$0xff]
    %v6039 = vld [vmem:[#allocation9 + $0x454] sm:$0xff]
    %v6040 = vld [vmem:[#allocation9 + $0x45c] sm:$0xf]
    %v6041 = vld [vmem:[#allocation9 + $0x460] sm:$0xff]
    %v6042 = vld [vmem:[#allocation9 + $0x468] sm:$0xff]
    %v6043 = vld [vmem:[#allocation9 + $0x470] sm:$0xff]
    %v6044 = vld [vmem:[#allocation9 + $0x478] sm:$0xf]
    %v6045 = vld [vmem:[#allocation9 + $0x47c] sm:$0xff]
    %v6046 = vld [vmem:[#allocation9 + $0x484] sm:$0xff]
    %v6047 = vld [vmem:[#allocation9 + $0x48c] sm:$0xff]
    %v6048 = vld [vmem:[#allocation9 + $0x494] sm:$0xf]
    %v6049 = vld [vmem:[#allocation9 + $0x498] sm:$0xff]
    %v6050 = vld [vmem:[#allocation9 + $0x4a0] sm:$0xff]
    %v6051 = vld [vmem:[#allocation9 + $0x4a8] sm:$0xff]
    %v6052 = vld [vmem:[#allocation9 + $0x4b0] sm:$0xf]
    %v6053 = vld [vmem:[#allocation9 + $0x4b4] sm:$0xff]
    %v6054 = vld [vmem:[#allocation9 + $0x4bc] sm:$0xff]
    %v6055 = vld [vmem:[#allocation9 + $0x4c4] sm:$0xff]
    %v6056 = vld [vmem:[#allocation9 + $0x4cc] sm:$0xf]
    %v6057 = vld [vmem:[#allocation9 + $0x4d0] sm:$0xff]
    %v6058 = vld [vmem:[#allocation9 + $0x4d8] sm:$0xff]
    %v6059 = vld [vmem:[#allocation9 + $0x4e0] sm:$0xff]
    %v6060 = vld [vmem:[#allocation9 + $0x4e8] sm:$0xf]
    %v6061 = vld [vmem:[#allocation9 + $0x4ec] sm:$0xff]
    %v6062 = vld [vmem:[#allocation9 + $0x4f4] sm:$0xff]
    %v6063 = vld [vmem:[#allocation9 + $0x4fc] sm:$0xff]
    %v6064 = vld [vmem:[#allocation9 + $0x504] sm:$0xf]
    %v6065 = vld [vmem:[#allocation9 + $0x508] sm:$0xff]
    %v6066 = vld [vmem:[#allocation9 + $0x510] sm:$0xff]
    %v6067 = vld [vmem:[#allocation9 + $0x518] sm:$0xff]
    %v6068 = vld [vmem:[#allocation9 + $0x520] sm:$0xf]
    %v6069 = vld [vmem:[#allocation9 + $0x524] sm:$0xff]
    %v6070 = vld [vmem:[#allocation9 + $0x52c] sm:$0xff]
    %v6071 = vld [vmem:[#allocation9 + $0x534] sm:$0xff]
    %v6072 = vld [vmem:[#allocation9 + $0x53c] sm:$0xf]
    %v6073 = vld [vmem:[#allocation9 + $0x540] sm:$0xff]
    %v6074 = vld [vmem:[#allocation9 + $0x548] sm:$0xff]
    %v6075 = vld [vmem:[#allocation9 + $0x550] sm:$0xff]
    %v6076 = vld [vmem:[#allocation9 + $0x558] sm:$0xf]
    %v6077 = vld [vmem:[#allocation9 + $0x55c] sm:$0xff]
    %v6078 = vld [vmem:[#allocation9 + $0x564] sm:$0xff]
    %v6079 = vld [vmem:[#allocation9 + $0x56c] sm:$0xff]
    %v6080 = vld [vmem:[#allocation9 + $0x574] sm:$0xf]
    %v6081 = vld [vmem:[#allocation9 + $0x578] sm:$0xff]
    %v6082 = vld [vmem:[#allocation9 + $0x580] sm:$0xff]
    %v6083 = vld [vmem:[#allocation9 + $0x588] sm:$0xff]
    %v6084 = vld [vmem:[#allocation9 + $0x590] sm:$0xf]
    %v6085 = vld [vmem:[#allocation9 + $0x594] sm:$0xff]
    %v6086 = vld [vmem:[#allocation9 + $0x59c] sm:$0xff]
    %v6087 = vld [vmem:[#allocation9 + $0x5a4] sm:$0xff]
    %v6088 = vld [vmem:[#allocation9 + $0x5ac] sm:$0xf]
    %v6089 = vld [vmem:[#allocation9 + $0x5b0] sm:$0xff]
    %v6090 = vld [vmem:[#allocation9 + $0x5b8] sm:$0xff]
    %v6091 = vld [vmem:[#allocation9 + $0x5c0] sm:$0xff]
    %v6092 = vld [vmem:[#allocation9 + $0x5c8] sm:$0xf]
    %v6093 = vld [vmem:[#allocation9 + $0x5cc] sm:$0xff]
    %v6094 = vld [vmem:[#allocation9 + $0x5d4] sm:$0xff]
    %v6095 = vld [vmem:[#allocation9 + $0x5dc] sm:$0xff]
    %v6096 = vld [vmem:[#allocation9 + $0x5e4] sm:$0xf]
    %v6097 = vld [vmem:[#allocation9 + $0x5e8] sm:$0xff]
    %v6098 = vld [vmem:[#allocation9 + $0x5f0] sm:$0xff]
    %v6099 = vld [vmem:[#allocation9 + $0x5f8] sm:$0xff]
    %v6100 = vld [vmem:[#allocation9 + $0x600] sm:$0xf]
    %v6101 = vld [vmem:[#allocation9 + $0x604] sm:$0xff]
    %v6102 = vld [vmem:[#allocation9 + $0x60c] sm:$0xff]
    %v6103 = vld [vmem:[#allocation9 + $0x614] sm:$0xff]
    %v6104 = vld [vmem:[#allocation9 + $0x61c] sm:$0xf]
    %v6105 = vld [vmem:[#allocation9 + $0x620] sm:$0xff]
    %v6106 = vld [vmem:[#allocation9 + $0x628] sm:$0xff]
    %v6107 = vld [vmem:[#allocation9 + $0x630] sm:$0xff]
    %v6108 = vld [vmem:[#allocation9 + $0x638] sm:$0xf]
    %v6109 = vld [vmem:[#allocation9 + $0x63c] sm:$0xff]
    %v6110 = vld [vmem:[#allocation9 + $0x644] sm:$0xff]
    %v6111 = vld [vmem:[#allocation9 + $0x64c] sm:$0xff]
    %v6112 = vld [vmem:[#allocation9 + $0x654] sm:$0xf]
    %v6113 = vld [vmem:[#allocation9 + $0x658] sm:$0xff]
    %v6114 = vld [vmem:[#allocation9 + $0x660] sm:$0xff]
    %v6115 = vld [vmem:[#allocation9 + $0x668] sm:$0xff]
    %v6116 = vld [vmem:[#allocation9 + $0x670] sm:$0xf]
    %v6117 = vld [vmem:[#allocation9 + $0x674] sm:$0xff]
    %v6118 = vld [vmem:[#allocation9 + $0x67c] sm:$0xff]
    %v6119 = vld [vmem:[#allocation9 + $0x684] sm:$0xff]
    %v6120 = vld [vmem:[#allocation9 + $0x68c] sm:$0xf]
    %v6121 = vld [vmem:[#allocation9 + $0x690] sm:$0xff]
    %v6122 = vld [vmem:[#allocation9 + $0x698] sm:$0xff]
    %v6123 = vld [vmem:[#allocation9 + $0x6a0] sm:$0xff]
    %v6124 = vld [vmem:[#allocation9 + $0x6a8] sm:$0xf]
    %v6125 = vld [vmem:[#allocation9 + $0x6ac] sm:$0xff]
    %v6126 = vld [vmem:[#allocation9 + $0x6b4] sm:$0xff]
    %v6127 = vld [vmem:[#allocation9 + $0x6bc] sm:$0xff]
    %v6128 = vld [vmem:[#allocation9 + $0x6c4] sm:$0xf]
    %v6129 = vld [vmem:[#allocation9 + $0x6c8] sm:$0xff]
    %v6130 = vld [vmem:[#allocation9 + $0x6d0] sm:$0xff]
    %v6131 = vld [vmem:[#allocation9 + $0x6d8] sm:$0xff]
    %v6132 = vld [vmem:[#allocation9 + $0x6e0] sm:$0xf]
    %v6133 = vld [vmem:[#allocation9 + $0x6e4] sm:$0xff]
    %v6134 = vld [vmem:[#allocation9 + $0x6ec] sm:$0xff]
    %v6135 = vld [vmem:[#allocation9 + $0x6f4] sm:$0xff]
    %v6136 = vld [vmem:[#allocation9 + $0x6fc] sm:$0xf]
    %v6137 = vld [vmem:[#allocation9 + $0x700] sm:$0xff]
    %v6138 = vld [vmem:[#allocation9 + $0x708] sm:$0xff]
    %v6139 = vld [vmem:[#allocation9 + $0x710] sm:$0xff]
    %v6140 = vld [vmem:[#allocation9 + $0x718] sm:$0xf]
    %v6141 = vld [vmem:[#allocation9 + $0x71c] sm:$0xff]
    %v6142 = vld [vmem:[#allocation9 + $0x724] sm:$0xff]
    %v6143 = vld [vmem:[#allocation9 + $0x72c] sm:$0xff]
    %v6144 = vld [vmem:[#allocation9 + $0x734] sm:$0xf]
    %v6145 = vld [vmem:[#allocation9 + $0x738] sm:$0xff]
    %v6146 = vld [vmem:[#allocation9 + $0x740] sm:$0xff]
    %v6147 = vld [vmem:[#allocation9 + $0x748] sm:$0xff]
    %v6148 = vld [vmem:[#allocation9 + $0x750] sm:$0xf]
    %v6149 = vld [vmem:[#allocation9 + $0x754] sm:$0xff]
    %v6150 = vld [vmem:[#allocation9 + $0x75c] sm:$0xff]
    %v6151 = vld [vmem:[#allocation9 + $0x764] sm:$0xff]
    %v6152 = vld [vmem:[#allocation9 + $0x76c] sm:$0xf]
    %v6153 = vld [vmem:[#allocation9 + $0x770] sm:$0xff]
    %v6154 = vld [vmem:[#allocation9 + $0x778] sm:$0xff]
    %v6155 = vld [vmem:[#allocation9 + $0x780] sm:$0xff]
    %v6156 = vld [vmem:[#allocation9 + $0x788] sm:$0xf]
    %v6157 = vld [vmem:[#allocation9 + $0x78c] sm:$0xff]
    %v6158 = vld [vmem:[#allocation9 + $0x794] sm:$0xff]
    %v6159 = vld [vmem:[#allocation9 + $0x79c] sm:$0xff]
    %v6160 = vld [vmem:[#allocation9 + $0x7a4] sm:$0xf]
    %v6161 = vld [vmem:[#allocation9 + $0x7a8] sm:$0xff]
    %v6162 = vld [vmem:[#allocation9 + $0x7b0] sm:$0xff]
    %v6163 = vld [vmem:[#allocation9 + $0x7b8] sm:$0xff]
    %v6164 = vld [vmem:[#allocation9 + $0x7c0] sm:$0xf]
    %v6165 = vld [vmem:[#allocation9 + $0x7c4] sm:$0xff]
    %v6166 = vld [vmem:[#allocation9 + $0x7cc] sm:$0xff]
    %v6167 = vld [vmem:[#allocation9 + $0x7d4] sm:$0xff]
    %v6168 = vld [vmem:[#allocation9 + $0x7dc] sm:$0xf]
    %v6169 = vld [vmem:[#allocation9 + $0x7e0] sm:$0xff]
    %v6170 = vld [vmem:[#allocation9 + $0x7e8] sm:$0xff]
    %v6171 = vld [vmem:[#allocation9 + $0x7f0] sm:$0xff]
    %v6172 = vld [vmem:[#allocation9 + $0x7f8] sm:$0xf]
    %v6173 = vld [vmem:[#allocation9 + $0x7fc] sm:$0xff]
    %v6174 = vld [vmem:[#allocation9 + $0x804] sm:$0xff]
    %v6175 = vld [vmem:[#allocation9 + $0x80c] sm:$0xff]
    %v6176 = vld [vmem:[#allocation9 + $0x814] sm:$0xf]
    %v6177 = vld [vmem:[#allocation9 + $0x818] sm:$0xff]
    %v6178 = vld [vmem:[#allocation9 + $0x820] sm:$0xff]
    %v6179 = vld [vmem:[#allocation9 + $0x828] sm:$0xff]
    %v6180 = vld [vmem:[#allocation9 + $0x830] sm:$0xf]
    %v6181 = vld [vmem:[#allocation9 + $0x834] sm:$0xff]
    %v6182 = vld [vmem:[#allocation9 + $0x83c] sm:$0xff]
    %v6183 = vld [vmem:[#allocation9 + $0x844] sm:$0xff]
    %v6184 = vld [vmem:[#allocation9 + $0x84c] sm:$0xf]
    %v6185 = vld [vmem:[#allocation9 + $0x850] sm:$0xff]
    %v6186 = vld [vmem:[#allocation9 + $0x858] sm:$0xff]
    %v6187 = vld [vmem:[#allocation9 + $0x860] sm:$0xff]
    %v6188 = vld [vmem:[#allocation9 + $0x868] sm:$0xf]
    %v6189 = vld [vmem:[#allocation9 + $0x86c] sm:$0xff]
    %v6190 = vld [vmem:[#allocation9 + $0x874] sm:$0xff]
    %v6191 = vld [vmem:[#allocation9 + $0x87c] sm:$0xff]
    %v6192 = vld [vmem:[#allocation9 + $0x884] sm:$0xf]
    %v6193 = vld [vmem:[#allocation9 + $0x888] sm:$0xff]
    %v6194 = vld [vmem:[#allocation9 + $0x890] sm:$0xff]
    %v6195 = vld [vmem:[#allocation9 + $0x898] sm:$0xff]
    %v6196 = vld [vmem:[#allocation9 + $0x8a0] sm:$0xf]
    %v6197 = vld [vmem:[#allocation9 + $0x8a4] sm:$0xff]
    %v6198 = vld [vmem:[#allocation9 + $0x8ac] sm:$0xff]
    %v6199 = vld [vmem:[#allocation9 + $0x8b4] sm:$0xff]
    %v6200 = vld [vmem:[#allocation9 + $0x8bc] sm:$0xf]
    %v6201 = vld [vmem:[#allocation9 + $0x8c0] sm:$0xff]
    %v6202 = vld [vmem:[#allocation9 + $0x8c8] sm:$0xff]
    %v6203 = vld [vmem:[#allocation9 + $0x8d0] sm:$0xff]
    %v6204 = vld [vmem:[#allocation9 + $0x8d8] sm:$0xf]
    %v6205 = vld [vmem:[#allocation9 + $0x8dc] sm:$0xff]
    %v6206 = vld [vmem:[#allocation9 + $0x8e4] sm:$0xff]
    %v6207 = vld [vmem:[#allocation9 + $0x8ec] sm:$0xff]
    %v6208 = vld [vmem:[#allocation9 + $0x8f4] sm:$0xf]
    %v6209 = vld [vmem:[#allocation9 + $0x8f8] sm:$0xff]
    %v6210 = vld [vmem:[#allocation9 + $0x900] sm:$0xff]
    %v6211 = vld [vmem:[#allocation9 + $0x908] sm:$0xff]
    %v6212 = vld [vmem:[#allocation9 + $0x910] sm:$0xf]
    %v6213 = vld [vmem:[#allocation9 + $0x914] sm:$0xff]
    %v6214 = vld [vmem:[#allocation9 + $0x91c] sm:$0xff]
    %v6215 = vld [vmem:[#allocation9 + $0x924] sm:$0xff]
    %v6216 = vld [vmem:[#allocation9 + $0x92c] sm:$0xf]
    %v6217 = vld [vmem:[#allocation9 + $0x930] sm:$0xff]
    %v6218 = vld [vmem:[#allocation9 + $0x938] sm:$0xff]
    %v6219 = vld [vmem:[#allocation9 + $0x940] sm:$0xff]
    %v6220 = vld [vmem:[#allocation9 + $0x948] sm:$0xf]
    %v6221 = vld [vmem:[#allocation9 + $0x94c] sm:$0xff]
    %v6222 = vld [vmem:[#allocation9 + $0x954] sm:$0xff]
    %v6223 = vld [vmem:[#allocation9 + $0x95c] sm:$0xff]
    %v6224 = vld [vmem:[#allocation9 + $0x964] sm:$0xf]
    %v6225 = vld [vmem:[#allocation9 + $0x968] sm:$0xff]
    %v6226 = vld [vmem:[#allocation9 + $0x970] sm:$0xff]
    %v6227 = vld [vmem:[#allocation9 + $0x978] sm:$0xff]
    %v6228 = vld [vmem:[#allocation9 + $0x980] sm:$0xf]
    %v6229 = vld [vmem:[#allocation9 + $0x984] sm:$0xff]
    %v6230 = vld [vmem:[#allocation9 + $0x98c] sm:$0xff]
    %v6231 = vld [vmem:[#allocation9 + $0x994] sm:$0xff]
    %v6232 = vld [vmem:[#allocation9 + $0x99c] sm:$0xf]
    %v6233 = vld [vmem:[#allocation9 + $0x9a0] sm:$0xff]
    %v6234 = vld [vmem:[#allocation9 + $0x9a8] sm:$0xff]
    %v6235 = vld [vmem:[#allocation9 + $0x9b0] sm:$0xff]
    %v6236 = vld [vmem:[#allocation9 + $0x9b8] sm:$0xf]
    %v6237 = vld [vmem:[#allocation9 + $0x9bc] sm:$0xff]
    %v6238 = vld [vmem:[#allocation9 + $0x9c4] sm:$0xff]
    %v6239 = vld [vmem:[#allocation9 + $0x9cc] sm:$0xff]
    %v6240 = vld [vmem:[#allocation9 + $0x9d4] sm:$0xf]
    %v6241 = vld [vmem:[#allocation9 + $0x9d8] sm:$0xff]
    %v6242 = vld [vmem:[#allocation9 + $0x9e0] sm:$0xff]
    %v6243 = vld [vmem:[#allocation9 + $0x9e8] sm:$0xff]
    %v6244 = vld [vmem:[#allocation9 + $0x9f0] sm:$0xf]
    %v6245 = vld [vmem:[#allocation9 + $0x9f4] sm:$0xff]
    %v6246 = vld [vmem:[#allocation9 + $0x9fc] sm:$0xff]
    %v6247 = vld [vmem:[#allocation9 + $0xa04] sm:$0xff]
    %v6248 = vld [vmem:[#allocation9 + $0xa0c] sm:$0xf]
    %v6249 = vld [vmem:[#allocation9 + $0xa10] sm:$0xff]
    %v6250 = vld [vmem:[#allocation9 + $0xa18] sm:$0xff]
    %v6251 = vld [vmem:[#allocation9 + $0xa20] sm:$0xff]
    %v6252 = vld [vmem:[#allocation9 + $0xa28] sm:$0xf]
    %v6253 = vld [vmem:[#allocation9 + $0xa2c] sm:$0xff]
    %v6254 = vld [vmem:[#allocation9 + $0xa34] sm:$0xff]
    %v6255 = vld [vmem:[#allocation9 + $0xa3c] sm:$0xff]
    %v6256 = vld [vmem:[#allocation9 + $0xa44] sm:$0xf]
    %v6257 = vld [vmem:[#allocation9 + $0xa48] sm:$0xff]
    %v6258 = vld [vmem:[#allocation9 + $0xa50] sm:$0xff]
    %v6259 = vld [vmem:[#allocation9 + $0xa58] sm:$0xff]
    %v6260 = vld [vmem:[#allocation9 + $0xa60] sm:$0xf]
    %v6261 = vld [vmem:[#allocation9 + $0xa64] sm:$0xff]
    %v6262 = vld [vmem:[#allocation9 + $0xa6c] sm:$0xff]
    %v6263 = vld [vmem:[#allocation9 + $0xa74] sm:$0xff]
    %v6264 = vld [vmem:[#allocation9 + $0xa7c] sm:$0xf]
    %v6265 = vld [vmem:[#allocation9 + $0xa80] sm:$0xff]
    %v6266 = vld [vmem:[#allocation9 + $0xa88] sm:$0xff]
    %v6267 = vld [vmem:[#allocation9 + $0xa90] sm:$0xff]
    %v6268 = vld [vmem:[#allocation9 + $0xa98] sm:$0xf]
    %v6269 = vld [vmem:[#allocation9 + $0xa9c] sm:$0xff]
    %v6270 = vld [vmem:[#allocation9 + $0xaa4] sm:$0xff]
    %v6271 = vld [vmem:[#allocation9 + $0xaac] sm:$0xff]
    %v6272 = vld [vmem:[#allocation9 + $0xab4] sm:$0xf]
    %v6273 = vld [vmem:[#allocation9 + $0xab8] sm:$0xff]
    %v6274 = vld [vmem:[#allocation9 + $0xac0] sm:$0xff]
    %v6275 = vld [vmem:[#allocation9 + $0xac8] sm:$0xff]
    %v6276 = vld [vmem:[#allocation9 + $0xad0] sm:$0xf]
    %v6277 = vld [vmem:[#allocation9 + $0xad4] sm:$0xff]
    %v6278 = vld [vmem:[#allocation9 + $0xadc] sm:$0xff]
    %v6279 = vld [vmem:[#allocation9 + $0xae4] sm:$0xff]
    %v6280 = vld [vmem:[#allocation9 + $0xaec] sm:$0xf]
    %v6281 = vld [vmem:[#allocation9 + $0xaf0] sm:$0xff]
    %v6282 = vld [vmem:[#allocation9 + $0xaf8] sm:$0xff]
    %v6283 = vld [vmem:[#allocation9 + $0xb00] sm:$0xff]
    %v6284 = vld [vmem:[#allocation9 + $0xb08] sm:$0xf]
    %v6285 = vld [vmem:[#allocation9 + $0xb0c] sm:$0xff]
    %v6286 = vld [vmem:[#allocation9 + $0xb14] sm:$0xff]
    %v6287 = vld [vmem:[#allocation9 + $0xb1c] sm:$0xff]
    %v6288 = vld [vmem:[#allocation9 + $0xb24] sm:$0xf]
    %v6289 = vld [vmem:[#allocation9 + $0xb28] sm:$0xff]
    %v6290 = vld [vmem:[#allocation9 + $0xb30] sm:$0xff]
    %v6291 = vld [vmem:[#allocation9 + $0xb38] sm:$0xff]
    %v6292 = vld [vmem:[#allocation9 + $0xb40] sm:$0xf]
    %v6293 = vld [vmem:[#allocation9 + $0xb44] sm:$0xff]
    %v6294 = vld [vmem:[#allocation9 + $0xb4c] sm:$0xff]
    %v6295 = vld [vmem:[#allocation9 + $0xb54] sm:$0xff]
    %v6296 = vld [vmem:[#allocation9 + $0xb5c] sm:$0xf]
    %v6297 = vld [vmem:[#allocation9 + $0xb60] sm:$0xff]
    %v6298 = vld [vmem:[#allocation9 + $0xb68] sm:$0xff]
    %v6299 = vld [vmem:[#allocation9 + $0xb70] sm:$0xff]
    %v6300 = vld [vmem:[#allocation9 + $0xb78] sm:$0xf]
    %v6301 = vld [vmem:[#allocation9 + $0xb7c] sm:$0xff]
    %v6302 = vld [vmem:[#allocation9 + $0xb84] sm:$0xff]
    %v6303 = vld [vmem:[#allocation9 + $0xb8c] sm:$0xff]
    %v6304 = vld [vmem:[#allocation9 + $0xb94] sm:$0xf]
    %v6305 = vld [vmem:[#allocation9 + $0xb98] sm:$0xff]
    %v6306 = vld [vmem:[#allocation9 + $0xba0] sm:$0xff]
    %v6307 = vld [vmem:[#allocation9 + $0xba8] sm:$0xff]
    %v6308 = vld [vmem:[#allocation9 + $0xbb0] sm:$0xf]
    %v6309 = vld [vmem:[#allocation9 + $0xbb4] sm:$0xff]
    %v6310 = vld [vmem:[#allocation9 + $0xbbc] sm:$0xff]
    %v6311 = vld [vmem:[#allocation9 + $0xbc4] sm:$0xff]
    %v6312 = vld [vmem:[#allocation9 + $0xbcc] sm:$0xf]
    %v6313 = vld [vmem:[#allocation9 + $0xbd0] sm:$0xff]
    %v6314 = vld [vmem:[#allocation9 + $0xbd8] sm:$0xff]
    %v6315 = vld [vmem:[#allocation9 + $0xbe0] sm:$0xff]
    %v6316 = vld [vmem:[#allocation9 + $0xbe8] sm:$0xf]
    %v6317 = vld [vmem:[#allocation9 + $0xbec] sm:$0xff]
    %v6318 = vld [vmem:[#allocation9 + $0xbf4] sm:$0xff]
    %v6319 = vld [vmem:[#allocation9 + $0xbfc] sm:$0xff]
    %v6320 = vld [vmem:[#allocation9 + $0xc04] sm:$0xf]
    %v6321 = vld [vmem:[#allocation9 + $0xc08] sm:$0xff]
    %v6322 = vld [vmem:[#allocation9 + $0xc10] sm:$0xff]
    %v6323 = vld [vmem:[#allocation9 + $0xc18] sm:$0xff]
    %v6324 = vld [vmem:[#allocation9 + $0xc20] sm:$0xf]
    %v6325 = vld [vmem:[#allocation9 + $0xc24] sm:$0xff]
    %v6326 = vld [vmem:[#allocation9 + $0xc2c] sm:$0xff]
    %v6327 = vld [vmem:[#allocation9 + $0xc34] sm:$0xff]
    %v6328 = vld [vmem:[#allocation9 + $0xc3c] sm:$0xf]
    %v6329 = vld [vmem:[#allocation9 + $0xc40] sm:$0xff]
    %v6330 = vld [vmem:[#allocation9 + $0xc48] sm:$0xff]
    %v6331 = vld [vmem:[#allocation9 + $0xc50] sm:$0xff]
    %v6332 = vld [vmem:[#allocation9 + $0xc58] sm:$0xf]
    %v6333 = vld [vmem:[#allocation9 + $0xc5c] sm:$0xff]
    %v6334 = vld [vmem:[#allocation9 + $0xc64] sm:$0xff]
    %v6335 = vld [vmem:[#allocation9 + $0xc6c] sm:$0xff]
    %v6336 = vld [vmem:[#allocation9 + $0xc74] sm:$0xf]
    %v6337 = vld [vmem:[#allocation9 + $0xc78] sm:$0xff]
    %v6338 = vld [vmem:[#allocation9 + $0xc80] sm:$0xff]
    %v6339 = vld [vmem:[#allocation9 + $0xc88] sm:$0xff]
    %v6340 = vld [vmem:[#allocation9 + $0xc90] sm:$0xf]
    %v6341 = vld [vmem:[#allocation9 + $0xc94] sm:$0xff]
    %v6342 = vld [vmem:[#allocation9 + $0xc9c] sm:$0xff]
    %v6343 = vld [vmem:[#allocation9 + $0xca4] sm:$0xff]
    %v6344 = vld [vmem:[#allocation9 + $0xcac] sm:$0xf]
    %v6345 = vld [vmem:[#allocation9 + $0xcb0] sm:$0xff]
    %v6346 = vld [vmem:[#allocation9 + $0xcb8] sm:$0xff]
    %v6347 = vld [vmem:[#allocation9 + $0xcc0] sm:$0xff]
    %v6348 = vld [vmem:[#allocation9 + $0xcc8] sm:$0xf]
    %v6349 = vld [vmem:[#allocation9 + $0xccc] sm:$0xff]
    %v6350 = vld [vmem:[#allocation9 + $0xcd4] sm:$0xff]
    %v6351 = vld [vmem:[#allocation9 + $0xcdc] sm:$0xff]
    %v6352 = vld [vmem:[#allocation9 + $0xce4] sm:$0xf]
    %v6353 = vld [vmem:[#allocation9 + $0xce8] sm:$0xff]
    %v6354 = vld [vmem:[#allocation9 + $0xcf0] sm:$0xff]
    %v6355 = vld [vmem:[#allocation9 + $0xcf8] sm:$0xff]
    %v6356 = vld [vmem:[#allocation9 + $0xd00] sm:$0xf]
    %v6357 = vld [vmem:[#allocation9 + $0xd04] sm:$0xff]
    %v6358 = vld [vmem:[#allocation9 + $0xd0c] sm:$0xff]
    %v6359 = vld [vmem:[#allocation9 + $0xd14] sm:$0xff]
    %v6360 = vld [vmem:[#allocation9 + $0xd1c] sm:$0xf]
    %v6361 = vld [vmem:[#allocation9 + $0xd20] sm:$0xff]
    %v6362 = vld [vmem:[#allocation9 + $0xd28] sm:$0xff]
    %v6363 = vld [vmem:[#allocation9 + $0xd30] sm:$0xff]
    %v6364 = vld [vmem:[#allocation9 + $0xd38] sm:$0xf]
    %v6365 = vld [vmem:[#allocation9 + $0xd3c] sm:$0xff]
    %v6366 = vld [vmem:[#allocation9 + $0xd44] sm:$0xff]
    %v6367 = vld [vmem:[#allocation9 + $0xd4c] sm:$0xff]
    %v6368 = vld [vmem:[#allocation9 + $0xd54] sm:$0xf]
    %v6369 = vld [vmem:[#allocation9 + $0xd58] sm:$0xff]
    %v6370 = vld [vmem:[#allocation9 + $0xd60] sm:$0xff]
    %v6371 = vld [vmem:[#allocation9 + $0xd68] sm:$0xff]
    %v6372 = vld [vmem:[#allocation9 + $0xd70] sm:$0xf]
    %v6373 = vld [vmem:[#allocation9 + $0xd74] sm:$0xff]
    %v6374 = vld [vmem:[#allocation9 + $0xd7c] sm:$0xff]
    %v6375 = vld [vmem:[#allocation9 + $0xd84] sm:$0xff]
    %v6376 = vld [vmem:[#allocation9 + $0xd8c] sm:$0xf]
    %v6377 = vld [vmem:[#allocation9 + $0xd90] sm:$0xff]
    %v6378 = vld [vmem:[#allocation9 + $0xd98] sm:$0xff]
    %v6379 = vld [vmem:[#allocation9 + $0xda0] sm:$0xff]
    %v6380 = vld [vmem:[#allocation9 + $0xda8] sm:$0xf]
    %v6381 = vld [vmem:[#allocation9 + $0xdac] sm:$0xff]
    %v6382 = vld [vmem:[#allocation9 + $0xdb4] sm:$0xff]
    %v6383 = vld [vmem:[#allocation9 + $0xdbc] sm:$0xff]
    %v6384 = vld [vmem:[#allocation9 + $0xdc4] sm:$0xf]
    %v6385 = vld [vmem:[#allocation9 + $0xdc8] sm:$0xff]
    %v6386 = vld [vmem:[#allocation9 + $0xdd0] sm:$0xff]
    %v6387 = vld [vmem:[#allocation9 + $0xdd8] sm:$0xff]
    %v6388 = vld [vmem:[#allocation9 + $0xde0] sm:$0xf]
    %v6389 = vld [vmem:[#allocation9 + $0xde4] sm:$0xff]
    %v6390 = vld [vmem:[#allocation9 + $0xdec] sm:$0xff]
    %v6391 = vld [vmem:[#allocation9 + $0xdf4] sm:$0xff]
    %v6392 = vld [vmem:[#allocation9 + $0xdfc] sm:$0xf]
    %v6393 = vld [vmem:[#allocation10] sm:$0xff]
    %v6395 = vlaneseq
    %v6396 = vshrl.u32 %v6395, 7
    %v6397 = vsub.s32 0, %v6396
    %v6398 = vrot.slane %v6393, %v6397
    %v6399 = vlaneseq
    %v6400 = vshrl.u32 %v6399, 7
    %v6401 = vsub.s32 1, %v6400
    %v6402 = vrot.slane %v6393, %v6401
    %v6403 = vlaneseq
    %v6404 = vshrl.u32 %v6403, 7
    %v6405 = vsub.s32 2, %v6404
    %v6406 = vrot.slane %v6393, %v6405
    %v6407 = vlaneseq
    %v6408 = vshrl.u32 %v6407, 7
    %v6409 = vsub.s32 3, %v6408
    %v6410 = vrot.slane %v6393, %v6409
    %v6411 = vlaneseq
    %v6412 = vshrl.u32 %v6411, 7
    %v6413 = vsub.s32 4, %v6412
    %v6414 = vrot.slane %v6393, %v6413
    %v6415 = vlaneseq
    %v6416 = vshrl.u32 %v6415, 7
    %v6417 = vsub.s32 5, %v6416
    %v6418 = vrot.slane %v6393, %v6417
    %v6419 = vlaneseq
    %v6420 = vshrl.u32 %v6419, 7
    %v6421 = vsub.s32 6, %v6420
    %v6422 = vrot.slane %v6393, %v6421
    %v6942 = vunpack.c.l.b16 %v5881
    %v6943 = vunpack.c.h.b16 %v5881
    %v6944 = vunpack.c.l.b16 %v5882
    %v6945 = vunpack.c.h.b16 %v5882
    %v6946 = vunpack.c.l.b16 %v5883
    %v6947 = vunpack.c.h.b16 %v5883
    %v6948 = vunpack.c.l.b16 %v5884
    %v6949 = vunpack.c.l.b16 %v5885
    %v6950 = vunpack.c.h.b16 %v5885
    %v6951 = vunpack.c.l.b16 %v5886
    %v6952 = vunpack.c.h.b16 %v5886
    %v6953 = vunpack.c.l.b16 %v5887
    %v6954 = vunpack.c.h.b16 %v5887
    %v6955 = vunpack.c.l.b16 %v5888
    %v6956 = vunpack.c.l.b16 %v5889
    %v6957 = vunpack.c.h.b16 %v5889
    %v6958 = vunpack.c.l.b16 %v5890
    %v6959 = vunpack.c.h.b16 %v5890
    %v6960 = vunpack.c.l.b16 %v5891
    %v6961 = vunpack.c.h.b16 %v5891
    %v6962 = vunpack.c.l.b16 %v5892
    %v6963 = vunpack.c.l.b16 %v5893
    %v6964 = vunpack.c.h.b16 %v5893
    %v6965 = vunpack.c.l.b16 %v5894
    %v6966 = vunpack.c.h.b16 %v5894
    %v6967 = vunpack.c.l.b16 %v5895
    %v6968 = vunpack.c.h.b16 %v5895
    %v6969 = vunpack.c.l.b16 %v5896
    %v6970 = vunpack.c.l.b16 %v5897
    %v6971 = vunpack.c.h.b16 %v5897
    %v6972 = vunpack.c.l.b16 %v5898
    %v6973 = vunpack.c.h.b16 %v5898
    %v6974 = vunpack.c.l.b16 %v5899
    %v6975 = vunpack.c.h.b16 %v5899
    %v6976 = vunpack.c.l.b16 %v5900
    %v6977 = vunpack.c.l.b16 %v5901
    %v6978 = vunpack.c.h.b16 %v5901
    %v6979 = vunpack.c.l.b16 %v5902
    %v6980 = vunpack.c.h.b16 %v5902
    %v6981 = vunpack.c.l.b16 %v5903
    %v6982 = vunpack.c.h.b16 %v5903
    %v6983 = vunpack.c.l.b16 %v5904
    %v6984 = vunpack.c.l.b16 %v5905
    %v6985 = vunpack.c.h.b16 %v5905
    %v6986 = vunpack.c.l.b16 %v5906
    %v6987 = vunpack.c.h.b16 %v5906
    %v6988 = vunpack.c.l.b16 %v5907
    %v6989 = vunpack.c.h.b16 %v5907
    %v6990 = vunpack.c.l.b16 %v5908
    %v6991 = vunpack.c.l.b16 %v5909
    %v6992 = vunpack.c.h.b16 %v5909
    %v6993 = vunpack.c.l.b16 %v5910
    %v6994 = vunpack.c.h.b16 %v5910
    %v6995 = vunpack.c.l.b16 %v5911
    %v6996 = vunpack.c.h.b16 %v5911
    %v6997 = vunpack.c.l.b16 %v5912
    %v6998 = vunpack.c.l.b16 %v5913
    %v6999 = vunpack.c.h.b16 %v5913
    %v7000 = vunpack.c.l.b16 %v5914
    %v7001 = vunpack.c.h.b16 %v5914
    %v7002 = vunpack.c.l.b16 %v5915
    %v7003 = vunpack.c.h.b16 %v5915
    %v7004 = vunpack.c.l.b16 %v5916
    %v7005 = vunpack.c.l.b16 %v5917
    %v7006 = vunpack.c.h.b16 %v5917
    %v7007 = vunpack.c.l.b16 %v5918
    %v7008 = vunpack.c.h.b16 %v5918
    %v7009 = vunpack.c.l.b16 %v5919
    %v7010 = vunpack.c.h.b16 %v5919
    %v7011 = vunpack.c.l.b16 %v5920
    %v7012 = vunpack.c.l.b16 %v5921
    %v7013 = vunpack.c.h.b16 %v5921
    %v7014 = vunpack.c.l.b16 %v5922
    %v7015 = vunpack.c.h.b16 %v5922
    %v7016 = vunpack.c.l.b16 %v5923
    %v7017 = vunpack.c.h.b16 %v5923
    %v7018 = vunpack.c.l.b16 %v5924
    %v7019 = vunpack.c.l.b16 %v5925
    %v7020 = vunpack.c.h.b16 %v5925
    %v7021 = vunpack.c.l.b16 %v5926
    %v7022 = vunpack.c.h.b16 %v5926
    %v7023 = vunpack.c.l.b16 %v5927
    %v7024 = vunpack.c.h.b16 %v5927
    %v7025 = vunpack.c.l.b16 %v5928
    %v7026 = vunpack.c.l.b16 %v5929
    %v7027 = vunpack.c.h.b16 %v5929
    %v7028 = vunpack.c.l.b16 %v5930
    %v7029 = vunpack.c.h.b16 %v5930
    %v7030 = vunpack.c.l.b16 %v5931
    %v7031 = vunpack.c.h.b16 %v5931
    %v7032 = vunpack.c.l.b16 %v5932
    %v7033 = vunpack.c.l.b16 %v5933
    %v7034 = vunpack.c.h.b16 %v5933
    %v7035 = vunpack.c.l.b16 %v5934
    %v7036 = vunpack.c.h.b16 %v5934
    %v7037 = vunpack.c.l.b16 %v5935
    %v7038 = vunpack.c.h.b16 %v5935
    %v7039 = vunpack.c.l.b16 %v5936
    %v7040 = vunpack.c.l.b16 %v5937
    %v7041 = vunpack.c.h.b16 %v5937
    %v7042 = vunpack.c.l.b16 %v5938
    %v7043 = vunpack.c.h.b16 %v5938
    %v7044 = vunpack.c.l.b16 %v5939
    %v7045 = vunpack.c.h.b16 %v5939
    %v7046 = vunpack.c.l.b16 %v5940
    %v7047 = vunpack.c.l.b16 %v5941
    %v7048 = vunpack.c.h.b16 %v5941
    %v7049 = vunpack.c.l.b16 %v5942
    %v7050 = vunpack.c.h.b16 %v5942
    %v7051 = vunpack.c.l.b16 %v5943
    %v7052 = vunpack.c.h.b16 %v5943
    %v7053 = vunpack.c.l.b16 %v5944
    %v7054 = vunpack.c.l.b16 %v5945
    %v7055 = vunpack.c.h.b16 %v5945
    %v7056 = vunpack.c.l.b16 %v5946
    %v7057 = vunpack.c.h.b16 %v5946
    %v7058 = vunpack.c.l.b16 %v5947
    %v7059 = vunpack.c.h.b16 %v5947
    %v7060 = vunpack.c.l.b16 %v5948
    %v7061 = vunpack.c.l.b16 %v5949
    %v7062 = vunpack.c.h.b16 %v5949
    %v7063 = vunpack.c.l.b16 %v5950
    %v7064 = vunpack.c.h.b16 %v5950
    %v7065 = vunpack.c.l.b16 %v5951
    %v7066 = vunpack.c.h.b16 %v5951
    %v7067 = vunpack.c.l.b16 %v5952
    %v7068 = vunpack.c.l.b16 %v5953
    %v7069 = vunpack.c.h.b16 %v5953
    %v7070 = vunpack.c.l.b16 %v5954
    %v7071 = vunpack.c.h.b16 %v5954
    %v7072 = vunpack.c.l.b16 %v5955
    %v7073 = vunpack.c.h.b16 %v5955
    %v7074 = vunpack.c.l.b16 %v5956
    %v7075 = vunpack.c.l.b16 %v5957
    %v7076 = vunpack.c.h.b16 %v5957
    %v7077 = vunpack.c.l.b16 %v5958
    %v7078 = vunpack.c.h.b16 %v5958
    %v7079 = vunpack.c.l.b16 %v5959
    %v7080 = vunpack.c.h.b16 %v5959
    %v7081 = vunpack.c.l.b16 %v5960
    %v7082 = vunpack.c.l.b16 %v5961
    %v7083 = vunpack.c.h.b16 %v5961
    %v7084 = vunpack.c.l.b16 %v5962
    %v7085 = vunpack.c.h.b16 %v5962
    %v7086 = vunpack.c.l.b16 %v5963
    %v7087 = vunpack.c.h.b16 %v5963
    %v7088 = vunpack.c.l.b16 %v5964
    %v7089 = vunpack.c.l.b16 %v5965
    %v7090 = vunpack.c.h.b16 %v5965
    %v7091 = vunpack.c.l.b16 %v5966
    %v7092 = vunpack.c.h.b16 %v5966
    %v7093 = vunpack.c.l.b16 %v5967
    %v7094 = vunpack.c.h.b16 %v5967
    %v7095 = vunpack.c.l.b16 %v5968
    %v7096 = vunpack.c.l.b16 %v5969
    %v7097 = vunpack.c.h.b16 %v5969
    %v7098 = vunpack.c.l.b16 %v5970
    %v7099 = vunpack.c.h.b16 %v5970
    %v7100 = vunpack.c.l.b16 %v5971
    %v7101 = vunpack.c.h.b16 %v5971
    %v7102 = vunpack.c.l.b16 %v5972
    %v7103 = vunpack.c.l.b16 %v5973
    %v7104 = vunpack.c.h.b16 %v5973
    %v7105 = vunpack.c.l.b16 %v5974
    %v7106 = vunpack.c.h.b16 %v5974
    %v7107 = vunpack.c.l.b16 %v5975
    %v7108 = vunpack.c.h.b16 %v5975
    %v7109 = vunpack.c.l.b16 %v5976
    %v7110 = vunpack.c.l.b16 %v5977
    %v7111 = vunpack.c.h.b16 %v5977
    %v7112 = vunpack.c.l.b16 %v5978
    %v7113 = vunpack.c.h.b16 %v5978
    %v7114 = vunpack.c.l.b16 %v5979
    %v7115 = vunpack.c.h.b16 %v5979
    %v7116 = vunpack.c.l.b16 %v5980
    %v7117 = vunpack.c.l.b16 %v5981
    %v7118 = vunpack.c.h.b16 %v5981
    %v7119 = vunpack.c.l.b16 %v5982
    %v7120 = vunpack.c.h.b16 %v5982
    %v7121 = vunpack.c.l.b16 %v5983
    %v7122 = vunpack.c.h.b16 %v5983
    %v7123 = vunpack.c.l.b16 %v5984
    %v7124 = vunpack.c.l.b16 %v5985
    %v7125 = vunpack.c.h.b16 %v5985
    %v7126 = vunpack.c.l.b16 %v5986
    %v7127 = vunpack.c.h.b16 %v5986
    %v7128 = vunpack.c.l.b16 %v5987
    %v7129 = vunpack.c.h.b16 %v5987
    %v7130 = vunpack.c.l.b16 %v5988
    %v7131 = vunpack.c.l.b16 %v5989
    %v7132 = vunpack.c.h.b16 %v5989
    %v7133 = vunpack.c.l.b16 %v5990
    %v7134 = vunpack.c.h.b16 %v5990
    %v7135 = vunpack.c.l.b16 %v5991
    %v7136 = vunpack.c.h.b16 %v5991
    %v7137 = vunpack.c.l.b16 %v5992
    %v7138 = vunpack.c.l.b16 %v5993
    %v7139 = vunpack.c.h.b16 %v5993
    %v7140 = vunpack.c.l.b16 %v5994
    %v7141 = vunpack.c.h.b16 %v5994
    %v7142 = vunpack.c.l.b16 %v5995
    %v7143 = vunpack.c.h.b16 %v5995
    %v7144 = vunpack.c.l.b16 %v5996
    %v7145 = vunpack.c.l.b16 %v5997
    %v7146 = vunpack.c.h.b16 %v5997
    %v7147 = vunpack.c.l.b16 %v5998
    %v7148 = vunpack.c.h.b16 %v5998
    %v7149 = vunpack.c.l.b16 %v5999
    %v7150 = vunpack.c.h.b16 %v5999
    %v7151 = vunpack.c.l.b16 %v6000
    %v7152 = vunpack.c.l.b16 %v6001
    %v7153 = vunpack.c.h.b16 %v6001
    %v7154 = vunpack.c.l.b16 %v6002
    %v7155 = vunpack.c.h.b16 %v6002
    %v7156 = vunpack.c.l.b16 %v6003
    %v7157 = vunpack.c.h.b16 %v6003
    %v7158 = vunpack.c.l.b16 %v6004
    %v7159 = vunpack.c.l.b16 %v6005
    %v7160 = vunpack.c.h.b16 %v6005
    %v7161 = vunpack.c.l.b16 %v6006
    %v7162 = vunpack.c.h.b16 %v6006
    %v7163 = vunpack.c.l.b16 %v6007
    %v7164 = vunpack.c.h.b16 %v6007
    %v7165 = vunpack.c.l.b16 %v6008
    %v7166 = vunpack.c.l.b16 %v6009
    %v7167 = vunpack.c.h.b16 %v6009
    %v7168 = vunpack.c.l.b16 %v6010
    %v7169 = vunpack.c.h.b16 %v6010
    %v7170 = vunpack.c.l.b16 %v6011
    %v7171 = vunpack.c.h.b16 %v6011
    %v7172 = vunpack.c.l.b16 %v6012
    %v7173 = vunpack.c.l.b16 %v6013
    %v7174 = vunpack.c.h.b16 %v6013
    %v7175 = vunpack.c.l.b16 %v6014
    %v7176 = vunpack.c.h.b16 %v6014
    %v7177 = vunpack.c.l.b16 %v6015
    %v7178 = vunpack.c.h.b16 %v6015
    %v7179 = vunpack.c.l.b16 %v6016
    %v7180 = vunpack.c.l.b16 %v6017
    %v7181 = vunpack.c.h.b16 %v6017
    %v7182 = vunpack.c.l.b16 %v6018
    %v7183 = vunpack.c.h.b16 %v6018
    %v7184 = vunpack.c.l.b16 %v6019
    %v7185 = vunpack.c.h.b16 %v6019
    %v7186 = vunpack.c.l.b16 %v6020
    %v7187 = vunpack.c.l.b16 %v6021
    %v7188 = vunpack.c.h.b16 %v6021
    %v7189 = vunpack.c.l.b16 %v6022
    %v7190 = vunpack.c.h.b16 %v6022
    %v7191 = vunpack.c.l.b16 %v6023
    %v7192 = vunpack.c.h.b16 %v6023
    %v7193 = vunpack.c.l.b16 %v6024
    %v7194 = vunpack.c.l.b16 %v6025
    %v7195 = vunpack.c.h.b16 %v6025
    %v7196 = vunpack.c.l.b16 %v6026
    %v7197 = vunpack.c.h.b16 %v6026
    %v7198 = vunpack.c.l.b16 %v6027
    %v7199 = vunpack.c.h.b16 %v6027
    %v7200 = vunpack.c.l.b16 %v6028
    %v7201 = vunpack.c.l.b16 %v6029
    %v7202 = vunpack.c.h.b16 %v6029
    %v7203 = vunpack.c.l.b16 %v6030
    %v7204 = vunpack.c.h.b16 %v6030
    %v7205 = vunpack.c.l.b16 %v6031
    %v7206 = vunpack.c.h.b16 %v6031
    %v7207 = vunpack.c.l.b16 %v6032
    %v7208 = vunpack.c.l.b16 %v6033
    %v7209 = vunpack.c.h.b16 %v6033
    %v7210 = vunpack.c.l.b16 %v6034
    %v7211 = vunpack.c.h.b16 %v6034
    %v7212 = vunpack.c.l.b16 %v6035
    %v7213 = vunpack.c.h.b16 %v6035
    %v7214 = vunpack.c.l.b16 %v6036
    %v7215 = vunpack.c.l.b16 %v6037
    %v7216 = vunpack.c.h.b16 %v6037
    %v7217 = vunpack.c.l.b16 %v6038
    %v7218 = vunpack.c.h.b16 %v6038
    %v7219 = vunpack.c.l.b16 %v6039
    %v7220 = vunpack.c.h.b16 %v6039
    %v7221 = vunpack.c.l.b16 %v6040
    %v7222 = vunpack.c.l.b16 %v6041
    %v7223 = vunpack.c.h.b16 %v6041
    %v7224 = vunpack.c.l.b16 %v6042
    %v7225 = vunpack.c.h.b16 %v6042
    %v7226 = vunpack.c.l.b16 %v6043
    %v7227 = vunpack.c.h.b16 %v6043
    %v7228 = vunpack.c.l.b16 %v6044
    %v7229 = vunpack.c.l.b16 %v6045
    %v7230 = vunpack.c.h.b16 %v6045
    %v7231 = vunpack.c.l.b16 %v6046
    %v7232 = vunpack.c.h.b16 %v6046
    %v7233 = vunpack.c.l.b16 %v6047
    %v7234 = vunpack.c.h.b16 %v6047
    %v7235 = vunpack.c.l.b16 %v6048
    %v7236 = vunpack.c.l.b16 %v6049
    %v7237 = vunpack.c.h.b16 %v6049
    %v7238 = vunpack.c.l.b16 %v6050
    %v7239 = vunpack.c.h.b16 %v6050
    %v7240 = vunpack.c.l.b16 %v6051
    %v7241 = vunpack.c.h.b16 %v6051
    %v7242 = vunpack.c.l.b16 %v6052
    %v7243 = vunpack.c.l.b16 %v6053
    %v7244 = vunpack.c.h.b16 %v6053
    %v7245 = vunpack.c.l.b16 %v6054
    %v7246 = vunpack.c.h.b16 %v6054
    %v7247 = vunpack.c.l.b16 %v6055
    %v7248 = vunpack.c.h.b16 %v6055
    %v7249 = vunpack.c.l.b16 %v6056
    %v7250 = vunpack.c.l.b16 %v6057
    %v7251 = vunpack.c.h.b16 %v6057
    %v7252 = vunpack.c.l.b16 %v6058
    %v7253 = vunpack.c.h.b16 %v6058
    %v7254 = vunpack.c.l.b16 %v6059
    %v7255 = vunpack.c.h.b16 %v6059
    %v7256 = vunpack.c.l.b16 %v6060
    %v7257 = vunpack.c.l.b16 %v6061
    %v7258 = vunpack.c.h.b16 %v6061
    %v7259 = vunpack.c.l.b16 %v6062
    %v7260 = vunpack.c.h.b16 %v6062
    %v7261 = vunpack.c.l.b16 %v6063
    %v7262 = vunpack.c.h.b16 %v6063
    %v7263 = vunpack.c.l.b16 %v6064
    %v7264 = vunpack.c.l.b16 %v6065
    %v7265 = vunpack.c.h.b16 %v6065
    %v7266 = vunpack.c.l.b16 %v6066
    %v7267 = vunpack.c.h.b16 %v6066
    %v7268 = vunpack.c.l.b16 %v6067
    %v7269 = vunpack.c.h.b16 %v6067
    %v7270 = vunpack.c.l.b16 %v6068
    %v7271 = vunpack.c.l.b16 %v6069
    %v7272 = vunpack.c.h.b16 %v6069
    %v7273 = vunpack.c.l.b16 %v6070
    %v7274 = vunpack.c.h.b16 %v6070
    %v7275 = vunpack.c.l.b16 %v6071
    %v7276 = vunpack.c.h.b16 %v6071
    %v7277 = vunpack.c.l.b16 %v6072
    %v7278 = vunpack.c.l.b16 %v6073
    %v7279 = vunpack.c.h.b16 %v6073
    %v7280 = vunpack.c.l.b16 %v6074
    %v7281 = vunpack.c.h.b16 %v6074
    %v7282 = vunpack.c.l.b16 %v6075
    %v7283 = vunpack.c.h.b16 %v6075
    %v7284 = vunpack.c.l.b16 %v6076
    %v7285 = vunpack.c.l.b16 %v6077
    %v7286 = vunpack.c.h.b16 %v6077
    %v7287 = vunpack.c.l.b16 %v6078
    %v7288 = vunpack.c.h.b16 %v6078
    %v7289 = vunpack.c.l.b16 %v6079
    %v7290 = vunpack.c.h.b16 %v6079
    %v7291 = vunpack.c.l.b16 %v6080
    %v7292 = vunpack.c.l.b16 %v6081
    %v7293 = vunpack.c.h.b16 %v6081
    %v7294 = vunpack.c.l.b16 %v6082
    %v7295 = vunpack.c.h.b16 %v6082
    %v7296 = vunpack.c.l.b16 %v6083
    %v7297 = vunpack.c.h.b16 %v6083
    %v7298 = vunpack.c.l.b16 %v6084
    %v7299 = vunpack.c.l.b16 %v6085
    %v7300 = vunpack.c.h.b16 %v6085
    %v7301 = vunpack.c.l.b16 %v6086
    %v7302 = vunpack.c.h.b16 %v6086
    %v7303 = vunpack.c.l.b16 %v6087
    %v7304 = vunpack.c.h.b16 %v6087
    %v7305 = vunpack.c.l.b16 %v6088
    %v7306 = vunpack.c.l.b16 %v6089
    %v7307 = vunpack.c.h.b16 %v6089
    %v7308 = vunpack.c.l.b16 %v6090
    %v7309 = vunpack.c.h.b16 %v6090
    %v7310 = vunpack.c.l.b16 %v6091
    %v7311 = vunpack.c.h.b16 %v6091
    %v7312 = vunpack.c.l.b16 %v6092
    %v7313 = vunpack.c.l.b16 %v6093
    %v7314 = vunpack.c.h.b16 %v6093
    %v7315 = vunpack.c.l.b16 %v6094
    %v7316 = vunpack.c.h.b16 %v6094
    %v7317 = vunpack.c.l.b16 %v6095
    %v7318 = vunpack.c.h.b16 %v6095
    %v7319 = vunpack.c.l.b16 %v6096
    %v7320 = vunpack.c.l.b16 %v6097
    %v7321 = vunpack.c.h.b16 %v6097
    %v7322 = vunpack.c.l.b16 %v6098
    %v7323 = vunpack.c.h.b16 %v6098
    %v7324 = vunpack.c.l.b16 %v6099
    %v7325 = vunpack.c.h.b16 %v6099
    %v7326 = vunpack.c.l.b16 %v6100
    %v7327 = vunpack.c.l.b16 %v6101
    %v7328 = vunpack.c.h.b16 %v6101
    %v7329 = vunpack.c.l.b16 %v6102
    %v7330 = vunpack.c.h.b16 %v6102
    %v7331 = vunpack.c.l.b16 %v6103
    %v7332 = vunpack.c.h.b16 %v6103
    %v7333 = vunpack.c.l.b16 %v6104
    %v7334 = vunpack.c.l.b16 %v6105
    %v7335 = vunpack.c.h.b16 %v6105
    %v7336 = vunpack.c.l.b16 %v6106
    %v7337 = vunpack.c.h.b16 %v6106
    %v7338 = vunpack.c.l.b16 %v6107
    %v7339 = vunpack.c.h.b16 %v6107
    %v7340 = vunpack.c.l.b16 %v6108
    %v7341 = vunpack.c.l.b16 %v6109
    %v7342 = vunpack.c.h.b16 %v6109
    %v7343 = vunpack.c.l.b16 %v6110
    %v7344 = vunpack.c.h.b16 %v6110
    %v7345 = vunpack.c.l.b16 %v6111
    %v7346 = vunpack.c.h.b16 %v6111
    %v7347 = vunpack.c.l.b16 %v6112
    %v7348 = vunpack.c.l.b16 %v6113
    %v7349 = vunpack.c.h.b16 %v6113
    %v7350 = vunpack.c.l.b16 %v6114
    %v7351 = vunpack.c.h.b16 %v6114
    %v7352 = vunpack.c.l.b16 %v6115
    %v7353 = vunpack.c.h.b16 %v6115
    %v7354 = vunpack.c.l.b16 %v6116
    %v7355 = vunpack.c.l.b16 %v6117
    %v7356 = vunpack.c.h.b16 %v6117
    %v7357 = vunpack.c.l.b16 %v6118
    %v7358 = vunpack.c.h.b16 %v6118
    %v7359 = vunpack.c.l.b16 %v6119
    %v7360 = vunpack.c.h.b16 %v6119
    %v7361 = vunpack.c.l.b16 %v6120
    %v7362 = vunpack.c.l.b16 %v6121
    %v7363 = vunpack.c.h.b16 %v6121
    %v7364 = vunpack.c.l.b16 %v6122
    %v7365 = vunpack.c.h.b16 %v6122
    %v7366 = vunpack.c.l.b16 %v6123
    %v7367 = vunpack.c.h.b16 %v6123
    %v7368 = vunpack.c.l.b16 %v6124
    %v7369 = vunpack.c.l.b16 %v6125
    %v7370 = vunpack.c.h.b16 %v6125
    %v7371 = vunpack.c.l.b16 %v6126
    %v7372 = vunpack.c.h.b16 %v6126
    %v7373 = vunpack.c.l.b16 %v6127
    %v7374 = vunpack.c.h.b16 %v6127
    %v7375 = vunpack.c.l.b16 %v6128
    %v7376 = vunpack.c.l.b16 %v6129
    %v7377 = vunpack.c.h.b16 %v6129
    %v7378 = vunpack.c.l.b16 %v6130
    %v7379 = vunpack.c.h.b16 %v6130
    %v7380 = vunpack.c.l.b16 %v6131
    %v7381 = vunpack.c.h.b16 %v6131
    %v7382 = vunpack.c.l.b16 %v6132
    %v7383 = vunpack.c.l.b16 %v6133
    %v7384 = vunpack.c.h.b16 %v6133
    %v7385 = vunpack.c.l.b16 %v6134
    %v7386 = vunpack.c.h.b16 %v6134
    %v7387 = vunpack.c.l.b16 %v6135
    %v7388 = vunpack.c.h.b16 %v6135
    %v7389 = vunpack.c.l.b16 %v6136
    %v7390 = vunpack.c.l.b16 %v6137
    %v7391 = vunpack.c.h.b16 %v6137
    %v7392 = vunpack.c.l.b16 %v6138
    %v7393 = vunpack.c.h.b16 %v6138
    %v7394 = vunpack.c.l.b16 %v6139
    %v7395 = vunpack.c.h.b16 %v6139
    %v7396 = vunpack.c.l.b16 %v6140
    %v7397 = vunpack.c.l.b16 %v6141
    %v7398 = vunpack.c.h.b16 %v6141
    %v7399 = vunpack.c.l.b16 %v6142
    %v7400 = vunpack.c.h.b16 %v6142
    %v7401 = vunpack.c.l.b16 %v6143
    %v7402 = vunpack.c.h.b16 %v6143
    %v7403 = vunpack.c.l.b16 %v6144
    %v7404 = vunpack.c.l.b16 %v6145
    %v7405 = vunpack.c.h.b16 %v6145
    %v7406 = vunpack.c.l.b16 %v6146
    %v7407 = vunpack.c.h.b16 %v6146
    %v7408 = vunpack.c.l.b16 %v6147
    %v7409 = vunpack.c.h.b16 %v6147
    %v7410 = vunpack.c.l.b16 %v6148
    %v7411 = vunpack.c.l.b16 %v6149
    %v7412 = vunpack.c.h.b16 %v6149
    %v7413 = vunpack.c.l.b16 %v6150
    %v7414 = vunpack.c.h.b16 %v6150
    %v7415 = vunpack.c.l.b16 %v6151
    %v7416 = vunpack.c.h.b16 %v6151
    %v7417 = vunpack.c.l.b16 %v6152
    %v7418 = vunpack.c.l.b16 %v6153
    %v7419 = vunpack.c.h.b16 %v6153
    %v7420 = vunpack.c.l.b16 %v6154
    %v7421 = vunpack.c.h.b16 %v6154
    %v7422 = vunpack.c.l.b16 %v6155
    %v7423 = vunpack.c.h.b16 %v6155
    %v7424 = vunpack.c.l.b16 %v6156
    %v7425 = vunpack.c.l.b16 %v6157
    %v7426 = vunpack.c.h.b16 %v6157
    %v7427 = vunpack.c.l.b16 %v6158
    %v7428 = vunpack.c.h.b16 %v6158
    %v7429 = vunpack.c.l.b16 %v6159
    %v7430 = vunpack.c.h.b16 %v6159
    %v7431 = vunpack.c.l.b16 %v6160
    %v7432 = vunpack.c.l.b16 %v6161
    %v7433 = vunpack.c.h.b16 %v6161
    %v7434 = vunpack.c.l.b16 %v6162
    %v7435 = vunpack.c.h.b16 %v6162
    %v7436 = vunpack.c.l.b16 %v6163
    %v7437 = vunpack.c.h.b16 %v6163
    %v7438 = vunpack.c.l.b16 %v6164
    %v7439 = vunpack.c.l.b16 %v6165
    %v7440 = vunpack.c.h.b16 %v6165
    %v7441 = vunpack.c.l.b16 %v6166
    %v7442 = vunpack.c.h.b16 %v6166
    %v7443 = vunpack.c.l.b16 %v6167
    %v7444 = vunpack.c.h.b16 %v6167
    %v7445 = vunpack.c.l.b16 %v6168
    %v7446 = vunpack.c.l.b16 %v6169
    %v7447 = vunpack.c.h.b16 %v6169
    %v7448 = vunpack.c.l.b16 %v6170
    %v7449 = vunpack.c.h.b16 %v6170
    %v7450 = vunpack.c.l.b16 %v6171
    %v7451 = vunpack.c.h.b16 %v6171
    %v7452 = vunpack.c.l.b16 %v6172
    %v7453 = vunpack.c.l.b16 %v6173
    %v7454 = vunpack.c.h.b16 %v6173
    %v7455 = vunpack.c.l.b16 %v6174
    %v7456 = vunpack.c.h.b16 %v6174
    %v7457 = vunpack.c.l.b16 %v6175
    %v7458 = vunpack.c.h.b16 %v6175
    %v7459 = vunpack.c.l.b16 %v6176
    %v7460 = vunpack.c.l.b16 %v6177
    %v7461 = vunpack.c.h.b16 %v6177
    %v7462 = vunpack.c.l.b16 %v6178
    %v7463 = vunpack.c.h.b16 %v6178
    %v7464 = vunpack.c.l.b16 %v6179
    %v7465 = vunpack.c.h.b16 %v6179
    %v7466 = vunpack.c.l.b16 %v6180
    %v7467 = vunpack.c.l.b16 %v6181
    %v7468 = vunpack.c.h.b16 %v6181
    %v7469 = vunpack.c.l.b16 %v6182
    %v7470 = vunpack.c.h.b16 %v6182
    %v7471 = vunpack.c.l.b16 %v6183
    %v7472 = vunpack.c.h.b16 %v6183
    %v7473 = vunpack.c.l.b16 %v6184
    %v7474 = vunpack.c.l.b16 %v6185
    %v7475 = vunpack.c.h.b16 %v6185
    %v7476 = vunpack.c.l.b16 %v6186
    %v7477 = vunpack.c.h.b16 %v6186
    %v7478 = vunpack.c.l.b16 %v6187
    %v7479 = vunpack.c.h.b16 %v6187
    %v7480 = vunpack.c.l.b16 %v6188
    %v7481 = vunpack.c.l.b16 %v6189
    %v7482 = vunpack.c.h.b16 %v6189
    %v7483 = vunpack.c.l.b16 %v6190
    %v7484 = vunpack.c.h.b16 %v6190
    %v7485 = vunpack.c.l.b16 %v6191
    %v7486 = vunpack.c.h.b16 %v6191
    %v7487 = vunpack.c.l.b16 %v6192
    %v7488 = vunpack.c.l.b16 %v6193
    %v7489 = vunpack.c.h.b16 %v6193
    %v7490 = vunpack.c.l.b16 %v6194
    %v7491 = vunpack.c.h.b16 %v6194
    %v7492 = vunpack.c.l.b16 %v6195
    %v7493 = vunpack.c.h.b16 %v6195
    %v7494 = vunpack.c.l.b16 %v6196
    %v7495 = vunpack.c.l.b16 %v6197
    %v7496 = vunpack.c.h.b16 %v6197
    %v7497 = vunpack.c.l.b16 %v6198
    %v7498 = vunpack.c.h.b16 %v6198
    %v7499 = vunpack.c.l.b16 %v6199
    %v7500 = vunpack.c.h.b16 %v6199
    %v7501 = vunpack.c.l.b16 %v6200
    %v7502 = vunpack.c.l.b16 %v6201
    %v7503 = vunpack.c.h.b16 %v6201
    %v7504 = vunpack.c.l.b16 %v6202
    %v7505 = vunpack.c.h.b16 %v6202
    %v7506 = vunpack.c.l.b16 %v6203
    %v7507 = vunpack.c.h.b16 %v6203
    %v7508 = vunpack.c.l.b16 %v6204
    %v7509 = vunpack.c.l.b16 %v6205
    %v7510 = vunpack.c.h.b16 %v6205
    %v7511 = vunpack.c.l.b16 %v6206
    %v7512 = vunpack.c.h.b16 %v6206
    %v7513 = vunpack.c.l.b16 %v6207
    %v7514 = vunpack.c.h.b16 %v6207
    %v7515 = vunpack.c.l.b16 %v6208
    %v7516 = vunpack.c.l.b16 %v6209
    %v7517 = vunpack.c.h.b16 %v6209
    %v7518 = vunpack.c.l.b16 %v6210
    %v7519 = vunpack.c.h.b16 %v6210
    %v7520 = vunpack.c.l.b16 %v6211
    %v7521 = vunpack.c.h.b16 %v6211
    %v7522 = vunpack.c.l.b16 %v6212
    %v7523 = vunpack.c.l.b16 %v6213
    %v7524 = vunpack.c.h.b16 %v6213
    %v7525 = vunpack.c.l.b16 %v6214
    %v7526 = vunpack.c.h.b16 %v6214
    %v7527 = vunpack.c.l.b16 %v6215
    %v7528 = vunpack.c.h.b16 %v6215
    %v7529 = vunpack.c.l.b16 %v6216
    %v7530 = vunpack.c.l.b16 %v6217
    %v7531 = vunpack.c.h.b16 %v6217
    %v7532 = vunpack.c.l.b16 %v6218
    %v7533 = vunpack.c.h.b16 %v6218
    %v7534 = vunpack.c.l.b16 %v6219
    %v7535 = vunpack.c.h.b16 %v6219
    %v7536 = vunpack.c.l.b16 %v6220
    %v7537 = vunpack.c.l.b16 %v6221
    %v7538 = vunpack.c.h.b16 %v6221
    %v7539 = vunpack.c.l.b16 %v6222
    %v7540 = vunpack.c.h.b16 %v6222
    %v7541 = vunpack.c.l.b16 %v6223
    %v7542 = vunpack.c.h.b16 %v6223
    %v7543 = vunpack.c.l.b16 %v6224
    %v7544 = vunpack.c.l.b16 %v6225
    %v7545 = vunpack.c.h.b16 %v6225
    %v7546 = vunpack.c.l.b16 %v6226
    %v7547 = vunpack.c.h.b16 %v6226
    %v7548 = vunpack.c.l.b16 %v6227
    %v7549 = vunpack.c.h.b16 %v6227
    %v7550 = vunpack.c.l.b16 %v6228
    %v7551 = vunpack.c.l.b16 %v6229
    %v7552 = vunpack.c.h.b16 %v6229
    %v7553 = vunpack.c.l.b16 %v6230
    %v7554 = vunpack.c.h.b16 %v6230
    %v7555 = vunpack.c.l.b16 %v6231
    %v7556 = vunpack.c.h.b16 %v6231
    %v7557 = vunpack.c.l.b16 %v6232
    %v7558 = vunpack.c.l.b16 %v6233
    %v7559 = vunpack.c.h.b16 %v6233
    %v7560 = vunpack.c.l.b16 %v6234
    %v7561 = vunpack.c.h.b16 %v6234
    %v7562 = vunpack.c.l.b16 %v6235
    %v7563 = vunpack.c.h.b16 %v6235
    %v7564 = vunpack.c.l.b16 %v6236
    %v7565 = vunpack.c.l.b16 %v6237
    %v7566 = vunpack.c.h.b16 %v6237
    %v7567 = vunpack.c.l.b16 %v6238
    %v7568 = vunpack.c.h.b16 %v6238
    %v7569 = vunpack.c.l.b16 %v6239
    %v7570 = vunpack.c.h.b16 %v6239
    %v7571 = vunpack.c.l.b16 %v6240
    %v7572 = vunpack.c.l.b16 %v6241
    %v7573 = vunpack.c.h.b16 %v6241
    %v7574 = vunpack.c.l.b16 %v6242
    %v7575 = vunpack.c.h.b16 %v6242
    %v7576 = vunpack.c.l.b16 %v6243
    %v7577 = vunpack.c.h.b16 %v6243
    %v7578 = vunpack.c.l.b16 %v6244
    %v7579 = vunpack.c.l.b16 %v6245
    %v7580 = vunpack.c.h.b16 %v6245
    %v7581 = vunpack.c.l.b16 %v6246
    %v7582 = vunpack.c.h.b16 %v6246
    %v7583 = vunpack.c.l.b16 %v6247
    %v7584 = vunpack.c.h.b16 %v6247
    %v7585 = vunpack.c.l.b16 %v6248
    %v7586 = vunpack.c.l.b16 %v6249
    %v7587 = vunpack.c.h.b16 %v6249
    %v7588 = vunpack.c.l.b16 %v6250
    %v7589 = vunpack.c.h.b16 %v6250
    %v7590 = vunpack.c.l.b16 %v6251
    %v7591 = vunpack.c.h.b16 %v6251
    %v7592 = vunpack.c.l.b16 %v6252
    %v7593 = vunpack.c.l.b16 %v6253
    %v7594 = vunpack.c.h.b16 %v6253
    %v7595 = vunpack.c.l.b16 %v6254
    %v7596 = vunpack.c.h.b16 %v6254
    %v7597 = vunpack.c.l.b16 %v6255
    %v7598 = vunpack.c.h.b16 %v6255
    %v7599 = vunpack.c.l.b16 %v6256
    %v7600 = vunpack.c.l.b16 %v6257
    %v7601 = vunpack.c.h.b16 %v6257
    %v7602 = vunpack.c.l.b16 %v6258
    %v7603 = vunpack.c.h.b16 %v6258
    %v7604 = vunpack.c.l.b16 %v6259
    %v7605 = vunpack.c.h.b16 %v6259
    %v7606 = vunpack.c.l.b16 %v6260
    %v7607 = vunpack.c.l.b16 %v6261
    %v7608 = vunpack.c.h.b16 %v6261
    %v7609 = vunpack.c.l.b16 %v6262
    %v7610 = vunpack.c.h.b16 %v6262
    %v7611 = vunpack.c.l.b16 %v6263
    %v7612 = vunpack.c.h.b16 %v6263
    %v7613 = vunpack.c.l.b16 %v6264
    %v7614 = vunpack.c.l.b16 %v6265
    %v7615 = vunpack.c.h.b16 %v6265
    %v7616 = vunpack.c.l.b16 %v6266
    %v7617 = vunpack.c.h.b16 %v6266
    %v7618 = vunpack.c.l.b16 %v6267
    %v7619 = vunpack.c.h.b16 %v6267
    %v7620 = vunpack.c.l.b16 %v6268
    %v7621 = vunpack.c.l.b16 %v6269
    %v7622 = vunpack.c.h.b16 %v6269
    %v7623 = vunpack.c.l.b16 %v6270
    %v7624 = vunpack.c.h.b16 %v6270
    %v7625 = vunpack.c.l.b16 %v6271
    %v7626 = vunpack.c.h.b16 %v6271
    %v7627 = vunpack.c.l.b16 %v6272
    %v7628 = vunpack.c.l.b16 %v6273
    %v7629 = vunpack.c.h.b16 %v6273
    %v7630 = vunpack.c.l.b16 %v6274
    %v7631 = vunpack.c.h.b16 %v6274
    %v7632 = vunpack.c.l.b16 %v6275
    %v7633 = vunpack.c.h.b16 %v6275
    %v7634 = vunpack.c.l.b16 %v6276
    %v7635 = vunpack.c.l.b16 %v6277
    %v7636 = vunpack.c.h.b16 %v6277
    %v7637 = vunpack.c.l.b16 %v6278
    %v7638 = vunpack.c.h.b16 %v6278
    %v7639 = vunpack.c.l.b16 %v6279
    %v7640 = vunpack.c.h.b16 %v6279
    %v7641 = vunpack.c.l.b16 %v6280
    %v7642 = vunpack.c.l.b16 %v6281
    %v7643 = vunpack.c.h.b16 %v6281
    %v7644 = vunpack.c.l.b16 %v6282
    %v7645 = vunpack.c.h.b16 %v6282
    %v7646 = vunpack.c.l.b16 %v6283
    %v7647 = vunpack.c.h.b16 %v6283
    %v7648 = vunpack.c.l.b16 %v6284
    %v7649 = vunpack.c.l.b16 %v6285
    %v7650 = vunpack.c.h.b16 %v6285
    %v7651 = vunpack.c.l.b16 %v6286
    %v7652 = vunpack.c.h.b16 %v6286
    %v7653 = vunpack.c.l.b16 %v6287
    %v7654 = vunpack.c.h.b16 %v6287
    %v7655 = vunpack.c.l.b16 %v6288
    %v7656 = vunpack.c.l.b16 %v6289
    %v7657 = vunpack.c.h.b16 %v6289
    %v7658 = vunpack.c.l.b16 %v6290
    %v7659 = vunpack.c.h.b16 %v6290
    %v7660 = vunpack.c.l.b16 %v6291
    %v7661 = vunpack.c.h.b16 %v6291
    %v7662 = vunpack.c.l.b16 %v6292
    %v7663 = vunpack.c.l.b16 %v6293
    %v7664 = vunpack.c.h.b16 %v6293
    %v7665 = vunpack.c.l.b16 %v6294
    %v7666 = vunpack.c.h.b16 %v6294
    %v7667 = vunpack.c.l.b16 %v6295
    %v7668 = vunpack.c.h.b16 %v6295
    %v7669 = vunpack.c.l.b16 %v6296
    %v7670 = vunpack.c.l.b16 %v6297
    %v7671 = vunpack.c.h.b16 %v6297
    %v7672 = vunpack.c.l.b16 %v6298
    %v7673 = vunpack.c.h.b16 %v6298
    %v7674 = vunpack.c.l.b16 %v6299
    %v7675 = vunpack.c.h.b16 %v6299
    %v7676 = vunpack.c.l.b16 %v6300
    %v7677 = vunpack.c.l.b16 %v6301
    %v7678 = vunpack.c.h.b16 %v6301
    %v7679 = vunpack.c.l.b16 %v6302
    %v7680 = vunpack.c.h.b16 %v6302
    %v7681 = vunpack.c.l.b16 %v6303
    %v7682 = vunpack.c.h.b16 %v6303
    %v7683 = vunpack.c.l.b16 %v6304
    %v7684 = vunpack.c.l.b16 %v6305
    %v7685 = vunpack.c.h.b16 %v6305
    %v7686 = vunpack.c.l.b16 %v6306
    %v7687 = vunpack.c.h.b16 %v6306
    %v7688 = vunpack.c.l.b16 %v6307
    %v7689 = vunpack.c.h.b16 %v6307
    %v7690 = vunpack.c.l.b16 %v6308
    %v7691 = vunpack.c.l.b16 %v6309
    %v7692 = vunpack.c.h.b16 %v6309
    %v7693 = vunpack.c.l.b16 %v6310
    %v7694 = vunpack.c.h.b16 %v6310
    %v7695 = vunpack.c.l.b16 %v6311
    %v7696 = vunpack.c.h.b16 %v6311
    %v7697 = vunpack.c.l.b16 %v6312
    %v7698 = vunpack.c.l.b16 %v6313
    %v7699 = vunpack.c.h.b16 %v6313
    %v7700 = vunpack.c.l.b16 %v6314
    %v7701 = vunpack.c.h.b16 %v6314
    %v7702 = vunpack.c.l.b16 %v6315
    %v7703 = vunpack.c.h.b16 %v6315
    %v7704 = vunpack.c.l.b16 %v6316
    %v7705 = vunpack.c.l.b16 %v6317
    %v7706 = vunpack.c.h.b16 %v6317
    %v7707 = vunpack.c.l.b16 %v6318
    %v7708 = vunpack.c.h.b16 %v6318
    %v7709 = vunpack.c.l.b16 %v6319
    %v7710 = vunpack.c.h.b16 %v6319
    %v7711 = vunpack.c.l.b16 %v6320
    %v7712 = vunpack.c.l.b16 %v6321
    %v7713 = vunpack.c.h.b16 %v6321
    %v7714 = vunpack.c.l.b16 %v6322
    %v7715 = vunpack.c.h.b16 %v6322
    %v7716 = vunpack.c.l.b16 %v6323
    %v7717 = vunpack.c.h.b16 %v6323
    %v7718 = vunpack.c.l.b16 %v6324
    %v7719 = vunpack.c.l.b16 %v6325
    %v7720 = vunpack.c.h.b16 %v6325
    %v7721 = vunpack.c.l.b16 %v6326
    %v7722 = vunpack.c.h.b16 %v6326
    %v7723 = vunpack.c.l.b16 %v6327
    %v7724 = vunpack.c.h.b16 %v6327
    %v7725 = vunpack.c.l.b16 %v6328
    %v7726 = vunpack.c.l.b16 %v6329
    %v7727 = vunpack.c.h.b16 %v6329
    %v7728 = vunpack.c.l.b16 %v6330
    %v7729 = vunpack.c.h.b16 %v6330
    %v7730 = vunpack.c.l.b16 %v6331
    %v7731 = vunpack.c.h.b16 %v6331
    %v7732 = vunpack.c.l.b16 %v6332
    %v7733 = vunpack.c.l.b16 %v6333
    %v7734 = vunpack.c.h.b16 %v6333
    %v7735 = vunpack.c.l.b16 %v6334
    %v7736 = vunpack.c.h.b16 %v6334
    %v7737 = vunpack.c.l.b16 %v6335
    %v7738 = vunpack.c.h.b16 %v6335
    %v7739 = vunpack.c.l.b16 %v6336
    %v7740 = vunpack.c.l.b16 %v6337
    %v7741 = vunpack.c.h.b16 %v6337
    %v7742 = vunpack.c.l.b16 %v6338
    %v7743 = vunpack.c.h.b16 %v6338
    %v7744 = vunpack.c.l.b16 %v6339
    %v7745 = vunpack.c.h.b16 %v6339
    %v7746 = vunpack.c.l.b16 %v6340
    %v7747 = vunpack.c.l.b16 %v6341
    %v7748 = vunpack.c.h.b16 %v6341
    %v7749 = vunpack.c.l.b16 %v6342
    %v7750 = vunpack.c.h.b16 %v6342
    %v7751 = vunpack.c.l.b16 %v6343
    %v7752 = vunpack.c.h.b16 %v6343
    %v7753 = vunpack.c.l.b16 %v6344
    %v7754 = vunpack.c.l.b16 %v6345
    %v7755 = vunpack.c.h.b16 %v6345
    %v7756 = vunpack.c.l.b16 %v6346
    %v7757 = vunpack.c.h.b16 %v6346
    %v7758 = vunpack.c.l.b16 %v6347
    %v7759 = vunpack.c.h.b16 %v6347
    %v7760 = vunpack.c.l.b16 %v6348
    %v7761 = vunpack.c.l.b16 %v6349
    %v7762 = vunpack.c.h.b16 %v6349
    %v7763 = vunpack.c.l.b16 %v6350
    %v7764 = vunpack.c.h.b16 %v6350
    %v7765 = vunpack.c.l.b16 %v6351
    %v7766 = vunpack.c.h.b16 %v6351
    %v7767 = vunpack.c.l.b16 %v6352
    %v7768 = vunpack.c.l.b16 %v6353
    %v7769 = vunpack.c.h.b16 %v6353
    %v7770 = vunpack.c.l.b16 %v6354
    %v7771 = vunpack.c.h.b16 %v6354
    %v7772 = vunpack.c.l.b16 %v6355
    %v7773 = vunpack.c.h.b16 %v6355
    %v7774 = vunpack.c.l.b16 %v6356
    %v7775 = vunpack.c.l.b16 %v6357
    %v7776 = vunpack.c.h.b16 %v6357
    %v7777 = vunpack.c.l.b16 %v6358
    %v7778 = vunpack.c.h.b16 %v6358
    %v7779 = vunpack.c.l.b16 %v6359
    %v7780 = vunpack.c.h.b16 %v6359
    %v7781 = vunpack.c.l.b16 %v6360
    %v7782 = vunpack.c.l.b16 %v6361
    %v7783 = vunpack.c.h.b16 %v6361
    %v7784 = vunpack.c.l.b16 %v6362
    %v7785 = vunpack.c.h.b16 %v6362
    %v7786 = vunpack.c.l.b16 %v6363
    %v7787 = vunpack.c.h.b16 %v6363
    %v7788 = vunpack.c.l.b16 %v6364
    %v7789 = vunpack.c.l.b16 %v6365
    %v7790 = vunpack.c.h.b16 %v6365
    %v7791 = vunpack.c.l.b16 %v6366
    %v7792 = vunpack.c.h.b16 %v6366
    %v7793 = vunpack.c.l.b16 %v6367
    %v7794 = vunpack.c.h.b16 %v6367
    %v7795 = vunpack.c.l.b16 %v6368
    %v7796 = vunpack.c.l.b16 %v6369
    %v7797 = vunpack.c.h.b16 %v6369
    %v7798 = vunpack.c.l.b16 %v6370
    %v7799 = vunpack.c.h.b16 %v6370
    %v7800 = vunpack.c.l.b16 %v6371
    %v7801 = vunpack.c.h.b16 %v6371
    %v7802 = vunpack.c.l.b16 %v6372
    %v7803 = vunpack.c.l.b16 %v6373
    %v7804 = vunpack.c.h.b16 %v6373
    %v7805 = vunpack.c.l.b16 %v6374
    %v7806 = vunpack.c.h.b16 %v6374
    %v7807 = vunpack.c.l.b16 %v6375
    %v7808 = vunpack.c.h.b16 %v6375
    %v7809 = vunpack.c.l.b16 %v6376
    %v7810 = vunpack.c.l.b16 %v6377
    %v7811 = vunpack.c.h.b16 %v6377
    %v7812 = vunpack.c.l.b16 %v6378
    %v7813 = vunpack.c.h.b16 %v6378
    %v7814 = vunpack.c.l.b16 %v6379
    %v7815 = vunpack.c.h.b16 %v6379
    %v7816 = vunpack.c.l.b16 %v6380
    %v7817 = vunpack.c.l.b16 %v6381
    %v7818 = vunpack.c.h.b16 %v6381
    %v7819 = vunpack.c.l.b16 %v6382
    %v7820 = vunpack.c.h.b16 %v6382
    %v7821 = vunpack.c.l.b16 %v6383
    %v7822 = vunpack.c.h.b16 %v6383
    %v7823 = vunpack.c.l.b16 %v6384
    %v7824 = vunpack.c.l.b16 %v6385
    %v7825 = vunpack.c.h.b16 %v6385
    %v7826 = vunpack.c.l.b16 %v6386
    %v7827 = vunpack.c.h.b16 %v6386
    %v7828 = vunpack.c.l.b16 %v6387
    %v7829 = vunpack.c.h.b16 %v6387
    %v7830 = vunpack.c.l.b16 %v6388
    %v7831 = vunpack.c.l.b16 %v6389
    %v7832 = vunpack.c.h.b16 %v6389
    %v7833 = vunpack.c.l.b16 %v6390
    %v7834 = vunpack.c.h.b16 %v6390
    %v7835 = vunpack.c.l.b16 %v6391
    %v7836 = vunpack.c.h.b16 %v6391
    %v7837 = vunpack.c.l.b16 %v6392
    %v7838 = vpack.c.b16 %v6949, %v6942
    %v7839 = vpack.c.b16 %v6950, %v6943
    %v7840 = vpack.c.b16 %v6951, %v6944
    %v7841 = vpack.c.b16 %v6952, %v6945
    %v7842 = vpack.c.b16 %v6953, %v6946
    %v7843 = vpack.c.b16 %v6954, %v6947
    %v7844 = vpack.c.b16 %v6955, %v6948
    %v7845 = vpack.c.b16 %v6963, %v6956
    %v7846 = vpack.c.b16 %v6964, %v6957
    %v7847 = vpack.c.b16 %v6965, %v6958
    %v7848 = vpack.c.b16 %v6966, %v6959
    %v7849 = vpack.c.b16 %v6967, %v6960
    %v7850 = vpack.c.b16 %v6968, %v6961
    %v7851 = vpack.c.b16 %v6969, %v6962
    %v7852 = vpack.c.b16 %v6977, %v6970
    %v7853 = vpack.c.b16 %v6978, %v6971
    %v7854 = vpack.c.b16 %v6979, %v6972
    %v7855 = vpack.c.b16 %v6980, %v6973
    %v7856 = vpack.c.b16 %v6981, %v6974
    %v7857 = vpack.c.b16 %v6982, %v6975
    %v7858 = vpack.c.b16 %v6983, %v6976
    %v7859 = vpack.c.b16 %v6991, %v6984
    %v7860 = vpack.c.b16 %v6992, %v6985
    %v7861 = vpack.c.b16 %v6993, %v6986
    %v7862 = vpack.c.b16 %v6994, %v6987
    %v7863 = vpack.c.b16 %v6995, %v6988
    %v7864 = vpack.c.b16 %v6996, %v6989
    %v7865 = vpack.c.b16 %v6997, %v6990
    %v7866 = vpack.c.b16 %v7005, %v6998
    %v7867 = vpack.c.b16 %v7006, %v6999
    %v7868 = vpack.c.b16 %v7007, %v7000
    %v7869 = vpack.c.b16 %v7008, %v7001
    %v7870 = vpack.c.b16 %v7009, %v7002
    %v7871 = vpack.c.b16 %v7010, %v7003
    %v7872 = vpack.c.b16 %v7011, %v7004
    %v7873 = vpack.c.b16 %v7019, %v7012
    %v7874 = vpack.c.b16 %v7020, %v7013
    %v7875 = vpack.c.b16 %v7021, %v7014
    %v7876 = vpack.c.b16 %v7022, %v7015
    %v7877 = vpack.c.b16 %v7023, %v7016
    %v7878 = vpack.c.b16 %v7024, %v7017
    %v7879 = vpack.c.b16 %v7025, %v7018
    %v7880 = vpack.c.b16 %v7033, %v7026
    %v7881 = vpack.c.b16 %v7034, %v7027
    %v7882 = vpack.c.b16 %v7035, %v7028
    %v7883 = vpack.c.b16 %v7036, %v7029
    %v7884 = vpack.c.b16 %v7037, %v7030
    %v7885 = vpack.c.b16 %v7038, %v7031
    %v7886 = vpack.c.b16 %v7039, %v7032
    %v7887 = vpack.c.b16 %v7047, %v7040
    %v7888 = vpack.c.b16 %v7048, %v7041
    %v7889 = vpack.c.b16 %v7049, %v7042
    %v7890 = vpack.c.b16 %v7050, %v7043
    %v7891 = vpack.c.b16 %v7051, %v7044
    %v7892 = vpack.c.b16 %v7052, %v7045
    %v7893 = vpack.c.b16 %v7053, %v7046
    %v7894 = vpack.c.b16 %v7061, %v7054
    %v7895 = vpack.c.b16 %v7062, %v7055
    %v7896 = vpack.c.b16 %v7063, %v7056
    %v7897 = vpack.c.b16 %v7064, %v7057
    %v7898 = vpack.c.b16 %v7065, %v7058
    %v7899 = vpack.c.b16 %v7066, %v7059
    %v7900 = vpack.c.b16 %v7067, %v7060
    %v7901 = vpack.c.b16 %v7075, %v7068
    %v7902 = vpack.c.b16 %v7076, %v7069
    %v7903 = vpack.c.b16 %v7077, %v7070
    %v7904 = vpack.c.b16 %v7078, %v7071
    %v7905 = vpack.c.b16 %v7079, %v7072
    %v7906 = vpack.c.b16 %v7080, %v7073
    %v7907 = vpack.c.b16 %v7081, %v7074
    %v7908 = vpack.c.b16 %v7089, %v7082
    %v7909 = vpack.c.b16 %v7090, %v7083
    %v7910 = vpack.c.b16 %v7091, %v7084
    %v7911 = vpack.c.b16 %v7092, %v7085
    %v7912 = vpack.c.b16 %v7093, %v7086
    %v7913 = vpack.c.b16 %v7094, %v7087
    %v7914 = vpack.c.b16 %v7095, %v7088
    %v7915 = vpack.c.b16 %v7103, %v7096
    %v7916 = vpack.c.b16 %v7104, %v7097
    %v7917 = vpack.c.b16 %v7105, %v7098
    %v7918 = vpack.c.b16 %v7106, %v7099
    %v7919 = vpack.c.b16 %v7107, %v7100
    %v7920 = vpack.c.b16 %v7108, %v7101
    %v7921 = vpack.c.b16 %v7109, %v7102
    %v7922 = vpack.c.b16 %v7117, %v7110
    %v7923 = vpack.c.b16 %v7118, %v7111
    %v7924 = vpack.c.b16 %v7119, %v7112
    %v7925 = vpack.c.b16 %v7120, %v7113
    %v7926 = vpack.c.b16 %v7121, %v7114
    %v7927 = vpack.c.b16 %v7122, %v7115
    %v7928 = vpack.c.b16 %v7123, %v7116
    %v7929 = vpack.c.b16 %v7131, %v7124
    %v7930 = vpack.c.b16 %v7132, %v7125
    %v7931 = vpack.c.b16 %v7133, %v7126
    %v7932 = vpack.c.b16 %v7134, %v7127
    %v7933 = vpack.c.b16 %v7135, %v7128
    %v7934 = vpack.c.b16 %v7136, %v7129
    %v7935 = vpack.c.b16 %v7137, %v7130
    %v7936 = vpack.c.b16 %v7145, %v7138
    %v7937 = vpack.c.b16 %v7146, %v7139
    %v7938 = vpack.c.b16 %v7147, %v7140
    %v7939 = vpack.c.b16 %v7148, %v7141
    %v7940 = vpack.c.b16 %v7149, %v7142
    %v7941 = vpack.c.b16 %v7150, %v7143
    %v7942 = vpack.c.b16 %v7151, %v7144
    %v7943 = vpack.c.b16 %v7159, %v7152
    %v7944 = vpack.c.b16 %v7160, %v7153
    %v7945 = vpack.c.b16 %v7161, %v7154
    %v7946 = vpack.c.b16 %v7162, %v7155
    %v7947 = vpack.c.b16 %v7163, %v7156
    %v7948 = vpack.c.b16 %v7164, %v7157
    %v7949 = vpack.c.b16 %v7165, %v7158
    %v7950 = vpack.c.b16 %v7173, %v7166
    %v7951 = vpack.c.b16 %v7174, %v7167
    %v7952 = vpack.c.b16 %v7175, %v7168
    %v7953 = vpack.c.b16 %v7176, %v7169
    %v7954 = vpack.c.b16 %v7177, %v7170
    %v7955 = vpack.c.b16 %v7178, %v7171
    %v7956 = vpack.c.b16 %v7179, %v7172
    %v7957 = vpack.c.b16 %v7187, %v7180
    %v7958 = vpack.c.b16 %v7188, %v7181
    %v7959 = vpack.c.b16 %v7189, %v7182
    %v7960 = vpack.c.b16 %v7190, %v7183
    %v7961 = vpack.c.b16 %v7191, %v7184
    %v7962 = vpack.c.b16 %v7192, %v7185
    %v7963 = vpack.c.b16 %v7193, %v7186
    %v7964 = vpack.c.b16 %v7201, %v7194
    %v7965 = vpack.c.b16 %v7202, %v7195
    %v7966 = vpack.c.b16 %v7203, %v7196
    %v7967 = vpack.c.b16 %v7204, %v7197
    %v7968 = vpack.c.b16 %v7205, %v7198
    %v7969 = vpack.c.b16 %v7206, %v7199
    %v7970 = vpack.c.b16 %v7207, %v7200
    %v7971 = vpack.c.b16 %v7215, %v7208
    %v7972 = vpack.c.b16 %v7216, %v7209
    %v7973 = vpack.c.b16 %v7217, %v7210
    %v7974 = vpack.c.b16 %v7218, %v7211
    %v7975 = vpack.c.b16 %v7219, %v7212
    %v7976 = vpack.c.b16 %v7220, %v7213
    %v7977 = vpack.c.b16 %v7221, %v7214
    %v7978 = vpack.c.b16 %v7229, %v7222
    %v7979 = vpack.c.b16 %v7230, %v7223
    %v7980 = vpack.c.b16 %v7231, %v7224
    %v7981 = vpack.c.b16 %v7232, %v7225
    %v7982 = vpack.c.b16 %v7233, %v7226
    %v7983 = vpack.c.b16 %v7234, %v7227
    %v7984 = vpack.c.b16 %v7235, %v7228
    %v7985 = vpack.c.b16 %v7243, %v7236
    %v7986 = vpack.c.b16 %v7244, %v7237
    %v7987 = vpack.c.b16 %v7245, %v7238
    %v7988 = vpack.c.b16 %v7246, %v7239
    %v7989 = vpack.c.b16 %v7247, %v7240
    %v7990 = vpack.c.b16 %v7248, %v7241
    %v7991 = vpack.c.b16 %v7249, %v7242
    %v7992 = vpack.c.b16 %v7257, %v7250
    %v7993 = vpack.c.b16 %v7258, %v7251
    %v7994 = vpack.c.b16 %v7259, %v7252
    %v7995 = vpack.c.b16 %v7260, %v7253
    %v7996 = vpack.c.b16 %v7261, %v7254
    %v7997 = vpack.c.b16 %v7262, %v7255
    %v7998 = vpack.c.b16 %v7263, %v7256
    %v7999 = vpack.c.b16 %v7271, %v7264
    %v8000 = vpack.c.b16 %v7272, %v7265
    %v8001 = vpack.c.b16 %v7273, %v7266
    %v8002 = vpack.c.b16 %v7274, %v7267
    %v8003 = vpack.c.b16 %v7275, %v7268
    %v8004 = vpack.c.b16 %v7276, %v7269
    %v8005 = vpack.c.b16 %v7277, %v7270
    %v8006 = vpack.c.b16 %v7285, %v7278
    %v8007 = vpack.c.b16 %v7286, %v7279
    %v8008 = vpack.c.b16 %v7287, %v7280
    %v8009 = vpack.c.b16 %v7288, %v7281
    %v8010 = vpack.c.b16 %v7289, %v7282
    %v8011 = vpack.c.b16 %v7290, %v7283
    %v8012 = vpack.c.b16 %v7291, %v7284
    %v8013 = vpack.c.b16 %v7299, %v7292
    %v8014 = vpack.c.b16 %v7300, %v7293
    %v8015 = vpack.c.b16 %v7301, %v7294
    %v8016 = vpack.c.b16 %v7302, %v7295
    %v8017 = vpack.c.b16 %v7303, %v7296
    %v8018 = vpack.c.b16 %v7304, %v7297
    %v8019 = vpack.c.b16 %v7305, %v7298
    %v8020 = vpack.c.b16 %v7313, %v7306
    %v8021 = vpack.c.b16 %v7314, %v7307
    %v8022 = vpack.c.b16 %v7315, %v7308
    %v8023 = vpack.c.b16 %v7316, %v7309
    %v8024 = vpack.c.b16 %v7317, %v7310
    %v8025 = vpack.c.b16 %v7318, %v7311
    %v8026 = vpack.c.b16 %v7319, %v7312
    %v8027 = vpack.c.b16 %v7327, %v7320
    %v8028 = vpack.c.b16 %v7328, %v7321
    %v8029 = vpack.c.b16 %v7329, %v7322
    %v8030 = vpack.c.b16 %v7330, %v7323
    %v8031 = vpack.c.b16 %v7331, %v7324
    %v8032 = vpack.c.b16 %v7332, %v7325
    %v8033 = vpack.c.b16 %v7333, %v7326
    %v8034 = vpack.c.b16 %v7341, %v7334
    %v8035 = vpack.c.b16 %v7342, %v7335
    %v8036 = vpack.c.b16 %v7343, %v7336
    %v8037 = vpack.c.b16 %v7344, %v7337
    %v8038 = vpack.c.b16 %v7345, %v7338
    %v8039 = vpack.c.b16 %v7346, %v7339
    %v8040 = vpack.c.b16 %v7347, %v7340
    %v8041 = vpack.c.b16 %v7355, %v7348
    %v8042 = vpack.c.b16 %v7356, %v7349
    %v8043 = vpack.c.b16 %v7357, %v7350
    %v8044 = vpack.c.b16 %v7358, %v7351
    %v8045 = vpack.c.b16 %v7359, %v7352
    %v8046 = vpack.c.b16 %v7360, %v7353
    %v8047 = vpack.c.b16 %v7361, %v7354
    %v8048 = vpack.c.b16 %v7369, %v7362
    %v8049 = vpack.c.b16 %v7370, %v7363
    %v8050 = vpack.c.b16 %v7371, %v7364
    %v8051 = vpack.c.b16 %v7372, %v7365
    %v8052 = vpack.c.b16 %v7373, %v7366
    %v8053 = vpack.c.b16 %v7374, %v7367
    %v8054 = vpack.c.b16 %v7375, %v7368
    %v8055 = vpack.c.b16 %v7383, %v7376
    %v8056 = vpack.c.b16 %v7384, %v7377
    %v8057 = vpack.c.b16 %v7385, %v7378
    %v8058 = vpack.c.b16 %v7386, %v7379
    %v8059 = vpack.c.b16 %v7387, %v7380
    %v8060 = vpack.c.b16 %v7388, %v7381
    %v8061 = vpack.c.b16 %v7389, %v7382
    %v8062 = vpack.c.b16 %v7397, %v7390
    %v8063 = vpack.c.b16 %v7398, %v7391
    %v8064 = vpack.c.b16 %v7399, %v7392
    %v8065 = vpack.c.b16 %v7400, %v7393
    %v8066 = vpack.c.b16 %v7401, %v7394
    %v8067 = vpack.c.b16 %v7402, %v7395
    %v8068 = vpack.c.b16 %v7403, %v7396
    %v8069 = vpack.c.b16 %v7411, %v7404
    %v8070 = vpack.c.b16 %v7412, %v7405
    %v8071 = vpack.c.b16 %v7413, %v7406
    %v8072 = vpack.c.b16 %v7414, %v7407
    %v8073 = vpack.c.b16 %v7415, %v7408
    %v8074 = vpack.c.b16 %v7416, %v7409
    %v8075 = vpack.c.b16 %v7417, %v7410
    %v8076 = vpack.c.b16 %v7425, %v7418
    %v8077 = vpack.c.b16 %v7426, %v7419
    %v8078 = vpack.c.b16 %v7427, %v7420
    %v8079 = vpack.c.b16 %v7428, %v7421
    %v8080 = vpack.c.b16 %v7429, %v7422
    %v8081 = vpack.c.b16 %v7430, %v7423
    %v8082 = vpack.c.b16 %v7431, %v7424
    %v8083 = vpack.c.b16 %v7439, %v7432
    %v8084 = vpack.c.b16 %v7440, %v7433
    %v8085 = vpack.c.b16 %v7441, %v7434
    %v8086 = vpack.c.b16 %v7442, %v7435
    %v8087 = vpack.c.b16 %v7443, %v7436
    %v8088 = vpack.c.b16 %v7444, %v7437
    %v8089 = vpack.c.b16 %v7445, %v7438
    %v8090 = vpack.c.b16 %v7453, %v7446
    %v8091 = vpack.c.b16 %v7454, %v7447
    %v8092 = vpack.c.b16 %v7455, %v7448
    %v8093 = vpack.c.b16 %v7456, %v7449
    %v8094 = vpack.c.b16 %v7457, %v7450
    %v8095 = vpack.c.b16 %v7458, %v7451
    %v8096 = vpack.c.b16 %v7459, %v7452
    %v8097 = vpack.c.b16 %v7467, %v7460
    %v8098 = vpack.c.b16 %v7468, %v7461
    %v8099 = vpack.c.b16 %v7469, %v7462
    %v8100 = vpack.c.b16 %v7470, %v7463
    %v8101 = vpack.c.b16 %v7471, %v7464
    %v8102 = vpack.c.b16 %v7472, %v7465
    %v8103 = vpack.c.b16 %v7473, %v7466
    %v8104 = vpack.c.b16 %v7481, %v7474
    %v8105 = vpack.c.b16 %v7482, %v7475
    %v8106 = vpack.c.b16 %v7483, %v7476
    %v8107 = vpack.c.b16 %v7484, %v7477
    %v8108 = vpack.c.b16 %v7485, %v7478
    %v8109 = vpack.c.b16 %v7486, %v7479
    %v8110 = vpack.c.b16 %v7487, %v7480
    %v8111 = vpack.c.b16 %v7495, %v7488
    %v8112 = vpack.c.b16 %v7496, %v7489
    %v8113 = vpack.c.b16 %v7497, %v7490
    %v8114 = vpack.c.b16 %v7498, %v7491
    %v8115 = vpack.c.b16 %v7499, %v7492
    %v8116 = vpack.c.b16 %v7500, %v7493
    %v8117 = vpack.c.b16 %v7501, %v7494
    %v8118 = vpack.c.b16 %v7509, %v7502
    %v8119 = vpack.c.b16 %v7510, %v7503
    %v8120 = vpack.c.b16 %v7511, %v7504
    %v8121 = vpack.c.b16 %v7512, %v7505
    %v8122 = vpack.c.b16 %v7513, %v7506
    %v8123 = vpack.c.b16 %v7514, %v7507
    %v8124 = vpack.c.b16 %v7515, %v7508
    %v8125 = vpack.c.b16 %v7523, %v7516
    %v8126 = vpack.c.b16 %v7524, %v7517
    %v8127 = vpack.c.b16 %v7525, %v7518
    %v8128 = vpack.c.b16 %v7526, %v7519
    %v8129 = vpack.c.b16 %v7527, %v7520
    %v8130 = vpack.c.b16 %v7528, %v7521
    %v8131 = vpack.c.b16 %v7529, %v7522
    %v8132 = vpack.c.b16 %v7537, %v7530
    %v8133 = vpack.c.b16 %v7538, %v7531
    %v8134 = vpack.c.b16 %v7539, %v7532
    %v8135 = vpack.c.b16 %v7540, %v7533
    %v8136 = vpack.c.b16 %v7541, %v7534
    %v8137 = vpack.c.b16 %v7542, %v7535
    %v8138 = vpack.c.b16 %v7543, %v7536
    %v8139 = vpack.c.b16 %v7551, %v7544
    %v8140 = vpack.c.b16 %v7552, %v7545
    %v8141 = vpack.c.b16 %v7553, %v7546
    %v8142 = vpack.c.b16 %v7554, %v7547
    %v8143 = vpack.c.b16 %v7555, %v7548
    %v8144 = vpack.c.b16 %v7556, %v7549
    %v8145 = vpack.c.b16 %v7557, %v7550
    %v8146 = vpack.c.b16 %v7565, %v7558
    %v8147 = vpack.c.b16 %v7566, %v7559
    %v8148 = vpack.c.b16 %v7567, %v7560
    %v8149 = vpack.c.b16 %v7568, %v7561
    %v8150 = vpack.c.b16 %v7569, %v7562
    %v8151 = vpack.c.b16 %v7570, %v7563
    %v8152 = vpack.c.b16 %v7571, %v7564
    %v8153 = vpack.c.b16 %v7579, %v7572
    %v8154 = vpack.c.b16 %v7580, %v7573
    %v8155 = vpack.c.b16 %v7581, %v7574
    %v8156 = vpack.c.b16 %v7582, %v7575
    %v8157 = vpack.c.b16 %v7583, %v7576
    %v8158 = vpack.c.b16 %v7584, %v7577
    %v8159 = vpack.c.b16 %v7585, %v7578
    %v8160 = vpack.c.b16 %v7593, %v7586
    %v8161 = vpack.c.b16 %v7594, %v7587
    %v8162 = vpack.c.b16 %v7595, %v7588
    %v8163 = vpack.c.b16 %v7596, %v7589
    %v8164 = vpack.c.b16 %v7597, %v7590
    %v8165 = vpack.c.b16 %v7598, %v7591
    %v8166 = vpack.c.b16 %v7599, %v7592
    %v8167 = vpack.c.b16 %v7607, %v7600
    %v8168 = vpack.c.b16 %v7608, %v7601
    %v8169 = vpack.c.b16 %v7609, %v7602
    %v8170 = vpack.c.b16 %v7610, %v7603
    %v8171 = vpack.c.b16 %v7611, %v7604
    %v8172 = vpack.c.b16 %v7612, %v7605
    %v8173 = vpack.c.b16 %v7613, %v7606
    %v8174 = vpack.c.b16 %v7621, %v7614
    %v8175 = vpack.c.b16 %v7622, %v7615
    %v8176 = vpack.c.b16 %v7623, %v7616
    %v8177 = vpack.c.b16 %v7624, %v7617
    %v8178 = vpack.c.b16 %v7625, %v7618
    %v8179 = vpack.c.b16 %v7626, %v7619
    %v8180 = vpack.c.b16 %v7627, %v7620
    %v8181 = vpack.c.b16 %v7635, %v7628
    %v8182 = vpack.c.b16 %v7636, %v7629
    %v8183 = vpack.c.b16 %v7637, %v7630
    %v8184 = vpack.c.b16 %v7638, %v7631
    %v8185 = vpack.c.b16 %v7639, %v7632
    %v8186 = vpack.c.b16 %v7640, %v7633
    %v8187 = vpack.c.b16 %v7641, %v7634
    %v8188 = vpack.c.b16 %v7649, %v7642
    %v8189 = vpack.c.b16 %v7650, %v7643
    %v8190 = vpack.c.b16 %v7651, %v7644
    %v8191 = vpack.c.b16 %v7652, %v7645
    %v8192 = vpack.c.b16 %v7653, %v7646
    %v8193 = vpack.c.b16 %v7654, %v7647
    %v8194 = vpack.c.b16 %v7655, %v7648
    %v8195 = vpack.c.b16 %v7663, %v7656
    %v8196 = vpack.c.b16 %v7664, %v7657
    %v8197 = vpack.c.b16 %v7665, %v7658
    %v8198 = vpack.c.b16 %v7666, %v7659
    %v8199 = vpack.c.b16 %v7667, %v7660
    %v8200 = vpack.c.b16 %v7668, %v7661
    %v8201 = vpack.c.b16 %v7669, %v7662
    %v8202 = vpack.c.b16 %v7677, %v7670
    %v8203 = vpack.c.b16 %v7678, %v7671
    %v8204 = vpack.c.b16 %v7679, %v7672
    %v8205 = vpack.c.b16 %v7680, %v7673
    %v8206 = vpack.c.b16 %v7681, %v7674
    %v8207 = vpack.c.b16 %v7682, %v7675
    %v8208 = vpack.c.b16 %v7683, %v7676
    %v8209 = vpack.c.b16 %v7691, %v7684
    %v8210 = vpack.c.b16 %v7692, %v7685
    %v8211 = vpack.c.b16 %v7693, %v7686
    %v8212 = vpack.c.b16 %v7694, %v7687
    %v8213 = vpack.c.b16 %v7695, %v7688
    %v8214 = vpack.c.b16 %v7696, %v7689
    %v8215 = vpack.c.b16 %v7697, %v7690
    %v8216 = vpack.c.b16 %v7705, %v7698
    %v8217 = vpack.c.b16 %v7706, %v7699
    %v8218 = vpack.c.b16 %v7707, %v7700
    %v8219 = vpack.c.b16 %v7708, %v7701
    %v8220 = vpack.c.b16 %v7709, %v7702
    %v8221 = vpack.c.b16 %v7710, %v7703
    %v8222 = vpack.c.b16 %v7711, %v7704
    %v8223 = vpack.c.b16 %v7719, %v7712
    %v8224 = vpack.c.b16 %v7720, %v7713
    %v8225 = vpack.c.b16 %v7721, %v7714
    %v8226 = vpack.c.b16 %v7722, %v7715
    %v8227 = vpack.c.b16 %v7723, %v7716
    %v8228 = vpack.c.b16 %v7724, %v7717
    %v8229 = vpack.c.b16 %v7725, %v7718
    %v8230 = vpack.c.b16 %v7733, %v7726
    %v8231 = vpack.c.b16 %v7734, %v7727
    %v8232 = vpack.c.b16 %v7735, %v7728
    %v8233 = vpack.c.b16 %v7736, %v7729
    %v8234 = vpack.c.b16 %v7737, %v7730
    %v8235 = vpack.c.b16 %v7738, %v7731
    %v8236 = vpack.c.b16 %v7739, %v7732
    %v8237 = vpack.c.b16 %v7747, %v7740
    %v8238 = vpack.c.b16 %v7748, %v7741
    %v8239 = vpack.c.b16 %v7749, %v7742
    %v8240 = vpack.c.b16 %v7750, %v7743
    %v8241 = vpack.c.b16 %v7751, %v7744
    %v8242 = vpack.c.b16 %v7752, %v7745
    %v8243 = vpack.c.b16 %v7753, %v7746
    %v8244 = vpack.c.b16 %v7761, %v7754
    %v8245 = vpack.c.b16 %v7762, %v7755
    %v8246 = vpack.c.b16 %v7763, %v7756
    %v8247 = vpack.c.b16 %v7764, %v7757
    %v8248 = vpack.c.b16 %v7765, %v7758
    %v8249 = vpack.c.b16 %v7766, %v7759
    %v8250 = vpack.c.b16 %v7767, %v7760
    %v8251 = vpack.c.b16 %v7775, %v7768
    %v8252 = vpack.c.b16 %v7776, %v7769
    %v8253 = vpack.c.b16 %v7777, %v7770
    %v8254 = vpack.c.b16 %v7778, %v7771
    %v8255 = vpack.c.b16 %v7779, %v7772
    %v8256 = vpack.c.b16 %v7780, %v7773
    %v8257 = vpack.c.b16 %v7781, %v7774
    %v8258 = vpack.c.b16 %v7789, %v7782
    %v8259 = vpack.c.b16 %v7790, %v7783
    %v8260 = vpack.c.b16 %v7791, %v7784
    %v8261 = vpack.c.b16 %v7792, %v7785
    %v8262 = vpack.c.b16 %v7793, %v7786
    %v8263 = vpack.c.b16 %v7794, %v7787
    %v8264 = vpack.c.b16 %v7795, %v7788
    %v8265 = vpack.c.b16 %v7803, %v7796
    %v8266 = vpack.c.b16 %v7804, %v7797
    %v8267 = vpack.c.b16 %v7805, %v7798
    %v8268 = vpack.c.b16 %v7806, %v7799
    %v8269 = vpack.c.b16 %v7807, %v7800
    %v8270 = vpack.c.b16 %v7808, %v7801
    %v8271 = vpack.c.b16 %v7809, %v7802
    %v8272 = vpack.c.b16 %v7817, %v7810
    %v8273 = vpack.c.b16 %v7818, %v7811
    %v8274 = vpack.c.b16 %v7819, %v7812
    %v8275 = vpack.c.b16 %v7820, %v7813
    %v8276 = vpack.c.b16 %v7821, %v7814
    %v8277 = vpack.c.b16 %v7822, %v7815
    %v8278 = vpack.c.b16 %v7823, %v7816
    %v8279 = vpack.c.b16 %v7831, %v7824
    %v8280 = vpack.c.b16 %v7832, %v7825
    %v8281 = vpack.c.b16 %v7833, %v7826
    %v8282 = vpack.c.b16 %v7834, %v7827
    %v8283 = vpack.c.b16 %v7835, %v7828
    %v8284 = vpack.c.b16 %v7836, %v7829
    %v8285 = vpack.c.b16 %v7837, %v7830
    %8734 = vmatprep.subr.bf16.mxu0 %v7839
    %8735 = vmatpush1.bf16.msra.mxu0 %v7838
    %8736 = vmatprep.subr.bf16.mxu0 %v7846
    %8737 = vmatpush1.bf16.msra.mxu0 %v7845
    %8738 = vmatprep.subr.bf16.mxu0 %v7853
    %8739 = vmatpush1.bf16.msra.mxu0 %v7852
    %8740 = vmatprep.subr.bf16.mxu0 %v7860
    %8741 = vmatpush1.bf16.msra.mxu0 %v7859
    %8742 = vmatprep.subr.bf16.mxu0 %v7867
    %8743 = vmatpush1.bf16.msra.mxu0 %v7866
    %8744 = vmatprep.subr.bf16.mxu0 %v7874
    %8745 = vmatpush1.bf16.msra.mxu0 %v7873
    %8746 = vmatprep.subr.bf16.mxu0 %v7881
    %8747 = vmatpush1.bf16.msra.mxu0 %v7880
    %8748 = vmatprep.subr.bf16.mxu0 %v7888
    %8749 = vmatpush1.bf16.msra.mxu0 %v7887
    %8750 = vmatprep.subr.bf16.mxu0 %v7895
    %8751 = vmatpush1.bf16.msra.mxu0 %v7894
    %8752 = vmatprep.subr.bf16.mxu0 %v7902
    %8753 = vmatpush1.bf16.msra.mxu0 %v7901
    %8754 = vmatprep.subr.bf16.mxu0 %v7909
    %8755 = vmatpush1.bf16.msra.mxu0 %v7908
    %8756 = vmatprep.subr.bf16.mxu0 %v7916
    %8757 = vmatpush1.bf16.msra.mxu0 %v7915
    %8758 = vmatprep.subr.bf16.mxu0 %v7923
    %8759 = vmatpush1.bf16.msra.mxu0 %v7922
    %8760 = vmatprep.subr.bf16.mxu0 %v7930
    %8761 = vmatpush1.bf16.msra.mxu0 %v7929
    %8762 = vmatprep.subr.bf16.mxu0 %v7937
    %8763 = vmatpush1.bf16.msra.mxu0 %v7936
    %8764 = vmatprep.subr.bf16.mxu0 %v7944
    %8765 = vmatpush1.bf16.msra.mxu0 %v7943
    %8766 = vmatprep.mubr.bf16.mxu0 %v5818
    %8767 = vmatmul.mubr.bf16.gmra.mrb[0].mxu0 %v5817
    %v8768 = vpop.f32.mrb[0].mxu0
    %v8769 = vadd.f32 %v6398, %v8768
    %v8770 = vpop.f32.mrb[0].mxu0
    %v8771 = vadd.f32 %v6402, %v8770
    %v8772 = vpop.f32.mrb[0].mxu0
    %v8773 = vadd.f32 %v6398, %v8772
    %v8774 = vpop.f32.mrb[0].mxu0
    %v8775 = vadd.f32 %v6402, %v8774
    %8776 = vmatprep.mubr.bf16.mxu0 %v5826
    %8777 = vmatmul.mubr.bf16.gmra.mrb[0].mxu0 %v5825
    %v8778 = vpop.f32.mrb[0].mxu0
    %v8779 = vadd.f32 %v6398, %v8778
    %v8780 = vpop.f32.mrb[0].mxu0
    %v8781 = vadd.f32 %v6402, %v8780
    %v8782 = vpop.f32.mrb[0].mxu0
    %v8783 = vadd.f32 %v6398, %v8782
    %v8784 = vpop.f32.mrb[0].mxu0
    %v8785 = vadd.f32 %v6402, %v8784
    %8786 = vmatprep.mubr.bf16.mxu0 %v5834
    %8787 = vmatmul.mubr.bf16.gmra.mrb[0].mxu0 %v5833
    %v8788 = vpop.f32.mrb[0].mxu0
    %v8789 = vadd.f32 %v6398, %v8788
    %v8790 = vpop.f32.mrb[0].mxu0
    %v8791 = vadd.f32 %v6402, %v8790
    %v8792 = vpop.f32.mrb[0].mxu0
    %v8793 = vadd.f32 %v6398, %v8792
    %v8794 = vpop.f32.mrb[0].mxu0
    %v8795 = vadd.f32 %v6402, %v8794
    %8796 = vmatprep.mubr.bf16.mxu0 %v5842
    %8797 = vmatmul.mubr.bf16.gmra.mrb[0].mxu0 %v5841
    %v8798 = vpop.f32.mrb[0].mxu0
    %v8799 = vadd.f32 %v6398, %v8798
    %v8800 = vpop.f32.mrb[0].mxu0
    %v8801 = vadd.f32 %v6402, %v8800
    %v8802 = vpop.f32.mrb[0].mxu0
    %v8803 = vadd.f32 %v6398, %v8802
    %v8804 = vpop.f32.mrb[0].mxu0
    %v8805 = vadd.f32 %v6402, %v8804
    %8806 = vmatprep.mubr.bf16.mxu0 %v5850
    %8807 = vmatmul.mubr.bf16.gmra.mrb[0].mxu0 %v5849
    %v8808 = vpop.f32.mrb[0].mxu0
    %v8809 = vadd.f32 %v6398, %v8808
    %v8810 = vpop.f32.mrb[0].mxu0
    %v8811 = vadd.f32 %v6402, %v8810
    %v8812 = vpop.f32.mrb[0].mxu0
    %v8813 = vadd.f32 %v6398, %v8812
    %v8814 = vpop.f32.mrb[0].mxu0
    %v8815 = vadd.f32 %v6402, %v8814
    %8816 = vmatprep.mubr.bf16.mxu0 %v5858
    %8817 = vmatmul.mubr.bf16.gmra.mrb[0].mxu0 %v5857
    %v8818 = vpop.f32.mrb[0].mxu0
    %v8819 = vadd.f32 %v6398, %v8818
    %v8820 = vpop.f32.mrb[0].mxu0
    %v8821 = vadd.f32 %v6402, %v8820
    %v8822 = vpop.f32.mrb[0].mxu0
    %v8823 = vadd.f32 %v6398, %v8822
    %v8824 = vpop.f32.mrb[0].mxu0
    %v8825 = vadd.f32 %v6402, %v8824
    %8826 = vmatprep.mubr.bf16.mxu0 %v5866
    %8827 = vmatmul.mubr.bf16.gmra.mrb[0].mxu0 %v5865
    %v8828 = vpop.f32.mrb[0].mxu0
    %v8829 = vadd.f32 %v6398, %v8828
    %v8830 = vpop.f32.mrb[0].mxu0
    %v8831 = vadd.f32 %v6402, %v8830
    %v8832 = vpop.f32.mrb[0].mxu0
    %v8833 = vadd.f32 %v6398, %v8832
    %v8834 = vpop.f32.mrb[0].mxu0
    %v8835 = vadd.f32 %v6402, %v8834
    %8836 = vmatprep.mubr.bf16.mxu0 %v5874
    %8837 = vmatmul.mubr.bf16.gmra.mrb[0].mxu0 %v5873
    %v8838 = vpop.f32.mrb[0].mxu0
    %v8839 = vadd.f32 %v6398, %v8838
    %v8840 = vpop.f32.mrb[0].mxu0
    %v8841 = vadd.f32 %v6402, %v8840
    %v8842 = vpop.f32.mrb[0].mxu0
    %v8843 = vadd.f32 %v6398, %v8842
    %v8844 = vpop.f32.mrb[0].mxu0
    %v8845 = vadd.f32 %v6402, %v8844
    %8846 = vdwg.mxu0
    %8847 = vmatprep.subr.bf16.mxu0 %v7951
    %8848 = vmatpush1.bf16.msra.mxu0 %v7950
    %8849 = vmatprep.subr.bf16.mxu0 %v7958
    %8850 = vmatpush1.bf16.msra.mxu0 %v7957
    %8851 = vmatprep.subr.bf16.mxu0 %v7965
    %8852 = vmatpush1.bf16.msra.mxu0 %v7964
    %8853 = vmatprep.subr.bf16.mxu0 %v7972
    %8854 = vmatpush1.bf16.msra.mxu0 %v7971
    %8855 = vmatprep.subr.bf16.mxu0 %v7979
    %8856 = vmatpush1.bf16.msra.mxu0 %v7978
    %8857 = vmatprep.subr.bf16.mxu0 %v7986
    %8858 = vmatpush1.bf16.msra.mxu0 %v7985
    %8859 = vmatprep.subr.bf16.mxu0 %v7993
    %8860 = vmatpush1.bf16.msra.mxu0 %v7992
    %8861 = vmatprep.subr.bf16.mxu0 %v8000
    %8862 = vmatpush1.bf16.msra.mxu0 %v7999
    %8863 = vmatprep.subr.bf16.mxu0 %v8007
    %8864 = vmatpush1.bf16.msra.mxu0 %v8006
    %8865 = vmatprep.subr.bf16.mxu0 %v8014
    %8866 = vmatpush1.bf16.msra.mxu0 %v8013
    %8867 = vmatprep.subr.bf16.mxu0 %v8021
    %8868 = vmatpush1.bf16.msra.mxu0 %v8020
    %8869 = vmatprep.subr.bf16.mxu0 %v8028
    %8870 = vmatpush1.bf16.msra.mxu0 %v8027
    %8871 = vmatprep.subr.bf16.mxu0 %v8035
    %8872 = vmatpush1.bf16.msra.mxu0 %v8034
    %8873 = vmatprep.subr.bf16.mxu0 %v8042
    %8874 = vmatpush1.bf16.msra.mxu0 %v8041
    %8875 = vmatprep.subr.bf16.mxu0 %v8049
    %8876 = vmatpush1.bf16.msra.mxu0 %v8048
    %8877 = vmatprep.subr.bf16.mxu0 %v8056
    %8878 = vmatpush1.bf16.msra.mxu0 %v8055
    %8879 = vmatprep.mubr.bf16.mxu0 %v5820
    %8880 = vmatmul.mubr.bf16.gmra.mrb[0].mxu0 %v5819
    %v8881 = vpop.f32.mrb[0].mxu0
    %v8882 = vadd.f32 %v8769, %v8881
    %v8883 = vpop.f32.mrb[0].mxu0
    %v8884 = vadd.f32 %v8771, %v8883
    %v8885 = vpop.f32.mrb[0].mxu0
    %v8886 = vadd.f32 %v8773, %v8885
    %v8887 = vpop.f32.mrb[0].mxu0
    %v8888 = vadd.f32 %v8775, %v8887
    %8889 = vmatprep.mubr.bf16.mxu0 %v5828
    %8890 = vmatmul.mubr.bf16.gmra.mrb[0].mxu0 %v5827
    %v8891 = vpop.f32.mrb[0].mxu0
    %v8892 = vadd.f32 %v8779, %v8891
    %v8893 = vpop.f32.mrb[0].mxu0
    %v8894 = vadd.f32 %v8781, %v8893
    %v8895 = vpop.f32.mrb[0].mxu0
    %v8896 = vadd.f32 %v8783, %v8895
    %v8897 = vpop.f32.mrb[0].mxu0
    %v8898 = vadd.f32 %v8785, %v8897
    %8899 = vmatprep.mubr.bf16.mxu0 %v5836
    %8900 = vmatmul.mubr.bf16.gmra.mrb[0].mxu0 %v5835
    %v8901 = vpop.f32.mrb[0].mxu0
    %v8902 = vadd.f32 %v8789, %v8901
    %v8903 = vpop.f32.mrb[0].mxu0
    %v8904 = vadd.f32 %v8791, %v8903
    %v8905 = vpop.f32.mrb[0].mxu0
    %v8906 = vadd.f32 %v8793, %v8905
    %v8907 = vpop.f32.mrb[0].mxu0
    %v8908 = vadd.f32 %v8795, %v8907
    %8909 = vmatprep.mubr.bf16.mxu0 %v5844
    %8910 = vmatmul.mubr.bf16.gmra.mrb[0].mxu0 %v5843
    %v8911 = vpop.f32.mrb[0].mxu0
    %v8912 = vadd.f32 %v8799, %v8911
    %v8913 = vpop.f32.mrb[0].mxu0
    %v8914 = vadd.f32 %v8801, %v8913
    %v8915 = vpop.f32.mrb[0].mxu0
    %v8916 = vadd.f32 %v8803, %v8915
    %v8917 = vpop.f32.mrb[0].mxu0
    %v8918 = vadd.f32 %v8805, %v8917
    %8919 = vmatprep.mubr.bf16.mxu0 %v5852
    %8920 = vmatmul.mubr.bf16.gmra.mrb[0].mxu0 %v5851
    %v8921 = vpop.f32.mrb[0].mxu0
    %v8922 = vadd.f32 %v8809, %v8921
    %v8923 = vpop.f32.mrb[0].mxu0
    %v8924 = vadd.f32 %v8811, %v8923
    %v8925 = vpop.f32.mrb[0].mxu0
    %v8926 = vadd.f32 %v8813, %v8925
    %v8927 = vpop.f32.mrb[0].mxu0
    %v8928 = vadd.f32 %v8815, %v8927
    %8929 = vmatprep.mubr.bf16.mxu0 %v5860
    %8930 = vmatmul.mubr.bf16.gmra.mrb[0].mxu0 %v5859
    %v8931 = vpop.f32.mrb[0].mxu0
    %v8932 = vadd.f32 %v8819, %v8931
    %v8933 = vpop.f32.mrb[0].mxu0
    %v8934 = vadd.f32 %v8821, %v8933
    %v8935 = vpop.f32.mrb[0].mxu0
    %v8936 = vadd.f32 %v8823, %v8935
    %v8937 = vpop.f32.mrb[0].mxu0
    %v8938 = vadd.f32 %v8825, %v8937
    %8939 = vmatprep.mubr.bf16.mxu0 %v5868
    %8940 = vmatmul.mubr.bf16.gmra.mrb[0].mxu0 %v5867
    %v8941 = vpop.f32.mrb[0].mxu0
    %v8942 = vadd.f32 %v8829, %v8941
    %v8943 = vpop.f32.mrb[0].mxu0
    %v8944 = vadd.f32 %v8831, %v8943
    %v8945 = vpop.f32.mrb[0].mxu0
    %v8946 = vadd.f32 %v8833, %v8945
    %v8947 = vpop.f32.mrb[0].mxu0
    %v8948 = vadd.f32 %v8835, %v8947
    %8949 = vmatprep.mubr.bf16.mxu0 %v5876
    %8950 = vmatmul.mubr.bf16.gmra.mrb[0].mxu0 %v5875
    %v8951 = vpop.f32.mrb[0].mxu0
    %v8952 = vadd.f32 %v8839, %v8951
    %v8953 = vpop.f32.mrb[0].mxu0
    %v8954 = vadd.f32 %v8841, %v8953
    %v8955 = vpop.f32.mrb[0].mxu0
    %v8956 = vadd.f32 %v8843, %v8955
    %v8957 = vpop.f32.mrb[0].mxu0
    %v8958 = vadd.f32 %v8845, %v8957
    %8959 = vdwg.mxu0
    %8960 = vmatprep.subr.bf16.mxu0 %v8063
    %8961 = vmatpush1.bf16.msra.mxu0 %v8062
    %8962 = vmatprep.subr.bf16.mxu0 %v8070
    %8963 = vmatpush1.bf16.msra.mxu0 %v8069
    %8964 = vmatprep.subr.bf16.mxu0 %v8077
    %8965 = vmatpush1.bf16.msra.mxu0 %v8076
    %8966 = vmatprep.subr.bf16.mxu0 %v8084
    %8967 = vmatpush1.bf16.msra.mxu0 %v8083
    %8968 = vmatprep.subr.bf16.mxu0 %v8091
    %8969 = vmatpush1.bf16.msra.mxu0 %v8090
    %8970 = vmatprep.subr.bf16.mxu0 %v8098
    %8971 = vmatpush1.bf16.msra.mxu0 %v8097
    %8972 = vmatprep.subr.bf16.mxu0 %v8105
    %8973 = vmatpush1.bf16.msra.mxu0 %v8104
    %8974 = vmatprep.subr.bf16.mxu0 %v8112
    %8975 = vmatpush1.bf16.msra.mxu0 %v8111
    %8976 = vmatprep.subr.bf16.mxu0 %v8119
    %8977 = vmatpush1.bf16.msra.mxu0 %v8118
    %8978 = vmatprep.subr.bf16.mxu0 %v8126
    %8979 = vmatpush1.bf16.msra.mxu0 %v8125
    %8980 = vmatprep.subr.bf16.mxu0 %v8133
    %8981 = vmatpush1.bf16.msra.mxu0 %v8132
    %8982 = vmatprep.subr.bf16.mxu0 %v8140
    %8983 = vmatpush1.bf16.msra.mxu0 %v8139
    %8984 = vmatprep.subr.bf16.mxu0 %v8147
    %8985 = vmatpush1.bf16.msra.mxu0 %v8146
    %8986 = vmatprep.subr.bf16.mxu0 %v8154
    %8987 = vmatpush1.bf16.msra.mxu0 %v8153
    %8988 = vmatprep.subr.bf16.mxu0 %v8161
    %8989 = vmatpush1.bf16.msra.mxu0 %v8160
    %8990 = vmatprep.subr.bf16.mxu0 %v8168
    %8991 = vmatpush1.bf16.msra.mxu0 %v8167
    %8992 = vmatprep.mubr.bf16.mxu0 %v5822
    %8993 = vmatmul.mubr.bf16.gmra.mrb[0].mxu0 %v5821
    %v8994 = vpop.f32.mrb[0].mxu0
    %v8995 = vadd.f32 %v8882, %v8994
    %v8996 = vpop.f32.mrb[0].mxu0
    %v8997 = vadd.f32 %v8884, %v8996
    %v8998 = vpop.f32.mrb[0].mxu0
    %v8999 = vadd.f32 %v8886, %v8998
    %v9000 = vpop.f32.mrb[0].mxu0
    %v9001 = vadd.f32 %v8888, %v9000
    %9002 = vmatprep.mubr.bf16.mxu0 %v5830
    %9003 = vmatmul.mubr.bf16.gmra.mrb[0].mxu0 %v5829
    %v9004 = vpop.f32.mrb[0].mxu0
    %v9005 = vadd.f32 %v8892, %v9004
    %v9006 = vpop.f32.mrb[0].mxu0
    %v9007 = vadd.f32 %v8894, %v9006
    %v9008 = vpop.f32.mrb[0].mxu0
    %v9009 = vadd.f32 %v8896, %v9008
    %v9010 = vpop.f32.mrb[0].mxu0
    %v9011 = vadd.f32 %v8898, %v9010
    %9012 = vmatprep.mubr.bf16.mxu0 %v5838
    %9013 = vmatmul.mubr.bf16.gmra.mrb[0].mxu0 %v5837
    %v9014 = vpop.f32.mrb[0].mxu0
    %v9015 = vadd.f32 %v8902, %v9014
    %v9016 = vpop.f32.mrb[0].mxu0
    %v9017 = vadd.f32 %v8904, %v9016
    %v9018 = vpop.f32.mrb[0].mxu0
    %v9019 = vadd.f32 %v8906, %v9018
    %v9020 = vpop.f32.mrb[0].mxu0
    %v9021 = vadd.f32 %v8908, %v9020
    %9022 = vmatprep.mubr.bf16.mxu0 %v5846
    %9023 = vmatmul.mubr.bf16.gmra.mrb[0].mxu0 %v5845
    %v9024 = vpop.f32.mrb[0].mxu0
    %v9025 = vadd.f32 %v8912, %v9024
    %v9026 = vpop.f32.mrb[0].mxu0
    %v9027 = vadd.f32 %v8914, %v9026
    %v9028 = vpop.f32.mrb[0].mxu0
    %v9029 = vadd.f32 %v8916, %v9028
    %v9030 = vpop.f32.mrb[0].mxu0
    %v9031 = vadd.f32 %v8918, %v9030
    %9032 = vmatprep.mubr.bf16.mxu0 %v5854
    %9033 = vmatmul.mubr.bf16.gmra.mrb[0].mxu0 %v5853
    %v9034 = vpop.f32.mrb[0].mxu0
    %v9035 = vadd.f32 %v8922, %v9034
    %v9036 = vpop.f32.mrb[0].mxu0
    %v9037 = vadd.f32 %v8924, %v9036
    %v9038 = vpop.f32.mrb[0].mxu0
    %v9039 = vadd.f32 %v8926, %v9038
    %v9040 = vpop.f32.mrb[0].mxu0
    %v9041 = vadd.f32 %v8928, %v9040
    %9042 = vmatprep.mubr.bf16.mxu0 %v5862
    %9043 = vmatmul.mubr.bf16.gmra.mrb[0].mxu0 %v5861
    %v9044 = vpop.f32.mrb[0].mxu0
    %v9045 = vadd.f32 %v8932, %v9044
    %v9046 = vpop.f32.mrb[0].mxu0
    %v9047 = vadd.f32 %v8934, %v9046
    %v9048 = vpop.f32.mrb[0].mxu0
    %v9049 = vadd.f32 %v8936, %v9048
    %v9050 = vpop.f32.mrb[0].mxu0
    %v9051 = vadd.f32 %v8938, %v9050
    %9052 = vmatprep.mubr.bf16.mxu0 %v5870
    %9053 = vmatmul.mubr.bf16.gmra.mrb[0].mxu0 %v5869
    %v9054 = vpop.f32.mrb[0].mxu0
    %v9055 = vadd.f32 %v8942, %v9054
    %v9056 = vpop.f32.mrb[0].mxu0
    %v9057 = vadd.f32 %v8944, %v9056
    %v9058 = vpop.f32.mrb[0].mxu0
    %v9059 = vadd.f32 %v8946, %v9058
    %v9060 = vpop.f32.mrb[0].mxu0
    %v9061 = vadd.f32 %v8948, %v9060
    %9062 = vmatprep.mubr.bf16.mxu0 %v5878
    %9063 = vmatmul.mubr.bf16.gmra.mrb[0].mxu0 %v5877
    %v9064 = vpop.f32.mrb[0].mxu0
    %v9065 = vadd.f32 %v8952, %v9064
    %v9066 = vpop.f32.mrb[0].mxu0
    %v9067 = vadd.f32 %v8954, %v9066
    %v9068 = vpop.f32.mrb[0].mxu0
    %v9069 = vadd.f32 %v8956, %v9068
    %v9070 = vpop.f32.mrb[0].mxu0
    %v9071 = vadd.f32 %v8958, %v9070
    %9072 = vdwg.mxu0
    %9073 = vmatprep.subr.bf16.mxu0 %v8175
    %9074 = vmatpush1.bf16.msra.mxu0 %v8174
    %9075 = vmatprep.subr.bf16.mxu0 %v8182
    %9076 = vmatpush1.bf16.msra.mxu0 %v8181
    %9077 = vmatprep.subr.bf16.mxu0 %v8189
    %9078 = vmatpush1.bf16.msra.mxu0 %v8188
    %9079 = vmatprep.subr.bf16.mxu0 %v8196
    %9080 = vmatpush1.bf16.msra.mxu0 %v8195
    %9081 = vmatprep.subr.bf16.mxu0 %v8203
    %9082 = vmatpush1.bf16.msra.mxu0 %v8202
    %9083 = vmatprep.subr.bf16.mxu0 %v8210
    %9084 = vmatpush1.bf16.msra.mxu0 %v8209
    %9085 = vmatprep.subr.bf16.mxu0 %v8217
    %9086 = vmatpush1.bf16.msra.mxu0 %v8216
    %9087 = vmatprep.subr.bf16.mxu0 %v8224
    %9088 = vmatpush1.bf16.msra.mxu0 %v8223
    %9089 = vmatprep.subr.bf16.mxu0 %v8231
    %9090 = vmatpush1.bf16.msra.mxu0 %v8230
    %9091 = vmatprep.subr.bf16.mxu0 %v8238
    %9092 = vmatpush1.bf16.msra.mxu0 %v8237
    %9093 = vmatprep.subr.bf16.mxu0 %v8245
    %9094 = vmatpush1.bf16.msra.mxu0 %v8244
    %9095 = vmatprep.subr.bf16.mxu0 %v8252
    %9096 = vmatpush1.bf16.msra.mxu0 %v8251
    %9097 = vmatprep.subr.bf16.mxu0 %v8259
    %9098 = vmatpush1.bf16.msra.mxu0 %v8258
    %9099 = vmatprep.subr.bf16.mxu0 %v8266
    %9100 = vmatpush1.bf16.msra.mxu0 %v8265
    %9101 = vmatprep.subr.bf16.mxu0 %v8273
    %9102 = vmatpush1.bf16.msra.mxu0 %v8272
    %9103 = vmatprep.subr.bf16.mxu0 %v8280
    %9104 = vmatpush1.bf16.msra.mxu0 %v8279
    %9105 = vmatprep.mubr.bf16.mxu0 %v5824
    %9106 = vmatmul.mubr.bf16.gmra.mrb[0].mxu0 %v5823
    %v9107 = vpop.f32.mrb[0].mxu0
    %v9108 = vadd.f32 %v8995, %v9107
    %v9109 = vpop.f32.mrb[0].mxu0
    %v9110 = vadd.f32 %v8997, %v9109
    %v9111 = vpop.f32.mrb[0].mxu0
    %v9112 = vadd.f32 %v8999, %v9111
    %v9113 = vpop.f32.mrb[0].mxu0
    %v9114 = vadd.f32 %v9001, %v9113
    %9115 = vmatprep.mubr.bf16.mxu0 %v5832
    %9116 = vmatmul.mubr.bf16.gmra.mrb[0].mxu0 %v5831
    %v9117 = vpop.f32.mrb[0].mxu0
    %v9118 = vadd.f32 %v9005, %v9117
    %v9119 = vpop.f32.mrb[0].mxu0
    %v9120 = vadd.f32 %v9007, %v9119
    %v9121 = vpop.f32.mrb[0].mxu0
    %v9122 = vadd.f32 %v9009, %v9121
    %v9123 = vpop.f32.mrb[0].mxu0
    %v9124 = vadd.f32 %v9011, %v9123
    %9125 = vmatprep.mubr.bf16.mxu0 %v5840
    %9126 = vmatmul.mubr.bf16.gmra.mrb[0].mxu0 %v5839
    %v9127 = vpop.f32.mrb[0].mxu0
    %v9128 = vadd.f32 %v9015, %v9127
    %v9129 = vpop.f32.mrb[0].mxu0
    %v9130 = vadd.f32 %v9017, %v9129
    %v9131 = vpop.f32.mrb[0].mxu0
    %v9132 = vadd.f32 %v9019, %v9131
    %v9133 = vpop.f32.mrb[0].mxu0
    %v9134 = vadd.f32 %v9021, %v9133
    %9135 = vmatprep.mubr.bf16.mxu0 %v5848
    %9136 = vmatmul.mubr.bf16.gmra.mrb[0].mxu0 %v5847
    %v9137 = vpop.f32.mrb[0].mxu0
    %v9138 = vadd.f32 %v9025, %v9137
    %v9139 = vpop.f32.mrb[0].mxu0
    %v9140 = vadd.f32 %v9027, %v9139
    %v9141 = vpop.f32.mrb[0].mxu0
    %v9142 = vadd.f32 %v9029, %v9141
    %v9143 = vpop.f32.mrb[0].mxu0
    %v9144 = vadd.f32 %v9031, %v9143
    %9145 = vmatprep.mubr.bf16.mxu0 %v5856
    %9146 = vmatmul.mubr.bf16.gmra.mrb[0].mxu0 %v5855
    %v9147 = vpop.f32.mrb[0].mxu0
    %v9148 = vadd.f32 %v9035, %v9147
    %v9149 = vpop.f32.mrb[0].mxu0
    %v9150 = vadd.f32 %v9037, %v9149
    %v9151 = vpop.f32.mrb[0].mxu0
    %v9152 = vadd.f32 %v9039, %v9151
    %v9153 = vpop.f32.mrb[0].mxu0
    %v9154 = vadd.f32 %v9041, %v9153
    %9155 = vmatprep.mubr.bf16.mxu0 %v5864
    %9156 = vmatmul.mubr.bf16.gmra.mrb[0].mxu0 %v5863
    %v9157 = vpop.f32.mrb[0].mxu0
    %v9158 = vadd.f32 %v9045, %v9157
    %v9159 = vpop.f32.mrb[0].mxu0
    %v9160 = vadd.f32 %v9047, %v9159
    %v9161 = vpop.f32.mrb[0].mxu0
    %v9162 = vadd.f32 %v9049, %v9161
    %v9163 = vpop.f32.mrb[0].mxu0
    %v9164 = vadd.f32 %v9051, %v9163
    %9165 = vmatprep.mubr.bf16.mxu0 %v5872
    %9166 = vmatmul.mubr.bf16.gmra.mrb[0].mxu0 %v5871
    %v9167 = vpop.f32.mrb[0].mxu0
    %v9168 = vadd.f32 %v9055, %v9167
    %v9169 = vpop.f32.mrb[0].mxu0
    %v9170 = vadd.f32 %v9057, %v9169
    %v9171 = vpop.f32.mrb[0].mxu0
    %v9172 = vadd.f32 %v9059, %v9171
    %v9173 = vpop.f32.mrb[0].mxu0
    %v9174 = vadd.f32 %v9061, %v9173
    %9175 = vmatprep.mubr.bf16.mxu0 %v5880
    %9176 = vmatmul.mubr.bf16.gmra.mrb[0].mxu0 %v5879
    %v9177 = vpop.f32.mrb[0].mxu0
    %v9178 = vadd.f32 %v9065, %v9177
    %v9179 = vpop.f32.mrb[0].mxu0
    %v9180 = vadd.f32 %v9067, %v9179
    %v9181 = vpop.f32.mrb[0].mxu0
    %v9182 = vadd.f32 %v9069, %v9181
    %v9183 = vpop.f32.mrb[0].mxu0
    %v9184 = vadd.f32 %v9071, %v9183
    %9185 = vdwg.mxu0
    %9186 = vmatprep.subr.bf16.mxu0 %v7841
    %9187 = vmatpush1.bf16.msra.mxu0 %v7840
    %9188 = vmatprep.subr.bf16.mxu0 %v7848
    %9189 = vmatpush1.bf16.msra.mxu0 %v7847
    %9190 = vmatprep.subr.bf16.mxu0 %v7855
    %9191 = vmatpush1.bf16.msra.mxu0 %v7854
    %9192 = vmatprep.subr.bf16.mxu0 %v7862
    %9193 = vmatpush1.bf16.msra.mxu0 %v7861
    %9194 = vmatprep.subr.bf16.mxu0 %v7869
    %9195 = vmatpush1.bf16.msra.mxu0 %v7868
    %9196 = vmatprep.subr.bf16.mxu0 %v7876
    %9197 = vmatpush1.bf16.msra.mxu0 %v7875
    %9198 = vmatprep.subr.bf16.mxu0 %v7883
    %9199 = vmatpush1.bf16.msra.mxu0 %v7882
    %9200 = vmatprep.subr.bf16.mxu0 %v7890
    %9201 = vmatpush1.bf16.msra.mxu0 %v7889
    %9202 = vmatprep.subr.bf16.mxu0 %v7897
    %9203 = vmatpush1.bf16.msra.mxu0 %v7896
    %9204 = vmatprep.subr.bf16.mxu0 %v7904
    %9205 = vmatpush1.bf16.msra.mxu0 %v7903
    %9206 = vmatprep.subr.bf16.mxu0 %v7911
    %9207 = vmatpush1.bf16.msra.mxu0 %v7910
    %9208 = vmatprep.subr.bf16.mxu0 %v7918
    %9209 = vmatpush1.bf16.msra.mxu0 %v7917
    %9210 = vmatprep.subr.bf16.mxu0 %v7925
    %9211 = vmatpush1.bf16.msra.mxu0 %v7924
    %9212 = vmatprep.subr.bf16.mxu0 %v7932
    %9213 = vmatpush1.bf16.msra.mxu0 %v7931
    %9214 = vmatprep.subr.bf16.mxu0 %v7939
    %9215 = vmatpush1.bf16.msra.mxu0 %v7938
    %9216 = vmatprep.subr.bf16.mxu0 %v7946
    %9217 = vmatpush1.bf16.msra.mxu0 %v7945
    %9218 = vmatprep.mubr.bf16.mxu0 %v5818
    %9219 = vmatmul.mubr.bf16.gmra.mrb[0].mxu0 %v5817
    %v9220 = vpop.f32.mrb[0].mxu0
    %v9221 = vadd.f32 %v6406, %v9220
    %v9222 = vpop.f32.mrb[0].mxu0
    %v9223 = vadd.f32 %v6410, %v9222
    %v9224 = vpop.f32.mrb[0].mxu0
    %v9225 = vadd.f32 %v6406, %v9224
    %v9226 = vpop.f32.mrb[0].mxu0
    %v9227 = vadd.f32 %v6410, %v9226
    %9228 = vmatprep.mubr.bf16.mxu0 %v5826
    %9229 = vmatmul.mubr.bf16.gmra.mrb[0].mxu0 %v5825
    %v9230 = vpop.f32.mrb[0].mxu0
    %v9231 = vadd.f32 %v6406, %v9230
    %v9232 = vpop.f32.mrb[0].mxu0
    %v9233 = vadd.f32 %v6410, %v9232
    %v9234 = vpop.f32.mrb[0].mxu0
    %v9235 = vadd.f32 %v6406, %v9234
    %v9236 = vpop.f32.mrb[0].mxu0
    %v9237 = vadd.f32 %v6410, %v9236
    %9238 = vmatprep.mubr.bf16.mxu0 %v5834
    %9239 = vmatmul.mubr.bf16.gmra.mrb[0].mxu0 %v5833
    %v9240 = vpop.f32.mrb[0].mxu0
    %v9241 = vadd.f32 %v6406, %v9240
    %v9242 = vpop.f32.mrb[0].mxu0
    %v9243 = vadd.f32 %v6410, %v9242
    %v9244 = vpop.f32.mrb[0].mxu0
    %v9245 = vadd.f32 %v6406, %v9244
    %v9246 = vpop.f32.mrb[0].mxu0
    %v9247 = vadd.f32 %v6410, %v9246
    %9248 = vmatprep.mubr.bf16.mxu0 %v5842
    %9249 = vmatmul.mubr.bf16.gmra.mrb[0].mxu0 %v5841
    %v9250 = vpop.f32.mrb[0].mxu0
    %v9251 = vadd.f32 %v6406, %v9250
    %v9252 = vpop.f32.mrb[0].mxu0
    %v9253 = vadd.f32 %v6410, %v9252
    %v9254 = vpop.f32.mrb[0].mxu0
    %v9255 = vadd.f32 %v6406, %v9254
    %v9256 = vpop.f32.mrb[0].mxu0
    %v9257 = vadd.f32 %v6410, %v9256
    %9258 = vmatprep.mubr.bf16.mxu0 %v5850
    %9259 = vmatmul.mubr.bf16.gmra.mrb[0].mxu0 %v5849
    %v9260 = vpop.f32.mrb[0].mxu0
    %v9261 = vadd.f32 %v6406, %v9260
    %v9262 = vpop.f32.mrb[0].mxu0
    %v9263 = vadd.f32 %v6410, %v9262
    %v9264 = vpop.f32.mrb[0].mxu0
    %v9265 = vadd.f32 %v6406, %v9264
    %v9266 = vpop.f32.mrb[0].mxu0
    %v9267 = vadd.f32 %v6410, %v9266
    %9268 = vmatprep.mubr.bf16.mxu0 %v5858
    %9269 = vmatmul.mubr.bf16.gmra.mrb[0].mxu0 %v5857
    %v9270 = vpop.f32.mrb[0].mxu0
    %v9271 = vadd.f32 %v6406, %v9270
    %v9272 = vpop.f32.mrb[0].mxu0
    %v9273 = vadd.f32 %v6410, %v9272
    %v9274 = vpop.f32.mrb[0].mxu0
    %v9275 = vadd.f32 %v6406, %v9274
    %v9276 = vpop.f32.mrb[0].mxu0
    %v9277 = vadd.f32 %v6410, %v9276
    %9278 = vmatprep.mubr.bf16.mxu0 %v5866
    %9279 = vmatmul.mubr.bf16.gmra.mrb[0].mxu0 %v5865
    %v9280 = vpop.f32.mrb[0].mxu0
    %v9281 = vadd.f32 %v6406, %v9280
    %v9282 = vpop.f32.mrb[0].mxu0
    %v9283 = vadd.f32 %v6410, %v9282
    %v9284 = vpop.f32.mrb[0].mxu0
    %v9285 = vadd.f32 %v6406, %v9284
    %v9286 = vpop.f32.mrb[0].mxu0
    %v9287 = vadd.f32 %v6410, %v9286
    %9288 = vmatprep.mubr.bf16.mxu0 %v5874
    %9289 = vmatmul.mubr.bf16.gmra.mrb[0].mxu0 %v5873
    %v9290 = vpop.f32.mrb[0].mxu0
    %v9291 = vadd.f32 %v6406, %v9290
    %v9292 = vpop.f32.mrb[0].mxu0
    %v9293 = vadd.f32 %v6410, %v9292
    %v9294 = vpop.f32.mrb[0].mxu0
    %v9295 = vadd.f32 %v6406, %v9294
    %v9296 = vpop.f32.mrb[0].mxu0
    %v9297 = vadd.f32 %v6410, %v9296
    %9298 = vdwg.mxu0
    %9299 = vmatprep.subr.bf16.mxu0 %v7953
    %9300 = vmatpush1.bf16.msra.mxu0 %v7952
    %9301 = vmatprep.subr.bf16.mxu0 %v7960
    %9302 = vmatpush1.bf16.msra.mxu0 %v7959
    %9303 = vmatprep.subr.bf16.mxu0 %v7967
    %9304 = vmatpush1.bf16.msra.mxu0 %v7966
    %9305 = vmatprep.subr.bf16.mxu0 %v7974
    %9306 = vmatpush1.bf16.msra.mxu0 %v7973
    %9307 = vmatprep.subr.bf16.mxu0 %v7981
    %9308 = vmatpush1.bf16.msra.mxu0 %v7980
    %9309 = vmatprep.subr.bf16.mxu0 %v7988
    %9310 = vmatpush1.bf16.msra.mxu0 %v7987
    %9311 = vmatprep.subr.bf16.mxu0 %v7995
    %9312 = vmatpush1.bf16.msra.mxu0 %v7994
    %9313 = vmatprep.subr.bf16.mxu0 %v8002
    %9314 = vmatpush1.bf16.msra.mxu0 %v8001
    %9315 = vmatprep.subr.bf16.mxu0 %v8009
    %9316 = vmatpush1.bf16.msra.mxu0 %v8008
    %9317 = vmatprep.subr.bf16.mxu0 %v8016
    %9318 = vmatpush1.bf16.msra.mxu0 %v8015
    %9319 = vmatprep.subr.bf16.mxu0 %v8023
    %9320 = vmatpush1.bf16.msra.mxu0 %v8022
    %9321 = vmatprep.subr.bf16.mxu0 %v8030
    %9322 = vmatpush1.bf16.msra.mxu0 %v8029
    %9323 = vmatprep.subr.bf16.mxu0 %v8037
    %9324 = vmatpush1.bf16.msra.mxu0 %v8036
    %9325 = vmatprep.subr.bf16.mxu0 %v8044
    %9326 = vmatpush1.bf16.msra.mxu0 %v8043
    %9327 = vmatprep.subr.bf16.mxu0 %v8051
    %9328 = vmatpush1.bf16.msra.mxu0 %v8050
    %9329 = vmatprep.subr.bf16.mxu0 %v8058
    %9330 = vmatpush1.bf16.msra.mxu0 %v8057
    %9331 = vmatprep.mubr.bf16.mxu0 %v5820
    %9332 = vmatmul.mubr.bf16.gmra.mrb[0].mxu0 %v5819
    %v9333 = vpop.f32.mrb[0].mxu0
    %v9334 = vadd.f32 %v9221, %v9333
    %v9335 = vpop.f32.mrb[0].mxu0
    %v9336 = vadd.f32 %v9223, %v9335
    %v9337 = vpop.f32.mrb[0].mxu0
    %v9338 = vadd.f32 %v9225, %v9337
    %v9339 = vpop.f32.mrb[0].mxu0
    %v9340 = vadd.f32 %v9227, %v9339
    %9341 = vmatprep.mubr.bf16.mxu0 %v5828
    %9342 = vmatmul.mubr.bf16.gmra.mrb[0].mxu0 %v5827
    %v9343 = vpop.f32.mrb[0].mxu0
    %v9344 = vadd.f32 %v9231, %v9343
    %v9345 = vpop.f32.mrb[0].mxu0
    %v9346 = vadd.f32 %v9233, %v9345
    %v9347 = vpop.f32.mrb[0].mxu0
    %v9348 = vadd.f32 %v9235, %v9347
    %v9349 = vpop.f32.mrb[0].mxu0
    %v9350 = vadd.f32 %v9237, %v9349
    %9351 = vmatprep.mubr.bf16.mxu0 %v5836
    %9352 = vmatmul.mubr.bf16.gmra.mrb[0].mxu0 %v5835
    %v9353 = vpop.f32.mrb[0].mxu0
    %v9354 = vadd.f32 %v9241, %v9353
    %v9355 = vpop.f32.mrb[0].mxu0
    %v9356 = vadd.f32 %v9243, %v9355
    %v9357 = vpop.f32.mrb[0].mxu0
    %v9358 = vadd.f32 %v9245, %v9357
    %v9359 = vpop.f32.mrb[0].mxu0
    %v9360 = vadd.f32 %v9247, %v9359
    %9361 = vmatprep.mubr.bf16.mxu0 %v5844
    %9362 = vmatmul.mubr.bf16.gmra.mrb[0].mxu0 %v5843
    %v9363 = vpop.f32.mrb[0].mxu0
    %v9364 = vadd.f32 %v9251, %v9363
    %v9365 = vpop.f32.mrb[0].mxu0
    %v9366 = vadd.f32 %v9253, %v9365
    %v9367 = vpop.f32.mrb[0].mxu0
    %v9368 = vadd.f32 %v9255, %v9367
    %v9369 = vpop.f32.mrb[0].mxu0
    %v9370 = vadd.f32 %v9257, %v9369
    %9371 = vmatprep.mubr.bf16.mxu0 %v5852
    %9372 = vmatmul.mubr.bf16.gmra.mrb[0].mxu0 %v5851
    %v9373 = vpop.f32.mrb[0].mxu0
    %v9374 = vadd.f32 %v9261, %v9373
    %v9375 = vpop.f32.mrb[0].mxu0
    %v9376 = vadd.f32 %v9263, %v9375
    %v9377 = vpop.f32.mrb[0].mxu0
    %v9378 = vadd.f32 %v9265, %v9377
    %v9379 = vpop.f32.mrb[0].mxu0
    %v9380 = vadd.f32 %v9267, %v9379
    %9381 = vmatprep.mubr.bf16.mxu0 %v5860
    %9382 = vmatmul.mubr.bf16.gmra.mrb[0].mxu0 %v5859
    %v9383 = vpop.f32.mrb[0].mxu0
    %v9384 = vadd.f32 %v9271, %v9383
    %v9385 = vpop.f32.mrb[0].mxu0
    %v9386 = vadd.f32 %v9273, %v9385
    %v9387 = vpop.f32.mrb[0].mxu0
    %v9388 = vadd.f32 %v9275, %v9387
    %v9389 = vpop.f32.mrb[0].mxu0
    %v9390 = vadd.f32 %v9277, %v9389
    %9391 = vmatprep.mubr.bf16.mxu0 %v5868
    %9392 = vmatmul.mubr.bf16.gmra.mrb[0].mxu0 %v5867
    %v9393 = vpop.f32.mrb[0].mxu0
    %v9394 = vadd.f32 %v9281, %v9393
    %v9395 = vpop.f32.mrb[0].mxu0
    %v9396 = vadd.f32 %v9283, %v9395
    %v9397 = vpop.f32.mrb[0].mxu0
    %v9398 = vadd.f32 %v9285, %v9397
    %v9399 = vpop.f32.mrb[0].mxu0
    %v9400 = vadd.f32 %v9287, %v9399
    %9401 = vmatprep.mubr.bf16.mxu0 %v5876
    %9402 = vmatmul.mubr.bf16.gmra.mrb[0].mxu0 %v5875
    %v9403 = vpop.f32.mrb[0].mxu0
    %v9404 = vadd.f32 %v9291, %v9403
    %v9405 = vpop.f32.mrb[0].mxu0
    %v9406 = vadd.f32 %v9293, %v9405
    %v9407 = vpop.f32.mrb[0].mxu0
    %v9408 = vadd.f32 %v9295, %v9407
    %v9409 = vpop.f32.mrb[0].mxu0
    %v9410 = vadd.f32 %v9297, %v9409
    %9411 = vdwg.mxu0
    %9412 = vmatprep.subr.bf16.mxu0 %v8065
    %9413 = vmatpush1.bf16.msra.mxu0 %v8064
    %9414 = vmatprep.subr.bf16.mxu0 %v8072
    %9415 = vmatpush1.bf16.msra.mxu0 %v8071
    %9416 = vmatprep.subr.bf16.mxu0 %v8079
    %9417 = vmatpush1.bf16.msra.mxu0 %v8078
    %9418 = vmatprep.subr.bf16.mxu0 %v8086
    %9419 = vmatpush1.bf16.msra.mxu0 %v8085
    %9420 = vmatprep.subr.bf16.mxu0 %v8093
    %9421 = vmatpush1.bf16.msra.mxu0 %v8092
    %9422 = vmatprep.subr.bf16.mxu0 %v8100
    %9423 = vmatpush1.bf16.msra.mxu0 %v8099
    %9424 = vmatprep.subr.bf16.mxu0 %v8107
    %9425 = vmatpush1.bf16.msra.mxu0 %v8106
    %9426 = vmatprep.subr.bf16.mxu0 %v8114
    %9427 = vmatpush1.bf16.msra.mxu0 %v8113
    %9428 = vmatprep.subr.bf16.mxu0 %v8121
    %9429 = vmatpush1.bf16.msra.mxu0 %v8120
    %9430 = vmatprep.subr.bf16.mxu0 %v8128
    %9431 = vmatpush1.bf16.msra.mxu0 %v8127
    %9432 = vmatprep.subr.bf16.mxu0 %v8135
    %9433 = vmatpush1.bf16.msra.mxu0 %v8134
    %9434 = vmatprep.subr.bf16.mxu0 %v8142
    %9435 = vmatpush1.bf16.msra.mxu0 %v8141
    %9436 = vmatprep.subr.bf16.mxu0 %v8149
    %9437 = vmatpush1.bf16.msra.mxu0 %v8148
    %9438 = vmatprep.subr.bf16.mxu0 %v8156
    %9439 = vmatpush1.bf16.msra.mxu0 %v8155
    %9440 = vmatprep.subr.bf16.mxu0 %v8163
    %9441 = vmatpush1.bf16.msra.mxu0 %v8162
    %9442 = vmatprep.subr.bf16.mxu0 %v8170
    %9443 = vmatpush1.bf16.msra.mxu0 %v8169
    %9444 = vmatprep.mubr.bf16.mxu0 %v5822
    %9445 = vmatmul.mubr.bf16.gmra.mrb[0].mxu0 %v5821
    %v9446 = vpop.f32.mrb[0].mxu0
    %v9447 = vadd.f32 %v9334, %v9446
    %v9448 = vpop.f32.mrb[0].mxu0
    %v9449 = vadd.f32 %v9336, %v9448
    %v9450 = vpop.f32.mrb[0].mxu0
    %v9451 = vadd.f32 %v9338, %v9450
    %v9452 = vpop.f32.mrb[0].mxu0
    %v9453 = vadd.f32 %v9340, %v9452
    %9454 = vmatprep.mubr.bf16.mxu0 %v5830
    %9455 = vmatmul.mubr.bf16.gmra.mrb[0].mxu0 %v5829
    %v9456 = vpop.f32.mrb[0].mxu0
    %v9457 = vadd.f32 %v9344, %v9456
    %v9458 = vpop.f32.mrb[0].mxu0
    %v9459 = vadd.f32 %v9346, %v9458
    %v9460 = vpop.f32.mrb[0].mxu0
    %v9461 = vadd.f32 %v9348, %v9460
    %v9462 = vpop.f32.mrb[0].mxu0
    %v9463 = vadd.f32 %v9350, %v9462
    %9464 = vmatprep.mubr.bf16.mxu0 %v5838
    %9465 = vmatmul.mubr.bf16.gmra.mrb[0].mxu0 %v5837
    %v9466 = vpop.f32.mrb[0].mxu0
    %v9467 = vadd.f32 %v9354, %v9466
    %v9468 = vpop.f32.mrb[0].mxu0
    %v9469 = vadd.f32 %v9356, %v9468
    %v9470 = vpop.f32.mrb[0].mxu0
    %v9471 = vadd.f32 %v9358, %v9470
    %v9472 = vpop.f32.mrb[0].mxu0
    %v9473 = vadd.f32 %v9360, %v9472
    %9474 = vmatprep.mubr.bf16.mxu0 %v5846
    %9475 = vmatmul.mubr.bf16.gmra.mrb[0].mxu0 %v5845
    %v9476 = vpop.f32.mrb[0].mxu0
    %v9477 = vadd.f32 %v9364, %v9476
    %v9478 = vpop.f32.mrb[0].mxu0
    %v9479 = vadd.f32 %v9366, %v9478
    %v9480 = vpop.f32.mrb[0].mxu0
    %v9481 = vadd.f32 %v9368, %v9480
    %v9482 = vpop.f32.mrb[0].mxu0
    %v9483 = vadd.f32 %v9370, %v9482
    %9484 = vmatprep.mubr.bf16.mxu0 %v5854
    %9485 = vmatmul.mubr.bf16.gmra.mrb[0].mxu0 %v5853
    %v9486 = vpop.f32.mrb[0].mxu0
    %v9487 = vadd.f32 %v9374, %v9486
    %v9488 = vpop.f32.mrb[0].mxu0
    %v9489 = vadd.f32 %v9376, %v9488
    %v9490 = vpop.f32.mrb[0].mxu0
    %v9491 = vadd.f32 %v9378, %v9490
    %v9492 = vpop.f32.mrb[0].mxu0
    %v9493 = vadd.f32 %v9380, %v9492
    %9494 = vmatprep.mubr.bf16.mxu0 %v5862
    %9495 = vmatmul.mubr.bf16.gmra.mrb[0].mxu0 %v5861
    %v9496 = vpop.f32.mrb[0].mxu0
    %v9497 = vadd.f32 %v9384, %v9496
    %v9498 = vpop.f32.mrb[0].mxu0
    %v9499 = vadd.f32 %v9386, %v9498
    %v9500 = vpop.f32.mrb[0].mxu0
    %v9501 = vadd.f32 %v9388, %v9500
    %v9502 = vpop.f32.mrb[0].mxu0
    %v9503 = vadd.f32 %v9390, %v9502
    %9504 = vmatprep.mubr.bf16.mxu0 %v5870
    %9505 = vmatmul.mubr.bf16.gmra.mrb[0].mxu0 %v5869
    %v9506 = vpop.f32.mrb[0].mxu0
    %v9507 = vadd.f32 %v9394, %v9506
    %v9508 = vpop.f32.mrb[0].mxu0
    %v9509 = vadd.f32 %v9396, %v9508
    %v9510 = vpop.f32.mrb[0].mxu0
    %v9511 = vadd.f32 %v9398, %v9510
    %v9512 = vpop.f32.mrb[0].mxu0
    %v9513 = vadd.f32 %v9400, %v9512
    %9514 = vmatprep.mubr.bf16.mxu0 %v5878
    %9515 = vmatmul.mubr.bf16.gmra.mrb[0].mxu0 %v5877
    %v9516 = vpop.f32.mrb[0].mxu0
    %v9517 = vadd.f32 %v9404, %v9516
    %v9518 = vpop.f32.mrb[0].mxu0
    %v9519 = vadd.f32 %v9406, %v9518
    %v9520 = vpop.f32.mrb[0].mxu0
    %v9521 = vadd.f32 %v9408, %v9520
    %v9522 = vpop.f32.mrb[0].mxu0
    %v9523 = vadd.f32 %v9410, %v9522
    %9524 = vdwg.mxu0
    %9525 = vmatprep.subr.bf16.mxu0 %v8177
    %9526 = vmatpush1.bf16.msra.mxu0 %v8176
    %9527 = vmatprep.subr.bf16.mxu0 %v8184
    %9528 = vmatpush1.bf16.msra.mxu0 %v8183
    %9529 = vmatprep.subr.bf16.mxu0 %v8191
    %9530 = vmatpush1.bf16.msra.mxu0 %v8190
    %9531 = vmatprep.subr.bf16.mxu0 %v8198
    %9532 = vmatpush1.bf16.msra.mxu0 %v8197
    %9533 = vmatprep.subr.bf16.mxu0 %v8205
    %9534 = vmatpush1.bf16.msra.mxu0 %v8204
    %9535 = vmatprep.subr.bf16.mxu0 %v8212
    %9536 = vmatpush1.bf16.msra.mxu0 %v8211
    %9537 = vmatprep.subr.bf16.mxu0 %v8219
    %9538 = vmatpush1.bf16.msra.mxu0 %v8218
    %9539 = vmatprep.subr.bf16.mxu0 %v8226
    %9540 = vmatpush1.bf16.msra.mxu0 %v8225
    %9541 = vmatprep.subr.bf16.mxu0 %v8233
    %9542 = vmatpush1.bf16.msra.mxu0 %v8232
    %9543 = vmatprep.subr.bf16.mxu0 %v8240
    %9544 = vmatpush1.bf16.msra.mxu0 %v8239
    %9545 = vmatprep.subr.bf16.mxu0 %v8247
    %9546 = vmatpush1.bf16.msra.mxu0 %v8246
    %9547 = vmatprep.subr.bf16.mxu0 %v8254
    %9548 = vmatpush1.bf16.msra.mxu0 %v8253
    %9549 = vmatprep.subr.bf16.mxu0 %v8261
    %9550 = vmatpush1.bf16.msra.mxu0 %v8260
    %9551 = vmatprep.subr.bf16.mxu0 %v8268
    %9552 = vmatpush1.bf16.msra.mxu0 %v8267
    %9553 = vmatprep.subr.bf16.mxu0 %v8275
    %9554 = vmatpush1.bf16.msra.mxu0 %v8274
    %9555 = vmatprep.subr.bf16.mxu0 %v8282
    %9556 = vmatpush1.bf16.msra.mxu0 %v8281
    %9557 = vmatprep.mubr.bf16.mxu0 %v5824
    %9558 = vmatmul.mubr.bf16.gmra.mrb[0].mxu0 %v5823
    %v9559 = vpop.f32.mrb[0].mxu0
    %v9560 = vadd.f32 %v9447, %v9559
    %v9561 = vpop.f32.mrb[0].mxu0
    %v9562 = vadd.f32 %v9449, %v9561
    %v9563 = vpop.f32.mrb[0].mxu0
    %v9564 = vadd.f32 %v9451, %v9563
    %v9565 = vpop.f32.mrb[0].mxu0
    %v9566 = vadd.f32 %v9453, %v9565
    %9567 = vmatprep.mubr.bf16.mxu0 %v5832
    %9568 = vmatmul.mubr.bf16.gmra.mrb[0].mxu0 %v5831
    %v9569 = vpop.f32.mrb[0].mxu0
    %v9570 = vadd.f32 %v9457, %v9569
    %v9571 = vpop.f32.mrb[0].mxu0
    %v9572 = vadd.f32 %v9459, %v9571
    %v9573 = vpop.f32.mrb[0].mxu0
    %v9574 = vadd.f32 %v9461, %v9573
    %v9575 = vpop.f32.mrb[0].mxu0
    %v9576 = vadd.f32 %v9463, %v9575
    %9577 = vmatprep.mubr.bf16.mxu0 %v5840
    %9578 = vmatmul.mubr.bf16.gmra.mrb[0].mxu0 %v5839
    %v9579 = vpop.f32.mrb[0].mxu0
    %v9580 = vadd.f32 %v9467, %v9579
    %v9581 = vpop.f32.mrb[0].mxu0
    %v9582 = vadd.f32 %v9469, %v9581
    %v9583 = vpop.f32.mrb[0].mxu0
    %v9584 = vadd.f32 %v9471, %v9583
    %v9585 = vpop.f32.mrb[0].mxu0
    %v9586 = vadd.f32 %v9473, %v9585
    %9587 = vmatprep.mubr.bf16.mxu0 %v5848
    %9588 = vmatmul.mubr.bf16.gmra.mrb[0].mxu0 %v5847
    %v9589 = vpop.f32.mrb[0].mxu0
    %v9590 = vadd.f32 %v9477, %v9589
    %v9591 = vpop.f32.mrb[0].mxu0
    %v9592 = vadd.f32 %v9479, %v9591
    %v9593 = vpop.f32.mrb[0].mxu0
    %v9594 = vadd.f32 %v9481, %v9593
    %v9595 = vpop.f32.mrb[0].mxu0
    %v9596 = vadd.f32 %v9483, %v9595
    %9597 = vmatprep.mubr.bf16.mxu0 %v5856
    %9598 = vmatmul.mubr.bf16.gmra.mrb[0].mxu0 %v5855
    %v9599 = vpop.f32.mrb[0].mxu0
    %v9600 = vadd.f32 %v9487, %v9599
    %v9601 = vpop.f32.mrb[0].mxu0
    %v9602 = vadd.f32 %v9489, %v9601
    %v9603 = vpop.f32.mrb[0].mxu0
    %v9604 = vadd.f32 %v9491, %v9603
    %v9605 = vpop.f32.mrb[0].mxu0
    %v9606 = vadd.f32 %v9493, %v9605
    %9607 = vmatprep.mubr.bf16.mxu0 %v5864
    %9608 = vmatmul.mubr.bf16.gmra.mrb[0].mxu0 %v5863
    %v9609 = vpop.f32.mrb[0].mxu0
    %v9610 = vadd.f32 %v9497, %v9609
    %v9611 = vpop.f32.mrb[0].mxu0
    %v9612 = vadd.f32 %v9499, %v9611
    %v9613 = vpop.f32.mrb[0].mxu0
    %v9614 = vadd.f32 %v9501, %v9613
    %v9615 = vpop.f32.mrb[0].mxu0
    %v9616 = vadd.f32 %v9503, %v9615
    %9617 = vmatprep.mubr.bf16.mxu0 %v5872
    %9618 = vmatmul.mubr.bf16.gmra.mrb[0].mxu0 %v5871
    %v9619 = vpop.f32.mrb[0].mxu0
    %v9620 = vadd.f32 %v9507, %v9619
    %v9621 = vpop.f32.mrb[0].mxu0
    %v9622 = vadd.f32 %v9509, %v9621
    %v9623 = vpop.f32.mrb[0].mxu0
    %v9624 = vadd.f32 %v9511, %v9623
    %v9625 = vpop.f32.mrb[0].mxu0
    %v9626 = vadd.f32 %v9513, %v9625
    %9627 = vmatprep.mubr.bf16.mxu0 %v5880
    %9628 = vmatmul.mubr.bf16.gmra.mrb[0].mxu0 %v5879
    %v9629 = vpop.f32.mrb[0].mxu0
    %v9630 = vadd.f32 %v9517, %v9629
    %v9631 = vpop.f32.mrb[0].mxu0
    %v9632 = vadd.f32 %v9519, %v9631
    %v9633 = vpop.f32.mrb[0].mxu0
    %v9634 = vadd.f32 %v9521, %v9633
    %v9635 = vpop.f32.mrb[0].mxu0
    %v9636 = vadd.f32 %v9523, %v9635
    %9637 = vdwg.mxu0
    %9638 = vmatprep.subr.bf16.mxu0 %v7843
    %9639 = vmatpush1.bf16.msra.mxu0 %v7842
    %9640 = vmatprep.subr.bf16.mxu0 %v7850
    %9641 = vmatpush1.bf16.msra.mxu0 %v7849
    %9642 = vmatprep.subr.bf16.mxu0 %v7857
    %9643 = vmatpush1.bf16.msra.mxu0 %v7856
    %9644 = vmatprep.subr.bf16.mxu0 %v7864
    %9645 = vmatpush1.bf16.msra.mxu0 %v7863
    %9646 = vmatprep.subr.bf16.mxu0 %v7871
    %9647 = vmatpush1.bf16.msra.mxu0 %v7870
    %9648 = vmatprep.subr.bf16.mxu0 %v7878
    %9649 = vmatpush1.bf16.msra.mxu0 %v7877
    %9650 = vmatprep.subr.bf16.mxu0 %v7885
    %9651 = vmatpush1.bf16.msra.mxu0 %v7884
    %9652 = vmatprep.subr.bf16.mxu0 %v7892
    %9653 = vmatpush1.bf16.msra.mxu0 %v7891
    %9654 = vmatprep.subr.bf16.mxu0 %v7899
    %9655 = vmatpush1.bf16.msra.mxu0 %v7898
    %9656 = vmatprep.subr.bf16.mxu0 %v7906
    %9657 = vmatpush1.bf16.msra.mxu0 %v7905
    %9658 = vmatprep.subr.bf16.mxu0 %v7913
    %9659 = vmatpush1.bf16.msra.mxu0 %v7912
    %9660 = vmatprep.subr.bf16.mxu0 %v7920
    %9661 = vmatpush1.bf16.msra.mxu0 %v7919
    %9662 = vmatprep.subr.bf16.mxu0 %v7927
    %9663 = vmatpush1.bf16.msra.mxu0 %v7926
    %9664 = vmatprep.subr.bf16.mxu0 %v7934
    %9665 = vmatpush1.bf16.msra.mxu0 %v7933
    %9666 = vmatprep.subr.bf16.mxu0 %v7941
    %9667 = vmatpush1.bf16.msra.mxu0 %v7940
    %9668 = vmatprep.subr.bf16.mxu0 %v7948
    %9669 = vmatpush1.bf16.msra.mxu0 %v7947
    %9670 = vmatprep.mubr.bf16.mxu0 %v5818
    %9671 = vmatmul.mubr.bf16.gmra.mrb[0].mxu0 %v5817
    %v9672 = vpop.f32.mrb[0].mxu0
    %v9673 = vadd.f32 %v6414, %v9672
    %v9674 = vpop.f32.mrb[0].mxu0
    %v9675 = vadd.f32 %v6418, %v9674
    %v9676 = vpop.f32.mrb[0].mxu0
    %v9677 = vadd.f32 %v6414, %v9676
    %v9678 = vpop.f32.mrb[0].mxu0
    %v9679 = vadd.f32 %v6418, %v9678
    %9680 = vmatprep.mubr.bf16.mxu0 %v5826
    %9681 = vmatmul.mubr.bf16.gmra.mrb[0].mxu0 %v5825
    %v9682 = vpop.f32.mrb[0].mxu0
    %v9683 = vadd.f32 %v6414, %v9682
    %v9684 = vpop.f32.mrb[0].mxu0
    %v9685 = vadd.f32 %v6418, %v9684
    %v9686 = vpop.f32.mrb[0].mxu0
    %v9687 = vadd.f32 %v6414, %v9686
    %v9688 = vpop.f32.mrb[0].mxu0
    %v9689 = vadd.f32 %v6418, %v9688
    %9690 = vmatprep.mubr.bf16.mxu0 %v5834
    %9691 = vmatmul.mubr.bf16.gmra.mrb[0].mxu0 %v5833
    %v9692 = vpop.f32.mrb[0].mxu0
    %v9693 = vadd.f32 %v6414, %v9692
    %v9694 = vpop.f32.mrb[0].mxu0
    %v9695 = vadd.f32 %v6418, %v9694
    %v9696 = vpop.f32.mrb[0].mxu0
    %v9697 = vadd.f32 %v6414, %v9696
    %v9698 = vpop.f32.mrb[0].mxu0
    %v9699 = vadd.f32 %v6418, %v9698
    %9700 = vmatprep.mubr.bf16.mxu0 %v5842
    %9701 = vmatmul.mubr.bf16.gmra.mrb[0].mxu0 %v5841
    %v9702 = vpop.f32.mrb[0].mxu0
    %v9703 = vadd.f32 %v6414, %v9702
    %v9704 = vpop.f32.mrb[0].mxu0
    %v9705 = vadd.f32 %v6418, %v9704
    %v9706 = vpop.f32.mrb[0].mxu0
    %v9707 = vadd.f32 %v6414, %v9706
    %v9708 = vpop.f32.mrb[0].mxu0
    %v9709 = vadd.f32 %v6418, %v9708
    %9710 = vmatprep.mubr.bf16.mxu0 %v5850
    %9711 = vmatmul.mubr.bf16.gmra.mrb[0].mxu0 %v5849
    %v9712 = vpop.f32.mrb[0].mxu0
    %v9713 = vadd.f32 %v6414, %v9712
    %v9714 = vpop.f32.mrb[0].mxu0
    %v9715 = vadd.f32 %v6418, %v9714
    %v9716 = vpop.f32.mrb[0].mxu0
    %v9717 = vadd.f32 %v6414, %v9716
    %v9718 = vpop.f32.mrb[0].mxu0
    %v9719 = vadd.f32 %v6418, %v9718
    %9720 = vmatprep.mubr.bf16.mxu0 %v5858
    %9721 = vmatmul.mubr.bf16.gmra.mrb[0].mxu0 %v5857
    %v9722 = vpop.f32.mrb[0].mxu0
    %v9723 = vadd.f32 %v6414, %v9722
    %v9724 = vpop.f32.mrb[0].mxu0
    %v9725 = vadd.f32 %v6418, %v9724
    %v9726 = vpop.f32.mrb[0].mxu0
    %v9727 = vadd.f32 %v6414, %v9726
    %v9728 = vpop.f32.mrb[0].mxu0
    %v9729 = vadd.f32 %v6418, %v9728
    %9730 = vmatprep.mubr.bf16.mxu0 %v5866
    %9731 = vmatmul.mubr.bf16.gmra.mrb[0].mxu0 %v5865
    %v9732 = vpop.f32.mrb[0].mxu0
    %v9733 = vadd.f32 %v6414, %v9732
    %v9734 = vpop.f32.mrb[0].mxu0
    %v9735 = vadd.f32 %v6418, %v9734
    %v9736 = vpop.f32.mrb[0].mxu0
    %v9737 = vadd.f32 %v6414, %v9736
    %v9738 = vpop.f32.mrb[0].mxu0
    %v9739 = vadd.f32 %v6418, %v9738
    %9740 = vmatprep.mubr.bf16.mxu0 %v5874
    %9741 = vmatmul.mubr.bf16.gmra.mrb[0].mxu0 %v5873
    %v9742 = vpop.f32.mrb[0].mxu0
    %v9743 = vadd.f32 %v6414, %v9742
    %v9744 = vpop.f32.mrb[0].mxu0
    %v9745 = vadd.f32 %v6418, %v9744
    %v9746 = vpop.f32.mrb[0].mxu0
    %v9747 = vadd.f32 %v6414, %v9746
    %v9748 = vpop.f32.mrb[0].mxu0
    %v9749 = vadd.f32 %v6418, %v9748
    %9750 = vdwg.mxu0
    %9751 = vmatprep.subr.bf16.mxu0 %v7955
    %9752 = vmatpush1.bf16.msra.mxu0 %v7954
    %9753 = vmatprep.subr.bf16.mxu0 %v7962
    %9754 = vmatpush1.bf16.msra.mxu0 %v7961
    %9755 = vmatprep.subr.bf16.mxu0 %v7969
    %9756 = vmatpush1.bf16.msra.mxu0 %v7968
    %9757 = vmatprep.subr.bf16.mxu0 %v7976
    %9758 = vmatpush1.bf16.msra.mxu0 %v7975
    %9759 = vmatprep.subr.bf16.mxu0 %v7983
    %9760 = vmatpush1.bf16.msra.mxu0 %v7982
    %9761 = vmatprep.subr.bf16.mxu0 %v7990
    %9762 = vmatpush1.bf16.msra.mxu0 %v7989
    %9763 = vmatprep.subr.bf16.mxu0 %v7997
    %9764 = vmatpush1.bf16.msra.mxu0 %v7996
    %9765 = vmatprep.subr.bf16.mxu0 %v8004
    %9766 = vmatpush1.bf16.msra.mxu0 %v8003
    %9767 = vmatprep.subr.bf16.mxu0 %v8011
    %9768 = vmatpush1.bf16.msra.mxu0 %v8010
    %9769 = vmatprep.subr.bf16.mxu0 %v8018
    %9770 = vmatpush1.bf16.msra.mxu0 %v8017
    %9771 = vmatprep.subr.bf16.mxu0 %v8025
    %9772 = vmatpush1.bf16.msra.mxu0 %v8024
    %9773 = vmatprep.subr.bf16.mxu0 %v8032
    %9774 = vmatpush1.bf16.msra.mxu0 %v8031
    %9775 = vmatprep.subr.bf16.mxu0 %v8039
    %9776 = vmatpush1.bf16.msra.mxu0 %v8038
    %9777 = vmatprep.subr.bf16.mxu0 %v8046
    %9778 = vmatpush1.bf16.msra.mxu0 %v8045
    %9779 = vmatprep.subr.bf16.mxu0 %v8053
    %9780 = vmatpush1.bf16.msra.mxu0 %v8052
    %9781 = vmatprep.subr.bf16.mxu0 %v8060
    %9782 = vmatpush1.bf16.msra.mxu0 %v8059
    %9783 = vmatprep.mubr.bf16.mxu0 %v5820
    %9784 = vmatmul.mubr.bf16.gmra.mrb[0].mxu0 %v5819
    %v9785 = vpop.f32.mrb[0].mxu0
    %v9786 = vadd.f32 %v9673, %v9785
    %v9787 = vpop.f32.mrb[0].mxu0
    %v9788 = vadd.f32 %v9675, %v9787
    %v9789 = vpop.f32.mrb[0].mxu0
    %v9790 = vadd.f32 %v9677, %v9789
    %v9791 = vpop.f32.mrb[0].mxu0
    %v9792 = vadd.f32 %v9679, %v9791
    %9793 = vmatprep.mubr.bf16.mxu0 %v5828
    %9794 = vmatmul.mubr.bf16.gmra.mrb[0].mxu0 %v5827
    %v9795 = vpop.f32.mrb[0].mxu0
    %v9796 = vadd.f32 %v9683, %v9795
    %v9797 = vpop.f32.mrb[0].mxu0
    %v9798 = vadd.f32 %v9685, %v9797
    %v9799 = vpop.f32.mrb[0].mxu0
    %v9800 = vadd.f32 %v9687, %v9799
    %v9801 = vpop.f32.mrb[0].mxu0
    %v9802 = vadd.f32 %v9689, %v9801
    %9803 = vmatprep.mubr.bf16.mxu0 %v5836
    %9804 = vmatmul.mubr.bf16.gmra.mrb[0].mxu0 %v5835
    %v9805 = vpop.f32.mrb[0].mxu0
    %v9806 = vadd.f32 %v9693, %v9805
    %v9807 = vpop.f32.mrb[0].mxu0
    %v9808 = vadd.f32 %v9695, %v9807
    %v9809 = vpop.f32.mrb[0].mxu0
    %v9810 = vadd.f32 %v9697, %v9809
    %v9811 = vpop.f32.mrb[0].mxu0
    %v9812 = vadd.f32 %v9699, %v9811
    %9813 = vmatprep.mubr.bf16.mxu0 %v5844
    %9814 = vmatmul.mubr.bf16.gmra.mrb[0].mxu0 %v5843
    %v9815 = vpop.f32.mrb[0].mxu0
    %v9816 = vadd.f32 %v9703, %v9815
    %v9817 = vpop.f32.mrb[0].mxu0
    %v9818 = vadd.f32 %v9705, %v9817
    %v9819 = vpop.f32.mrb[0].mxu0
    %v9820 = vadd.f32 %v9707, %v9819
    %v9821 = vpop.f32.mrb[0].mxu0
    %v9822 = vadd.f32 %v9709, %v9821
    %9823 = vmatprep.mubr.bf16.mxu0 %v5852
    %9824 = vmatmul.mubr.bf16.gmra.mrb[0].mxu0 %v5851
    %v9825 = vpop.f32.mrb[0].mxu0
    %v9826 = vadd.f32 %v9713, %v9825
    %v9827 = vpop.f32.mrb[0].mxu0
    %v9828 = vadd.f32 %v9715, %v9827
    %v9829 = vpop.f32.mrb[0].mxu0
    %v9830 = vadd.f32 %v9717, %v9829
    %v9831 = vpop.f32.mrb[0].mxu0
    %v9832 = vadd.f32 %v9719, %v9831
    %9833 = vmatprep.mubr.bf16.mxu0 %v5860
    %9834 = vmatmul.mubr.bf16.gmra.mrb[0].mxu0 %v5859
    %v9835 = vpop.f32.mrb[0].mxu0
    %v9836 = vadd.f32 %v9723, %v9835
    %v9837 = vpop.f32.mrb[0].mxu0
    %v9838 = vadd.f32 %v9725, %v9837
    %v9839 = vpop.f32.mrb[0].mxu0
    %v9840 = vadd.f32 %v9727, %v9839
    %v9841 = vpop.f32.mrb[0].mxu0
    %v9842 = vadd.f32 %v9729, %v9841
    %9843 = vmatprep.mubr.bf16.mxu0 %v5868
    %9844 = vmatmul.mubr.bf16.gmra.mrb[0].mxu0 %v5867
    %v9845 = vpop.f32.mrb[0].mxu0
    %v9846 = vadd.f32 %v9733, %v9845
    %v9847 = vpop.f32.mrb[0].mxu0
    %v9848 = vadd.f32 %v9735, %v9847
    %v9849 = vpop.f32.mrb[0].mxu0
    %v9850 = vadd.f32 %v9737, %v9849
    %v9851 = vpop.f32.mrb[0].mxu0
    %v9852 = vadd.f32 %v9739, %v9851
    %9853 = vmatprep.mubr.bf16.mxu0 %v5876
    %9854 = vmatmul.mubr.bf16.gmra.mrb[0].mxu0 %v5875
    %v9855 = vpop.f32.mrb[0].mxu0
    %v9856 = vadd.f32 %v9743, %v9855
    %v9857 = vpop.f32.mrb[0].mxu0
    %v9858 = vadd.f32 %v9745, %v9857
    %v9859 = vpop.f32.mrb[0].mxu0
    %v9860 = vadd.f32 %v9747, %v9859
    %v9861 = vpop.f32.mrb[0].mxu0
    %v9862 = vadd.f32 %v9749, %v9861
    %9863 = vdwg.mxu0
    %9864 = vmatprep.subr.bf16.mxu0 %v8067
    %9865 = vmatpush1.bf16.msra.mxu0 %v8066
    %9866 = vmatprep.subr.bf16.mxu0 %v8074
    %9867 = vmatpush1.bf16.msra.mxu0 %v8073
    %9868 = vmatprep.subr.bf16.mxu0 %v8081
    %9869 = vmatpush1.bf16.msra.mxu0 %v8080
    %9870 = vmatprep.subr.bf16.mxu0 %v8088
    %9871 = vmatpush1.bf16.msra.mxu0 %v8087
    %9872 = vmatprep.subr.bf16.mxu0 %v8095
    %9873 = vmatpush1.bf16.msra.mxu0 %v8094
    %9874 = vmatprep.subr.bf16.mxu0 %v8102
    %9875 = vmatpush1.bf16.msra.mxu0 %v8101
    %9876 = vmatprep.subr.bf16.mxu0 %v8109
    %9877 = vmatpush1.bf16.msra.mxu0 %v8108
    %9878 = vmatprep.subr.bf16.mxu0 %v8116
    %9879 = vmatpush1.bf16.msra.mxu0 %v8115
    %9880 = vmatprep.subr.bf16.mxu0 %v8123
    %9881 = vmatpush1.bf16.msra.mxu0 %v8122
    %9882 = vmatprep.subr.bf16.mxu0 %v8130
    %9883 = vmatpush1.bf16.msra.mxu0 %v8129
    %9884 = vmatprep.subr.bf16.mxu0 %v8137
    %9885 = vmatpush1.bf16.msra.mxu0 %v8136
    %9886 = vmatprep.subr.bf16.mxu0 %v8144
    %9887 = vmatpush1.bf16.msra.mxu0 %v8143
    %9888 = vmatprep.subr.bf16.mxu0 %v8151
    %9889 = vmatpush1.bf16.msra.mxu0 %v8150
    %9890 = vmatprep.subr.bf16.mxu0 %v8158
    %9891 = vmatpush1.bf16.msra.mxu0 %v8157
    %9892 = vmatprep.subr.bf16.mxu0 %v8165
    %9893 = vmatpush1.bf16.msra.mxu0 %v8164
    %9894 = vmatprep.subr.bf16.mxu0 %v8172
    %9895 = vmatpush1.bf16.msra.mxu0 %v8171
    %9896 = vmatprep.mubr.bf16.mxu0 %v5822
    %9897 = vmatmul.mubr.bf16.gmra.mrb[0].mxu0 %v5821
    %v9898 = vpop.f32.mrb[0].mxu0
    %v9899 = vadd.f32 %v9786, %v9898
    %v9900 = vpop.f32.mrb[0].mxu0
    %v9901 = vadd.f32 %v9788, %v9900
    %v9902 = vpop.f32.mrb[0].mxu0
    %v9903 = vadd.f32 %v9790, %v9902
    %v9904 = vpop.f32.mrb[0].mxu0
    %v9905 = vadd.f32 %v9792, %v9904
    %9906 = vmatprep.mubr.bf16.mxu0 %v5830
    %9907 = vmatmul.mubr.bf16.gmra.mrb[0].mxu0 %v5829
    %v9908 = vpop.f32.mrb[0].mxu0
    %v9909 = vadd.f32 %v9796, %v9908
    %v9910 = vpop.f32.mrb[0].mxu0
    %v9911 = vadd.f32 %v9798, %v9910
    %v9912 = vpop.f32.mrb[0].mxu0
    %v9913 = vadd.f32 %v9800, %v9912
    %v9914 = vpop.f32.mrb[0].mxu0
    %v9915 = vadd.f32 %v9802, %v9914
    %9916 = vmatprep.mubr.bf16.mxu0 %v5838
    %9917 = vmatmul.mubr.bf16.gmra.mrb[0].mxu0 %v5837
    %v9918 = vpop.f32.mrb[0].mxu0
    %v9919 = vadd.f32 %v9806, %v9918
    %v9920 = vpop.f32.mrb[0].mxu0
    %v9921 = vadd.f32 %v9808, %v9920
    %v9922 = vpop.f32.mrb[0].mxu0
    %v9923 = vadd.f32 %v9810, %v9922
    %v9924 = vpop.f32.mrb[0].mxu0
    %v9925 = vadd.f32 %v9812, %v9924
    %9926 = vmatprep.mubr.bf16.mxu0 %v5846
    %9927 = vmatmul.mubr.bf16.gmra.mrb[0].mxu0 %v5845
    %v9928 = vpop.f32.mrb[0].mxu0
    %v9929 = vadd.f32 %v9816, %v9928
    %v9930 = vpop.f32.mrb[0].mxu0
    %v9931 = vadd.f32 %v9818, %v9930
    %v9932 = vpop.f32.mrb[0].mxu0
    %v9933 = vadd.f32 %v9820, %v9932
    %v9934 = vpop.f32.mrb[0].mxu0
    %v9935 = vadd.f32 %v9822, %v9934
    %9936 = vmatprep.mubr.bf16.mxu0 %v5854
    %9937 = vmatmul.mubr.bf16.gmra.mrb[0].mxu0 %v5853
    %v9938 = vpop.f32.mrb[0].mxu0
    %v9939 = vadd.f32 %v9826, %v9938
    %v9940 = vpop.f32.mrb[0].mxu0
    %v9941 = vadd.f32 %v9828, %v9940
    %v9942 = vpop.f32.mrb[0].mxu0
    %v9943 = vadd.f32 %v9830, %v9942
    %v9944 = vpop.f32.mrb[0].mxu0
    %v9945 = vadd.f32 %v9832, %v9944
    %9946 = vmatprep.mubr.bf16.mxu0 %v5862
    %9947 = vmatmul.mubr.bf16.gmra.mrb[0].mxu0 %v5861
    %v9948 = vpop.f32.mrb[0].mxu0
    %v9949 = vadd.f32 %v9836, %v9948
    %v9950 = vpop.f32.mrb[0].mxu0
    %v9951 = vadd.f32 %v9838, %v9950
    %v9952 = vpop.f32.mrb[0].mxu0
    %v9953 = vadd.f32 %v9840, %v9952
    %v9954 = vpop.f32.mrb[0].mxu0
    %v9955 = vadd.f32 %v9842, %v9954
    %9956 = vmatprep.mubr.bf16.mxu0 %v5870
    %9957 = vmatmul.mubr.bf16.gmra.mrb[0].mxu0 %v5869
    %v9958 = vpop.f32.mrb[0].mxu0
    %v9959 = vadd.f32 %v9846, %v9958
    %v9960 = vpop.f32.mrb[0].mxu0
    %v9961 = vadd.f32 %v9848, %v9960
    %v9962 = vpop.f32.mrb[0].mxu0
    %v9963 = vadd.f32 %v9850, %v9962
    %v9964 = vpop.f32.mrb[0].mxu0
    %v9965 = vadd.f32 %v9852, %v9964
    %9966 = vmatprep.mubr.bf16.mxu0 %v5878
    %9967 = vmatmul.mubr.bf16.gmra.mrb[0].mxu0 %v5877
    %v9968 = vpop.f32.mrb[0].mxu0
    %v9969 = vadd.f32 %v9856, %v9968
    %v9970 = vpop.f32.mrb[0].mxu0
    %v9971 = vadd.f32 %v9858, %v9970
    %v9972 = vpop.f32.mrb[0].mxu0
    %v9973 = vadd.f32 %v9860, %v9972
    %v9974 = vpop.f32.mrb[0].mxu0
    %v9975 = vadd.f32 %v9862, %v9974
    %9976 = vdwg.mxu0
    %9977 = vmatprep.subr.bf16.mxu0 %v8179
    %9978 = vmatpush1.bf16.msra.mxu0 %v8178
    %9979 = vmatprep.subr.bf16.mxu0 %v8186
    %9980 = vmatpush1.bf16.msra.mxu0 %v8185
    %9981 = vmatprep.subr.bf16.mxu0 %v8193
    %9982 = vmatpush1.bf16.msra.mxu0 %v8192
    %9983 = vmatprep.subr.bf16.mxu0 %v8200
    %9984 = vmatpush1.bf16.msra.mxu0 %v8199
    %9985 = vmatprep.subr.bf16.mxu0 %v8207
    %9986 = vmatpush1.bf16.msra.mxu0 %v8206
    %9987 = vmatprep.subr.bf16.mxu0 %v8214
    %9988 = vmatpush1.bf16.msra.mxu0 %v8213
    %9989 = vmatprep.subr.bf16.mxu0 %v8221
    %9990 = vmatpush1.bf16.msra.mxu0 %v8220
    %9991 = vmatprep.subr.bf16.mxu0 %v8228
    %9992 = vmatpush1.bf16.msra.mxu0 %v8227
    %9993 = vmatprep.subr.bf16.mxu0 %v8235
    %9994 = vmatpush1.bf16.msra.mxu0 %v8234
    %9995 = vmatprep.subr.bf16.mxu0 %v8242
    %9996 = vmatpush1.bf16.msra.mxu0 %v8241
    %9997 = vmatprep.subr.bf16.mxu0 %v8249
    %9998 = vmatpush1.bf16.msra.mxu0 %v8248
    %9999 = vmatprep.subr.bf16.mxu0 %v8256
    %10000 = vmatpush1.bf16.msra.mxu0 %v8255
    %10001 = vmatprep.subr.bf16.mxu0 %v8263
    %10002 = vmatpush1.bf16.msra.mxu0 %v8262
    %10003 = vmatprep.subr.bf16.mxu0 %v8270
    %10004 = vmatpush1.bf16.msra.mxu0 %v8269
    %10005 = vmatprep.subr.bf16.mxu0 %v8277
    %10006 = vmatpush1.bf16.msra.mxu0 %v8276
    %10007 = vmatprep.subr.bf16.mxu0 %v8284
    %10008 = vmatpush1.bf16.msra.mxu0 %v8283
    %10009 = vmatprep.mubr.bf16.mxu0 %v5824
    %10010 = vmatmul.mubr.bf16.gmra.mrb[0].mxu0 %v5823
    %v10011 = vpop.f32.mrb[0].mxu0
    %v10012 = vadd.f32 %v9899, %v10011
    %v10013 = vpop.f32.mrb[0].mxu0
    %v10014 = vadd.f32 %v9901, %v10013
    %v10015 = vpop.f32.mrb[0].mxu0
    %v10016 = vadd.f32 %v9903, %v10015
    %v10017 = vpop.f32.mrb[0].mxu0
    %v10018 = vadd.f32 %v9905, %v10017
    %10019 = vmatprep.mubr.bf16.mxu0 %v5832
    %10020 = vmatmul.mubr.bf16.gmra.mrb[0].mxu0 %v5831
    %v10021 = vpop.f32.mrb[0].mxu0
    %v10022 = vadd.f32 %v9909, %v10021
    %v10023 = vpop.f32.mrb[0].mxu0
    %v10024 = vadd.f32 %v9911, %v10023
    %v10025 = vpop.f32.mrb[0].mxu0
    %v10026 = vadd.f32 %v9913, %v10025
    %v10027 = vpop.f32.mrb[0].mxu0
    %v10028 = vadd.f32 %v9915, %v10027
    %10029 = vmatprep.mubr.bf16.mxu0 %v5840
    %10030 = vmatmul.mubr.bf16.gmra.mrb[0].mxu0 %v5839
    %v10031 = vpop.f32.mrb[0].mxu0
    %v10032 = vadd.f32 %v9919, %v10031
    %v10033 = vpop.f32.mrb[0].mxu0
    %v10034 = vadd.f32 %v9921, %v10033
    %v10035 = vpop.f32.mrb[0].mxu0
    %v10036 = vadd.f32 %v9923, %v10035
    %v10037 = vpop.f32.mrb[0].mxu0
    %v10038 = vadd.f32 %v9925, %v10037
    %10039 = vmatprep.mubr.bf16.mxu0 %v5848
    %10040 = vmatmul.mubr.bf16.gmra.mrb[0].mxu0 %v5847
    %v10041 = vpop.f32.mrb[0].mxu0
    %v10042 = vadd.f32 %v9929, %v10041
    %v10043 = vpop.f32.mrb[0].mxu0
    %v10044 = vadd.f32 %v9931, %v10043
    %v10045 = vpop.f32.mrb[0].mxu0
    %v10046 = vadd.f32 %v9933, %v10045
    %v10047 = vpop.f32.mrb[0].mxu0
    %v10048 = vadd.f32 %v9935, %v10047
    %10049 = vmatprep.mubr.bf16.mxu0 %v5856
    %10050 = vmatmul.mubr.bf16.gmra.mrb[0].mxu0 %v5855
    %v10051 = vpop.f32.mrb[0].mxu0
    %v10052 = vadd.f32 %v9939, %v10051
    %v10053 = vpop.f32.mrb[0].mxu0
    %v10054 = vadd.f32 %v9941, %v10053
    %v10055 = vpop.f32.mrb[0].mxu0
    %v10056 = vadd.f32 %v9943, %v10055
    %v10057 = vpop.f32.mrb[0].mxu0
    %v10058 = vadd.f32 %v9945, %v10057
    %10059 = vmatprep.mubr.bf16.mxu0 %v5864
    %10060 = vmatmul.mubr.bf16.gmra.mrb[0].mxu0 %v5863
    %v10061 = vpop.f32.mrb[0].mxu0
    %v10062 = vadd.f32 %v9949, %v10061
    %v10063 = vpop.f32.mrb[0].mxu0
    %v10064 = vadd.f32 %v9951, %v10063
    %v10065 = vpop.f32.mrb[0].mxu0
    %v10066 = vadd.f32 %v9953, %v10065
    %v10067 = vpop.f32.mrb[0].mxu0
    %v10068 = vadd.f32 %v9955, %v10067
    %10069 = vmatprep.mubr.bf16.mxu0 %v5872
    %10070 = vmatmul.mubr.bf16.gmra.mrb[0].mxu0 %v5871
    %v10071 = vpop.f32.mrb[0].mxu0
    %v10072 = vadd.f32 %v9959, %v10071
    %v10073 = vpop.f32.mrb[0].mxu0
    %v10074 = vadd.f32 %v9961, %v10073
    %v10075 = vpop.f32.mrb[0].mxu0
    %v10076 = vadd.f32 %v9963, %v10075
    %v10077 = vpop.f32.mrb[0].mxu0
    %v10078 = vadd.f32 %v9965, %v10077
    %10079 = vmatprep.mubr.bf16.mxu0 %v5880
    %10080 = vmatmul.mubr.bf16.gmra.mrb[0].mxu0 %v5879
    %v10081 = vpop.f32.mrb[0].mxu0
    %v10082 = vadd.f32 %v9969, %v10081
    %v10083 = vpop.f32.mrb[0].mxu0
    %v10084 = vadd.f32 %v9971, %v10083
    %v10085 = vpop.f32.mrb[0].mxu0
    %v10086 = vadd.f32 %v9973, %v10085
    %v10087 = vpop.f32.mrb[0].mxu0
    %v10088 = vadd.f32 %v9975, %v10087
    %10089 = vdwg.mxu0
    %10090 = vmatprep.subr.bf16.mxu0 0
    %10091 = vmatpush1.bf16.msra.mxu0 %v7844
    %10092 = vmatprep.subr.bf16.mxu0 0
    %10093 = vmatpush1.bf16.msra.mxu0 %v7851
    %10094 = vmatprep.subr.bf16.mxu0 0
    %10095 = vmatpush1.bf16.msra.mxu0 %v7858
    %10096 = vmatprep.subr.bf16.mxu0 0
    %10097 = vmatpush1.bf16.msra.mxu0 %v7865
    %10098 = vmatprep.subr.bf16.mxu0 0
    %10099 = vmatpush1.bf16.msra.mxu0 %v7872
    %10100 = vmatprep.subr.bf16.mxu0 0
    %10101 = vmatpush1.bf16.msra.mxu0 %v7879
    %10102 = vmatprep.subr.bf16.mxu0 0
    %10103 = vmatpush1.bf16.msra.mxu0 %v7886
    %10104 = vmatprep.subr.bf16.mxu0 0
    %10105 = vmatpush1.bf16.msra.mxu0 %v7893
    %10106 = vmatprep.subr.bf16.mxu0 0
    %10107 = vmatpush1.bf16.msra.mxu0 %v7900
    %10108 = vmatprep.subr.bf16.mxu0 0
    %10109 = vmatpush1.bf16.msra.mxu0 %v7907
    %10110 = vmatprep.subr.bf16.mxu0 0
    %10111 = vmatpush1.bf16.msra.mxu0 %v7914
    %10112 = vmatprep.subr.bf16.mxu0 0
    %10113 = vmatpush1.bf16.msra.mxu0 %v7921
    %10114 = vmatprep.subr.bf16.mxu0 0
    %10115 = vmatpush1.bf16.msra.mxu0 %v7928
    %10116 = vmatprep.subr.bf16.mxu0 0
    %10117 = vmatpush1.bf16.msra.mxu0 %v7935
    %10118 = vmatprep.subr.bf16.mxu0 0
    %10119 = vmatpush1.bf16.msra.mxu0 %v7942
    %10120 = vmatprep.subr.bf16.mxu0 0
    %10121 = vmatpush1.bf16.msra.mxu0 %v7949
    %10122 = vmatprep.mubr.bf16.mxu0 %v5818
    %10123 = vmatmul.mubr.bf16.gmra.mrb[0].mxu0 %v5817
    %v10124 = vpop.f32.mrb[0].mxu0
    %v10125 = vadd.f32 %v6422, %v10124
    %v10126 = vpop.f32.mrb[0].mxu0
    %v10127 = vpop.f32.mrb[0].mxu0
    %v10128 = vadd.f32 %v6422, %v10127
    %v10129 = vpop.f32.mrb[0].mxu0
    %10130 = vmatprep.mubr.bf16.mxu0 %v5826
    %10131 = vmatmul.mubr.bf16.gmra.mrb[0].mxu0 %v5825
    %v10132 = vpop.f32.mrb[0].mxu0
    %v10133 = vadd.f32 %v6422, %v10132
    %v10134 = vpop.f32.mrb[0].mxu0
    %v10135 = vpop.f32.mrb[0].mxu0
    %v10136 = vadd.f32 %v6422, %v10135
    %v10137 = vpop.f32.mrb[0].mxu0
    %10138 = vmatprep.mubr.bf16.mxu0 %v5834
    %10139 = vmatmul.mubr.bf16.gmra.mrb[0].mxu0 %v5833
    %v10140 = vpop.f32.mrb[0].mxu0
    %v10141 = vadd.f32 %v6422, %v10140
    %v10142 = vpop.f32.mrb[0].mxu0
    %v10143 = vpop.f32.mrb[0].mxu0
    %v10144 = vadd.f32 %v6422, %v10143
    %v10145 = vpop.f32.mrb[0].mxu0
    %10146 = vmatprep.mubr.bf16.mxu0 %v5842
    %10147 = vmatmul.mubr.bf16.gmra.mrb[0].mxu0 %v5841
    %v10148 = vpop.f32.mrb[0].mxu0
    %v10149 = vadd.f32 %v6422, %v10148
    %v10150 = vpop.f32.mrb[0].mxu0
    %v10151 = vpop.f32.mrb[0].mxu0
    %v10152 = vadd.f32 %v6422, %v10151
    %v10153 = vpop.f32.mrb[0].mxu0
    %10154 = vmatprep.mubr.bf16.mxu0 %v5850
    %10155 = vmatmul.mubr.bf16.gmra.mrb[0].mxu0 %v5849
    %v10156 = vpop.f32.mrb[0].mxu0
    %v10157 = vadd.f32 %v6422, %v10156
    %v10158 = vpop.f32.mrb[0].mxu0
    %v10159 = vpop.f32.mrb[0].mxu0
    %v10160 = vadd.f32 %v6422, %v10159
    %v10161 = vpop.f32.mrb[0].mxu0
    %10162 = vmatprep.mubr.bf16.mxu0 %v5858
    %10163 = vmatmul.mubr.bf16.gmra.mrb[0].mxu0 %v5857
    %v10164 = vpop.f32.mrb[0].mxu0
    %v10165 = vadd.f32 %v6422, %v10164
    %v10166 = vpop.f32.mrb[0].mxu0
    %v10167 = vpop.f32.mrb[0].mxu0
    %v10168 = vadd.f32 %v6422, %v10167
    %v10169 = vpop.f32.mrb[0].mxu0
    %10170 = vmatprep.mubr.bf16.mxu0 %v5866
    %10171 = vmatmul.mubr.bf16.gmra.mrb[0].mxu0 %v5865
    %v10172 = vpop.f32.mrb[0].mxu0
    %v10173 = vadd.f32 %v6422, %v10172
    %v10174 = vpop.f32.mrb[0].mxu0
    %v10175 = vpop.f32.mrb[0].mxu0
    %v10176 = vadd.f32 %v6422, %v10175
    %v10177 = vpop.f32.mrb[0].mxu0
    %10178 = vmatprep.mubr.bf16.mxu0 %v5874
    %10179 = vmatmul.mubr.bf16.gmra.mrb[0].mxu0 %v5873
    %v10180 = vpop.f32.mrb[0].mxu0
    %v10181 = vadd.f32 %v6422, %v10180
    %v10182 = vpop.f32.mrb[0].mxu0
    %v10183 = vpop.f32.mrb[0].mxu0
    %v10184 = vadd.f32 %v6422, %v10183
    %v10185 = vpop.f32.mrb[0].mxu0
    %10186 = vdwg.mxu0
    %10187 = vmatprep.subr.bf16.mxu0 0
    %10188 = vmatpush1.bf16.msra.mxu0 %v7956
    %10189 = vmatprep.subr.bf16.mxu0 0
    %10190 = vmatpush1.bf16.msra.mxu0 %v7963
    %10191 = vmatprep.subr.bf16.mxu0 0
    %10192 = vmatpush1.bf16.msra.mxu0 %v7970
    %10193 = vmatprep.subr.bf16.mxu0 0
    %10194 = vmatpush1.bf16.msra.mxu0 %v7977
    %10195 = vmatprep.subr.bf16.mxu0 0
    %10196 = vmatpush1.bf16.msra.mxu0 %v7984
    %10197 = vmatprep.subr.bf16.mxu0 0
    %10198 = vmatpush1.bf16.msra.mxu0 %v7991
    %10199 = vmatprep.subr.bf16.mxu0 0
    %10200 = vmatpush1.bf16.msra.mxu0 %v7998
    %10201 = vmatprep.subr.bf16.mxu0 0
    %10202 = vmatpush1.bf16.msra.mxu0 %v8005
    %10203 = vmatprep.subr.bf16.mxu0 0
    %10204 = vmatpush1.bf16.msra.mxu0 %v8012
    %10205 = vmatprep.subr.bf16.mxu0 0
    %10206 = vmatpush1.bf16.msra.mxu0 %v8019
    %10207 = vmatprep.subr.bf16.mxu0 0
    %10208 = vmatpush1.bf16.msra.mxu0 %v8026
    %10209 = vmatprep.subr.bf16.mxu0 0
    %10210 = vmatpush1.bf16.msra.mxu0 %v8033
    %10211 = vmatprep.subr.bf16.mxu0 0
    %10212 = vmatpush1.bf16.msra.mxu0 %v8040
    %10213 = vmatprep.subr.bf16.mxu0 0
    %10214 = vmatpush1.bf16.msra.mxu0 %v8047
    %10215 = vmatprep.subr.bf16.mxu0 0
    %10216 = vmatpush1.bf16.msra.mxu0 %v8054
    %10217 = vmatprep.subr.bf16.mxu0 0
    %10218 = vmatpush1.bf16.msra.mxu0 %v8061
    %10219 = vmatprep.mubr.bf16.mxu0 %v5820
    %10220 = vmatmul.mubr.bf16.gmra.mrb[0].mxu0 %v5819
    %v10221 = vpop.f32.mrb[0].mxu0
    %v10222 = vadd.f32 %v10125, %v10221
    %v10223 = vpop.f32.mrb[0].mxu0
    %v10224 = vpop.f32.mrb[0].mxu0
    %v10225 = vadd.f32 %v10128, %v10224
    %v10226 = vpop.f32.mrb[0].mxu0
    %10227 = vmatprep.mubr.bf16.mxu0 %v5828
    %10228 = vmatmul.mubr.bf16.gmra.mrb[0].mxu0 %v5827
    %v10229 = vpop.f32.mrb[0].mxu0
    %v10230 = vadd.f32 %v10133, %v10229
    %v10231 = vpop.f32.mrb[0].mxu0
    %v10232 = vpop.f32.mrb[0].mxu0
    %v10233 = vadd.f32 %v10136, %v10232
    %v10234 = vpop.f32.mrb[0].mxu0
    %10235 = vmatprep.mubr.bf16.mxu0 %v5836
    %10236 = vmatmul.mubr.bf16.gmra.mrb[0].mxu0 %v5835
    %v10237 = vpop.f32.mrb[0].mxu0
    %v10238 = vadd.f32 %v10141, %v10237
    %v10239 = vpop.f32.mrb[0].mxu0
    %v10240 = vpop.f32.mrb[0].mxu0
    %v10241 = vadd.f32 %v10144, %v10240
    %v10242 = vpop.f32.mrb[0].mxu0
    %10243 = vmatprep.mubr.bf16.mxu0 %v5844
    %10244 = vmatmul.mubr.bf16.gmra.mrb[0].mxu0 %v5843
    %v10245 = vpop.f32.mrb[0].mxu0
    %v10246 = vadd.f32 %v10149, %v10245
    %v10247 = vpop.f32.mrb[0].mxu0
    %v10248 = vpop.f32.mrb[0].mxu0
    %v10249 = vadd.f32 %v10152, %v10248
    %v10250 = vpop.f32.mrb[0].mxu0
    %10251 = vmatprep.mubr.bf16.mxu0 %v5852
    %10252 = vmatmul.mubr.bf16.gmra.mrb[0].mxu0 %v5851
    %v10253 = vpop.f32.mrb[0].mxu0
    %v10254 = vadd.f32 %v10157, %v10253
    %v10255 = vpop.f32.mrb[0].mxu0
    %v10256 = vpop.f32.mrb[0].mxu0
    %v10257 = vadd.f32 %v10160, %v10256
    %v10258 = vpop.f32.mrb[0].mxu0
    %10259 = vmatprep.mubr.bf16.mxu0 %v5860
    %10260 = vmatmul.mubr.bf16.gmra.mrb[0].mxu0 %v5859
    %v10261 = vpop.f32.mrb[0].mxu0
    %v10262 = vadd.f32 %v10165, %v10261
    %v10263 = vpop.f32.mrb[0].mxu0
    %v10264 = vpop.f32.mrb[0].mxu0
    %v10265 = vadd.f32 %v10168, %v10264
    %v10266 = vpop.f32.mrb[0].mxu0
    %10267 = vmatprep.mubr.bf16.mxu0 %v5868
    %10268 = vmatmul.mubr.bf16.gmra.mrb[0].mxu0 %v5867
    %v10269 = vpop.f32.mrb[0].mxu0
    %v10270 = vadd.f32 %v10173, %v10269
    %v10271 = vpop.f32.mrb[0].mxu0
    %v10272 = vpop.f32.mrb[0].mxu0
    %v10273 = vadd.f32 %v10176, %v10272
    %v10274 = vpop.f32.mrb[0].mxu0
    %10275 = vmatprep.mubr.bf16.mxu0 %v5876
    %10276 = vmatmul.mubr.bf16.gmra.mrb[0].mxu0 %v5875
    %v10277 = vpop.f32.mrb[0].mxu0
    %v10278 = vadd.f32 %v10181, %v10277
    %v10279 = vpop.f32.mrb[0].mxu0
    %v10280 = vpop.f32.mrb[0].mxu0
    %v10281 = vadd.f32 %v10184, %v10280
    %v10282 = vpop.f32.mrb[0].mxu0
    %10283 = vdwg.mxu0
    %10284 = vmatprep.subr.bf16.mxu0 0
    %10285 = vmatpush1.bf16.msra.mxu0 %v8068
    %10286 = vmatprep.subr.bf16.mxu0 0
    %10287 = vmatpush1.bf16.msra.mxu0 %v8075
    %10288 = vmatprep.subr.bf16.mxu0 0
    %10289 = vmatpush1.bf16.msra.mxu0 %v8082
    %10290 = vmatprep.subr.bf16.mxu0 0
    %10291 = vmatpush1.bf16.msra.mxu0 %v8089
    %10292 = vmatprep.subr.bf16.mxu0 0
    %10293 = vmatpush1.bf16.msra.mxu0 %v8096
    %10294 = vmatprep.subr.bf16.mxu0 0
    %10295 = vmatpush1.bf16.msra.mxu0 %v8103
    %10296 = vmatprep.subr.bf16.mxu0 0
    %10297 = vmatpush1.bf16.msra.mxu0 %v8110
    %10298 = vmatprep.subr.bf16.mxu0 0
    %10299 = vmatpush1.bf16.msra.mxu0 %v8117
    %10300 = vmatprep.subr.bf16.mxu0 0
    %10301 = vmatpush1.bf16.msra.mxu0 %v8124
    %10302 = vmatprep.subr.bf16.mxu0 0
    %10303 = vmatpush1.bf16.msra.mxu0 %v8131
    %10304 = vmatprep.subr.bf16.mxu0 0
    %10305 = vmatpush1.bf16.msra.mxu0 %v8138
    %10306 = vmatprep.subr.bf16.mxu0 0
    %10307 = vmatpush1.bf16.msra.mxu0 %v8145
    %10308 = vmatprep.subr.bf16.mxu0 0
    %10309 = vmatpush1.bf16.msra.mxu0 %v8152
    %10310 = vmatprep.subr.bf16.mxu0 0
    %10311 = vmatpush1.bf16.msra.mxu0 %v8159
    %10312 = vmatprep.subr.bf16.mxu0 0
    %10313 = vmatpush1.bf16.msra.mxu0 %v8166
    %10314 = vmatprep.subr.bf16.mxu0 0
    %10315 = vmatpush1.bf16.msra.mxu0 %v8173
    %10316 = vmatprep.mubr.bf16.mxu0 %v5822
    %10317 = vmatmul.mubr.bf16.gmra.mrb[0].mxu0 %v5821
    %v10318 = vpop.f32.mrb[0].mxu0
    %v10319 = vadd.f32 %v10222, %v10318
    %v10320 = vpop.f32.mrb[0].mxu0
    %v10321 = vpop.f32.mrb[0].mxu0
    %v10322 = vadd.f32 %v10225, %v10321
    %v10323 = vpop.f32.mrb[0].mxu0
    %10324 = vmatprep.mubr.bf16.mxu0 %v5830
    %10325 = vmatmul.mubr.bf16.gmra.mrb[0].mxu0 %v5829
    %v10326 = vpop.f32.mrb[0].mxu0
    %v10327 = vadd.f32 %v10230, %v10326
    %v10328 = vpop.f32.mrb[0].mxu0
    %v10329 = vpop.f32.mrb[0].mxu0
    %v10330 = vadd.f32 %v10233, %v10329
    %v10331 = vpop.f32.mrb[0].mxu0
    %10332 = vmatprep.mubr.bf16.mxu0 %v5838
    %10333 = vmatmul.mubr.bf16.gmra.mrb[0].mxu0 %v5837
    %v10334 = vpop.f32.mrb[0].mxu0
    %v10335 = vadd.f32 %v10238, %v10334
    %v10336 = vpop.f32.mrb[0].mxu0
    %v10337 = vpop.f32.mrb[0].mxu0
    %v10338 = vadd.f32 %v10241, %v10337
    %v10339 = vpop.f32.mrb[0].mxu0
    %10340 = vmatprep.mubr.bf16.mxu0 %v5846
    %10341 = vmatmul.mubr.bf16.gmra.mrb[0].mxu0 %v5845
    %v10342 = vpop.f32.mrb[0].mxu0
    %v10343 = vadd.f32 %v10246, %v10342
    %v10344 = vpop.f32.mrb[0].mxu0
    %v10345 = vpop.f32.mrb[0].mxu0
    %v10346 = vadd.f32 %v10249, %v10345
    %v10347 = vpop.f32.mrb[0].mxu0
    %10348 = vmatprep.mubr.bf16.mxu0 %v5854
    %10349 = vmatmul.mubr.bf16.gmra.mrb[0].mxu0 %v5853
    %v10350 = vpop.f32.mrb[0].mxu0
    %v10351 = vadd.f32 %v10254, %v10350
    %v10352 = vpop.f32.mrb[0].mxu0
    %v10353 = vpop.f32.mrb[0].mxu0
    %v10354 = vadd.f32 %v10257, %v10353
    %v10355 = vpop.f32.mrb[0].mxu0
    %10356 = vmatprep.mubr.bf16.mxu0 %v5862
    %10357 = vmatmul.mubr.bf16.gmra.mrb[0].mxu0 %v5861
    %v10358 = vpop.f32.mrb[0].mxu0
    %v10359 = vadd.f32 %v10262, %v10358
    %v10360 = vpop.f32.mrb[0].mxu0
    %v10361 = vpop.f32.mrb[0].mxu0
    %v10362 = vadd.f32 %v10265, %v10361
    %v10363 = vpop.f32.mrb[0].mxu0
    %10364 = vmatprep.mubr.bf16.mxu0 %v5870
    %10365 = vmatmul.mubr.bf16.gmra.mrb[0].mxu0 %v5869
    %v10366 = vpop.f32.mrb[0].mxu0
    %v10367 = vadd.f32 %v10270, %v10366
    %v10368 = vpop.f32.mrb[0].mxu0
    %v10369 = vpop.f32.mrb[0].mxu0
    %v10370 = vadd.f32 %v10273, %v10369
    %v10371 = vpop.f32.mrb[0].mxu0
    %10372 = vmatprep.mubr.bf16.mxu0 %v5878
    %10373 = vmatmul.mubr.bf16.gmra.mrb[0].mxu0 %v5877
    %v10374 = vpop.f32.mrb[0].mxu0
    %v10375 = vadd.f32 %v10278, %v10374
    %v10376 = vpop.f32.mrb[0].mxu0
    %v10377 = vpop.f32.mrb[0].mxu0
    %v10378 = vadd.f32 %v10281, %v10377
    %v10379 = vpop.f32.mrb[0].mxu0
    %10380 = vdwg.mxu0
    %10381 = vmatprep.subr.bf16.mxu0 0
    %10382 = vmatpush1.bf16.msra.mxu0 %v8180
    %10383 = vmatprep.subr.bf16.mxu0 0
    %10384 = vmatpush1.bf16.msra.mxu0 %v8187
    %10385 = vmatprep.subr.bf16.mxu0 0
    %10386 = vmatpush1.bf16.msra.mxu0 %v8194
    %10387 = vmatprep.subr.bf16.mxu0 0
    %10388 = vmatpush1.bf16.msra.mxu0 %v8201
    %10389 = vmatprep.subr.bf16.mxu0 0
    %10390 = vmatpush1.bf16.msra.mxu0 %v8208
    %10391 = vmatprep.subr.bf16.mxu0 0
    %10392 = vmatpush1.bf16.msra.mxu0 %v8215
    %10393 = vmatprep.subr.bf16.mxu0 0
    %10394 = vmatpush1.bf16.msra.mxu0 %v8222
    %10395 = vmatprep.subr.bf16.mxu0 0
    %10396 = vmatpush1.bf16.msra.mxu0 %v8229
    %10397 = vmatprep.subr.bf16.mxu0 0
    %10398 = vmatpush1.bf16.msra.mxu0 %v8236
    %10399 = vmatprep.subr.bf16.mxu0 0
    %10400 = vmatpush1.bf16.msra.mxu0 %v8243
    %10401 = vmatprep.subr.bf16.mxu0 0
    %10402 = vmatpush1.bf16.msra.mxu0 %v8250
    %10403 = vmatprep.subr.bf16.mxu0 0
    %10404 = vmatpush1.bf16.msra.mxu0 %v8257
    %10405 = vmatprep.subr.bf16.mxu0 0
    %10406 = vmatpush1.bf16.msra.mxu0 %v8264
    %10407 = vmatprep.subr.bf16.mxu0 0
    %10408 = vmatpush1.bf16.msra.mxu0 %v8271
    %10409 = vmatprep.subr.bf16.mxu0 0
    %10410 = vmatpush1.bf16.msra.mxu0 %v8278
    %10411 = vmatprep.subr.bf16.mxu0 0
    %10412 = vmatpush1.bf16.msra.mxu0 %v8285
    %10413 = vmatprep.mubr.bf16.mxu0 %v5824
    %10414 = vmatmul.mubr.bf16.gmra.mrb[0].mxu0 %v5823
    %v10415 = vpop.f32.mrb[0].mxu0
    %v10416 = vadd.f32 %v10319, %v10415
    %v10417 = vpop.f32.mrb[0].mxu0
    %v10418 = vpop.f32.mrb[0].mxu0
    %v10419 = vadd.f32 %v10322, %v10418
    %v10420 = vpop.f32.mrb[0].mxu0
    %10421 = vmatprep.mubr.bf16.mxu0 %v5832
    %10422 = vmatmul.mubr.bf16.gmra.mrb[0].mxu0 %v5831
    %v10423 = vpop.f32.mrb[0].mxu0
    %v10424 = vadd.f32 %v10327, %v10423
    %v10425 = vpop.f32.mrb[0].mxu0
    %v10426 = vpop.f32.mrb[0].mxu0
    %v10427 = vadd.f32 %v10330, %v10426
    %v10428 = vpop.f32.mrb[0].mxu0
    %10429 = vmatprep.mubr.bf16.mxu0 %v5840
    %10430 = vmatmul.mubr.bf16.gmra.mrb[0].mxu0 %v5839
    %v10431 = vpop.f32.mrb[0].mxu0
    %v10432 = vadd.f32 %v10335, %v10431
    %v10433 = vpop.f32.mrb[0].mxu0
    %v10434 = vpop.f32.mrb[0].mxu0
    %v10435 = vadd.f32 %v10338, %v10434
    %v10436 = vpop.f32.mrb[0].mxu0
    %10437 = vmatprep.mubr.bf16.mxu0 %v5848
    %10438 = vmatmul.mubr.bf16.gmra.mrb[0].mxu0 %v5847
    %v10439 = vpop.f32.mrb[0].mxu0
    %v10440 = vadd.f32 %v10343, %v10439
    %v10441 = vpop.f32.mrb[0].mxu0
    %v10442 = vpop.f32.mrb[0].mxu0
    %v10443 = vadd.f32 %v10346, %v10442
    %v10444 = vpop.f32.mrb[0].mxu0
    %10445 = vmatprep.mubr.bf16.mxu0 %v5856
    %10446 = vmatmul.mubr.bf16.gmra.mrb[0].mxu0 %v5855
    %v10447 = vpop.f32.mrb[0].mxu0
    %v10448 = vadd.f32 %v10351, %v10447
    %v10449 = vpop.f32.mrb[0].mxu0
    %v10450 = vpop.f32.mrb[0].mxu0
    %v10451 = vadd.f32 %v10354, %v10450
    %v10452 = vpop.f32.mrb[0].mxu0
    %10453 = vmatprep.mubr.bf16.mxu0 %v5864
    %10454 = vmatmul.mubr.bf16.gmra.mrb[0].mxu0 %v5863
    %v10455 = vpop.f32.mrb[0].mxu0
    %v10456 = vadd.f32 %v10359, %v10455
    %v10457 = vpop.f32.mrb[0].mxu0
    %v10458 = vpop.f32.mrb[0].mxu0
    %v10459 = vadd.f32 %v10362, %v10458
    %v10460 = vpop.f32.mrb[0].mxu0
    %10461 = vmatprep.mubr.bf16.mxu0 %v5872
    %10462 = vmatmul.mubr.bf16.gmra.mrb[0].mxu0 %v5871
    %v10463 = vpop.f32.mrb[0].mxu0
    %v10464 = vadd.f32 %v10367, %v10463
    %v10465 = vpop.f32.mrb[0].mxu0
    %v10466 = vpop.f32.mrb[0].mxu0
    %v10467 = vadd.f32 %v10370, %v10466
    %v10468 = vpop.f32.mrb[0].mxu0
    %10469 = vmatprep.mubr.bf16.mxu0 %v5880
    %10470 = vmatmul.mubr.bf16.gmra.mrb[0].mxu0 %v5879
    %v10471 = vpop.f32.mrb[0].mxu0
    %v10472 = vadd.f32 %v10375, %v10471
    %v10473 = vpop.f32.mrb[0].mxu0
    %v10474 = vpop.f32.mrb[0].mxu0
    %v10475 = vadd.f32 %v10378, %v10474
    %v10476 = vpop.f32.mrb[0].mxu0
    %10477 = vdwg.mxu0
    %v10478 = vxor.u32 %v9108, 2147483648
    %v10479 = vxor.u32 %v9110, 2147483648
    %v10480 = vxor.u32 %v9560, 2147483648
    %v10481 = vxor.u32 %v9562, 2147483648
    %v10482 = vxor.u32 %v10012, 2147483648
    %v10483 = vxor.u32 %v10014, 2147483648
    %v10484 = vxor.u32 %v10416, 2147483648
    %v10485 = vxor.u32 %v9112, 2147483648
    %v10486 = vxor.u32 %v9114, 2147483648
    %v10487 = vxor.u32 %v9564, 2147483648
    %v10488 = vxor.u32 %v9566, 2147483648
    %v10489 = vxor.u32 %v10016, 2147483648
    %v10490 = vxor.u32 %v10018, 2147483648
    %v10491 = vxor.u32 %v10419, 2147483648
    %v10492 = vxor.u32 %v9118, 2147483648
    %v10493 = vxor.u32 %v9120, 2147483648
    %v10494 = vxor.u32 %v9570, 2147483648
    %v10495 = vxor.u32 %v9572, 2147483648
    %v10496 = vxor.u32 %v10022, 2147483648
    %v10497 = vxor.u32 %v10024, 2147483648
    %v10498 = vxor.u32 %v10424, 2147483648
    %v10499 = vxor.u32 %v9122, 2147483648
    %v10500 = vxor.u32 %v9124, 2147483648
    %v10501 = vxor.u32 %v9574, 2147483648
    %v10502 = vxor.u32 %v9576, 2147483648
    %v10503 = vxor.u32 %v10026, 2147483648
    %v10504 = vxor.u32 %v10028, 2147483648
    %v10505 = vxor.u32 %v10427, 2147483648
    %v10506 = vxor.u32 %v9128, 2147483648
    %v10507 = vxor.u32 %v9130, 2147483648
    %v10508 = vxor.u32 %v9580, 2147483648
    %v10509 = vxor.u32 %v9582, 2147483648
    %v10510 = vxor.u32 %v10032, 2147483648
    %v10511 = vxor.u32 %v10034, 2147483648
    %v10512 = vxor.u32 %v10432, 2147483648
    %v10513 = vxor.u32 %v9132, 2147483648
    %v10514 = vxor.u32 %v9134, 2147483648
    %v10515 = vxor.u32 %v9584, 2147483648
    %v10516 = vxor.u32 %v9586, 2147483648
    %v10517 = vxor.u32 %v10036, 2147483648
    %v10518 = vxor.u32 %v10038, 2147483648
    %v10519 = vxor.u32 %v10435, 2147483648
    %v10520 = vxor.u32 %v9138, 2147483648
    %v10521 = vxor.u32 %v9140, 2147483648
    %v10522 = vxor.u32 %v9590, 2147483648
    %v10523 = vxor.u32 %v9592, 2147483648
    %v10524 = vxor.u32 %v10042, 2147483648
    %v10525 = vxor.u32 %v10044, 2147483648
    %v10526 = vxor.u32 %v10440, 2147483648
    %v10527 = vxor.u32 %v9142, 2147483648
    %v10528 = vxor.u32 %v9144, 2147483648
    %v10529 = vxor.u32 %v9594, 2147483648
    %v10530 = vxor.u32 %v9596, 2147483648
    %v10531 = vxor.u32 %v10046, 2147483648
    %v10532 = vxor.u32 %v10048, 2147483648
    %v10533 = vxor.u32 %v10443, 2147483648
    %v10534 = vxor.u32 %v9148, 2147483648
    %v10535 = vxor.u32 %v9150, 2147483648
    %v10536 = vxor.u32 %v9600, 2147483648
    %v10537 = vxor.u32 %v9602, 2147483648
    %v10538 = vxor.u32 %v10052, 2147483648
    %v10539 = vxor.u32 %v10054, 2147483648
    %v10540 = vxor.u32 %v10448, 2147483648
    %v10541 = vxor.u32 %v9152, 2147483648
    %v10542 = vxor.u32 %v9154, 2147483648
    %v10543 = vxor.u32 %v9604, 2147483648
    %v10544 = vxor.u32 %v9606, 2147483648
    %v10545 = vxor.u32 %v10056, 2147483648
    %v10546 = vxor.u32 %v10058, 2147483648
    %v10547 = vxor.u32 %v10451, 2147483648
    %v10548 = vxor.u32 %v9158, 2147483648
    %v10549 = vxor.u32 %v9160, 2147483648
    %v10550 = vxor.u32 %v9610, 2147483648
    %v10551 = vxor.u32 %v9612, 2147483648
    %v10552 = vxor.u32 %v10062, 2147483648
    %v10553 = vxor.u32 %v10064, 2147483648
    %v10554 = vxor.u32 %v10456, 2147483648
    %v10555 = vxor.u32 %v9162, 2147483648
    %v10556 = vxor.u32 %v9164, 2147483648
    %v10557 = vxor.u32 %v9614, 2147483648
    %v10558 = vxor.u32 %v9616, 2147483648
    %v10559 = vxor.u32 %v10066, 2147483648
    %v10560 = vxor.u32 %v10068, 2147483648
    %v10561 = vxor.u32 %v10459, 2147483648
    %v10562 = vxor.u32 %v9168, 2147483648
    %v10563 = vxor.u32 %v9170, 2147483648
    %v10564 = vxor.u32 %v9620, 2147483648
    %v10565 = vxor.u32 %v9622, 2147483648
    %v10566 = vxor.u32 %v10072, 2147483648
    %v10567 = vxor.u32 %v10074, 2147483648
    %v10568 = vxor.u32 %v10464, 2147483648
    %v10569 = vxor.u32 %v9172, 2147483648
    %v10570 = vxor.u32 %v9174, 2147483648
    %v10571 = vxor.u32 %v9624, 2147483648
    %v10572 = vxor.u32 %v9626, 2147483648
    %v10573 = vxor.u32 %v10076, 2147483648
    %v10574 = vxor.u32 %v10078, 2147483648
    %v10575 = vxor.u32 %v10467, 2147483648
    %v10576 = vxor.u32 %v9178, 2147483648
    %v10577 = vxor.u32 %v9180, 2147483648
    %v10578 = vxor.u32 %v9630, 2147483648
    %v10579 = vxor.u32 %v9632, 2147483648
    %v10580 = vxor.u32 %v10082, 2147483648
    %v10581 = vxor.u32 %v10084, 2147483648
    %v10582 = vxor.u32 %v10472, 2147483648
    %v10583 = vxor.u32 %v9182, 2147483648
    %v10584 = vxor.u32 %v9184, 2147483648
    %v10585 = vxor.u32 %v9634, 2147483648
    %v10586 = vxor.u32 %v9636, 2147483648
    %v10587 = vxor.u32 %v10086, 2147483648
    %v10588 = vxor.u32 %v10088, 2147483648
    %v10589 = vxor.u32 %v10475, 2147483648
    %v10590 = vmul.f32 %v10478, 1.442695
    %v10591 = vpow.pop %v10590
    %v10592 = vmul.f32 %v10479, 1.442695
    %v10593 = vpow.pop %v10592
    %v10594 = vmul.f32 %v10480, 1.442695
    %v10595 = vpow.pop %v10594
    %v10596 = vmul.f32 %v10481, 1.442695
    %v10597 = vpow.pop %v10596
    %v10598 = vmul.f32 %v10482, 1.442695
    %v10599 = vpow.pop %v10598
    %v10600 = vmul.f32 %v10483, 1.442695
    %v10601 = vpow.pop %v10600
    %v10602 = vmul.f32 %v10484, 1.442695
    %v10603 = vpow.pop %v10602
    %v10604 = vmul.f32 %v10485, 1.442695
    %v10605 = vpow.pop %v10604
    %v10606 = vmul.f32 %v10486, 1.442695
    %v10607 = vpow.pop %v10606
    %v10608 = vmul.f32 %v10487, 1.442695
    %v10609 = vpow.pop %v10608
    %v10610 = vmul.f32 %v10488, 1.442695
    %v10611 = vpow.pop %v10610
    %v10612 = vmul.f32 %v10489, 1.442695
    %v10613 = vpow.pop %v10612
    %v10614 = vmul.f32 %v10490, 1.442695
    %v10615 = vpow.pop %v10614
    %v10616 = vmul.f32 %v10491, 1.442695
    %v10617 = vpow.pop %v10616
    %v10618 = vmul.f32 %v10492, 1.442695
    %v10619 = vpow.pop %v10618
    %v10620 = vmul.f32 %v10493, 1.442695
    %v10621 = vpow.pop %v10620
    %v10622 = vmul.f32 %v10494, 1.442695
    %v10623 = vpow.pop %v10622
    %v10624 = vmul.f32 %v10495, 1.442695
    %v10625 = vpow.pop %v10624
    %v10626 = vmul.f32 %v10496, 1.442695
    %v10627 = vpow.pop %v10626
    %v10628 = vmul.f32 %v10497, 1.442695
    %v10629 = vpow.pop %v10628
    %v10630 = vmul.f32 %v10498, 1.442695
    %v10631 = vpow.pop %v10630
    %v10632 = vmul.f32 %v10499, 1.442695
    %v10633 = vpow.pop %v10632
    %v10634 = vmul.f32 %v10500, 1.442695
    %v10635 = vpow.pop %v10634
    %v10636 = vmul.f32 %v10501, 1.442695
    %v10637 = vpow.pop %v10636
    %v10638 = vmul.f32 %v10502, 1.442695
    %v10639 = vpow.pop %v10638
    %v10640 = vmul.f32 %v10503, 1.442695
    %v10641 = vpow.pop %v10640
    %v10642 = vmul.f32 %v10504, 1.442695
    %v10643 = vpow.pop %v10642
    %v10644 = vmul.f32 %v10505, 1.442695
    %v10645 = vpow.pop %v10644
    %v10646 = vmul.f32 %v10506, 1.442695
    %v10647 = vpow.pop %v10646
    %v10648 = vmul.f32 %v10507, 1.442695
    %v10649 = vpow.pop %v10648
    %v10650 = vmul.f32 %v10508, 1.442695
    %v10651 = vpow.pop %v10650
    %v10652 = vmul.f32 %v10509, 1.442695
    %v10653 = vpow.pop %v10652
    %v10654 = vmul.f32 %v10510, 1.442695
    %v10655 = vpow.pop %v10654
    %v10656 = vmul.f32 %v10511, 1.442695
    %v10657 = vpow.pop %v10656
    %v10658 = vmul.f32 %v10512, 1.442695
    %v10659 = vpow.pop %v10658
    %v10660 = vmul.f32 %v10513, 1.442695
    %v10661 = vpow.pop %v10660
    %v10662 = vmul.f32 %v10514, 1.442695
    %v10663 = vpow.pop %v10662
    %v10664 = vmul.f32 %v10515, 1.442695
    %v10665 = vpow.pop %v10664
    %v10666 = vmul.f32 %v10516, 1.442695
    %v10667 = vpow.pop %v10666
    %v10668 = vmul.f32 %v10517, 1.442695
    %v10669 = vpow.pop %v10668
    %v10670 = vmul.f32 %v10518, 1.442695
    %v10671 = vpow.pop %v10670
    %v10672 = vmul.f32 %v10519, 1.442695
    %v10673 = vpow.pop %v10672
    %v10674 = vmul.f32 %v10520, 1.442695
    %v10675 = vpow.pop %v10674
    %v10676 = vmul.f32 %v10521, 1.442695
    %v10677 = vpow.pop %v10676
    %v10678 = vmul.f32 %v10522, 1.442695
    %v10679 = vpow.pop %v10678
    %v10680 = vmul.f32 %v10523, 1.442695
    %v10681 = vpow.pop %v10680
    %v10682 = vmul.f32 %v10524, 1.442695
    %v10683 = vpow.pop %v10682
    %v10684 = vmul.f32 %v10525, 1.442695
    %v10685 = vpow.pop %v10684
    %v10686 = vmul.f32 %v10526, 1.442695
    %v10687 = vpow.pop %v10686
    %v10688 = vmul.f32 %v10527, 1.442695
    %v10689 = vpow.pop %v10688
    %v10690 = vmul.f32 %v10528, 1.442695
    %v10691 = vpow.pop %v10690
    %v10692 = vmul.f32 %v10529, 1.442695
    %v10693 = vpow.pop %v10692
    %v10694 = vmul.f32 %v10530, 1.442695
    %v10695 = vpow.pop %v10694
    %v10696 = vmul.f32 %v10531, 1.442695
    %v10697 = vpow.pop %v10696
    %v10698 = vmul.f32 %v10532, 1.442695
    %v10699 = vpow.pop %v10698
    %v10700 = vmul.f32 %v10533, 1.442695
    %v10701 = vpow.pop %v10700
    %v10702 = vmul.f32 %v10534, 1.442695
    %v10703 = vpow.pop %v10702
    %v10704 = vmul.f32 %v10535, 1.442695
    %v10705 = vpow.pop %v10704
    %v10706 = vmul.f32 %v10536, 1.442695
    %v10707 = vpow.pop %v10706
    %v10708 = vmul.f32 %v10537, 1.442695
    %v10709 = vpow.pop %v10708
    %v10710 = vmul.f32 %v10538, 1.442695
    %v10711 = vpow.pop %v10710
    %v10712 = vmul.f32 %v10539, 1.442695
    %v10713 = vpow.pop %v10712
    %v10714 = vmul.f32 %v10540, 1.442695
    %v10715 = vpow.pop %v10714
    %v10716 = vmul.f32 %v10541, 1.442695
    %v10717 = vpow.pop %v10716
    %v10718 = vmul.f32 %v10542, 1.442695
    %v10719 = vpow.pop %v10718
    %v10720 = vmul.f32 %v10543, 1.442695
    %v10721 = vpow.pop %v10720
    %v10722 = vmul.f32 %v10544, 1.442695
    %v10723 = vpow.pop %v10722
    %v10724 = vmul.f32 %v10545, 1.442695
    %v10725 = vpow.pop %v10724
    %v10726 = vmul.f32 %v10546, 1.442695
    %v10727 = vpow.pop %v10726
    %v10728 = vmul.f32 %v10547, 1.442695
    %v10729 = vpow.pop %v10728
    %v10730 = vmul.f32 %v10548, 1.442695
    %v10731 = vpow.pop %v10730
    %v10732 = vmul.f32 %v10549, 1.442695
    %v10733 = vpow.pop %v10732
    %v10734 = vmul.f32 %v10550, 1.442695
    %v10735 = vpow.pop %v10734
    %v10736 = vmul.f32 %v10551, 1.442695
    %v10737 = vpow.pop %v10736
    %v10738 = vmul.f32 %v10552, 1.442695
    %v10739 = vpow.pop %v10738
    %v10740 = vmul.f32 %v10553, 1.442695
    %v10741 = vpow.pop %v10740
    %v10742 = vmul.f32 %v10554, 1.442695
    %v10743 = vpow.pop %v10742
    %v10744 = vmul.f32 %v10555, 1.442695
    %v10745 = vpow.pop %v10744
    %v10746 = vmul.f32 %v10556, 1.442695
    %v10747 = vpow.pop %v10746
    %v10748 = vmul.f32 %v10557, 1.442695
    %v10749 = vpow.pop %v10748
    %v10750 = vmul.f32 %v10558, 1.442695
    %v10751 = vpow.pop %v10750
    %v10752 = vmul.f32 %v10559, 1.442695
    %v10753 = vpow.pop %v10752
    %v10754 = vmul.f32 %v10560, 1.442695
    %v10755 = vpow.pop %v10754
    %v10756 = vmul.f32 %v10561, 1.442695
    %v10757 = vpow.pop %v10756
    %v10758 = vmul.f32 %v10562, 1.442695
    %v10759 = vpow.pop %v10758
    %v10760 = vmul.f32 %v10563, 1.442695
    %v10761 = vpow.pop %v10760
    %v10762 = vmul.f32 %v10564, 1.442695
    %v10763 = vpow.pop %v10762
    %v10764 = vmul.f32 %v10565, 1.442695
    %v10765 = vpow.pop %v10764
    %v10766 = vmul.f32 %v10566, 1.442695
    %v10767 = vpow.pop %v10766
    %v10768 = vmul.f32 %v10567, 1.442695
    %v10769 = vpow.pop %v10768
    %v10770 = vmul.f32 %v10568, 1.442695
    %v10771 = vpow.pop %v10770
    %v10772 = vmul.f32 %v10569, 1.442695
    %v10773 = vpow.pop %v10772
    %v10774 = vmul.f32 %v10570, 1.442695
    %v10775 = vpow.pop %v10774
    %v10776 = vmul.f32 %v10571, 1.442695
    %v10777 = vpow.pop %v10776
    %v10778 = vmul.f32 %v10572, 1.442695
    %v10779 = vpow.pop %v10778
    %v10780 = vmul.f32 %v10573, 1.442695
    %v10781 = vpow.pop %v10780
    %v10782 = vmul.f32 %v10574, 1.442695
    %v10783 = vpow.pop %v10782
    %v10784 = vmul.f32 %v10575, 1.442695
    %v10785 = vpow.pop %v10784
    %v10786 = vmul.f32 %v10576, 1.442695
    %v10787 = vpow.pop %v10786
    %v10788 = vmul.f32 %v10577, 1.442695
    %v10789 = vpow.pop %v10788
    %v10790 = vmul.f32 %v10578, 1.442695
    %v10791 = vpow.pop %v10790
    %v10792 = vmul.f32 %v10579, 1.442695
    %v10793 = vpow.pop %v10792
    %v10794 = vmul.f32 %v10580, 1.442695
    %v10795 = vpow.pop %v10794
    %v10796 = vmul.f32 %v10581, 1.442695
    %v10797 = vpow.pop %v10796
    %v10798 = vmul.f32 %v10582, 1.442695
    %v10799 = vpow.pop %v10798
    %v10800 = vmul.f32 %v10583, 1.442695
    %v10801 = vpow.pop %v10800
    %v10802 = vmul.f32 %v10584, 1.442695
    %v10803 = vpow.pop %v10802
    %v10804 = vmul.f32 %v10585, 1.442695
    %v10805 = vpow.pop %v10804
    %v10806 = vmul.f32 %v10586, 1.442695
    %v10807 = vpow.pop %v10806
    %v10808 = vmul.f32 %v10587, 1.442695
    %v10809 = vpow.pop %v10808
    %v10810 = vmul.f32 %v10588, 1.442695
    %v10811 = vpow.pop %v10810
    %v10812 = vmul.f32 %v10589, 1.442695
    %v10813 = vpow.pop %v10812
    %v10814 = vadd.f32 %v10591, 1.0
    %v10815 = vadd.f32 %v10593, 1.0
    %v10816 = vadd.f32 %v10595, 1.0
    %v10817 = vadd.f32 %v10597, 1.0
    %v10818 = vadd.f32 %v10599, 1.0
    %v10819 = vadd.f32 %v10601, 1.0
    %v10820 = vadd.f32 %v10603, 1.0
    %v10821 = vadd.f32 %v10605, 1.0
    %v10822 = vadd.f32 %v10607, 1.0
    %v10823 = vadd.f32 %v10609, 1.0
    %v10824 = vadd.f32 %v10611, 1.0
    %v10825 = vadd.f32 %v10613, 1.0
    %v10826 = vadd.f32 %v10615, 1.0
    %v10827 = vadd.f32 %v10617, 1.0
    %v10828 = vadd.f32 %v10619, 1.0
    %v10829 = vadd.f32 %v10621, 1.0
    %v10830 = vadd.f32 %v10623, 1.0
    %v10831 = vadd.f32 %v10625, 1.0
    %v10832 = vadd.f32 %v10627, 1.0
    %v10833 = vadd.f32 %v10629, 1.0
    %v10834 = vadd.f32 %v10631, 1.0
    %v10835 = vadd.f32 %v10633, 1.0
    %v10836 = vadd.f32 %v10635, 1.0
    %v10837 = vadd.f32 %v10637, 1.0
    %v10838 = vadd.f32 %v10639, 1.0
    %v10839 = vadd.f32 %v10641, 1.0
    %v10840 = vadd.f32 %v10643, 1.0
    %v10841 = vadd.f32 %v10645, 1.0
    %v10842 = vadd.f32 %v10647, 1.0
    %v10843 = vadd.f32 %v10649, 1.0
    %v10844 = vadd.f32 %v10651, 1.0
    %v10845 = vadd.f32 %v10653, 1.0
    %v10846 = vadd.f32 %v10655, 1.0
    %v10847 = vadd.f32 %v10657, 1.0
    %v10848 = vadd.f32 %v10659, 1.0
    %v10849 = vadd.f32 %v10661, 1.0
    %v10850 = vadd.f32 %v10663, 1.0
    %v10851 = vadd.f32 %v10665, 1.0
    %v10852 = vadd.f32 %v10667, 1.0
    %v10853 = vadd.f32 %v10669, 1.0
    %v10854 = vadd.f32 %v10671, 1.0
    %v10855 = vadd.f32 %v10673, 1.0
    %v10856 = vadd.f32 %v10675, 1.0
    %v10857 = vadd.f32 %v10677, 1.0
    %v10858 = vadd.f32 %v10679, 1.0
    %v10859 = vadd.f32 %v10681, 1.0
    %v10860 = vadd.f32 %v10683, 1.0
    %v10861 = vadd.f32 %v10685, 1.0
    %v10862 = vadd.f32 %v10687, 1.0
    %v10863 = vadd.f32 %v10689, 1.0
    %v10864 = vadd.f32 %v10691, 1.0
    %v10865 = vadd.f32 %v10693, 1.0
    %v10866 = vadd.f32 %v10695, 1.0
    %v10867 = vadd.f32 %v10697, 1.0
    %v10868 = vadd.f32 %v10699, 1.0
    %v10869 = vadd.f32 %v10701, 1.0
    %v10870 = vadd.f32 %v10703, 1.0
    %v10871 = vadd.f32 %v10705, 1.0
    %v10872 = vadd.f32 %v10707, 1.0
    %v10873 = vadd.f32 %v10709, 1.0
    %v10874 = vadd.f32 %v10711, 1.0
    %v10875 = vadd.f32 %v10713, 1.0
    %v10876 = vadd.f32 %v10715, 1.0
    %v10877 = vadd.f32 %v10717, 1.0
    %v10878 = vadd.f32 %v10719, 1.0
    %v10879 = vadd.f32 %v10721, 1.0
    %v10880 = vadd.f32 %v10723, 1.0
    %v10881 = vadd.f32 %v10725, 1.0
    %v10882 = vadd.f32 %v10727, 1.0
    %v10883 = vadd.f32 %v10729, 1.0
    %v10884 = vadd.f32 %v10731, 1.0
    %v10885 = vadd.f32 %v10733, 1.0
    %v10886 = vadd.f32 %v10735, 1.0
    %v10887 = vadd.f32 %v10737, 1.0
    %v10888 = vadd.f32 %v10739, 1.0
    %v10889 = vadd.f32 %v10741, 1.0
    %v10890 = vadd.f32 %v10743, 1.0
    %v10891 = vadd.f32 %v10745, 1.0
    %v10892 = vadd.f32 %v10747, 1.0
    %v10893 = vadd.f32 %v10749, 1.0
    %v10894 = vadd.f32 %v10751, 1.0
    %v10895 = vadd.f32 %v10753, 1.0
    %v10896 = vadd.f32 %v10755, 1.0
    %v10897 = vadd.f32 %v10757, 1.0
    %v10898 = vadd.f32 %v10759, 1.0
    %v10899 = vadd.f32 %v10761, 1.0
    %v10900 = vadd.f32 %v10763, 1.0
    %v10901 = vadd.f32 %v10765, 1.0
    %v10902 = vadd.f32 %v10767, 1.0
    %v10903 = vadd.f32 %v10769, 1.0
    %v10904 = vadd.f32 %v10771, 1.0
    %v10905 = vadd.f32 %v10773, 1.0
    %v10906 = vadd.f32 %v10775, 1.0
    %v10907 = vadd.f32 %v10777, 1.0
    %v10908 = vadd.f32 %v10779, 1.0
    %v10909 = vadd.f32 %v10781, 1.0
    %v10910 = vadd.f32 %v10783, 1.0
    %v10911 = vadd.f32 %v10785, 1.0
    %v10912 = vadd.f32 %v10787, 1.0
    %v10913 = vadd.f32 %v10789, 1.0
    %v10914 = vadd.f32 %v10791, 1.0
    %v10915 = vadd.f32 %v10793, 1.0
    %v10916 = vadd.f32 %v10795, 1.0
    %v10917 = vadd.f32 %v10797, 1.0
    %v10918 = vadd.f32 %v10799, 1.0
    %v10919 = vadd.f32 %v10801, 1.0
    %v10920 = vadd.f32 %v10803, 1.0
    %v10921 = vadd.f32 %v10805, 1.0
    %v10922 = vadd.f32 %v10807, 1.0
    %v10923 = vadd.f32 %v10809, 1.0
    %v10924 = vadd.f32 %v10811, 1.0
    %v10925 = vadd.f32 %v10813, 1.0
    %v10926 = vrcp.pop %v10814
    %v10927 = vmul.f32 1.0, %v10926
    %v10928 = vrcp.pop %v10815
    %v10929 = vmul.f32 1.0, %v10928
    %v10930 = vrcp.pop %v10816
    %v10931 = vmul.f32 1.0, %v10930
    %v10932 = vrcp.pop %v10817
    %v10933 = vmul.f32 1.0, %v10932
    %v10934 = vrcp.pop %v10818
    %v10935 = vmul.f32 1.0, %v10934
    %v10936 = vrcp.pop %v10819
    %v10937 = vmul.f32 1.0, %v10936
    %v10938 = vrcp.pop %v10820
    %v10939 = vmul.f32 1.0, %v10938
    %v10940 = vrcp.pop %v10821
    %v10941 = vmul.f32 1.0, %v10940
    %v10942 = vrcp.pop %v10822
    %v10943 = vmul.f32 1.0, %v10942
    %v10944 = vrcp.pop %v10823
    %v10945 = vmul.f32 1.0, %v10944
    %v10946 = vrcp.pop %v10824
    %v10947 = vmul.f32 1.0, %v10946
    %v10948 = vrcp.pop %v10825
    %v10949 = vmul.f32 1.0, %v10948
    %v10950 = vrcp.pop %v10826
    %v10951 = vmul.f32 1.0, %v10950
    %v10952 = vrcp.pop %v10827
    %v10953 = vmul.f32 1.0, %v10952
    %v10954 = vrcp.pop %v10828
    %v10955 = vmul.f32 1.0, %v10954
    %v10956 = vrcp.pop %v10829
    %v10957 = vmul.f32 1.0, %v10956
    %v10958 = vrcp.pop %v10830
    %v10959 = vmul.f32 1.0, %v10958
    %v10960 = vrcp.pop %v10831
    %v10961 = vmul.f32 1.0, %v10960
    %v10962 = vrcp.pop %v10832
    %v10963 = vmul.f32 1.0, %v10962
    %v10964 = vrcp.pop %v10833
    %v10965 = vmul.f32 1.0, %v10964
    %v10966 = vrcp.pop %v10834
    %v10967 = vmul.f32 1.0, %v10966
    %v10968 = vrcp.pop %v10835
    %v10969 = vmul.f32 1.0, %v10968
    %v10970 = vrcp.pop %v10836
    %v10971 = vmul.f32 1.0, %v10970
    %v10972 = vrcp.pop %v10837
    %v10973 = vmul.f32 1.0, %v10972
    %v10974 = vrcp.pop %v10838
    %v10975 = vmul.f32 1.0, %v10974
    %v10976 = vrcp.pop %v10839
    %v10977 = vmul.f32 1.0, %v10976
    %v10978 = vrcp.pop %v10840
    %v10979 = vmul.f32 1.0, %v10978
    %v10980 = vrcp.pop %v10841
    %v10981 = vmul.f32 1.0, %v10980
    %v10982 = vrcp.pop %v10842
    %v10983 = vmul.f32 1.0, %v10982
    %v10984 = vrcp.pop %v10843
    %v10985 = vmul.f32 1.0, %v10984
    %v10986 = vrcp.pop %v10844
    %v10987 = vmul.f32 1.0, %v10986
    %v10988 = vrcp.pop %v10845
    %v10989 = vmul.f32 1.0, %v10988
    %v10990 = vrcp.pop %v10846
    %v10991 = vmul.f32 1.0, %v10990
    %v10992 = vrcp.pop %v10847
    %v10993 = vmul.f32 1.0, %v10992
    %v10994 = vrcp.pop %v10848
    %v10995 = vmul.f32 1.0, %v10994
    %v10996 = vrcp.pop %v10849
    %v10997 = vmul.f32 1.0, %v10996
    %v10998 = vrcp.pop %v10850
    %v10999 = vmul.f32 1.0, %v10998
    %v11000 = vrcp.pop %v10851
    %v11001 = vmul.f32 1.0, %v11000
    %v11002 = vrcp.pop %v10852
    %v11003 = vmul.f32 1.0, %v11002
    %v11004 = vrcp.pop %v10853
    %v11005 = vmul.f32 1.0, %v11004
    %v11006 = vrcp.pop %v10854
    %v11007 = vmul.f32 1.0, %v11006
    %v11008 = vrcp.pop %v10855
    %v11009 = vmul.f32 1.0, %v11008
    %v11010 = vrcp.pop %v10856
    %v11011 = vmul.f32 1.0, %v11010
    %v11012 = vrcp.pop %v10857
    %v11013 = vmul.f32 1.0, %v11012
    %v11014 = vrcp.pop %v10858
    %v11015 = vmul.f32 1.0, %v11014
    %v11016 = vrcp.pop %v10859
    %v11017 = vmul.f32 1.0, %v11016
    %v11018 = vrcp.pop %v10860
    %v11019 = vmul.f32 1.0, %v11018
    %v11020 = vrcp.pop %v10861
    %v11021 = vmul.f32 1.0, %v11020
    %v11022 = vrcp.pop %v10862
    %v11023 = vmul.f32 1.0, %v11022
    %v11024 = vrcp.pop %v10863
    %v11025 = vmul.f32 1.0, %v11024
    %v11026 = vrcp.pop %v10864
    %v11027 = vmul.f32 1.0, %v11026
    %v11028 = vrcp.pop %v10865
    %v11029 = vmul.f32 1.0, %v11028
    %v11030 = vrcp.pop %v10866
    %v11031 = vmul.f32 1.0, %v11030
    %v11032 = vrcp.pop %v10867
    %v11033 = vmul.f32 1.0, %v11032
    %v11034 = vrcp.pop %v10868
    %v11035 = vmul.f32 1.0, %v11034
    %v11036 = vrcp.pop %v10869
    %v11037 = vmul.f32 1.0, %v11036
    %v11038 = vrcp.pop %v10870
    %v11039 = vmul.f32 1.0, %v11038
    %v11040 = vrcp.pop %v10871
    %v11041 = vmul.f32 1.0, %v11040
    %v11042 = vrcp.pop %v10872
    %v11043 = vmul.f32 1.0, %v11042
    %v11044 = vrcp.pop %v10873
    %v11045 = vmul.f32 1.0, %v11044
    %v11046 = vrcp.pop %v10874
    %v11047 = vmul.f32 1.0, %v11046
    %v11048 = vrcp.pop %v10875
    %v11049 = vmul.f32 1.0, %v11048
    %v11050 = vrcp.pop %v10876
    %v11051 = vmul.f32 1.0, %v11050
    %v11052 = vrcp.pop %v10877
    %v11053 = vmul.f32 1.0, %v11052
    %v11054 = vrcp.pop %v10878
    %v11055 = vmul.f32 1.0, %v11054
    %v11056 = vrcp.pop %v10879
    %v11057 = vmul.f32 1.0, %v11056
    %v11058 = vrcp.pop %v10880
    %v11059 = vmul.f32 1.0, %v11058
    %v11060 = vrcp.pop %v10881
    %v11061 = vmul.f32 1.0, %v11060
    %v11062 = vrcp.pop %v10882
    %v11063 = vmul.f32 1.0, %v11062
    %v11064 = vrcp.pop %v10883
    %v11065 = vmul.f32 1.0, %v11064
    %v11066 = vrcp.pop %v10884
    %v11067 = vmul.f32 1.0, %v11066
    %v11068 = vrcp.pop %v10885
    %v11069 = vmul.f32 1.0, %v11068
    %v11070 = vrcp.pop %v10886
    %v11071 = vmul.f32 1.0, %v11070
    %v11072 = vrcp.pop %v10887
    %v11073 = vmul.f32 1.0, %v11072
    %v11074 = vrcp.pop %v10888
    %v11075 = vmul.f32 1.0, %v11074
    %v11076 = vrcp.pop %v10889
    %v11077 = vmul.f32 1.0, %v11076
    %v11078 = vrcp.pop %v10890
    %v11079 = vmul.f32 1.0, %v11078
    %v11080 = vrcp.pop %v10891
    %v11081 = vmul.f32 1.0, %v11080
    %v11082 = vrcp.pop %v10892
    %v11083 = vmul.f32 1.0, %v11082
    %v11084 = vrcp.pop %v10893
    %v11085 = vmul.f32 1.0, %v11084
    %v11086 = vrcp.pop %v10894
    %v11087 = vmul.f32 1.0, %v11086
    %v11088 = vrcp.pop %v10895
    %v11089 = vmul.f32 1.0, %v11088
    %v11090 = vrcp.pop %v10896
    %v11091 = vmul.f32 1.0, %v11090
    %v11092 = vrcp.pop %v10897
    %v11093 = vmul.f32 1.0, %v11092
    %v11094 = vrcp.pop %v10898
    %v11095 = vmul.f32 1.0, %v11094
    %v11096 = vrcp.pop %v10899
    %v11097 = vmul.f32 1.0, %v11096
    %v11098 = vrcp.pop %v10900
    %v11099 = vmul.f32 1.0, %v11098
    %v11100 = vrcp.pop %v10901
    %v11101 = vmul.f32 1.0, %v11100
    %v11102 = vrcp.pop %v10902
    %v11103 = vmul.f32 1.0, %v11102
    %v11104 = vrcp.pop %v10903
    %v11105 = vmul.f32 1.0, %v11104
    %v11106 = vrcp.pop %v10904
    %v11107 = vmul.f32 1.0, %v11106
    %v11108 = vrcp.pop %v10905
    %v11109 = vmul.f32 1.0, %v11108
    %v11110 = vrcp.pop %v10906
    %v11111 = vmul.f32 1.0, %v11110
    %v11112 = vrcp.pop %v10907
    %v11113 = vmul.f32 1.0, %v11112
    %v11114 = vrcp.pop %v10908
    %v11115 = vmul.f32 1.0, %v11114
    %v11116 = vrcp.pop %v10909
    %v11117 = vmul.f32 1.0, %v11116
    %v11118 = vrcp.pop %v10910
    %v11119 = vmul.f32 1.0, %v11118
    %v11120 = vrcp.pop %v10911
    %v11121 = vmul.f32 1.0, %v11120
    %v11122 = vrcp.pop %v10912
    %v11123 = vmul.f32 1.0, %v11122
    %v11124 = vrcp.pop %v10913
    %v11125 = vmul.f32 1.0, %v11124
    %v11126 = vrcp.pop %v10914
    %v11127 = vmul.f32 1.0, %v11126
    %v11128 = vrcp.pop %v10915
    %v11129 = vmul.f32 1.0, %v11128
    %v11130 = vrcp.pop %v10916
    %v11131 = vmul.f32 1.0, %v11130
    %v11132 = vrcp.pop %v10917
    %v11133 = vmul.f32 1.0, %v11132
    %v11134 = vrcp.pop %v10918
    %v11135 = vmul.f32 1.0, %v11134
    %v11136 = vrcp.pop %v10919
    %v11137 = vmul.f32 1.0, %v11136
    %v11138 = vrcp.pop %v10920
    %v11139 = vmul.f32 1.0, %v11138
    %v11140 = vrcp.pop %v10921
    %v11141 = vmul.f32 1.0, %v11140
    %v11142 = vrcp.pop %v10922
    %v11143 = vmul.f32 1.0, %v11142
    %v11144 = vrcp.pop %v10923
    %v11145 = vmul.f32 1.0, %v11144
    %v11146 = vrcp.pop %v10924
    %v11147 = vmul.f32 1.0, %v11146
    %v11148 = vrcp.pop %v10925
    %v11149 = vmul.f32 1.0, %v11148
    %11150 = vst [vmem:[%s15] sm:$0xff] %v10927
    %11151 = vst [vmem:[%s15 + $0x8] sm:$0xff] %v10929
    %11152 = vst [vmem:[%s15 + $0x10] sm:$0xff] %v10931
    %11153 = vst [vmem:[%s15 + $0x18] sm:$0xff] %v10933
    %11154 = vst [vmem:[%s15 + $0x20] sm:$0xff] %v10935
    %11155 = vst [vmem:[%s15 + $0x28] sm:$0xff] %v10937
    %11156 = vst [vmem:[%s15 + $0x30] sm:$0xff] %v10939
    %11157 = vst [vmem:[%s15 + $0x38] sm:$0xff] %v10941
    %11158 = vst [vmem:[%s15 + $0x40] sm:$0xff] %v10943
    %11159 = vst [vmem:[%s15 + $0x48] sm:$0xff] %v10945
    %11160 = vst [vmem:[%s15 + $0x50] sm:$0xff] %v10947
    %11161 = vst [vmem:[%s15 + $0x58] sm:$0xff] %v10949
    %11162 = vst [vmem:[%s15 + $0x60] sm:$0xff] %v10951
    %11163 = vst [vmem:[%s15 + $0x68] sm:$0xff] %v10953
    %11164 = vst [vmem:[%s15 + $0x70] sm:$0xff] %v10955
    %11165 = vst [vmem:[%s15 + $0x78] sm:$0xff] %v10957
    %11166 = vst [vmem:[%s15 + $0x80] sm:$0xff] %v10959
    %11167 = vst [vmem:[%s15 + $0x88] sm:$0xff] %v10961
    %11168 = vst [vmem:[%s15 + $0x90] sm:$0xff] %v10963
    %11169 = vst [vmem:[%s15 + $0x98] sm:$0xff] %v10965
    %11170 = vst [vmem:[%s15 + $0xa0] sm:$0xff] %v10967
    %11171 = vst [vmem:[%s15 + $0xa8] sm:$0xff] %v10969
    %11172 = vst [vmem:[%s15 + $0xb0] sm:$0xff] %v10971
    %11173 = vst [vmem:[%s15 + $0xb8] sm:$0xff] %v10973
    %11174 = vst [vmem:[%s15 + $0xc0] sm:$0xff] %v10975
    %11175 = vst [vmem:[%s15 + $0xc8] sm:$0xff] %v10977
    %11176 = vst [vmem:[%s15 + $0xd0] sm:$0xff] %v10979
    %11177 = vst [vmem:[%s15 + $0xd8] sm:$0xff] %v10981
    %11178 = vst [vmem:[%s15 + $0xe0] sm:$0xff] %v10983
    %11179 = vst [vmem:[%s15 + $0xe8] sm:$0xff] %v10985
    %11180 = vst [vmem:[%s15 + $0xf0] sm:$0xff] %v10987
    %11181 = vst [vmem:[%s15 + $0xf8] sm:$0xff] %v10989
    %11182 = vst [vmem:[%s15 + $0x100] sm:$0xff] %v10991
    %11183 = vst [vmem:[%s15 + $0x108] sm:$0xff] %v10993
    %11184 = vst [vmem:[%s15 + $0x110] sm:$0xff] %v10995
    %11185 = vst [vmem:[%s15 + $0x118] sm:$0xff] %v10997
    %11186 = vst [vmem:[%s15 + $0x120] sm:$0xff] %v10999
    %11187 = vst [vmem:[%s15 + $0x128] sm:$0xff] %v11001
    %11188 = vst [vmem:[%s15 + $0x130] sm:$0xff] %v11003
    %11189 = vst [vmem:[%s15 + $0x138] sm:$0xff] %v11005
    %11190 = vst [vmem:[%s15 + $0x140] sm:$0xff] %v11007
    %11191 = vst [vmem:[%s15 + $0x148] sm:$0xff] %v11009
    %11192 = vst [vmem:[%s15 + $0x150] sm:$0xff] %v11011
    %11193 = vst [vmem:[%s15 + $0x158] sm:$0xff] %v11013
    %11194 = vst [vmem:[%s15 + $0x160] sm:$0xff] %v11015
    %11195 = vst [vmem:[%s15 + $0x168] sm:$0xff] %v11017
    %11196 = vst [vmem:[%s15 + $0x170] sm:$0xff] %v11019
    %11197 = vst [vmem:[%s15 + $0x178] sm:$0xff] %v11021
    %11198 = vst [vmem:[%s15 + $0x180] sm:$0xff] %v11023
    %11199 = vst [vmem:[%s15 + $0x188] sm:$0xff] %v11025
    %11200 = vst [vmem:[%s15 + $0x190] sm:$0xff] %v11027
    %11201 = vst [vmem:[%s15 + $0x198] sm:$0xff] %v11029
    %11202 = vst [vmem:[%s15 + $0x1a0] sm:$0xff] %v11031
    %11203 = vst [vmem:[%s15 + $0x1a8] sm:$0xff] %v11033
    %11204 = vst [vmem:[%s15 + $0x1b0] sm:$0xff] %v11035
    %11205 = vst [vmem:[%s15 + $0x1b8] sm:$0xff] %v11037
    %11206 = vst [vmem:[%s15 + $0x1c0] sm:$0xff] %v11039
    %11207 = vst [vmem:[%s15 + $0x1c8] sm:$0xff] %v11041
    %11208 = vst [vmem:[%s15 + $0x1d0] sm:$0xff] %v11043
    %11209 = vst [vmem:[%s15 + $0x1d8] sm:$0xff] %v11045
    %11210 = vst [vmem:[%s15 + $0x1e0] sm:$0xff] %v11047
    %11211 = vst [vmem:[%s15 + $0x1e8] sm:$0xff] %v11049
    %11212 = vst [vmem:[%s15 + $0x1f0] sm:$0xff] %v11051
    %11213 = vst [vmem:[%s15 + $0x1f8] sm:$0xff] %v11053
    %11214 = vst [vmem:[%s15 + $0x200] sm:$0xff] %v11055
    %11215 = vst [vmem:[%s15 + $0x208] sm:$0xff] %v11057
    %11216 = vst [vmem:[%s15 + $0x210] sm:$0xff] %v11059
    %11217 = vst [vmem:[%s15 + $0x218] sm:$0xff] %v11061
    %11218 = vst [vmem:[%s15 + $0x220] sm:$0xff] %v11063
    %11219 = vst [vmem:[%s15 + $0x228] sm:$0xff] %v11065
    %11220 = vst [vmem:[%s15 + $0x230] sm:$0xff] %v11067
    %11221 = vst [vmem:[%s15 + $0x238] sm:$0xff] %v11069
    %11222 = vst [vmem:[%s15 + $0x240] sm:$0xff] %v11071
    %11223 = vst [vmem:[%s15 + $0x248] sm:$0xff] %v11073
    %11224 = vst [vmem:[%s15 + $0x250] sm:$0xff] %v11075
    %11225 = vst [vmem:[%s15 + $0x258] sm:$0xff] %v11077
    %11226 = vst [vmem:[%s15 + $0x260] sm:$0xff] %v11079
    %11227 = vst [vmem:[%s15 + $0x268] sm:$0xff] %v11081
    %11228 = vst [vmem:[%s15 + $0x270] sm:$0xff] %v11083
    %11229 = vst [vmem:[%s15 + $0x278] sm:$0xff] %v11085
    %11230 = vst [vmem:[%s15 + $0x280] sm:$0xff] %v11087
    %11231 = vst [vmem:[%s15 + $0x288] sm:$0xff] %v11089
    %11232 = vst [vmem:[%s15 + $0x290] sm:$0xff] %v11091
    %11233 = vst [vmem:[%s15 + $0x298] sm:$0xff] %v11093
    %11234 = vst [vmem:[%s15 + $0x2a0] sm:$0xff] %v11095
    %11235 = vst [vmem:[%s15 + $0x2a8] sm:$0xff] %v11097
    %11236 = vst [vmem:[%s15 + $0x2b0] sm:$0xff] %v11099
    %11237 = vst [vmem:[%s15 + $0x2b8] sm:$0xff] %v11101
    %11238 = vst [vmem:[%s15 + $0x2c0] sm:$0xff] %v11103
    %11239 = vst [vmem:[%s15 + $0x2c8] sm:$0xff] %v11105
    %11240 = vst [vmem:[%s15 + $0x2d0] sm:$0xff] %v11107
    %11241 = vst [vmem:[%s15 + $0x2d8] sm:$0xff] %v11109
    %11242 = vst [vmem:[%s15 + $0x2e0] sm:$0xff] %v11111
    %11243 = vst [vmem:[%s15 + $0x2e8] sm:$0xff] %v11113
    %11244 = vst [vmem:[%s15 + $0x2f0] sm:$0xff] %v11115
    %11245 = vst [vmem:[%s15 + $0x2f8] sm:$0xff] %v11117
    %11246 = vst [vmem:[%s15 + $0x300] sm:$0xff] %v11119
    %11247 = vst [vmem:[%s15 + $0x308] sm:$0xff] %v11121
    %11248 = vst [vmem:[%s15 + $0x310] sm:$0xff] %v11123
    %11249 = vst [vmem:[%s15 + $0x318] sm:$0xff] %v11125
    %11250 = vst [vmem:[%s15 + $0x320] sm:$0xff] %v11127
    %11251 = vst [vmem:[%s15 + $0x328] sm:$0xff] %v11129
    %11252 = vst [vmem:[%s15 + $0x330] sm:$0xff] %v11131
    %11253 = vst [vmem:[%s15 + $0x338] sm:$0xff] %v11133
    %11254 = vst [vmem:[%s15 + $0x340] sm:$0xff] %v11135
    %11255 = vst [vmem:[%s15 + $0x348] sm:$0xff] %v11137
    %11256 = vst [vmem:[%s15 + $0x350] sm:$0xff] %v11139
    %11257 = vst [vmem:[%s15 + $0x358] sm:$0xff] %v11141
    %11258 = vst [vmem:[%s15 + $0x360] sm:$0xff] %v11143
    %11259 = vst [vmem:[%s15 + $0x368] sm:$0xff] %v11145
    %11260 = vst [vmem:[%s15 + $0x370] sm:$0xff] %v11147
    %11261 = vst [vmem:[%s15 + $0x378] sm:$0xff] %v11149
    // Predicated region
    $region118: #{generator_forward.1} parent=1 // pred_check
      _
    $region119: #{generator_forward.1} parent=1 // pred_check_branch
      %11263 = sbr.rel (0) target = $region121
    $region120: #{generator_forward.1} parent=1 // pred_region
      _
    $region121: #{generator_forward.1} parent=1 // pred_fallthru
      _
    // Predicated region
    $region122: #{generator_forward.1} parent=1 // pred_check
      _
    $region123: #{generator_forward.1} parent=1 // pred_check_branch
      %11265 = sbr.rel (0) target = $region125
    $region124: #{generator_forward.1} parent=1 // pred_region
      _
    $region125: #{generator_forward.1} parent=1 // pred_fallthru
      _
    %11266 = vsyncpa [#allocation3], 1
    %11267 = vsyncpa [#allocation5], 1
    %11268 = vsyncpa [#allocation8], 1
    %11269 = vsyncpa [#allocation11], 1
    %11270 = vsyncpa [#allocation14], 1
    %11271 = vsyncpa [#allocation17], 1
    %11272 = vsyncpa [#allocation20], 1
    %11273 = vsyncpa [#allocation23], 1

</llo_original>
